<compile_context>
chip_gen: v7x
topology: tpu7x:2x2x1
jax: 0.10.0
libtpu: 0.0.40
codegen_flags: <defaults>
</compile_context>

<pallas_src>
import jax
import jax.numpy as jnp
from jax.experimental import pallas as pl
from jax.experimental.pallas import tpu as pltpu

MODEL_DIM = 768  # nn.Linear dims inside the module are hard-coded around 768


def _round_up(x, m):
    return ((x + m - 1) // m) * m


# ----------------------------- Pallas kernel --------------------------------
def _concept_blender_kernel(alpha_ref, c1_ref, c2_ref,
                            w1_ref, b1_ref, w2_ref, b2_ref, w3_ref, b3_ref,
                            wc1a_ref, wc1b_ref, bc1_ref, wc2_ref, bc2_ref,
                            wc3_ref, bc3_ref,
                            blended_ref, compat_ref):
    """One batch tile: encode both concepts, compatibility score, interpolation blend."""
    tile_b = c1_ref.shape[0]

    # Cast to bf16 BEFORE the concat so the stacked (2*tile_b, D) staging buffer is half
    # the bytes, then run the encoder ONCE at M = 2*tile_b (3 matmuls instead of 6).
    c1 = c1_ref[...].astype(jnp.bfloat16)
    c2 = c2_ref[...].astype(jnp.bfloat16)
    x = jnp.concatenate([c1, c2], axis=0)                      # (2*tile_b, D), bf16

    def mm(a_bf16, w_ref, b_ref):
        # bf16 x bf16 on the MXU, f32 accumulation, f32 bias.
        return jnp.dot(a_bf16, w_ref[...],
                       preferred_element_type=jnp.float32) + b_ref[...]

    # concept_encoder: Linear(768,512)->ReLU->Dropout(eval=identity)
    #                  ->Linear(512,256)->ReLU->Linear(256,768)->Tanh
    # TODO(synk): Dropout is identity (eval mode); training-mode dropout not emitted.
    h = jnp.maximum(mm(x, w1_ref, b1_ref), 0.0).astype(jnp.bfloat16)
    h = jnp.maximum(mm(h, w2_ref, b2_ref), 0.0).astype(jnp.bfloat16)
    enc = jnp.tanh(mm(h, w3_ref, b3_ref))                      # (2*tile_b, D), f32

    enc1 = enc[:tile_b, :]
    enc2 = enc[tile_b:, :]

    # compatibility_scorer on cat([enc1, enc2], -1):
    #   cat @ Wc1 == enc1 @ Wc1[:D] + enc2 @ Wc1[D:]  (wc1 pre-split in the wrapper)
    e1b = enc1.astype(jnp.bfloat16)
    e2b = enc2.astype(jnp.bfloat16)
    h = (jnp.dot(e1b, wc1a_ref[...], preferred_element_type=jnp.float32)
         + jnp.dot(e2b, wc1b_ref[...], preferred_element_type=jnp.float32)
         + bc1_ref[...])
    h = jnp.maximum(h, 0.0).astype(jnp.bfloat16)
    h = jnp.maximum(mm(h, wc2_ref, bc2_ref), 0.0)               # (tile_b, 128), f32

    # Final 128 -> 1 projection on the VPU (mul + lane reduce) — no N=1 MXU pass.
    logits = jnp.sum(h * wc3_ref[...], axis=-1, keepdims=True) + bc3_ref[...]
    # Compact (tile_b, 1) store: 4 B/pair of HBM writeback (was a 128-lane f32 broadcast).
    compat_ref[...] = jax.nn.sigmoid(logits)

    # mode='interpolation': alpha * enc1 + (1 - alpha) * enc2
    # TODO(synk): other blend modes (union/intersection/transformation/emergence) use
    #             blend_network / randn noise and are not emitted in this kernel.
    alpha = alpha_ref[0, 0]
    blended_ref[...] = (alpha * enc1 + (1.0 - alpha) * enc2).astype(blended_ref.dtype)


# ------------------------------ wrapper --------------------------------------
def _weight_specs(weights, single_buffered):
    specs = []
    for w in weights:
        # Constant index_map: Pallas keeps the block VMEM-resident across grid steps.
        idx_map = (lambda i, _n=w.ndim: (0,) * _n)
        if single_buffered:
            # Never re-fetched, so the default 2nd pipeline buffer is pure VMEM waste.
            specs.append(pl.BlockSpec(w.shape, idx_map, pipeline_mode=pl.Buffered(1)))
        else:
            specs.append(pl.BlockSpec(w.shape, idx_map))
    return specs


def concept_blender_forward(concept1, concept2, params, alpha=0.5, tile_b=256,
                            blended_dtype=jnp.float32):
    """Returns (blended (B, D), compatibility (B, 1)) for a batch of concept pairs.

    blended_dtype: keep f32 for PyTorch parity; pass jnp.bfloat16 on mem-bound v6e to
    halve the dominant per-pair writeback when the consumer accepts bf16.
    """
    B, D = concept1.shape
    assert D == MODEL_DIM

    # Batch tiling: tile_b multiple of 8 (sublane). Force >= 2 grid tiles whenever the
    # padded batch allows it so dimension_semantics=("parallel",) can shard the batch
    # across v7x's two TensorCores (one extra ~0.35 us grid step on v5e/v6e is noise
    # next to the one-time ~2.3 MB weight DMA).
    B_pad8 = _round_up(B, 8)
    if B_pad8 >= 16:
        tile_b = min(tile_b, _round_up(pl.cdiv(B_pad8, 2), 8))
    else:
        tile_b = min(tile_b, B_pad8)
    tile_b = _round_up(tile_b, 8)
    B_pad = _round_up(B, tile_b)
    if B_pad != B:
        pad = ((0, B_pad - B), (0, 0))
        concept1 = jnp.pad(concept1, pad)
        concept2 = jnp.pad(concept2, pad)

    # bf16 weights (halve HBM->VMEM traffic, bf16-native MXU), f32 biases, wc1 pre-split,
    # wc3 as a (1,128) row vector for the VPU final projection.
    weights = [
        params["w1"].astype(jnp.bfloat16), params["b1"],
        params["w2"].astype(jnp.bfloat16), params["b2"],
        params["w3"].astype(jnp.bfloat16), params["b3"],
        params["wc1"][:MODEL_DIM].astype(jnp.bfloat16),
        params["wc1"][MODEL_DIM:].astype(jnp.bfloat16),
        params["bc1"],
        params["wc2"].astype(jnp.bfloat16), params["bc2"],
        params["wc3"].T,            # (1, 128), f32, used on the VPU
        params["bc3"],
    ]

    alpha_arr = jnp.full((1, 1), alpha, dtype=jnp.float32)
    grid = (B_pad // tile_b,)

    out_shape = (
        jax.ShapeDtypeStruct((B_pad, D), blended_dtype),
        jax.ShapeDtypeStruct((B_pad, 1), jnp.float32),          # compact compat column
    )
    out_specs = (
        pl.BlockSpec((tile_b, D), lambda i: (i, 0)),
        pl.BlockSpec((tile_b, 1), lambda i: (i, 0)),
    )

    def run(single_buffered_weights):
        in_specs = (
            [pl.BlockSpec((1, 1), lambda i: (0, 0),
                          memory_space=pltpu.MemorySpace.SMEM)]       # alpha scalar
            + [pl.BlockSpec((tile_b, D), lambda i: (i, 0)),           # concept1 tile
               pl.BlockSpec((tile_b, D), lambda i: (i, 0))]           # concept2 tile
            + _weight_specs(weights, single_buffered_weights)
        )
        return pl.pallas_call(
            _concept_blender_kernel,
            out_shape=out_shape,
            grid=grid,
            in_specs=in_specs,
            out_specs=out_specs,
            compiler_params=pltpu.CompilerParams(
                dimension_semantics=("parallel",),      # batch tiles are independent
                vmem_limit_bytes=32 * 1024 * 1024,      # safe on v5e/v6e and v7x
            ),
        )(alpha_arr, concept1, concept2, *weights)

    # TODO(synk): for tight serving loops at tiny B, keep weights resident across calls
    #             (P10-style cross-call prefetch) instead of re-DMAing ~2.3 MB per call.
    try:
        blended, compat = run(single_buffered_weights=True)
    except Exception:
        # pl.Buffered(1) not supported by this jax build: fall back to default
        # double-buffered weights (~2.3 MB extra VMEM, harmless at these tile sizes).
        blended, compat = run(single_buffered_weights=False)

    return blended[:B], compat[:B]


# ------------------------- deterministic parameter init ----------------------
def _linear_params(key, fan_in, fan_out):
    """PyTorch-style uniform init U(-1/sqrt(fan_in), 1/sqrt(fan_in)); W as (in, out)."""
    kw, kb = jax.random.split(key)
    bound = 1.0 / jnp.sqrt(float(fan_in))
    w = jax.random.uniform(kw, (fan_in, fan_out), jnp.float32, -bound, bound)
    b = jax.random.uniform(kb, (1, fan_out), jnp.float32, -bound, bound)
    return w, b


def init_params(key):
    keys = jax.random.split(key, 6)
    params = {}
    # concept_encoder: 768 -> 512 -> 256 -> 768
    params["w1"], params["b1"] = _linear_params(keys[0], MODEL_DIM, 512)
    params["w2"], params["b2"] = _linear_params(keys[1], 512, 256)
    params["w3"], params["b3"] = _linear_params(keys[2], 256, MODEL_DIM)
    # compatibility_scorer: 1536 -> 256 -> 128 -> 1
    params["wc1"], params["bc1"] = _linear_params(keys[3], 2 * MODEL_DIM, 256)
    params["wc2"], params["bc2"] = _linear_params(keys[4], 256, 128)
    params["wc3"], params["bc3"] = _linear_params(keys[5], 128, 1)
    return params


# ------------------------------ pure-JAX reference ---------------------------
def reference_forward(c1, c2, p, alpha=0.5):
    def enc(x):
        h = jnp.maximum(x @ p["w1"] + p["b1"], 0.0)
        h = jnp.maximum(h @ p["w2"] + p["b2"], 0.0)
        return jnp.tanh(h @ p["w3"] + p["b3"])

    e1, e2 = enc(c1), enc(c2)
    cat = jnp.concatenate([e1, e2], axis=-1)
    h = jnp.maximum(cat @ p["wc1"] + p["bc1"], 0.0)
    h = jnp.maximum(h @ p["wc2"] + p["bc2"], 0.0)
    compat = jax.nn.sigmoid(h @ p["wc3"] + p["bc3"])
    blended = alpha * e1 + (1.0 - alpha) * e2
    return blended, compat


# ------------------------------------ main ------------------------------------
if __name__ == "__main__":
    key = jax.random.PRNGKey(0)
    k_param, k_c1, k_c2 = jax.random.split(key, 3)

    params = init_params(k_param)
    # Small batched example: 16 concept pairs -> 2 grid tiles of 8 (both v7x cores get
    # work; weights stay VMEM-resident across both grid steps).
    B = 16
    concept1 = jax.random.normal(k_c1, (B, MODEL_DIM), jnp.float32)
    concept2 = jax.random.normal(k_c2, (B, MODEL_DIM), jnp.float32)

    blended, compat = concept_blender_forward(concept1, concept2, params, alpha=0.5)
    jax.block_until_ready((blended, compat))

    # Sanity check against the pure-f32 reference (tolerance relaxed for bf16 weights).
    blended_ref, compat_ref = reference_forward(concept1, concept2, params, alpha=0.5)
    assert blended.shape == (B, MODEL_DIM) and compat.shape == (B, 1)
    assert jnp.allclose(blended, blended_ref, atol=3e-2, rtol=3e-2), (
        float(jnp.max(jnp.abs(blended - blended_ref))))
    assert jnp.allclose(compat, compat_ref, atol=3e-2, rtol=3e-2), (
        float(jnp.max(jnp.abs(compat - compat_ref))))

    compatibility = float(compat[0, 0])  # matches `float(compatibility)` in the module
    assert 0.0 <= compatibility <= 1.0

    print("KERNEL_OK")
</pallas_src>

<mosaic_0001>
module attributes {stable_mosaic.version = 11 : i64} {
  func.func @_concept_blender_kernel(%arg0: i32, %arg1: memref<1x1xf32, #tpu.memory_space<smem>>, %arg2: memref<8x768xf32, #tpu.memory_space<vmem>>, %arg3: memref<8x768xf32, #tpu.memory_space<vmem>>, %arg4: memref<768x512xbf16, #tpu.memory_space<vmem>>, %arg5: memref<1x512xf32, #tpu.memory_space<vmem>>, %arg6: memref<512x256xbf16, #tpu.memory_space<vmem>>, %arg7: memref<1x256xf32, #tpu.memory_space<vmem>>, %arg8: memref<256x768xbf16, #tpu.memory_space<vmem>>, %arg9: memref<1x768xf32, #tpu.memory_space<vmem>>, %arg10: memref<768x256xbf16, #tpu.memory_space<vmem>>, %arg11: memref<768x256xbf16, #tpu.memory_space<vmem>>, %arg12: memref<1x256xf32, #tpu.memory_space<vmem>>, %arg13: memref<256x128xbf16, #tpu.memory_space<vmem>>, %arg14: memref<1x128xf32, #tpu.memory_space<vmem>>, %arg15: memref<1x128xf32, #tpu.memory_space<vmem>>, %arg16: memref<1x1xf32, #tpu.memory_space<vmem>>, %arg17: memref<8x768xf32, #tpu.memory_space<vmem>>, %arg18: memref<8x1xf32, #tpu.memory_space<vmem>>) attributes {dimension_semantics = [#tpu.dimension_semantics<parallel>], iteration_bounds = array<i64: 2>, scalar_prefetch = 0 : i64, scratch_operands = 0 : i64, tpu.core_type = #tpu.core_type<tc>, window_params = [{transform_indices = @transform_0, window_bounds = array<i64: 1, 1>}, {transform_indices = @transform_1, window_bounds = array<i64: 8, 768>}, {transform_indices = @transform_2, window_bounds = array<i64: 8, 768>}, {pipeline_mode = #tpu.pipeline_mode<synchronous>, transform_indices = @transform_3, window_bounds = array<i64: 768, 512>}, {pipeline_mode = #tpu.pipeline_mode<synchronous>, transform_indices = @transform_4, window_bounds = array<i64: 1, 512>}, {pipeline_mode = #tpu.pipeline_mode<synchronous>, transform_indices = @transform_5, window_bounds = array<i64: 512, 256>}, {pipeline_mode = #tpu.pipeline_mode<synchronous>, transform_indices = @transform_6, window_bounds = array<i64: 1, 256>}, {pipeline_mode = #tpu.pipeline_mode<synchronous>, transform_indices = @transform_7, window_bounds = array<i64: 256, 768>}, {pipeline_mode = #tpu.pipeline_mode<synchronous>, transform_indices = @transform_8, window_bounds = array<i64: 1, 768>}, {pipeline_mode = #tpu.pipeline_mode<synchronous>, transform_indices = @transform_9, window_bounds = array<i64: 768, 256>}, {pipeline_mode = #tpu.pipeline_mode<synchronous>, transform_indices = @transform_10, window_bounds = array<i64: 768, 256>}, {pipeline_mode = #tpu.pipeline_mode<synchronous>, transform_indices = @transform_11, window_bounds = array<i64: 1, 256>}, {pipeline_mode = #tpu.pipeline_mode<synchronous>, transform_indices = @transform_12, window_bounds = array<i64: 256, 128>}, {pipeline_mode = #tpu.pipeline_mode<synchronous>, transform_indices = @transform_13, window_bounds = array<i64: 1, 128>}, {pipeline_mode = #tpu.pipeline_mode<synchronous>, transform_indices = @transform_14, window_bounds = array<i64: 1, 128>}, {pipeline_mode = #tpu.pipeline_mode<synchronous>, transform_indices = @transform_15, window_bounds = array<i64: 1, 1>}, {transform_indices = @transform_16, window_bounds = array<i64: 8, 768>}, {transform_indices = @transform_17, window_bounds = array<i64: 8, 1>}]} {
    %c0 = arith.constant 0 : index
    %c0_0 = arith.constant 0 : index
    %0 = vector.load %arg2[%c0, %c0_0] : memref<8x768xf32, #tpu.memory_space<vmem>>, vector<8x768xf32>
    %1 = arith.truncf %0 : vector<8x768xf32> to vector<8x768xbf16>
    %c0_1 = arith.constant 0 : index
    %c0_2 = arith.constant 0 : index
    %2 = vector.load %arg3[%c0_1, %c0_2] : memref<8x768xf32, #tpu.memory_space<vmem>>, vector<8x768xf32>
    %3 = arith.truncf %2 : vector<8x768xf32> to vector<8x768xbf16>
    %4 = tpu.concatenate %1, %3 in 0 : vector<8x768xbf16>, vector<8x768xbf16> -> vector<16x768xbf16>
    %c0_3 = arith.constant 0 : index
    %c0_4 = arith.constant 0 : index
    %5 = vector.load %arg4[%c0_3, %c0_4] : memref<768x512xbf16, #tpu.memory_space<vmem>>, vector<768x512xbf16>
    %cst = arith.constant dense<0.000000e+00> : vector<16x512xf32>
    %6 = tpu.matmul %4, %5, %cst {dimension_numbers = #tpu.dot_dimension_numbers<[1], [0], [0], [1], [0, 0, 1, 1], [], []>} : vector<16x768xbf16>, vector<768x512xbf16>, vector<16x512xf32> -> vector<16x512xf32>
    %c0_5 = arith.constant 0 : index
    %c0_6 = arith.constant 0 : index
    %7 = vector.load %arg5[%c0_5, %c0_6] : memref<1x512xf32, #tpu.memory_space<vmem>>, vector<1x512xf32>
    %8 = vector.broadcast %7 : vector<1x512xf32> to vector<16x512xf32>
    %9 = arith.addf %6, %8 : vector<16x512xf32>
    %cst_7 = arith.constant 0.000000e+00 : f32
    %10 = vector.broadcast %cst_7 : f32 to vector<16x512xf32>
    %11 = arith.maximumf %9, %10 : vector<16x512xf32>
    %12 = arith.truncf %11 : vector<16x512xf32> to vector<16x512xbf16>
    %c0_8 = arith.constant 0 : index
    %c0_9 = arith.constant 0 : index
    %13 = vector.load %arg6[%c0_8, %c0_9] : memref<512x256xbf16, #tpu.memory_space<vmem>>, vector<512x256xbf16>
    %cst_10 = arith.constant dense<0.000000e+00> : vector<16x256xf32>
    %14 = tpu.matmul %12, %13, %cst_10 {dimension_numbers = #tpu.dot_dimension_numbers<[1], [0], [0], [1], [0, 0, 1, 1], [], []>} : vector<16x512xbf16>, vector<512x256xbf16>, vector<16x256xf32> -> vector<16x256xf32>
    %c0_11 = arith.constant 0 : index
    %c0_12 = arith.constant 0 : index
    %15 = vector.load %arg7[%c0_11, %c0_12] : memref<1x256xf32, #tpu.memory_space<vmem>>, vector<1x256xf32>
    %16 = vector.broadcast %15 : vector<1x256xf32> to vector<16x256xf32>
    %17 = arith.addf %14, %16 : vector<16x256xf32>
    %cst_13 = arith.constant 0.000000e+00 : f32
    %18 = vector.broadcast %cst_13 : f32 to vector<16x256xf32>
    %19 = arith.maximumf %17, %18 : vector<16x256xf32>
    %20 = arith.truncf %19 : vector<16x256xf32> to vector<16x256xbf16>
    %c0_14 = arith.constant 0 : index
    %c0_15 = arith.constant 0 : index
    %21 = vector.load %arg8[%c0_14, %c0_15] : memref<256x768xbf16, #tpu.memory_space<vmem>>, vector<256x768xbf16>
    %cst_16 = arith.constant dense<0.000000e+00> : vector<16x768xf32>
    %22 = tpu.matmul %20, %21, %cst_16 {dimension_numbers = #tpu.dot_dimension_numbers<[1], [0], [0], [1], [0, 0, 1, 1], [], []>} : vector<16x256xbf16>, vector<256x768xbf16>, vector<16x768xf32> -> vector<16x768xf32>
    %c0_17 = arith.constant 0 : index
    %c0_18 = arith.constant 0 : index
    %23 = vector.load %arg9[%c0_17, %c0_18] : memref<1x768xf32, #tpu.memory_space<vmem>>, vector<1x768xf32>
    %24 = vector.broadcast %23 : vector<1x768xf32> to vector<16x768xf32>
    %25 = arith.addf %22, %24 : vector<16x768xf32>
    %26 = math.tanh %25 : vector<16x768xf32>
    %27 = vector.extract_strided_slice %26 {offsets = [0, 0], sizes = [8, 768], strides = [1, 1]} : vector<16x768xf32> to vector<8x768xf32>
    %28 = vector.extract_strided_slice %26 {offsets = [8, 0], sizes = [8, 768], strides = [1, 1]} : vector<16x768xf32> to vector<8x768xf32>
    %29 = arith.truncf %27 : vector<8x768xf32> to vector<8x768xbf16>
    %30 = arith.truncf %28 : vector<8x768xf32> to vector<8x768xbf16>
    %c0_19 = arith.constant 0 : index
    %c0_20 = arith.constant 0 : index
    %31 = vector.load %arg10[%c0_19, %c0_20] : memref<768x256xbf16, #tpu.memory_space<vmem>>, vector<768x256xbf16>
    %cst_21 = arith.constant dense<0.000000e+00> : vector<8x256xf32>
    %32 = tpu.matmul %29, %31, %cst_21 {dimension_numbers = #tpu.dot_dimension_numbers<[1], [0], [0], [1], [0, 0, 1, 1], [], []>} : vector<8x768xbf16>, vector<768x256xbf16>, vector<8x256xf32> -> vector<8x256xf32>
    %c0_22 = arith.constant 0 : index
    %c0_23 = arith.constant 0 : index
    %33 = vector.load %arg11[%c0_22, %c0_23] : memref<768x256xbf16, #tpu.memory_space<vmem>>, vector<768x256xbf16>
    %cst_24 = arith.constant dense<0.000000e+00> : vector<8x256xf32>
    %34 = tpu.matmul %30, %33, %cst_24 {dimension_numbers = #tpu.dot_dimension_numbers<[1], [0], [0], [1], [0, 0, 1, 1], [], []>} : vector<8x768xbf16>, vector<768x256xbf16>, vector<8x256xf32> -> vector<8x256xf32>
    %35 = arith.addf %32, %34 : vector<8x256xf32>
    %c0_25 = arith.constant 0 : index
    %c0_26 = arith.constant 0 : index
    %36 = vector.load %arg12[%c0_25, %c0_26] : memref<1x256xf32, #tpu.memory_space<vmem>>, vector<1x256xf32>
    %37 = vector.broadcast %36 : vector<1x256xf32> to vector<8x256xf32>
    %38 = arith.addf %35, %37 : vector<8x256xf32>
    %cst_27 = arith.constant 0.000000e+00 : f32
    %39 = vector.broadcast %cst_27 : f32 to vector<8x256xf32>
    %40 = arith.maximumf %38, %39 : vector<8x256xf32>
    %41 = arith.truncf %40 : vector<8x256xf32> to vector<8x256xbf16>
    %c0_28 = arith.constant 0 : index
    %c0_29 = arith.constant 0 : index
    %42 = vector.load %arg13[%c0_28, %c0_29] : memref<256x128xbf16, #tpu.memory_space<vmem>>, vector<256x128xbf16>
    %cst_30 = arith.constant dense<0.000000e+00> : vector<8x128xf32>
    %43 = tpu.matmul %41, %42, %cst_30 {dimension_numbers = #tpu.dot_dimension_numbers<[1], [0], [0], [1], [0, 0, 1, 1], [], []>} : vector<8x256xbf16>, vector<256x128xbf16>, vector<8x128xf32> -> vector<8x128xf32>
    %c0_31 = arith.constant 0 : index
    %c0_32 = arith.constant 0 : index
    %44 = vector.load %arg14[%c0_31, %c0_32] : memref<1x128xf32, #tpu.memory_space<vmem>>, vector<1x128xf32>
    %45 = vector.broadcast %44 : vector<1x128xf32> to vector<8x128xf32>
    %46 = arith.addf %43, %45 : vector<8x128xf32>
    %cst_33 = arith.constant 0.000000e+00 : f32
    %47 = vector.broadcast %cst_33 : f32 to vector<8x128xf32>
    %48 = arith.maximumf %46, %47 : vector<8x128xf32>
    %c0_34 = arith.constant 0 : index
    %c0_35 = arith.constant 0 : index
    %49 = vector.load %arg15[%c0_34, %c0_35] : memref<1x128xf32, #tpu.memory_space<vmem>>, vector<1x128xf32>
    %50 = vector.broadcast %49 : vector<1x128xf32> to vector<8x128xf32>
    %51 = arith.mulf %48, %50 : vector<8x128xf32>
    %cst_36 = arith.constant dense<0.000000e+00> : vector<8xf32>
    %52 = vector.multi_reduction <add>, %51, %cst_36 [1] : vector<8x128xf32> to vector<8xf32>
    %53 = vector.shape_cast %52 : vector<8xf32> to vector<8x1xf32>
    %c0_37 = arith.constant 0 : index
    %c0_38 = arith.constant 0 : index
    %54 = vector.load %arg16[%c0_37, %c0_38] : memref<1x1xf32, #tpu.memory_space<vmem>>, vector<1x1xf32>
    %55 = vector.broadcast %54 : vector<1x1xf32> to vector<8x1xf32>
    %56 = arith.addf %53, %55 : vector<8x1xf32>
    %57 = arith.negf %56 : vector<8x1xf32>
    %58 = math.exp %57 : vector<8x1xf32>
    %cst_39 = arith.constant 1.000000e+00 : f32
    %59 = vector.broadcast %cst_39 : f32 to vector<8x1xf32>
    %60 = arith.addf %59, %58 : vector<8x1xf32>
    %61 = arith.divf %59, %60 : vector<8x1xf32>
    %c0_40 = arith.constant 0 : index
    %c0_41 = arith.constant 0 : index
    %62 = vector.load %arg18[%c0_40, %c0_41] : memref<8x1xf32, #tpu.memory_space<vmem>>, vector<8x1xf32>
    tpu.vector_store %arg18[%c0_40, %c0_41], %61 {strides = array<i32>} : memref<8x1xf32, #tpu.memory_space<vmem>>, vector<8x1xf32>,
    %c0_42 = arith.constant 0 : index
    %c0_43 = arith.constant 0 : index
    %63 = memref.load %arg1[%c0_42, %c0_43] : memref<1x1xf32, #tpu.memory_space<smem>>
    %64 = vector.broadcast %63 : f32 to vector<8x768xf32>
    %65 = arith.mulf %64, %27 : vector<8x768xf32>
    %cst_44 = arith.constant 1.000000e+00 : f32
    %66 = arith.subf %cst_44, %63 : f32
    %67 = vector.broadcast %66 : f32 to vector<8x768xf32>
    %68 = arith.mulf %67, %28 : vector<8x768xf32>
    %69 = arith.addf %65, %68 : vector<8x768xf32>
    %c0_45 = arith.constant 0 : index
    %c0_46 = arith.constant 0 : index
    %70 = vector.load %arg17[%c0_45, %c0_46] : memref<8x768xf32, #tpu.memory_space<vmem>>, vector<8x768xf32>
    tpu.vector_store %arg17[%c0_45, %c0_46], %69 {strides = array<i32>} : memref<8x768xf32, #tpu.memory_space<vmem>>, vector<8x768xf32>,
    return
  }
  func.func @transform_0(%arg0: i32) -> (i32, i32) {
    %c0_i32 = arith.constant 0 : i32
    %c0_i32_0 = arith.constant 0 : i32
    %c0_i32_1 = arith.constant 0 : i32
    return %c0_i32, %c0_i32_0 : i32, i32
  }
  func.func @transform_1(%arg0: i32) -> (i32, i32) {
    %c0_i32 = arith.constant 0 : i32
    %c0_i32_0 = arith.constant 0 : i32
    return %arg0, %c0_i32 : i32, i32
  }
  func.func @transform_2(%arg0: i32) -> (i32, i32) {
    %c0_i32 = arith.constant 0 : i32
    %c0_i32_0 = arith.constant 0 : i32
    return %arg0, %c0_i32 : i32, i32
  }
  func.func @transform_3(%arg0: i32) -> (i32, i32) {
    %c0_i32 = arith.constant 0 : i32
    %c0_i32_0 = arith.constant 0 : i32
    %c0_i32_1 = arith.constant 0 : i32
    return %c0_i32, %c0_i32_0 : i32, i32
  }
  func.func @transform_4(%arg0: i32) -> (i32, i32) {
    %c0_i32 = arith.constant 0 : i32
    %c0_i32_0 = arith.constant 0 : i32
    %c0_i32_1 = arith.constant 0 : i32
    return %c0_i32, %c0_i32_0 : i32, i32
  }
  func.func @transform_5(%arg0: i32) -> (i32, i32) {
    %c0_i32 = arith.constant 0 : i32
    %c0_i32_0 = arith.constant 0 : i32
    %c0_i32_1 = arith.constant 0 : i32
    return %c0_i32, %c0_i32_0 : i32, i32
  }
  func.func @transform_6(%arg0: i32) -> (i32, i32) {
    %c0_i32 = arith.constant 0 : i32
    %c0_i32_0 = arith.constant 0 : i32
    %c0_i32_1 = arith.constant 0 : i32
    return %c0_i32, %c0_i32_0 : i32, i32
  }
  func.func @transform_7(%arg0: i32) -> (i32, i32) {
    %c0_i32 = arith.constant 0 : i32
    %c0_i32_0 = arith.constant 0 : i32
    %c0_i32_1 = arith.constant 0 : i32
    return %c0_i32, %c0_i32_0 : i32, i32
  }
  func.func @transform_8(%arg0: i32) -> (i32, i32) {
    %c0_i32 = arith.constant 0 : i32
    %c0_i32_0 = arith.constant 0 : i32
    %c0_i32_1 = arith.constant 0 : i32
    return %c0_i32, %c0_i32_0 : i32, i32
  }
  func.func @transform_9(%arg0: i32) -> (i32, i32) {
    %c0_i32 = arith.constant 0 : i32
    %c0_i32_0 = arith.constant 0 : i32
    %c0_i32_1 = arith.constant 0 : i32
    return %c0_i32, %c0_i32_0 : i32, i32
  }
  func.func @transform_10(%arg0: i32) -> (i32, i32) {
    %c0_i32 = arith.constant 0 : i32
    %c0_i32_0 = arith.constant 0 : i32
    %c0_i32_1 = arith.constant 0 : i32
    return %c0_i32, %c0_i32_0 : i32, i32
  }
  func.func @transform_11(%arg0: i32) -> (i32, i32) {
    %c0_i32 = arith.constant 0 : i32
    %c0_i32_0 = arith.constant 0 : i32
    %c0_i32_1 = arith.constant 0 : i32
    return %c0_i32, %c0_i32_0 : i32, i32
  }
  func.func @transform_12(%arg0: i32) -> (i32, i32) {
    %c0_i32 = arith.constant 0 : i32
    %c0_i32_0 = arith.constant 0 : i32
    %c0_i32_1 = arith.constant 0 : i32
    return %c0_i32, %c0_i32_0 : i32, i32
  }
  func.func @transform_13(%arg0: i32) -> (i32, i32) {
    %c0_i32 = arith.constant 0 : i32
    %c0_i32_0 = arith.constant 0 : i32
    %c0_i32_1 = arith.constant 0 : i32
    return %c0_i32, %c0_i32_0 : i32, i32
  }
  func.func @transform_14(%arg0: i32) -> (i32, i32) {
    %c0_i32 = arith.constant 0 : i32
    %c0_i32_0 = arith.constant 0 : i32
    %c0_i32_1 = arith.constant 0 : i32
    return %c0_i32, %c0_i32_0 : i32, i32
  }
  func.func @transform_15(%arg0: i32) -> (i32, i32) {
    %c0_i32 = arith.constant 0 : i32
    %c0_i32_0 = arith.constant 0 : i32
    %c0_i32_1 = arith.constant 0 : i32
    return %c0_i32, %c0_i32_0 : i32, i32
  }
  func.func @transform_16(%arg0: i32) -> (i32, i32) {
    %c0_i32 = arith.constant 0 : i32
    %c0_i32_0 = arith.constant 0 : i32
    return %arg0, %c0_i32 : i32, i32
  }
  func.func @transform_17(%arg0: i32) -> (i32, i32) {
    %c0_i32 = arith.constant 0 : i32
    %c0_i32_0 = arith.constant 0 : i32
    return %arg0, %c0_i32 : i32, i32
  }
}

module attributes {stable_mosaic.version = 11 : i64} {
  func.func @_concept_blender_kernel(%arg0: i32, %arg1: memref<1x1xf32, #tpu.memory_space<smem>>, %arg2: memref<8x768xf32, #tpu.memory_space<vmem>>, %arg3: memref<8x768xf32, #tpu.memory_space<vmem>>, %arg4: memref<768x512xbf16, #tpu.memory_space<vmem>>, %arg5: memref<1x512xf32, #tpu.memory_space<vmem>>, %arg6: memref<512x256xbf16, #tpu.memory_space<vmem>>, %arg7: memref<1x256xf32, #tpu.memory_space<vmem>>, %arg8: memref<256x768xbf16, #tpu.memory_space<vmem>>, %arg9: memref<1x768xf32, #tpu.memory_space<vmem>>, %arg10: memref<768x256xbf16, #tpu.memory_space<vmem>>, %arg11: memref<768x256xbf16, #tpu.memory_space<vmem>>, %arg12: memref<1x256xf32, #tpu.memory_space<vmem>>, %arg13: memref<256x128xbf16, #tpu.memory_space<vmem>>, %arg14: memref<1x128xf32, #tpu.memory_space<vmem>>, %arg15: memref<1x128xf32, #tpu.memory_space<vmem>>, %arg16: memref<1x1xf32, #tpu.memory_space<vmem>>, %arg17: memref<8x768xf32, #tpu.memory_space<vmem>>, %arg18: memref<8x1xf32, #tpu.memory_space<vmem>>) attributes {dimension_semantics = [#tpu.dimension_semantics<parallel>], iteration_bounds = array<i64: 2>, scalar_prefetch = 0 : i64, scratch_operands = 0 : i64, tpu.core_type = #tpu.core_type<tc>, window_params = [{transform_indices = @transform_0, window_bounds = array<i64: 1, 1>}, {transform_indices = @transform_1, window_bounds = array<i64: 8, 768>}, {transform_indices = @transform_2, window_bounds = array<i64: 8, 768>}, {pipeline_mode = #tpu.pipeline_mode<synchronous>, transform_indices = @transform_3, window_bounds = array<i64: 768, 512>}, {pipeline_mode = #tpu.pipeline_mode<synchronous>, transform_indices = @transform_4, window_bounds = array<i64: 1, 512>}, {pipeline_mode = #tpu.pipeline_mode<synchronous>, transform_indices = @transform_5, window_bounds = array<i64: 512, 256>}, {pipeline_mode = #tpu.pipeline_mode<synchronous>, transform_indices = @transform_6, window_bounds = array<i64: 1, 256>}, {pipeline_mode = #tpu.pipeline_mode<synchronous>, transform_indices = @transform_7, window_bounds = array<i64: 256, 768>}, {pipeline_mode = #tpu.pipeline_mode<synchronous>, transform_indices = @transform_8, window_bounds = array<i64: 1, 768>}, {pipeline_mode = #tpu.pipeline_mode<synchronous>, transform_indices = @transform_9, window_bounds = array<i64: 768, 256>}, {pipeline_mode = #tpu.pipeline_mode<synchronous>, transform_indices = @transform_10, window_bounds = array<i64: 768, 256>}, {pipeline_mode = #tpu.pipeline_mode<synchronous>, transform_indices = @transform_11, window_bounds = array<i64: 1, 256>}, {pipeline_mode = #tpu.pipeline_mode<synchronous>, transform_indices = @transform_12, window_bounds = array<i64: 256, 128>}, {pipeline_mode = #tpu.pipeline_mode<synchronous>, transform_indices = @transform_13, window_bounds = array<i64: 1, 128>}, {pipeline_mode = #tpu.pipeline_mode<synchronous>, transform_indices = @transform_14, window_bounds = array<i64: 1, 128>}, {pipeline_mode = #tpu.pipeline_mode<synchronous>, transform_indices = @transform_15, window_bounds = array<i64: 1, 1>}, {transform_indices = @transform_16, window_bounds = array<i64: 8, 768>}, {transform_indices = @transform_17, window_bounds = array<i64: 8, 1>}]} {
    %c0 = arith.constant 0 : index
    %c0_0 = arith.constant 0 : index
    %0 = vector.load %arg2[%c0, %c0_0] : memref<8x768xf32, #tpu.memory_space<vmem>>, vector<8x768xf32>
    %1 = arith.truncf %0 : vector<8x768xf32> to vector<8x768xbf16>
    %c0_1 = arith.constant 0 : index
    %c0_2 = arith.constant 0 : index
    %2 = vector.load %arg3[%c0_1, %c0_2] : memref<8x768xf32, #tpu.memory_space<vmem>>, vector<8x768xf32>
    %3 = arith.truncf %2 : vector<8x768xf32> to vector<8x768xbf16>
    %4 = tpu.concatenate %1, %3 in 0 : vector<8x768xbf16>, vector<8x768xbf16> -> vector<16x768xbf16>
    %c0_3 = arith.constant 0 : index
    %c0_4 = arith.constant 0 : index
    %5 = vector.load %arg4[%c0_3, %c0_4] : memref<768x512xbf16, #tpu.memory_space<vmem>>, vector<768x512xbf16>
    %cst = arith.constant dense<0.000000e+00> : vector<16x512xf32>
    %6 = tpu.matmul %4, %5, %cst {dimension_numbers = #tpu.dot_dimension_numbers<[1], [0], [0], [1], [0, 0, 1, 1], [], []>} : vector<16x768xbf16>, vector<768x512xbf16>, vector<16x512xf32> -> vector<16x512xf32>
    %c0_5 = arith.constant 0 : index
    %c0_6 = arith.constant 0 : index
    %7 = vector.load %arg5[%c0_5, %c0_6] : memref<1x512xf32, #tpu.memory_space<vmem>>, vector<1x512xf32>
    %8 = vector.broadcast %7 : vector<1x512xf32> to vector<16x512xf32>
    %9 = arith.addf %6, %8 : vector<16x512xf32>
    %cst_7 = arith.constant 0.000000e+00 : f32
    %10 = vector.broadcast %cst_7 : f32 to vector<16x512xf32>
    %11 = arith.maximumf %9, %10 : vector<16x512xf32>
    %12 = arith.truncf %11 : vector<16x512xf32> to vector<16x512xbf16>
    %c0_8 = arith.constant 0 : index
    %c0_9 = arith.constant 0 : index
    %13 = vector.load %arg6[%c0_8, %c0_9] : memref<512x256xbf16, #tpu.memory_space<vmem>>, vector<512x256xbf16>
    %cst_10 = arith.constant dense<0.000000e+00> : vector<16x256xf32>
    %14 = tpu.matmul %12, %13, %cst_10 {dimension_numbers = #tpu.dot_dimension_numbers<[1], [0], [0], [1], [0, 0, 1, 1], [], []>} : vector<16x512xbf16>, vector<512x256xbf16>, vector<16x256xf32> -> vector<16x256xf32>
    %c0_11 = arith.constant 0 : index
    %c0_12 = arith.constant 0 : index
    %15 = vector.load %arg7[%c0_11, %c0_12] : memref<1x256xf32, #tpu.memory_space<vmem>>, vector<1x256xf32>
    %16 = vector.broadcast %15 : vector<1x256xf32> to vector<16x256xf32>
    %17 = arith.addf %14, %16 : vector<16x256xf32>
    %cst_13 = arith.constant 0.000000e+00 : f32
    %18 = vector.broadcast %cst_13 : f32 to vector<16x256xf32>
    %19 = arith.maximumf %17, %18 : vector<16x256xf32>
    %20 = arith.truncf %19 : vector<16x256xf32> to vector<16x256xbf16>
    %c0_14 = arith.constant 0 : index
    %c0_15 = arith.constant 0 : index
    %21 = vector.load %arg8[%c0_14, %c0_15] : memref<256x768xbf16, #tpu.memory_space<vmem>>, vector<256x768xbf16>
    %cst_16 = arith.constant dense<0.000000e+00> : vector<16x768xf32>
    %22 = tpu.matmul %20, %21, %cst_16 {dimension_numbers = #tpu.dot_dimension_numbers<[1], [0], [0], [1], [0, 0, 1, 1], [], []>} : vector<16x256xbf16>, vector<256x768xbf16>, vector<16x768xf32> -> vector<16x768xf32>
    %c0_17 = arith.constant 0 : index
    %c0_18 = arith.constant 0 : index
    %23 = vector.load %arg9[%c0_17, %c0_18] : memref<1x768xf32, #tpu.memory_space<vmem>>, vector<1x768xf32>
    %24 = vector.broadcast %23 : vector<1x768xf32> to vector<16x768xf32>
    %25 = arith.addf %22, %24 : vector<16x768xf32>
    %26 = math.tanh %25 : vector<16x768xf32>
    %27 = vector.extract_strided_slice %26 {offsets = [0, 0], sizes = [8, 768], strides = [1, 1]} : vector<16x768xf32> to vector<8x768xf32>
    %28 = vector.extract_strided_slice %26 {offsets = [8, 0], sizes = [8, 768], strides = [1, 1]} : vector<16x768xf32> to vector<8x768xf32>
    %29 = arith.truncf %27 : vector<8x768xf32> to vector<8x768xbf16>
    %30 = arith.truncf %28 : vector<8x768xf32> to vector<8x768xbf16>
    %c0_19 = arith.constant 0 : index
    %c0_20 = arith.constant 0 : index
    %31 = vector.load %arg10[%c0_19, %c0_20] : memref<768x256xbf16, #tpu.memory_space<vmem>>, vector<768x256xbf16>
    %cst_21 = arith.constant dense<0.000000e+00> : vector<8x256xf32>
    %32 = tpu.matmul %29, %31, %cst_21 {dimension_numbers = #tpu.dot_dimension_numbers<[1], [0], [0], [1], [0, 0, 1, 1], [], []>} : vector<8x768xbf16>, vector<768x256xbf16>, vector<8x256xf32> -> vector<8x256xf32>
    %c0_22 = arith.constant 0 : index
    %c0_23 = arith.constant 0 : index
    %33 = vector.load %arg11[%c0_22, %c0_23] : memref<768x256xbf16, #tpu.memory_space<vmem>>, vector<768x256xbf16>
    %cst_24 = arith.constant dense<0.000000e+00> : vector<8x256xf32>
    %34 = tpu.matmul %30, %33, %cst_24 {dimension_numbers = #tpu.dot_dimension_numbers<[1], [0], [0], [1], [0, 0, 1, 1], [], []>} : vector<8x768xbf16>, vector<768x256xbf16>, vector<8x256xf32> -> vector<8x256xf32>
    %35 = arith.addf %32, %34 : vector<8x256xf32>
    %c0_25 = arith.constant 0 : index
    %c0_26 = arith.constant 0 : index
    %36 = vector.load %arg12[%c0_25, %c0_26] : memref<1x256xf32, #tpu.memory_space<vmem>>, vector<1x256xf32>
    %37 = vector.broadcast %36 : vector<1x256xf32> to vector<8x256xf32>
    %38 = arith.addf %35, %37 : vector<8x256xf32>
    %cst_27 = arith.constant 0.000000e+00 : f32
    %39 = vector.broadcast %cst_27 : f32 to vector<8x256xf32>
    %40 = arith.maximumf %38, %39 : vector<8x256xf32>
    %41 = arith.truncf %40 : vector<8x256xf32> to vector<8x256xbf16>
    %c0_28 = arith.constant 0 : index
    %c0_29 = arith.constant 0 : index
    %42 = vector.load %arg13[%c0_28, %c0_29] : memref<256x128xbf16, #tpu.memory_space<vmem>>, vector<256x128xbf16>
    %cst_30 = arith.constant dense<0.000000e+00> : vector<8x128xf32>
    %43 = tpu.matmul %41, %42, %cst_30 {dimension_numbers = #tpu.dot_dimension_numbers<[1], [0], [0], [1], [0, 0, 1, 1], [], []>} : vector<8x256xbf16>, vector<256x128xbf16>, vector<8x128xf32> -> vector<8x128xf32>
    %c0_31 = arith.constant 0 : index
    %c0_32 = arith.constant 0 : index
    %44 = vector.load %arg14[%c0_31, %c0_32] : memref<1x128xf32, #tpu.memory_space<vmem>>, vector<1x128xf32>
    %45 = vector.broadcast %44 : vector<1x128xf32> to vector<8x128xf32>
    %46 = arith.addf %43, %45 : vector<8x128xf32>
    %cst_33 = arith.constant 0.000000e+00 : f32
    %47 = vector.broadcast %cst_33 : f32 to vector<8x128xf32>
    %48 = arith.maximumf %46, %47 : vector<8x128xf32>
    %c0_34 = arith.constant 0 : index
    %c0_35 = arith.constant 0 : index
    %49 = vector.load %arg15[%c0_34, %c0_35] : memref<1x128xf32, #tpu.memory_space<vmem>>, vector<1x128xf32>
    %50 = vector.broadcast %49 : vector<1x128xf32> to vector<8x128xf32>
    %51 = arith.mulf %48, %50 : vector<8x128xf32>
    %cst_36 = arith.constant dense<0.000000e+00> : vector<8xf32>
    %52 = vector.multi_reduction <add>, %51, %cst_36 [1] : vector<8x128xf32> to vector<8xf32>
    %53 = vector.shape_cast %52 : vector<8xf32> to vector<8x1xf32>
    %c0_37 = arith.constant 0 : index
    %c0_38 = arith.constant 0 : index
    %54 = vector.load %arg16[%c0_37, %c0_38] : memref<1x1xf32, #tpu.memory_space<vmem>>, vector<1x1xf32>
    %55 = vector.broadcast %54 : vector<1x1xf32> to vector<8x1xf32>
    %56 = arith.addf %53, %55 : vector<8x1xf32>
    %57 = arith.negf %56 : vector<8x1xf32>
    %58 = math.exp %57 : vector<8x1xf32>
    %cst_39 = arith.constant 1.000000e+00 : f32
    %59 = vector.broadcast %cst_39 : f32 to vector<8x1xf32>
    %60 = arith.addf %59, %58 : vector<8x1xf32>
    %61 = arith.divf %59, %60 : vector<8x1xf32>
    %c0_40 = arith.constant 0 : index
    %c0_41 = arith.constant 0 : index
    %62 = vector.load %arg18[%c0_40, %c0_41] : memref<8x1xf32, #tpu.memory_space<vmem>>, vector<8x1xf32>
    tpu.vector_store %arg18[%c0_40, %c0_41], %61 {strides = array<i32>} : memref<8x1xf32, #tpu.memory_space<vmem>>, vector<8x1xf32>,
    %c0_42 = arith.constant 0 : index
    %c0_43 = arith.constant 0 : index
    %63 = memref.load %arg1[%c0_42, %c0_43] : memref<1x1xf32, #tpu.memory_space<smem>>
    %64 = vector.broadcast %63 : f32 to vector<8x768xf32>
    %65 = arith.mulf %64, %27 : vector<8x768xf32>
    %cst_44 = arith.constant 1.000000e+00 : f32
    %66 = arith.subf %cst_44, %63 : f32
    %67 = vector.broadcast %66 : f32 to vector<8x768xf32>
    %68 = arith.mulf %67, %28 : vector<8x768xf32>
    %69 = arith.addf %65, %68 : vector<8x768xf32>
    %c0_45 = arith.constant 0 : index
    %c0_46 = arith.constant 0 : index
    %70 = vector.load %arg17[%c0_45, %c0_46] : memref<8x768xf32, #tpu.memory_space<vmem>>, vector<8x768xf32>
    tpu.vector_store %arg17[%c0_45, %c0_46], %69 {strides = array<i32>} : memref<8x768xf32, #tpu.memory_space<vmem>>, vector<8x768xf32>,
    return
  }
  func.func @transform_0(%arg0: i32) -> (i32, i32) {
    %c0_i32 = arith.constant 0 : i32
    %c0_i32_0 = arith.constant 0 : i32
    %c0_i32_1 = arith.constant 0 : i32
    return %c0_i32, %c0_i32_0 : i32, i32
  }
  func.func @transform_1(%arg0: i32) -> (i32, i32) {
    %c0_i32 = arith.constant 0 : i32
    %c0_i32_0 = arith.constant 0 : i32
    return %arg0, %c0_i32 : i32, i32
  }
  func.func @transform_2(%arg0: i32) -> (i32, i32) {
    %c0_i32 = arith.constant 0 : i32
    %c0_i32_0 = arith.constant 0 : i32
    return %arg0, %c0_i32 : i32, i32
  }
  func.func @transform_3(%arg0: i32) -> (i32, i32) {
    %c0_i32 = arith.constant 0 : i32
    %c0_i32_0 = arith.constant 0 : i32
    %c0_i32_1 = arith.constant 0 : i32
    return %c0_i32, %c0_i32_0 : i32, i32
  }
  func.func @transform_4(%arg0: i32) -> (i32, i32) {
    %c0_i32 = arith.constant 0 : i32
    %c0_i32_0 = arith.constant 0 : i32
    %c0_i32_1 = arith.constant 0 : i32
    return %c0_i32, %c0_i32_0 : i32, i32
  }
  func.func @transform_5(%arg0: i32) -> (i32, i32) {
    %c0_i32 = arith.constant 0 : i32
    %c0_i32_0 = arith.constant 0 : i32
    %c0_i32_1 = arith.constant 0 : i32
    return %c0_i32, %c0_i32_0 : i32, i32
  }
  func.func @transform_6(%arg0: i32) -> (i32, i32) {
    %c0_i32 = arith.constant 0 : i32
    %c0_i32_0 = arith.constant 0 : i32
    %c0_i32_1 = arith.constant 0 : i32
    return %c0_i32, %c0_i32_0 : i32, i32
  }
  func.func @transform_7(%arg0: i32) -> (i32, i32) {
    %c0_i32 = arith.constant 0 : i32
    %c0_i32_0 = arith.constant 0 : i32
    %c0_i32_1 = arith.constant 0 : i32
    return %c0_i32, %c0_i32_0 : i32, i32
  }
  func.func @transform_8(%arg0: i32) -> (i32, i32) {
    %c0_i32 = arith.constant 0 : i32
    %c0_i32_0 = arith.constant 0 : i32
    %c0_i32_1 = arith.constant 0 : i32
    return %c0_i32, %c0_i32_0 : i32, i32
  }
  func.func @transform_9(%arg0: i32) -> (i32, i32) {
    %c0_i32 = arith.constant 0 : i32
    %c0_i32_0 = arith.constant 0 : i32
    %c0_i32_1 = arith.constant 0 : i32
    return %c0_i32, %c0_i32_0 : i32, i32
  }
  func.func @transform_10(%arg0: i32) -> (i32, i32) {
    %c0_i32 = arith.constant 0 : i32
    %c0_i32_0 = arith.constant 0 : i32
    %c0_i32_1 = arith.constant 0 : i32
    return %c0_i32, %c0_i32_0 : i32, i32
  }
  func.func @transform_11(%arg0: i32) -> (i32, i32) {
    %c0_i32 = arith.constant 0 : i32
    %c0_i32_0 = arith.constant 0 : i32
    %c0_i32_1 = arith.constant 0 : i32
    return %c0_i32, %c0_i32_0 : i32, i32
  }
  func.func @transform_12(%arg0: i32) -> (i32, i32) {
    %c0_i32 = arith.constant 0 : i32
    %c0_i32_0 = arith.constant 0 : i32
    %c0_i32_1 = arith.constant 0 : i32
    return %c0_i32, %c0_i32_0 : i32, i32
  }
  func.func @transform_13(%arg0: i32) -> (i32, i32) {
    %c0_i32 = arith.constant 0 : i32
    %c0_i32_0 = arith.constant 0 : i32
    %c0_i32_1 = arith.constant 0 : i32
    return %c0_i32, %c0_i32_0 : i32, i32
  }
  func.func @transform_14(%arg0: i32) -> (i32, i32) {
    %c0_i32 = arith.constant 0 : i32
    %c0_i32_0 = arith.constant 0 : i32
    %c0_i32_1 = arith.constant 0 : i32
    return %c0_i32, %c0_i32_0 : i32, i32
  }
  func.func @transform_15(%arg0: i32) -> (i32, i32) {
    %c0_i32 = arith.constant 0 : i32
    %c0_i32_0 = arith.constant 0 : i32
    %c0_i32_1 = arith.constant 0 : i32
    return %c0_i32, %c0_i32_0 : i32, i32
  }
  func.func @transform_16(%arg0: i32) -> (i32, i32) {
    %c0_i32 = arith.constant 0 : i32
    %c0_i32_0 = arith.constant 0 : i32
    return %arg0, %c0_i32 : i32, i32
  }
  func.func @transform_17(%arg0: i32) -> (i32, i32) {
    %c0_i32 = arith.constant 0 : i32
    %c0_i32_0 = arith.constant 0 : i32
    return %arg0, %c0_i32 : i32, i32
  }
}

</mosaic_0001>

<llo_original>
// kernel: tpu_custom_call.1
$region0: #{tpu_custom_call.1}
  #allocation0 [shape = 'u32[]', space=smem, size = 0x4, offset = 0x4, fixed_abs, tag = 'smem constant byte address 0x4 - core index']
  #allocation1 [shape = 'u32[144,128]{1,0:T(1,128)}', space=vmem, size = 0x12000, scoped, tag = 'internal scratch']
  #allocation2 [shape = 'f32[1,1]{1,0:T(1,128)S(6)}', space=smem, size = 0x200, scoped, tag = 'scoped memory for tpu_custom_call.1']
  #allocation3 [shape = 'f32[1,1]{1,0:T(1,128)S(1)}', space=vmem, size = 0x200, scoped, tag = 'scoped memory for tpu_custom_call.1']
  %s0 = inlined_call_operand.<no memory space> [shape: f32[1,1], index: 0, kind: input, shape index: {}]
  %s1 = inlined_call_operand.hbm [shape: f32[16,768], index: 1, kind: input, shape index: {}]
  %s2 = inlined_call_operand.hbm [shape: f32[16,768], index: 2, kind: input, shape index: {}]
  %s3 = inlined_call_operand.hbm [shape: bf16[768,512], index: 3, kind: input, shape index: {}]
  %s4 = inlined_call_operand.vmem [shape: f32[1,512], index: 4, kind: input, shape index: {}]
  %s5 = inlined_call_operand.hbm [shape: bf16[512,256], index: 5, kind: input, shape index: {}]
  %s6 = inlined_call_operand.vmem [shape: f32[1,256], index: 6, kind: input, shape index: {}]
  %s7 = inlined_call_operand.hbm [shape: bf16[256,768], index: 7, kind: input, shape index: {}]
  %s8 = inlined_call_operand.vmem [shape: f32[1,768], index: 8, kind: input, shape index: {}]
  %s9 = inlined_call_operand.hbm [shape: bf16[768,256], index: 9, kind: input, shape index: {}]
  %s10 = inlined_call_operand.hbm [shape: bf16[768,256], index: 10, kind: input, shape index: {}]
  %s11 = inlined_call_operand.vmem [shape: f32[1,256], index: 11, kind: input, shape index: {}]
  %s12 = inlined_call_operand.hbm [shape: bf16[256,128], index: 12, kind: input, shape index: {}]
  %s13 = inlined_call_operand.vmem [shape: f32[1,128], index: 13, kind: input, shape index: {}]
  %s14 = inlined_call_operand.vmem [shape: f32[1,128], index: 14, kind: input, shape index: {}]
  %s15 = inlined_call_operand.<no memory space> [shape: f32[1,1], index: 15, kind: input, shape index: {}]
  %s16 = inlined_call_operand.hbm [shape: f32[16,768], index: 16, kind: output, shape index: {0}]
  %s17 = inlined_call_operand.vmem [shape: f32[16,1], index: 17, kind: output, shape index: {1}]
  %18 = xla_tuple %s16, %s17
  %s19 = sld [smem:[#allocation0]]
  $region137: #{tpu_custom_call.1} parent=0
    _
  %s21 = ssub.s32 1, %s19
  %s22 = scalar_select 0, %s21, %s19
  %23 = sst [smem:[#allocation2]] %s0
  %v24 = vstv %s15
  %25 = vst [vmem:[#allocation3] sm:$0x1] %v24
  $region1: #{tpu_custom_call.1} parent=0
    #allocation4 [shape = 'u8[49152]{0}', space=vmem, size = 0xc000, scoped, tag = 'input window, operand 1']
    #allocation5 [shape = 's32[2]{0}', space=sflag, size = 0x8, scoped, tag = 'scoped memory for tpu_custom_call.1']
    #allocation6 [shape = 's32[2]{0}', space=sflag, size = 0x8, scoped, tag = 'scoped memory for tpu_custom_call.1']
    #allocation7 [shape = 'u8[49152]{0}', space=vmem, size = 0xc000, scoped, tag = 'input window, operand 2']
    #allocation8 [shape = 's32[2]{0}', space=sflag, size = 0x8, scoped, tag = 'scoped memory for tpu_custom_call.1']
    #allocation9 [shape = 'u8[786432]{0}', space=vmem, size = 0xc0000, scoped, tag = 'input window, operand 3, single buffered']
    #allocation10 [shape = 'u8[262144]{0}', space=vmem, size = 0x40000, scoped, tag = 'input window, operand 5, single buffered']
    #allocation11 [shape = 's32[1]{0}', space=sflag, size = 0x4, scoped, tag = 'scoped memory for tpu_custom_call.1']
    #allocation12 [shape = 'u8[393216]{0}', space=vmem, size = 0x60000, scoped, tag = 'input window, operand 7, single buffered']
    #allocation13 [shape = 'u8[393216]{0}', space=vmem, size = 0x60000, scoped, tag = 'input window, operand 9, single buffered']
    #allocation14 [shape = 's32[1]{0}', space=sflag, size = 0x4, scoped, tag = 'scoped memory for tpu_custom_call.1']
    #allocation15 [shape = 'u8[393216]{0}', space=vmem, size = 0x60000, scoped, tag = 'input window, operand 10, single buffered']
    #allocation16 [shape = 'u8[65536]{0}', space=vmem, size = 0x10000, scoped, tag = 'input window, operand 12, single buffered']
    #allocation17 [shape = 's32[1]{0}', space=sflag, size = 0x4, scoped, tag = 'scoped memory for tpu_custom_call.1']
    #allocation18 [shape = 'u8[49152]{0}', space=vmem, size = 0xc000, scoped, tag = 'output window, operand 0']
    %26 = vsyncpa [#allocation5], 0
    %s27 = scalar_lea.sflag [#allocation5], 1
    %28 = vsyncpa %s27, 0
    %29 = vsyncpa [#allocation8], 0
    %s30 = scalar_lea.sflag [#allocation8], 1
    %31 = vsyncpa %s30, 0
    %32 = vsyncpa [#allocation11], 0
    %33 = vsyncpa [#allocation14], 0
    %34 = vsyncpa [#allocation17], 0
    %35 = vsyncpa [#allocation6], 0
    %s36 = scalar_lea.sflag [#allocation6], 1
    %37 = vsyncpa %s36, 0
    loop: start=0, step=1, limit=4
    $region2: #{tpu_custom_call.1} parent=1 // loop_pre_header
      _
    $region3: #{tpu_custom_call.1} parent=1 // loop_header
      %s39 = sphi 0, %s43
      %p40 = scmp.ge.s32.totalorder %s39, 4
      %s47 = sphi 0, %s47
      %s49 = sphi 0, %s47
      %s50 = sphi 0, %s49
      %s64 = sphi 0, %s50
      %s70 = sphi 0, %s72
      %s73 = sphi 0, %s70
      %s74 = sphi 0, %s73
      %s90 = sphi 0, %s74
      %s96 = sphi 0, %s98
      %s99 = sphi 0, %s96
      %s100 = sphi 0, %s99
      %s116 = sphi 0, %s100
      %s120 = sphi 0, %s120
      %s122 = sphi 0, %s120
      %s123 = sphi 0, %s122
      %s137 = sphi 0, %s123
      %s141 = sphi 0, %s141
      %s143 = sphi 0, %s141
      %s144 = sphi 0, %s143
      %s158 = sphi 0, %s144
      %s162 = sphi 0, %s162
      %s164 = sphi 0, %s162
      %s165 = sphi 0, %s164
      %s179 = sphi 0, %s165
      %s183 = sphi 0, %s183
      %s185 = sphi 0, %s183
      %s186 = sphi 0, %s185
      %s200 = sphi 0, %s186
      %s204 = sphi 0, %s204
      %s206 = sphi 0, %s204
      %s207 = sphi 0, %s206
      %s221 = sphi 0, %s207
      %s225 = sphi 0, %s225
      %s227 = sphi 0, %s225
      %s228 = sphi 0, %s227
      %s242 = sphi 0, %s228
      %s246 = sphi 0, %s246
      %s248 = sphi 0, %s246
      %s249 = sphi 0, %s248
      %s263 = sphi 0, %s249
      %s267 = sphi 0, %s267
      %s269 = sphi 0, %s267
      %s270 = sphi 0, %s269
      %s284 = sphi 0, %s270
      %s288 = sphi 0, %s288
      %s290 = sphi 0, %s288
      %s291 = sphi 0, %s290
      %s305 = sphi 0, %s291
      %s309 = sphi 0, %s309
      %s311 = sphi 0, %s309
      %s312 = sphi 0, %s311
      %s326 = sphi 0, %s312
      %s330 = sphi 0, %s330
      %s332 = sphi 0, %s330
      %s333 = sphi 0, %s332
      %s347 = sphi 0, %s333
      %s351 = sphi 0, %s351
      %s353 = sphi 0, %s351
      %s354 = sphi 0, %s353
      %s368 = sphi 0, %s354
      %s372 = sphi 0, %s372
      %s374 = sphi 0, %s372
      %s375 = sphi 0, %s374
      %s389 = sphi 0, %s375
      %s395 = sphi 0, %s397
      %s398 = sphi 0, %s395
      %s399 = sphi 0, %s398
      %s415 = sphi 0, %s399
      %s421 = sphi 0, %s423
      %s424 = sphi 0, %s421
      %s425 = sphi 0, %s424
      %s441 = sphi 0, %s425
    $region4: #{tpu_custom_call.1} parent=1 // loop_header_branch
      %42 = sbr.rel (%p40) target = $region8
    $region5: #{tpu_custom_call.1} parent=1 // loop_body
      %s44 = ssub.s32 %s39, 1
      %s45 = ssub.s32 %s39, 2
      %s46 = sadd.s32 %s39, 1
      %s48 = sadd.s32 %s47, 1
      %p51 = scmp.eq.s32.totalorder %s39, 1
      %p52 = scmp.ne.s32.totalorder %s47, %s49
      %p53 = scmp.eq.s32.totalorder %s39, 0
      %p54 = por %p52, %p53
      %p55 = scmp.ne.s32.totalorder %s47, %s49
      %p56 = scmp.eq.s32.totalorder %s44, 1
      %p57 = por %p55, %p56
      %p58 = scmp.ne.s32.totalorder %s49, %s50
      %p59 = scmp.eq.s32.totalorder %s44, 0
      %p60 = por %p58, %p59
      %p61 = scmp.ne.s32.totalorder %s49, %s50
      %p62 = scmp.eq.s32.totalorder %s45, 1
      %p63 = por %p61, %p62
      %p65 = scmp.ne.s32.totalorder %s50, %s64
      %p66 = scmp.eq.s32.totalorder %s45, 0
      %p67 = por %p65, %p66
      %s68 = ssub.s32 %s39, %s46
      %p69 = scmp.eq.s32.totalorder %s68, 0
      %s71 = sadd.s32 %s70, 1
      %s72 = scalar_select %p69, %s70, %s71
      %p75 = pneg %p69
      %p76 = scmp.eq.s32.totalorder %s39, 1
      %p77 = por %p75, %p76
      %p78 = scmp.ne.s32.totalorder %s70, %s73
      %p79 = scmp.eq.s32.totalorder %s39, 0
      %p80 = por %p78, %p79
      %p81 = scmp.ne.s32.totalorder %s70, %s73
      %p82 = scmp.eq.s32.totalorder %s44, 1
      %p83 = por %p81, %p82
      %p84 = scmp.ne.s32.totalorder %s73, %s74
      %p85 = scmp.eq.s32.totalorder %s44, 0
      %p86 = por %p84, %p85
      %p87 = scmp.ne.s32.totalorder %s73, %s74
      %p88 = scmp.eq.s32.totalorder %s45, 1
      %p89 = por %p87, %p88
      %p91 = scmp.ne.s32.totalorder %s74, %s90
      %p92 = scmp.eq.s32.totalorder %s45, 0
      %p93 = por %p91, %p92
      %s94 = ssub.s32 %s39, %s46
      %p95 = scmp.eq.s32.totalorder %s94, 0
      %s97 = sadd.s32 %s96, 1
      %s98 = scalar_select %p95, %s96, %s97
      %p101 = pneg %p95
      %p102 = scmp.eq.s32.totalorder %s39, 1
      %p103 = por %p101, %p102
      %p104 = scmp.ne.s32.totalorder %s96, %s99
      %p105 = scmp.eq.s32.totalorder %s39, 0
      %p106 = por %p104, %p105
      %p107 = scmp.ne.s32.totalorder %s96, %s99
      %p108 = scmp.eq.s32.totalorder %s44, 1
      %p109 = por %p107, %p108
      %p110 = scmp.ne.s32.totalorder %s99, %s100
      %p111 = scmp.eq.s32.totalorder %s44, 0
      %p112 = por %p110, %p111
      %p113 = scmp.ne.s32.totalorder %s99, %s100
      %p114 = scmp.eq.s32.totalorder %s45, 1
      %p115 = por %p113, %p114
      %p117 = scmp.ne.s32.totalorder %s100, %s116
      %p118 = scmp.eq.s32.totalorder %s45, 0
      %p119 = por %p117, %p118
      %s121 = sadd.s32 %s120, 1
      %p124 = scmp.eq.s32.totalorder %s39, 1
      %p125 = scmp.ne.s32.totalorder %s120, %s122
      %p126 = scmp.eq.s32.totalorder %s39, 0
      %p127 = por %p125, %p126
      %p128 = scmp.ne.s32.totalorder %s120, %s122
      %p129 = scmp.eq.s32.totalorder %s44, 1
      %p130 = por %p128, %p129
      %p131 = scmp.ne.s32.totalorder %s122, %s123
      %p132 = scmp.eq.s32.totalorder %s44, 0
      %p133 = por %p131, %p132
      %p134 = scmp.ne.s32.totalorder %s122, %s123
      %p135 = scmp.eq.s32.totalorder %s45, 1
      %p136 = por %p134, %p135
      %p138 = scmp.ne.s32.totalorder %s123, %s137
      %p139 = scmp.eq.s32.totalorder %s45, 0
      %p140 = por %p138, %p139
      %s142 = sadd.s32 %s141, 1
      %p145 = scmp.eq.s32.totalorder %s39, 1
      %p146 = scmp.ne.s32.totalorder %s141, %s143
      %p147 = scmp.eq.s32.totalorder %s39, 0
      %p148 = por %p146, %p147
      %p149 = scmp.ne.s32.totalorder %s141, %s143
      %p150 = scmp.eq.s32.totalorder %s44, 1
      %p151 = por %p149, %p150
      %p152 = scmp.ne.s32.totalorder %s143, %s144
      %p153 = scmp.eq.s32.totalorder %s44, 0
      %p154 = por %p152, %p153
      %p155 = scmp.ne.s32.totalorder %s143, %s144
      %p156 = scmp.eq.s32.totalorder %s45, 1
      %p157 = por %p155, %p156
      %p159 = scmp.ne.s32.totalorder %s144, %s158
      %p160 = scmp.eq.s32.totalorder %s45, 0
      %p161 = por %p159, %p160
      %s163 = sadd.s32 %s162, 1
      %p166 = scmp.eq.s32.totalorder %s39, 1
      %p167 = scmp.ne.s32.totalorder %s162, %s164
      %p168 = scmp.eq.s32.totalorder %s39, 0
      %p169 = por %p167, %p168
      %p170 = scmp.ne.s32.totalorder %s162, %s164
      %p171 = scmp.eq.s32.totalorder %s44, 1
      %p172 = por %p170, %p171
      %p173 = scmp.ne.s32.totalorder %s164, %s165
      %p174 = scmp.eq.s32.totalorder %s44, 0
      %p175 = por %p173, %p174
      %p176 = scmp.ne.s32.totalorder %s164, %s165
      %p177 = scmp.eq.s32.totalorder %s45, 1
      %p178 = por %p176, %p177
      %p180 = scmp.ne.s32.totalorder %s165, %s179
      %p181 = scmp.eq.s32.totalorder %s45, 0
      %p182 = por %p180, %p181
      %s184 = sadd.s32 %s183, 1
      %p187 = scmp.eq.s32.totalorder %s39, 1
      %p188 = scmp.ne.s32.totalorder %s183, %s185
      %p189 = scmp.eq.s32.totalorder %s39, 0
      %p190 = por %p188, %p189
      %p191 = scmp.ne.s32.totalorder %s183, %s185
      %p192 = scmp.eq.s32.totalorder %s44, 1
      %p193 = por %p191, %p192
      %p194 = scmp.ne.s32.totalorder %s185, %s186
      %p195 = scmp.eq.s32.totalorder %s44, 0
      %p196 = por %p194, %p195
      %p197 = scmp.ne.s32.totalorder %s185, %s186
      %p198 = scmp.eq.s32.totalorder %s45, 1
      %p199 = por %p197, %p198
      %p201 = scmp.ne.s32.totalorder %s186, %s200
      %p202 = scmp.eq.s32.totalorder %s45, 0
      %p203 = por %p201, %p202
      %s205 = sadd.s32 %s204, 1
      %p208 = scmp.eq.s32.totalorder %s39, 1
      %p209 = scmp.ne.s32.totalorder %s204, %s206
      %p210 = scmp.eq.s32.totalorder %s39, 0
      %p211 = por %p209, %p210
      %p212 = scmp.ne.s32.totalorder %s204, %s206
      %p213 = scmp.eq.s32.totalorder %s44, 1
      %p214 = por %p212, %p213
      %p215 = scmp.ne.s32.totalorder %s206, %s207
      %p216 = scmp.eq.s32.totalorder %s44, 0
      %p217 = por %p215, %p216
      %p218 = scmp.ne.s32.totalorder %s206, %s207
      %p219 = scmp.eq.s32.totalorder %s45, 1
      %p220 = por %p218, %p219
      %p222 = scmp.ne.s32.totalorder %s207, %s221
      %p223 = scmp.eq.s32.totalorder %s45, 0
      %p224 = por %p222, %p223
      %s226 = sadd.s32 %s225, 1
      %p229 = scmp.eq.s32.totalorder %s39, 1
      %p230 = scmp.ne.s32.totalorder %s225, %s227
      %p231 = scmp.eq.s32.totalorder %s39, 0
      %p232 = por %p230, %p231
      %p233 = scmp.ne.s32.totalorder %s225, %s227
      %p234 = scmp.eq.s32.totalorder %s44, 1
      %p235 = por %p233, %p234
      %p236 = scmp.ne.s32.totalorder %s227, %s228
      %p237 = scmp.eq.s32.totalorder %s44, 0
      %p238 = por %p236, %p237
      %p239 = scmp.ne.s32.totalorder %s227, %s228
      %p240 = scmp.eq.s32.totalorder %s45, 1
      %p241 = por %p239, %p240
      %p243 = scmp.ne.s32.totalorder %s228, %s242
      %p244 = scmp.eq.s32.totalorder %s45, 0
      %p245 = por %p243, %p244
      %s247 = sadd.s32 %s246, 1
      %p250 = scmp.eq.s32.totalorder %s39, 1
      %p251 = scmp.ne.s32.totalorder %s246, %s248
      %p252 = scmp.eq.s32.totalorder %s39, 0
      %p253 = por %p251, %p252
      %p254 = scmp.ne.s32.totalorder %s246, %s248
      %p255 = scmp.eq.s32.totalorder %s44, 1
      %p256 = por %p254, %p255
      %p257 = scmp.ne.s32.totalorder %s248, %s249
      %p258 = scmp.eq.s32.totalorder %s44, 0
      %p259 = por %p257, %p258
      %p260 = scmp.ne.s32.totalorder %s248, %s249
      %p261 = scmp.eq.s32.totalorder %s45, 1
      %p262 = por %p260, %p261
      %p264 = scmp.ne.s32.totalorder %s249, %s263
      %p265 = scmp.eq.s32.totalorder %s45, 0
      %p266 = por %p264, %p265
      %s268 = sadd.s32 %s267, 1
      %p271 = scmp.eq.s32.totalorder %s39, 1
      %p272 = scmp.ne.s32.totalorder %s267, %s269
      %p273 = scmp.eq.s32.totalorder %s39, 0
      %p274 = por %p272, %p273
      %p275 = scmp.ne.s32.totalorder %s267, %s269
      %p276 = scmp.eq.s32.totalorder %s44, 1
      %p277 = por %p275, %p276
      %p278 = scmp.ne.s32.totalorder %s269, %s270
      %p279 = scmp.eq.s32.totalorder %s44, 0
      %p280 = por %p278, %p279
      %p281 = scmp.ne.s32.totalorder %s269, %s270
      %p282 = scmp.eq.s32.totalorder %s45, 1
      %p283 = por %p281, %p282
      %p285 = scmp.ne.s32.totalorder %s270, %s284
      %p286 = scmp.eq.s32.totalorder %s45, 0
      %p287 = por %p285, %p286
      %s289 = sadd.s32 %s288, 1
      %p292 = scmp.eq.s32.totalorder %s39, 1
      %p293 = scmp.ne.s32.totalorder %s288, %s290
      %p294 = scmp.eq.s32.totalorder %s39, 0
      %p295 = por %p293, %p294
      %p296 = scmp.ne.s32.totalorder %s288, %s290
      %p297 = scmp.eq.s32.totalorder %s44, 1
      %p298 = por %p296, %p297
      %p299 = scmp.ne.s32.totalorder %s290, %s291
      %p300 = scmp.eq.s32.totalorder %s44, 0
      %p301 = por %p299, %p300
      %p302 = scmp.ne.s32.totalorder %s290, %s291
      %p303 = scmp.eq.s32.totalorder %s45, 1
      %p304 = por %p302, %p303
      %p306 = scmp.ne.s32.totalorder %s291, %s305
      %p307 = scmp.eq.s32.totalorder %s45, 0
      %p308 = por %p306, %p307
      %s310 = sadd.s32 %s309, 1
      %p313 = scmp.eq.s32.totalorder %s39, 1
      %p314 = scmp.ne.s32.totalorder %s309, %s311
      %p315 = scmp.eq.s32.totalorder %s39, 0
      %p316 = por %p314, %p315
      %p317 = scmp.ne.s32.totalorder %s309, %s311
      %p318 = scmp.eq.s32.totalorder %s44, 1
      %p319 = por %p317, %p318
      %p320 = scmp.ne.s32.totalorder %s311, %s312
      %p321 = scmp.eq.s32.totalorder %s44, 0
      %p322 = por %p320, %p321
      %p323 = scmp.ne.s32.totalorder %s311, %s312
      %p324 = scmp.eq.s32.totalorder %s45, 1
      %p325 = por %p323, %p324
      %p327 = scmp.ne.s32.totalorder %s312, %s326
      %p328 = scmp.eq.s32.totalorder %s45, 0
      %p329 = por %p327, %p328
      %s331 = sadd.s32 %s330, 1
      %p334 = scmp.eq.s32.totalorder %s39, 1
      %p335 = scmp.ne.s32.totalorder %s330, %s332
      %p336 = scmp.eq.s32.totalorder %s39, 0
      %p337 = por %p335, %p336
      %p338 = scmp.ne.s32.totalorder %s330, %s332
      %p339 = scmp.eq.s32.totalorder %s44, 1
      %p340 = por %p338, %p339
      %p341 = scmp.ne.s32.totalorder %s332, %s333
      %p342 = scmp.eq.s32.totalorder %s44, 0
      %p343 = por %p341, %p342
      %p344 = scmp.ne.s32.totalorder %s332, %s333
      %p345 = scmp.eq.s32.totalorder %s45, 1
      %p346 = por %p344, %p345
      %p348 = scmp.ne.s32.totalorder %s333, %s347
      %p349 = scmp.eq.s32.totalorder %s45, 0
      %p350 = por %p348, %p349
      %s352 = sadd.s32 %s351, 1
      %p355 = scmp.eq.s32.totalorder %s39, 1
      %p356 = scmp.ne.s32.totalorder %s351, %s353
      %p357 = scmp.eq.s32.totalorder %s39, 0
      %p358 = por %p356, %p357
      %p359 = scmp.ne.s32.totalorder %s351, %s353
      %p360 = scmp.eq.s32.totalorder %s44, 1
      %p361 = por %p359, %p360
      %p362 = scmp.ne.s32.totalorder %s353, %s354
      %p363 = scmp.eq.s32.totalorder %s44, 0
      %p364 = por %p362, %p363
      %p365 = scmp.ne.s32.totalorder %s353, %s354
      %p366 = scmp.eq.s32.totalorder %s45, 1
      %p367 = por %p365, %p366
      %p369 = scmp.ne.s32.totalorder %s354, %s368
      %p370 = scmp.eq.s32.totalorder %s45, 0
      %p371 = por %p369, %p370
      %s373 = sadd.s32 %s372, 1
      %p376 = scmp.eq.s32.totalorder %s39, 1
      %p377 = scmp.ne.s32.totalorder %s372, %s374
      %p378 = scmp.eq.s32.totalorder %s39, 0
      %p379 = por %p377, %p378
      %p380 = scmp.ne.s32.totalorder %s372, %s374
      %p381 = scmp.eq.s32.totalorder %s44, 1
      %p382 = por %p380, %p381
      %p383 = scmp.ne.s32.totalorder %s374, %s375
      %p384 = scmp.eq.s32.totalorder %s44, 0
      %p385 = por %p383, %p384
      %p386 = scmp.ne.s32.totalorder %s374, %s375
      %p387 = scmp.eq.s32.totalorder %s45, 1
      %p388 = por %p386, %p387
      %p390 = scmp.ne.s32.totalorder %s375, %s389
      %p391 = scmp.eq.s32.totalorder %s45, 0
      %p392 = por %p390, %p391
      %s393 = ssub.s32 %s39, %s46
      %p394 = scmp.eq.s32.totalorder %s393, 0
      %s396 = sadd.s32 %s395, 1
      %s397 = scalar_select %p394, %s395, %s396
      %p400 = pneg %p394
      %p401 = scmp.eq.s32.totalorder %s39, 1
      %p402 = por %p400, %p401
      %p403 = scmp.ne.s32.totalorder %s395, %s398
      %p404 = scmp.eq.s32.totalorder %s39, 0
      %p405 = por %p403, %p404
      %p406 = scmp.ne.s32.totalorder %s395, %s398
      %p407 = scmp.eq.s32.totalorder %s44, 1
      %p408 = por %p406, %p407
      %p409 = scmp.ne.s32.totalorder %s398, %s399
      %p410 = scmp.eq.s32.totalorder %s44, 0
      %p411 = por %p409, %p410
      %p412 = scmp.ne.s32.totalorder %s398, %s399
      %p413 = scmp.eq.s32.totalorder %s45, 1
      %p414 = por %p412, %p413
      %p416 = scmp.ne.s32.totalorder %s399, %s415
      %p417 = scmp.eq.s32.totalorder %s45, 0
      %p418 = por %p416, %p417
      %s419 = ssub.s32 %s39, %s46
      %p420 = scmp.eq.s32.totalorder %s419, 0
      %s422 = sadd.s32 %s421, 1
      %s423 = scalar_select %p420, %s421, %s422
      %p426 = pneg %p420
      %p427 = scmp.eq.s32.totalorder %s39, 1
      %p428 = por %p426, %p427
      %p429 = scmp.ne.s32.totalorder %s421, %s424
      %p430 = scmp.eq.s32.totalorder %s39, 0
      %p431 = por %p429, %p430
      %p432 = scmp.ne.s32.totalorder %s421, %s424
      %p433 = scmp.eq.s32.totalorder %s44, 1
      %p434 = por %p432, %p433
      %p435 = scmp.ne.s32.totalorder %s424, %s425
      %p436 = scmp.eq.s32.totalorder %s44, 0
      %p437 = por %p435, %p436
      %p438 = scmp.ne.s32.totalorder %s424, %s425
      %p439 = scmp.eq.s32.totalorder %s45, 1
      %p440 = por %p438, %p439
      %p442 = scmp.ne.s32.totalorder %s425, %s441
      %p443 = scmp.eq.s32.totalorder %s45, 0
      %p444 = por %p442, %p443
      %p445 = scmp.le.s32.totalorder 1, %s39
      %p446 = scmp.lt.s32.totalorder %s39, 3
      %p447 = pnand %p445, %p446
      %p448 = pneg %p447
      // Predicated region
      $region9: #{tpu_custom_call.1} parent=5 // pred_check
        _
      $region10: #{tpu_custom_call.1} parent=5 // pred_check_branch
        %450 = sbr.rel (%p447) target = $region12
      $region11: #{tpu_custom_call.1} parent=5 // pred_region
        %s451 = ssub.s32 %s39, 1
        // Predicated region
        $region13: #{tpu_custom_call.1} parent=11 // pred_check
          %p452 = pneg %p60
        $region14: #{tpu_custom_call.1} parent=11 // pred_check_branch
          %454 = sbr.rel (%p452) target = $region16
        $region15: #{tpu_custom_call.1} parent=11 // pred_region
          _
        $region16: #{tpu_custom_call.1} parent=11 // pred_fallthru
          _
        // Predicated region
        $region17: #{tpu_custom_call.1} parent=11 // pred_check
          %p455 = pneg %p133
        $region18: #{tpu_custom_call.1} parent=11 // pred_check_branch
          %457 = sbr.rel (%p455) target = $region20
        $region19: #{tpu_custom_call.1} parent=11 // pred_region
          %s459 = ssub.s32 24576, 24576
          %460 = vsyncadd [#allocation8], %s459
          %s461 = sshll.u32 [#allocation9], 4
          %s462 = int_to_ptr.vmem [resolvable:$true] %s461
          %467 = dma.hbm_to_vmem [thread:$0]  %s3, 24576, %s462, [#allocation8], 256, 256, 16
        $region20: #{tpu_custom_call.1} parent=11 // pred_fallthru
          _
        // Predicated region
        $region21: #{tpu_custom_call.1} parent=11 // pred_check
          %p468 = pneg %p154
        $region22: #{tpu_custom_call.1} parent=11 // pred_check_branch
          %470 = sbr.rel (%p468) target = $region24
        $region23: #{tpu_custom_call.1} parent=11 // pred_region
          _
        $region24: #{tpu_custom_call.1} parent=11 // pred_fallthru
          _
        // Predicated region
        $region25: #{tpu_custom_call.1} parent=11 // pred_check
          %p471 = pneg %p175
        $region26: #{tpu_custom_call.1} parent=11 // pred_check_branch
          %473 = sbr.rel (%p471) target = $region28
        $region27: #{tpu_custom_call.1} parent=11 // pred_region
          %s475 = ssub.s32 8192, 8192
          %476 = vsyncadd [#allocation11], %s475
          %s477 = sshll.u32 [#allocation10], 4
          %s478 = int_to_ptr.vmem [resolvable:$true] %s477
          %483 = dma.hbm_to_vmem [thread:$0]  %s5, 8192, %s478, [#allocation11], 128, 128, 8
        $region28: #{tpu_custom_call.1} parent=11 // pred_fallthru
          _
        // Predicated region
        $region29: #{tpu_custom_call.1} parent=11 // pred_check
          %p484 = pneg %p196
        $region30: #{tpu_custom_call.1} parent=11 // pred_check_branch
          %486 = sbr.rel (%p484) target = $region32
        $region31: #{tpu_custom_call.1} parent=11 // pred_region
          _
        $region32: #{tpu_custom_call.1} parent=11 // pred_fallthru
          _
        // Predicated region
        $region33: #{tpu_custom_call.1} parent=11 // pred_check
          %p487 = pneg %p217
        $region34: #{tpu_custom_call.1} parent=11 // pred_check_branch
          %489 = sbr.rel (%p487) target = $region36
        $region35: #{tpu_custom_call.1} parent=11 // pred_region
          %s491 = ssub.s32 12288, 12288
          %492 = vsyncadd [#allocation11], %s491
          %s493 = sshll.u32 [#allocation12], 4
          %s494 = int_to_ptr.vmem [resolvable:$true] %s493
          %499 = dma.hbm_to_vmem [thread:$0]  %s7, 12288, %s494, [#allocation11], 384, 384, 24
        $region36: #{tpu_custom_call.1} parent=11 // pred_fallthru
          _
        // Predicated region
        $region37: #{tpu_custom_call.1} parent=11 // pred_check
          %p500 = pneg %p238
        $region38: #{tpu_custom_call.1} parent=11 // pred_check_branch
          %502 = sbr.rel (%p500) target = $region40
        $region39: #{tpu_custom_call.1} parent=11 // pred_region
          _
        $region40: #{tpu_custom_call.1} parent=11 // pred_fallthru
          _
        // Predicated region
        $region41: #{tpu_custom_call.1} parent=11 // pred_check
          %p503 = pneg %p259
        $region42: #{tpu_custom_call.1} parent=11 // pred_check_branch
          %505 = sbr.rel (%p503) target = $region44
        $region43: #{tpu_custom_call.1} parent=11 // pred_region
          %s507 = ssub.s32 12288, 12288
          %508 = vsyncadd [#allocation14], %s507
          %s509 = sshll.u32 [#allocation13], 4
          %s510 = int_to_ptr.vmem [resolvable:$true] %s509
          %515 = dma.hbm_to_vmem [thread:$0]  %s9, 12288, %s510, [#allocation14], 128, 128, 8
        $region44: #{tpu_custom_call.1} parent=11 // pred_fallthru
          _
        // Predicated region
        $region45: #{tpu_custom_call.1} parent=11 // pred_check
          %p516 = pneg %p280
        $region46: #{tpu_custom_call.1} parent=11 // pred_check_branch
          %518 = sbr.rel (%p516) target = $region48
        $region47: #{tpu_custom_call.1} parent=11 // pred_region
          %s520 = ssub.s32 12288, 12288
          %521 = vsyncadd [#allocation14], %s520
          %s522 = sshll.u32 [#allocation15], 4
          %s523 = int_to_ptr.vmem [resolvable:$true] %s522
          %528 = dma.hbm_to_vmem [thread:$0]  %s10, 12288, %s523, [#allocation14], 128, 128, 8
        $region48: #{tpu_custom_call.1} parent=11 // pred_fallthru
          _
        // Predicated region
        $region49: #{tpu_custom_call.1} parent=11 // pred_check
          %p529 = pneg %p301
        $region50: #{tpu_custom_call.1} parent=11 // pred_check_branch
          %531 = sbr.rel (%p529) target = $region52
        $region51: #{tpu_custom_call.1} parent=11 // pred_region
          _
        $region52: #{tpu_custom_call.1} parent=11 // pred_fallthru
          _
        // Predicated region
        $region53: #{tpu_custom_call.1} parent=11 // pred_check
          %p532 = pneg %p322
        $region54: #{tpu_custom_call.1} parent=11 // pred_check_branch
          %534 = sbr.rel (%p532) target = $region56
        $region55: #{tpu_custom_call.1} parent=11 // pred_region
          %s536 = ssub.s32 2048, 2048
          %537 = vsyncadd [#allocation17], %s536
          %s538 = sshll.u32 [#allocation16], 4
          %s539 = int_to_ptr.vmem [resolvable:$true] %s538
          %544 = dma.hbm_to_vmem [thread:$0]  %s12, 2048, %s539, [#allocation17], 64, 64, 4
        $region56: #{tpu_custom_call.1} parent=11 // pred_fallthru
          _
        // Predicated region
        $region57: #{tpu_custom_call.1} parent=11 // pred_check
          %p545 = pneg %p343
        $region58: #{tpu_custom_call.1} parent=11 // pred_check_branch
          %547 = sbr.rel (%p545) target = $region60
        $region59: #{tpu_custom_call.1} parent=11 // pred_region
          _
        $region60: #{tpu_custom_call.1} parent=11 // pred_fallthru
          _
        // Predicated region
        $region61: #{tpu_custom_call.1} parent=11 // pred_check
          %p548 = pneg %p364
        $region62: #{tpu_custom_call.1} parent=11 // pred_check_branch
          %550 = sbr.rel (%p548) target = $region64
        $region63: #{tpu_custom_call.1} parent=11 // pred_region
          _
        $region64: #{tpu_custom_call.1} parent=11 // pred_fallthru
          _
        // Predicated region
        $region65: #{tpu_custom_call.1} parent=11 // pred_check
          %p551 = pneg %p385
        $region66: #{tpu_custom_call.1} parent=11 // pred_check_branch
          %553 = sbr.rel (%p551) target = $region68
        $region67: #{tpu_custom_call.1} parent=11 // pred_region
          _
        $region68: #{tpu_custom_call.1} parent=11 // pred_fallthru
          _
      $region12: #{tpu_custom_call.1} parent=5 // pred_fallthru
        _
      %p554 = scmp.lt.s32.totalorder %s39, 2
      // Predicated region
      $region69: #{tpu_custom_call.1} parent=5 // pred_check
        %p555 = pneg %p554
      $region70: #{tpu_custom_call.1} parent=5 // pred_check_branch
        %557 = sbr.rel (%p555) target = $region72
      $region71: #{tpu_custom_call.1} parent=5 // pred_region
        // Predicated region
        $region73: #{tpu_custom_call.1} parent=71 // pred_check
          %p558 = pneg %p80
        $region74: #{tpu_custom_call.1} parent=71 // pred_check_branch
          %560 = sbr.rel (%p558) target = $region76
        $region75: #{tpu_custom_call.1} parent=71 // pred_region
          %s561 = sand.u32 %s70, 1
          %s562 = scalar_lea.sflag [#allocation5], %s561
          %s563 = sand.u32 %s70, 1
          %s564 = smul.addr %s563, 48
          %s565 = scalar_lea.vmem [#allocation4], %s564
          %s567 = ssub.s32 768, 768
          %568 = vsyncadd %s562, %s567
          %s569 = smul.addr %s39, 6
          %s570 = smul.addr %s569, 128
          %s571 = scalar_lea.hbm %s1, %s570
          %s573 = sshll.u32 %s565, 4
          %s574 = int_to_ptr.vmem [resolvable:$true] %s573
          %576 = dma.hbm_to_vmem [thread:$0]  %s571, 768, %s574, %s562
        $region76: #{tpu_custom_call.1} parent=71 // pred_fallthru
          _
        // Predicated region
        $region77: #{tpu_custom_call.1} parent=71 // pred_check
          %p577 = pneg %p106
        $region78: #{tpu_custom_call.1} parent=71 // pred_check_branch
          %579 = sbr.rel (%p577) target = $region80
        $region79: #{tpu_custom_call.1} parent=71 // pred_region
          %s580 = sand.u32 %s39, 1
          %s581 = scalar_lea.sflag [#allocation8], %s580
          %s582 = sand.u32 %s96, 1
          %s583 = smul.addr %s582, 48
          %s584 = scalar_lea.vmem [#allocation7], %s583
          %s586 = ssub.s32 768, 768
          %587 = vsyncadd %s581, %s586
          %s588 = smul.addr %s39, 6
          %s589 = smul.addr %s588, 128
          %s590 = scalar_lea.hbm %s2, %s589
          %s592 = sshll.u32 %s584, 4
          %s593 = int_to_ptr.vmem [resolvable:$true] %s592
          %595 = dma.hbm_to_vmem [thread:$0]  %s590, 768, %s593, %s581
        $region80: #{tpu_custom_call.1} parent=71 // pred_fallthru
          _
      $region72: #{tpu_custom_call.1} parent=5 // pred_fallthru
        _
      %p596 = scmp.le.s32.totalorder 1, %s39
      %p597 = scmp.lt.s32.totalorder %s39, 3
      %p598 = pnand %p596, %p597
      %p599 = pneg %p598
      // Predicated region
      $region81: #{tpu_custom_call.1} parent=5 // pred_check
        _
      $region82: #{tpu_custom_call.1} parent=5 // pred_check_branch
        %601 = sbr.rel (%p598) target = $region84
      $region83: #{tpu_custom_call.1} parent=5 // pred_region
        %s602 = ssub.s32 %s39, 1
        %s603 = sand.u32 %s73, 1
        %s604 = scalar_lea.sflag [#allocation5], %s603
        %s605 = sand.u32 %s73, 1
        %s606 = smul.addr %s605, 48
        %s607 = scalar_lea.vmem [#allocation4], %s606
        // Predicated region
        $region85: #{tpu_custom_call.1} parent=83 // pred_check
          %p608 = pneg %p86
        $region86: #{tpu_custom_call.1} parent=83 // pred_check_branch
          %610 = sbr.rel (%p608) target = $region88
        $region87: #{tpu_custom_call.1} parent=83 // pred_region
          %611 = dma.done %s604, 768
        $region88: #{tpu_custom_call.1} parent=83 // pred_fallthru
          _
        %s612 = sand.u32 %s44, 1
        %s613 = scalar_lea.sflag [#allocation8], %s612
        %s614 = sand.u32 %s99, 1
        %s615 = smul.addr %s614, 48
        %s616 = scalar_lea.vmem [#allocation7], %s615
        // Predicated region
        $region89: #{tpu_custom_call.1} parent=83 // pred_check
          %p617 = pneg %p112
        $region90: #{tpu_custom_call.1} parent=83 // pred_check_branch
          %619 = sbr.rel (%p617) target = $region92
        $region91: #{tpu_custom_call.1} parent=83 // pred_region
          %620 = dma.done %s613, 768
        $region92: #{tpu_custom_call.1} parent=83 // pred_fallthru
          _
        // Predicated region
        $region93: #{tpu_custom_call.1} parent=83 // pred_check
          %p621 = pneg %p133
        $region94: #{tpu_custom_call.1} parent=83 // pred_check_branch
          %623 = sbr.rel (%p621) target = $region96
        $region95: #{tpu_custom_call.1} parent=83 // pred_region
          %624 = dma.done [#allocation8], 24576
        $region96: #{tpu_custom_call.1} parent=83 // pred_fallthru
          _
        // Predicated region
        $region97: #{tpu_custom_call.1} parent=83 // pred_check
          %p625 = pneg %p175
        $region98: #{tpu_custom_call.1} parent=83 // pred_check_branch
          %627 = sbr.rel (%p625) target = $region100
        $region99: #{tpu_custom_call.1} parent=83 // pred_region
          %628 = dma.done [#allocation11], 8192
        $region100: #{tpu_custom_call.1} parent=83 // pred_fallthru
          _
        // Predicated region
        $region101: #{tpu_custom_call.1} parent=83 // pred_check
          %p629 = pneg %p217
        $region102: #{tpu_custom_call.1} parent=83 // pred_check_branch
          %631 = sbr.rel (%p629) target = $region104
        $region103: #{tpu_custom_call.1} parent=83 // pred_region
          %632 = dma.done [#allocation11], 12288
        $region104: #{tpu_custom_call.1} parent=83 // pred_fallthru
          _
        // Predicated region
        $region105: #{tpu_custom_call.1} parent=83 // pred_check
          %p633 = pneg %p259
        $region106: #{tpu_custom_call.1} parent=83 // pred_check_branch
          %635 = sbr.rel (%p633) target = $region108
        $region107: #{tpu_custom_call.1} parent=83 // pred_region
          %636 = dma.done [#allocation14], 12288
        $region108: #{tpu_custom_call.1} parent=83 // pred_fallthru
          _
        // Predicated region
        $region109: #{tpu_custom_call.1} parent=83 // pred_check
          %p637 = pneg %p280
        $region110: #{tpu_custom_call.1} parent=83 // pred_check_branch
          %639 = sbr.rel (%p637) target = $region112
        $region111: #{tpu_custom_call.1} parent=83 // pred_region
          %640 = dma.done [#allocation14], 12288
        $region112: #{tpu_custom_call.1} parent=83 // pred_fallthru
          _
        // Predicated region
        $region113: #{tpu_custom_call.1} parent=83 // pred_check
          %p641 = pneg %p322
        $region114: #{tpu_custom_call.1} parent=83 // pred_check_branch
          %643 = sbr.rel (%p641) target = $region116
        $region115: #{tpu_custom_call.1} parent=83 // pred_region
          %644 = dma.done [#allocation17], 2048
        $region116: #{tpu_custom_call.1} parent=83 // pred_fallthru
          _
        %p645 = pneg %p60
        %p646 = pneg %p57
        %s647 = sand.u32 %s73, 1
        %s648 = scalar_lea.sflag [#allocation5], %s647
        %s649 = sand.u32 %s73, 1
        %s650 = smul.addr %s649, 48
        %s651 = scalar_lea.vmem [#allocation4], %s650
        %p652 = pneg %p86
        %p653 = pneg %p83
        %s654 = sand.u32 %s44, 1
        %s655 = scalar_lea.sflag [#allocation8], %s654
        %s656 = sand.u32 %s99, 1
        %s657 = smul.addr %s656, 48
        %s658 = scalar_lea.vmem [#allocation7], %s657
        %p659 = pneg %p112
        %p660 = pneg %p109
        %p661 = pneg %p133
        %p662 = pneg %p130
        %p663 = pneg %p154
        %p664 = pneg %p151
        %p665 = pneg %p175
        %p666 = pneg %p172
        %p667 = pneg %p196
        %p668 = pneg %p193
        %p669 = pneg %p217
        %p670 = pneg %p214
        %p671 = pneg %p238
        %p672 = pneg %p235
        %p673 = pneg %p259
        %p674 = pneg %p256
        %p675 = pneg %p280
        %p676 = pneg %p277
        %p677 = pneg %p301
        %p678 = pneg %p298
        %p679 = pneg %p322
        %p680 = pneg %p319
        %p681 = pneg %p343
        %p682 = pneg %p340
        %p683 = pneg %p364
        %p684 = pneg %p361
        %p685 = pneg %p385
        %p686 = pneg %p382
        %p687 = pneg %p411
        %p688 = pneg %p408
        %s689 = sand.u32 %s398, 1
        %s690 = scalar_lea.sflag [#allocation6], %s689
        %s691 = sand.u32 %s398, 1
        %s692 = smul.addr %s691, 48
        %s693 = scalar_lea.vmem [#allocation18], %s692
        %p694 = pneg %p437
        %p695 = pneg %p434
        %p696 = scmp.lt.s32.totalorder %s44, 1
        %s697 = scalar_select %p696, %s44, 1
        %s698 = smul.addr %s697, 8
        %s699 = scalar_lea.vmem %s17, %s698
        %p700 = scmp.lt.s32.totalorder %s44, 1
        %s701 = scalar_select %p700, %s44, 1
        %s702 = smul.addr %s701, 8
        %s703 = scalar_lea.vmem %s17, %s702
        %v705 = vld [vmem:[%s607] sm:$0xff]
        %v706 = vld [vmem:[%s607 + $0x8] sm:$0xff]
        %v707 = vld [vmem:[%s607 + $0x10] sm:$0xff]
        %v708 = vld [vmem:[%s607 + $0x18] sm:$0xff]
        %v709 = vld [vmem:[%s607 + $0x20] sm:$0xff]
        %v710 = vld [vmem:[%s607 + $0x28] sm:$0xff]
        %v711 = vpack.c.bf16 %v705, %v705
        %v712 = vpack.c.bf16 %v706, %v706
        %v713 = vpack.c.bf16 %v707, %v707
        %v714 = vpack.c.bf16 %v708, %v708
        %v715 = vpack.c.bf16 %v709, %v709
        %v716 = vpack.c.bf16 %v710, %v710
        %v717 = vld [vmem:[%s616] sm:$0xff]
        %v718 = vld [vmem:[%s616 + $0x8] sm:$0xff]
        %v719 = vld [vmem:[%s616 + $0x10] sm:$0xff]
        %v720 = vld [vmem:[%s616 + $0x18] sm:$0xff]
        %v721 = vld [vmem:[%s616 + $0x20] sm:$0xff]
        %v722 = vld [vmem:[%s616 + $0x28] sm:$0xff]
        %v723 = vpack.c.bf16 %v717, %v717
        %v724 = vpack.c.bf16 %v718, %v718
        %v725 = vpack.c.bf16 %v719, %v719
        %v726 = vpack.c.bf16 %v720, %v720
        %v727 = vpack.c.bf16 %v721, %v721
        %v728 = vpack.c.bf16 %v722, %v722
        %v735 = vrot.slane %v723, 4
        %v736 = vrot.slane %v724, 4
        %v737 = vrot.slane %v725, 4
        %v738 = vrot.slane %v726, 4
        %v739 = vrot.slane %v727, 4
        %v740 = vrot.slane %v728, 4
        %vm741 = vcmask 1043456
        %v744 = vsel %vm741, %v711, %v735
        %v748 = vsel %vm741, %v712, %v736
        %v752 = vsel %vm741, %v713, %v737
        %v756 = vsel %vm741, %v714, %v738
        %v760 = vsel %vm741, %v715, %v739
        %v764 = vsel %vm741, %v716, %v740
        %v766 = vld [vmem:[#allocation9] sm:$0xff]
        %v767 = vld [vmem:[#allocation9 + $0x8] sm:$0xff]
        %v768 = vld [vmem:[#allocation9 + $0x10] sm:$0xff]
        %v769 = vld [vmem:[#allocation9 + $0x18] sm:$0xff]
        %v770 = vld [vmem:[#allocation9 + $0x20] sm:$0xff]
        %v771 = vld [vmem:[#allocation9 + $0x28] sm:$0xff]
        %v772 = vld [vmem:[#allocation9 + $0x30] sm:$0xff]
        %v773 = vld [vmem:[#allocation9 + $0x38] sm:$0xff]
        %v774 = vld [vmem:[#allocation9 + $0x40] sm:$0xff]
        %v775 = vld [vmem:[#allocation9 + $0x48] sm:$0xff]
        %v776 = vld [vmem:[#allocation9 + $0x50] sm:$0xff]
        %v777 = vld [vmem:[#allocation9 + $0x58] sm:$0xff]
        %v778 = vld [vmem:[#allocation9 + $0x60] sm:$0xff]
        %v779 = vld [vmem:[#allocation9 + $0x68] sm:$0xff]
        %v780 = vld [vmem:[#allocation9 + $0x70] sm:$0xff]
        %v781 = vld [vmem:[#allocation9 + $0x78] sm:$0xff]
        %v782 = vld [vmem:[#allocation9 + $0x80] sm:$0xff]
        %v783 = vld [vmem:[#allocation9 + $0x88] sm:$0xff]
        %v784 = vld [vmem:[#allocation9 + $0x90] sm:$0xff]
        %v785 = vld [vmem:[#allocation9 + $0x98] sm:$0xff]
        %v786 = vld [vmem:[#allocation9 + $0xa0] sm:$0xff]
        %v787 = vld [vmem:[#allocation9 + $0xa8] sm:$0xff]
        %v788 = vld [vmem:[#allocation9 + $0xb0] sm:$0xff]
        %v789 = vld [vmem:[#allocation9 + $0xb8] sm:$0xff]
        %v790 = vld [vmem:[#allocation9 + $0xc0] sm:$0xff]
        %v791 = vld [vmem:[#allocation9 + $0xc8] sm:$0xff]
        %v792 = vld [vmem:[#allocation9 + $0xd0] sm:$0xff]
        %v793 = vld [vmem:[#allocation9 + $0xd8] sm:$0xff]
        %v794 = vld [vmem:[#allocation9 + $0xe0] sm:$0xff]
        %v795 = vld [vmem:[#allocation9 + $0xe8] sm:$0xff]
        %v796 = vld [vmem:[#allocation9 + $0xf0] sm:$0xff]
        %v797 = vld [vmem:[#allocation9 + $0xf8] sm:$0xff]
        %v798 = vld [vmem:[#allocation9 + $0x100] sm:$0xff]
        %v799 = vld [vmem:[#allocation9 + $0x108] sm:$0xff]
        %v800 = vld [vmem:[#allocation9 + $0x110] sm:$0xff]
        %v801 = vld [vmem:[#allocation9 + $0x118] sm:$0xff]
        %v802 = vld [vmem:[#allocation9 + $0x120] sm:$0xff]
        %v803 = vld [vmem:[#allocation9 + $0x128] sm:$0xff]
        %v804 = vld [vmem:[#allocation9 + $0x130] sm:$0xff]
        %v805 = vld [vmem:[#allocation9 + $0x138] sm:$0xff]
        %v806 = vld [vmem:[#allocation9 + $0x140] sm:$0xff]
        %v807 = vld [vmem:[#allocation9 + $0x148] sm:$0xff]
        %v808 = vld [vmem:[#allocation9 + $0x150] sm:$0xff]
        %v809 = vld [vmem:[#allocation9 + $0x158] sm:$0xff]
        %v810 = vld [vmem:[#allocation9 + $0x160] sm:$0xff]
        %v811 = vld [vmem:[#allocation9 + $0x168] sm:$0xff]
        %v812 = vld [vmem:[#allocation9 + $0x170] sm:$0xff]
        %v813 = vld [vmem:[#allocation9 + $0x178] sm:$0xff]
        %v814 = vld [vmem:[#allocation9 + $0x180] sm:$0xff]
        %v815 = vld [vmem:[#allocation9 + $0x188] sm:$0xff]
        %v816 = vld [vmem:[#allocation9 + $0x190] sm:$0xff]
        %v817 = vld [vmem:[#allocation9 + $0x198] sm:$0xff]
        %v818 = vld [vmem:[#allocation9 + $0x1a0] sm:$0xff]
        %v819 = vld [vmem:[#allocation9 + $0x1a8] sm:$0xff]
        %v820 = vld [vmem:[#allocation9 + $0x1b0] sm:$0xff]
        %v821 = vld [vmem:[#allocation9 + $0x1b8] sm:$0xff]
        %v822 = vld [vmem:[#allocation9 + $0x1c0] sm:$0xff]
        %v823 = vld [vmem:[#allocation9 + $0x1c8] sm:$0xff]
        %v824 = vld [vmem:[#allocation9 + $0x1d0] sm:$0xff]
        %v825 = vld [vmem:[#allocation9 + $0x1d8] sm:$0xff]
        %v826 = vld [vmem:[#allocation9 + $0x1e0] sm:$0xff]
        %v827 = vld [vmem:[#allocation9 + $0x1e8] sm:$0xff]
        %v828 = vld [vmem:[#allocation9 + $0x1f0] sm:$0xff]
        %v829 = vld [vmem:[#allocation9 + $0x1f8] sm:$0xff]
        %v830 = vld [vmem:[#allocation9 + $0x200] sm:$0xff]
        %v831 = vld [vmem:[#allocation9 + $0x208] sm:$0xff]
        %v832 = vld [vmem:[#allocation9 + $0x210] sm:$0xff]
        %v833 = vld [vmem:[#allocation9 + $0x218] sm:$0xff]
        %v834 = vld [vmem:[#allocation9 + $0x220] sm:$0xff]
        %v835 = vld [vmem:[#allocation9 + $0x228] sm:$0xff]
        %v836 = vld [vmem:[#allocation9 + $0x230] sm:$0xff]
        %v837 = vld [vmem:[#allocation9 + $0x238] sm:$0xff]
        %v838 = vld [vmem:[#allocation9 + $0x240] sm:$0xff]
        %v839 = vld [vmem:[#allocation9 + $0x248] sm:$0xff]
        %v840 = vld [vmem:[#allocation9 + $0x250] sm:$0xff]
        %v841 = vld [vmem:[#allocation9 + $0x258] sm:$0xff]
        %v842 = vld [vmem:[#allocation9 + $0x260] sm:$0xff]
        %v843 = vld [vmem:[#allocation9 + $0x268] sm:$0xff]
        %v844 = vld [vmem:[#allocation9 + $0x270] sm:$0xff]
        %v845 = vld [vmem:[#allocation9 + $0x278] sm:$0xff]
        %v846 = vld [vmem:[#allocation9 + $0x280] sm:$0xff]
        %v847 = vld [vmem:[#allocation9 + $0x288] sm:$0xff]
        %v848 = vld [vmem:[#allocation9 + $0x290] sm:$0xff]
        %v849 = vld [vmem:[#allocation9 + $0x298] sm:$0xff]
        %v850 = vld [vmem:[#allocation9 + $0x2a0] sm:$0xff]
        %v851 = vld [vmem:[#allocation9 + $0x2a8] sm:$0xff]
        %v852 = vld [vmem:[#allocation9 + $0x2b0] sm:$0xff]
        %v853 = vld [vmem:[#allocation9 + $0x2b8] sm:$0xff]
        %v854 = vld [vmem:[#allocation9 + $0x2c0] sm:$0xff]
        %v855 = vld [vmem:[#allocation9 + $0x2c8] sm:$0xff]
        %v856 = vld [vmem:[#allocation9 + $0x2d0] sm:$0xff]
        %v857 = vld [vmem:[#allocation9 + $0x2d8] sm:$0xff]
        %v858 = vld [vmem:[#allocation9 + $0x2e0] sm:$0xff]
        %v859 = vld [vmem:[#allocation9 + $0x2e8] sm:$0xff]
        %v860 = vld [vmem:[#allocation9 + $0x2f0] sm:$0xff]
        %v861 = vld [vmem:[#allocation9 + $0x2f8] sm:$0xff]
        %v862 = vld [vmem:[#allocation9 + $0x300] sm:$0xff]
        %v863 = vld [vmem:[#allocation9 + $0x308] sm:$0xff]
        %v864 = vld [vmem:[#allocation9 + $0x310] sm:$0xff]
        %v865 = vld [vmem:[#allocation9 + $0x318] sm:$0xff]
        %v866 = vld [vmem:[#allocation9 + $0x320] sm:$0xff]
        %v867 = vld [vmem:[#allocation9 + $0x328] sm:$0xff]
        %v868 = vld [vmem:[#allocation9 + $0x330] sm:$0xff]
        %v869 = vld [vmem:[#allocation9 + $0x338] sm:$0xff]
        %v870 = vld [vmem:[#allocation9 + $0x340] sm:$0xff]
        %v871 = vld [vmem:[#allocation9 + $0x348] sm:$0xff]
        %v872 = vld [vmem:[#allocation9 + $0x350] sm:$0xff]
        %v873 = vld [vmem:[#allocation9 + $0x358] sm:$0xff]
        %v874 = vld [vmem:[#allocation9 + $0x360] sm:$0xff]
        %v875 = vld [vmem:[#allocation9 + $0x368] sm:$0xff]
        %v876 = vld [vmem:[#allocation9 + $0x370] sm:$0xff]
        %v877 = vld [vmem:[#allocation9 + $0x378] sm:$0xff]
        %v878 = vld [vmem:[#allocation9 + $0x380] sm:$0xff]
        %v879 = vld [vmem:[#allocation9 + $0x388] sm:$0xff]
        %v880 = vld [vmem:[#allocation9 + $0x390] sm:$0xff]
        %v881 = vld [vmem:[#allocation9 + $0x398] sm:$0xff]
        %v882 = vld [vmem:[#allocation9 + $0x3a0] sm:$0xff]
        %v883 = vld [vmem:[#allocation9 + $0x3a8] sm:$0xff]
        %v884 = vld [vmem:[#allocation9 + $0x3b0] sm:$0xff]
        %v885 = vld [vmem:[#allocation9 + $0x3b8] sm:$0xff]
        %v886 = vld [vmem:[#allocation9 + $0x3c0] sm:$0xff]
        %v887 = vld [vmem:[#allocation9 + $0x3c8] sm:$0xff]
        %v888 = vld [vmem:[#allocation9 + $0x3d0] sm:$0xff]
        %v889 = vld [vmem:[#allocation9 + $0x3d8] sm:$0xff]
        %v890 = vld [vmem:[#allocation9 + $0x3e0] sm:$0xff]
        %v891 = vld [vmem:[#allocation9 + $0x3e8] sm:$0xff]
        %v892 = vld [vmem:[#allocation9 + $0x3f0] sm:$0xff]
        %v893 = vld [vmem:[#allocation9 + $0x3f8] sm:$0xff]
        %v894 = vld [vmem:[#allocation9 + $0x400] sm:$0xff]
        %v895 = vld [vmem:[#allocation9 + $0x408] sm:$0xff]
        %v896 = vld [vmem:[#allocation9 + $0x410] sm:$0xff]
        %v897 = vld [vmem:[#allocation9 + $0x418] sm:$0xff]
        %v898 = vld [vmem:[#allocation9 + $0x420] sm:$0xff]
        %v899 = vld [vmem:[#allocation9 + $0x428] sm:$0xff]
        %v900 = vld [vmem:[#allocation9 + $0x430] sm:$0xff]
        %v901 = vld [vmem:[#allocation9 + $0x438] sm:$0xff]
        %v902 = vld [vmem:[#allocation9 + $0x440] sm:$0xff]
        %v903 = vld [vmem:[#allocation9 + $0x448] sm:$0xff]
        %v904 = vld [vmem:[#allocation9 + $0x450] sm:$0xff]
        %v905 = vld [vmem:[#allocation9 + $0x458] sm:$0xff]
        %v906 = vld [vmem:[#allocation9 + $0x460] sm:$0xff]
        %v907 = vld [vmem:[#allocation9 + $0x468] sm:$0xff]
        %v908 = vld [vmem:[#allocation9 + $0x470] sm:$0xff]
        %v909 = vld [vmem:[#allocation9 + $0x478] sm:$0xff]
        %v910 = vld [vmem:[#allocation9 + $0x480] sm:$0xff]
        %v911 = vld [vmem:[#allocation9 + $0x488] sm:$0xff]
        %v912 = vld [vmem:[#allocation9 + $0x490] sm:$0xff]
        %v913 = vld [vmem:[#allocation9 + $0x498] sm:$0xff]
        %v914 = vld [vmem:[#allocation9 + $0x4a0] sm:$0xff]
        %v915 = vld [vmem:[#allocation9 + $0x4a8] sm:$0xff]
        %v916 = vld [vmem:[#allocation9 + $0x4b0] sm:$0xff]
        %v917 = vld [vmem:[#allocation9 + $0x4b8] sm:$0xff]
        %v918 = vld [vmem:[#allocation9 + $0x4c0] sm:$0xff]
        %v919 = vld [vmem:[#allocation9 + $0x4c8] sm:$0xff]
        %v920 = vld [vmem:[#allocation9 + $0x4d0] sm:$0xff]
        %v921 = vld [vmem:[#allocation9 + $0x4d8] sm:$0xff]
        %v922 = vld [vmem:[#allocation9 + $0x4e0] sm:$0xff]
        %v923 = vld [vmem:[#allocation9 + $0x4e8] sm:$0xff]
        %v924 = vld [vmem:[#allocation9 + $0x4f0] sm:$0xff]
        %v925 = vld [vmem:[#allocation9 + $0x4f8] sm:$0xff]
        %v926 = vld [vmem:[#allocation9 + $0x500] sm:$0xff]
        %v927 = vld [vmem:[#allocation9 + $0x508] sm:$0xff]
        %v928 = vld [vmem:[#allocation9 + $0x510] sm:$0xff]
        %v929 = vld [vmem:[#allocation9 + $0x518] sm:$0xff]
        %v930 = vld [vmem:[#allocation9 + $0x520] sm:$0xff]
        %v931 = vld [vmem:[#allocation9 + $0x528] sm:$0xff]
        %v932 = vld [vmem:[#allocation9 + $0x530] sm:$0xff]
        %v933 = vld [vmem:[#allocation9 + $0x538] sm:$0xff]
        %v934 = vld [vmem:[#allocation9 + $0x540] sm:$0xff]
        %v935 = vld [vmem:[#allocation9 + $0x548] sm:$0xff]
        %v936 = vld [vmem:[#allocation9 + $0x550] sm:$0xff]
        %v937 = vld [vmem:[#allocation9 + $0x558] sm:$0xff]
        %v938 = vld [vmem:[#allocation9 + $0x560] sm:$0xff]
        %v939 = vld [vmem:[#allocation9 + $0x568] sm:$0xff]
        %v940 = vld [vmem:[#allocation9 + $0x570] sm:$0xff]
        %v941 = vld [vmem:[#allocation9 + $0x578] sm:$0xff]
        %v942 = vld [vmem:[#allocation9 + $0x580] sm:$0xff]
        %v943 = vld [vmem:[#allocation9 + $0x588] sm:$0xff]
        %v944 = vld [vmem:[#allocation9 + $0x590] sm:$0xff]
        %v945 = vld [vmem:[#allocation9 + $0x598] sm:$0xff]
        %v946 = vld [vmem:[#allocation9 + $0x5a0] sm:$0xff]
        %v947 = vld [vmem:[#allocation9 + $0x5a8] sm:$0xff]
        %v948 = vld [vmem:[#allocation9 + $0x5b0] sm:$0xff]
        %v949 = vld [vmem:[#allocation9 + $0x5b8] sm:$0xff]
        %v950 = vld [vmem:[#allocation9 + $0x5c0] sm:$0xff]
        %v951 = vld [vmem:[#allocation9 + $0x5c8] sm:$0xff]
        %v952 = vld [vmem:[#allocation9 + $0x5d0] sm:$0xff]
        %v953 = vld [vmem:[#allocation9 + $0x5d8] sm:$0xff]
        %v954 = vld [vmem:[#allocation9 + $0x5e0] sm:$0xff]
        %v955 = vld [vmem:[#allocation9 + $0x5e8] sm:$0xff]
        %v956 = vld [vmem:[#allocation9 + $0x5f0] sm:$0xff]
        %v957 = vld [vmem:[#allocation9 + $0x5f8] sm:$0xff]
        %v958 = vld [vmem:[%s4] sm:$0xf]
        %v960 = vlaneseq
        %v961 = vshrl.u32 %v960, 7
        %v962 = vsub.s32 0, %v961
        %v963 = vrot.slane %v958, %v962
        %v964 = vlaneseq
        %v965 = vshrl.u32 %v964, 7
        %v966 = vsub.s32 1, %v965
        %v967 = vrot.slane %v958, %v966
        %v968 = vlaneseq
        %v969 = vshrl.u32 %v968, 7
        %v970 = vsub.s32 2, %v969
        %v971 = vrot.slane %v958, %v970
        %v972 = vlaneseq
        %v973 = vshrl.u32 %v972, 7
        %v974 = vsub.s32 3, %v973
        %v975 = vrot.slane %v958, %v974
        %v1172 = vunpack.c.l.b16 %v766
        %v1173 = vunpack.c.h.b16 %v766
        %v1174 = vunpack.c.l.b16 %v767
        %v1175 = vunpack.c.h.b16 %v767
        %v1176 = vunpack.c.l.b16 %v768
        %v1177 = vunpack.c.h.b16 %v768
        %v1178 = vunpack.c.l.b16 %v769
        %v1179 = vunpack.c.h.b16 %v769
        %v1180 = vunpack.c.l.b16 %v770
        %v1181 = vunpack.c.h.b16 %v770
        %v1182 = vunpack.c.l.b16 %v771
        %v1183 = vunpack.c.h.b16 %v771
        %v1184 = vunpack.c.l.b16 %v772
        %v1185 = vunpack.c.h.b16 %v772
        %v1186 = vunpack.c.l.b16 %v773
        %v1187 = vunpack.c.h.b16 %v773
        %v1188 = vunpack.c.l.b16 %v774
        %v1189 = vunpack.c.h.b16 %v774
        %v1190 = vunpack.c.l.b16 %v775
        %v1191 = vunpack.c.h.b16 %v775
        %v1192 = vunpack.c.l.b16 %v776
        %v1193 = vunpack.c.h.b16 %v776
        %v1194 = vunpack.c.l.b16 %v777
        %v1195 = vunpack.c.h.b16 %v777
        %v1196 = vunpack.c.l.b16 %v778
        %v1197 = vunpack.c.h.b16 %v778
        %v1198 = vunpack.c.l.b16 %v779
        %v1199 = vunpack.c.h.b16 %v779
        %v1200 = vunpack.c.l.b16 %v780
        %v1201 = vunpack.c.h.b16 %v780
        %v1202 = vunpack.c.l.b16 %v781
        %v1203 = vunpack.c.h.b16 %v781
        %v1204 = vunpack.c.l.b16 %v782
        %v1205 = vunpack.c.h.b16 %v782
        %v1206 = vunpack.c.l.b16 %v783
        %v1207 = vunpack.c.h.b16 %v783
        %v1208 = vunpack.c.l.b16 %v784
        %v1209 = vunpack.c.h.b16 %v784
        %v1210 = vunpack.c.l.b16 %v785
        %v1211 = vunpack.c.h.b16 %v785
        %v1212 = vunpack.c.l.b16 %v786
        %v1213 = vunpack.c.h.b16 %v786
        %v1214 = vunpack.c.l.b16 %v787
        %v1215 = vunpack.c.h.b16 %v787
        %v1216 = vunpack.c.l.b16 %v788
        %v1217 = vunpack.c.h.b16 %v788
        %v1218 = vunpack.c.l.b16 %v789
        %v1219 = vunpack.c.h.b16 %v789
        %v1220 = vunpack.c.l.b16 %v790
        %v1221 = vunpack.c.h.b16 %v790
        %v1222 = vunpack.c.l.b16 %v791
        %v1223 = vunpack.c.h.b16 %v791
        %v1224 = vunpack.c.l.b16 %v792
        %v1225 = vunpack.c.h.b16 %v792
        %v1226 = vunpack.c.l.b16 %v793
        %v1227 = vunpack.c.h.b16 %v793
        %v1228 = vunpack.c.l.b16 %v794
        %v1229 = vunpack.c.h.b16 %v794
        %v1230 = vunpack.c.l.b16 %v795
        %v1231 = vunpack.c.h.b16 %v795
        %v1232 = vunpack.c.l.b16 %v796
        %v1233 = vunpack.c.h.b16 %v796
        %v1234 = vunpack.c.l.b16 %v797
        %v1235 = vunpack.c.h.b16 %v797
        %v1236 = vunpack.c.l.b16 %v798
        %v1237 = vunpack.c.h.b16 %v798
        %v1238 = vunpack.c.l.b16 %v799
        %v1239 = vunpack.c.h.b16 %v799
        %v1240 = vunpack.c.l.b16 %v800
        %v1241 = vunpack.c.h.b16 %v800
        %v1242 = vunpack.c.l.b16 %v801
        %v1243 = vunpack.c.h.b16 %v801
        %v1244 = vunpack.c.l.b16 %v802
        %v1245 = vunpack.c.h.b16 %v802
        %v1246 = vunpack.c.l.b16 %v803
        %v1247 = vunpack.c.h.b16 %v803
        %v1248 = vunpack.c.l.b16 %v804
        %v1249 = vunpack.c.h.b16 %v804
        %v1250 = vunpack.c.l.b16 %v805
        %v1251 = vunpack.c.h.b16 %v805
        %v1252 = vunpack.c.l.b16 %v806
        %v1253 = vunpack.c.h.b16 %v806
        %v1254 = vunpack.c.l.b16 %v807
        %v1255 = vunpack.c.h.b16 %v807
        %v1256 = vunpack.c.l.b16 %v808
        %v1257 = vunpack.c.h.b16 %v808
        %v1258 = vunpack.c.l.b16 %v809
        %v1259 = vunpack.c.h.b16 %v809
        %v1260 = vunpack.c.l.b16 %v810
        %v1261 = vunpack.c.h.b16 %v810
        %v1262 = vunpack.c.l.b16 %v811
        %v1263 = vunpack.c.h.b16 %v811
        %v1264 = vunpack.c.l.b16 %v812
        %v1265 = vunpack.c.h.b16 %v812
        %v1266 = vunpack.c.l.b16 %v813
        %v1267 = vunpack.c.h.b16 %v813
        %v1268 = vunpack.c.l.b16 %v814
        %v1269 = vunpack.c.h.b16 %v814
        %v1270 = vunpack.c.l.b16 %v815
        %v1271 = vunpack.c.h.b16 %v815
        %v1272 = vunpack.c.l.b16 %v816
        %v1273 = vunpack.c.h.b16 %v816
        %v1274 = vunpack.c.l.b16 %v817
        %v1275 = vunpack.c.h.b16 %v817
        %v1276 = vunpack.c.l.b16 %v818
        %v1277 = vunpack.c.h.b16 %v818
        %v1278 = vunpack.c.l.b16 %v819
        %v1279 = vunpack.c.h.b16 %v819
        %v1280 = vunpack.c.l.b16 %v820
        %v1281 = vunpack.c.h.b16 %v820
        %v1282 = vunpack.c.l.b16 %v821
        %v1283 = vunpack.c.h.b16 %v821
        %v1284 = vunpack.c.l.b16 %v822
        %v1285 = vunpack.c.h.b16 %v822
        %v1286 = vunpack.c.l.b16 %v823
        %v1287 = vunpack.c.h.b16 %v823
        %v1288 = vunpack.c.l.b16 %v824
        %v1289 = vunpack.c.h.b16 %v824
        %v1290 = vunpack.c.l.b16 %v825
        %v1291 = vunpack.c.h.b16 %v825
        %v1292 = vunpack.c.l.b16 %v826
        %v1293 = vunpack.c.h.b16 %v826
        %v1294 = vunpack.c.l.b16 %v827
        %v1295 = vunpack.c.h.b16 %v827
        %v1296 = vunpack.c.l.b16 %v828
        %v1297 = vunpack.c.h.b16 %v828
        %v1298 = vunpack.c.l.b16 %v829
        %v1299 = vunpack.c.h.b16 %v829
        %v1300 = vunpack.c.l.b16 %v830
        %v1301 = vunpack.c.h.b16 %v830
        %v1302 = vunpack.c.l.b16 %v831
        %v1303 = vunpack.c.h.b16 %v831
        %v1304 = vunpack.c.l.b16 %v832
        %v1305 = vunpack.c.h.b16 %v832
        %v1306 = vunpack.c.l.b16 %v833
        %v1307 = vunpack.c.h.b16 %v833
        %v1308 = vunpack.c.l.b16 %v834
        %v1309 = vunpack.c.h.b16 %v834
        %v1310 = vunpack.c.l.b16 %v835
        %v1311 = vunpack.c.h.b16 %v835
        %v1312 = vunpack.c.l.b16 %v836
        %v1313 = vunpack.c.h.b16 %v836
        %v1314 = vunpack.c.l.b16 %v837
        %v1315 = vunpack.c.h.b16 %v837
        %v1316 = vunpack.c.l.b16 %v838
        %v1317 = vunpack.c.h.b16 %v838
        %v1318 = vunpack.c.l.b16 %v839
        %v1319 = vunpack.c.h.b16 %v839
        %v1320 = vunpack.c.l.b16 %v840
        %v1321 = vunpack.c.h.b16 %v840
        %v1322 = vunpack.c.l.b16 %v841
        %v1323 = vunpack.c.h.b16 %v841
        %v1324 = vunpack.c.l.b16 %v842
        %v1325 = vunpack.c.h.b16 %v842
        %v1326 = vunpack.c.l.b16 %v843
        %v1327 = vunpack.c.h.b16 %v843
        %v1328 = vunpack.c.l.b16 %v844
        %v1329 = vunpack.c.h.b16 %v844
        %v1330 = vunpack.c.l.b16 %v845
        %v1331 = vunpack.c.h.b16 %v845
        %v1332 = vunpack.c.l.b16 %v846
        %v1333 = vunpack.c.h.b16 %v846
        %v1334 = vunpack.c.l.b16 %v847
        %v1335 = vunpack.c.h.b16 %v847
        %v1336 = vunpack.c.l.b16 %v848
        %v1337 = vunpack.c.h.b16 %v848
        %v1338 = vunpack.c.l.b16 %v849
        %v1339 = vunpack.c.h.b16 %v849
        %v1340 = vunpack.c.l.b16 %v850
        %v1341 = vunpack.c.h.b16 %v850
        %v1342 = vunpack.c.l.b16 %v851
        %v1343 = vunpack.c.h.b16 %v851
        %v1344 = vunpack.c.l.b16 %v852
        %v1345 = vunpack.c.h.b16 %v852
        %v1346 = vunpack.c.l.b16 %v853
        %v1347 = vunpack.c.h.b16 %v853
        %v1348 = vunpack.c.l.b16 %v854
        %v1349 = vunpack.c.h.b16 %v854
        %v1350 = vunpack.c.l.b16 %v855
        %v1351 = vunpack.c.h.b16 %v855
        %v1352 = vunpack.c.l.b16 %v856
        %v1353 = vunpack.c.h.b16 %v856
        %v1354 = vunpack.c.l.b16 %v857
        %v1355 = vunpack.c.h.b16 %v857
        %v1356 = vunpack.c.l.b16 %v858
        %v1357 = vunpack.c.h.b16 %v858
        %v1358 = vunpack.c.l.b16 %v859
        %v1359 = vunpack.c.h.b16 %v859
        %v1360 = vunpack.c.l.b16 %v860
        %v1361 = vunpack.c.h.b16 %v860
        %v1362 = vunpack.c.l.b16 %v861
        %v1363 = vunpack.c.h.b16 %v861
        %v1364 = vunpack.c.l.b16 %v862
        %v1365 = vunpack.c.h.b16 %v862
        %v1366 = vunpack.c.l.b16 %v863
        %v1367 = vunpack.c.h.b16 %v863
        %v1368 = vunpack.c.l.b16 %v864
        %v1369 = vunpack.c.h.b16 %v864
        %v1370 = vunpack.c.l.b16 %v865
        %v1371 = vunpack.c.h.b16 %v865
        %v1372 = vunpack.c.l.b16 %v866
        %v1373 = vunpack.c.h.b16 %v866
        %v1374 = vunpack.c.l.b16 %v867
        %v1375 = vunpack.c.h.b16 %v867
        %v1376 = vunpack.c.l.b16 %v868
        %v1377 = vunpack.c.h.b16 %v868
        %v1378 = vunpack.c.l.b16 %v869
        %v1379 = vunpack.c.h.b16 %v869
        %v1380 = vunpack.c.l.b16 %v870
        %v1381 = vunpack.c.h.b16 %v870
        %v1382 = vunpack.c.l.b16 %v871
        %v1383 = vunpack.c.h.b16 %v871
        %v1384 = vunpack.c.l.b16 %v872
        %v1385 = vunpack.c.h.b16 %v872
        %v1386 = vunpack.c.l.b16 %v873
        %v1387 = vunpack.c.h.b16 %v873
        %v1388 = vunpack.c.l.b16 %v874
        %v1389 = vunpack.c.h.b16 %v874
        %v1390 = vunpack.c.l.b16 %v875
        %v1391 = vunpack.c.h.b16 %v875
        %v1392 = vunpack.c.l.b16 %v876
        %v1393 = vunpack.c.h.b16 %v876
        %v1394 = vunpack.c.l.b16 %v877
        %v1395 = vunpack.c.h.b16 %v877
        %v1396 = vunpack.c.l.b16 %v878
        %v1397 = vunpack.c.h.b16 %v878
        %v1398 = vunpack.c.l.b16 %v879
        %v1399 = vunpack.c.h.b16 %v879
        %v1400 = vunpack.c.l.b16 %v880
        %v1401 = vunpack.c.h.b16 %v880
        %v1402 = vunpack.c.l.b16 %v881
        %v1403 = vunpack.c.h.b16 %v881
        %v1404 = vunpack.c.l.b16 %v882
        %v1405 = vunpack.c.h.b16 %v882
        %v1406 = vunpack.c.l.b16 %v883
        %v1407 = vunpack.c.h.b16 %v883
        %v1408 = vunpack.c.l.b16 %v884
        %v1409 = vunpack.c.h.b16 %v884
        %v1410 = vunpack.c.l.b16 %v885
        %v1411 = vunpack.c.h.b16 %v885
        %v1412 = vunpack.c.l.b16 %v886
        %v1413 = vunpack.c.h.b16 %v886
        %v1414 = vunpack.c.l.b16 %v887
        %v1415 = vunpack.c.h.b16 %v887
        %v1416 = vunpack.c.l.b16 %v888
        %v1417 = vunpack.c.h.b16 %v888
        %v1418 = vunpack.c.l.b16 %v889
        %v1419 = vunpack.c.h.b16 %v889
        %v1420 = vunpack.c.l.b16 %v890
        %v1421 = vunpack.c.h.b16 %v890
        %v1422 = vunpack.c.l.b16 %v891
        %v1423 = vunpack.c.h.b16 %v891
        %v1424 = vunpack.c.l.b16 %v892
        %v1425 = vunpack.c.h.b16 %v892
        %v1426 = vunpack.c.l.b16 %v893
        %v1427 = vunpack.c.h.b16 %v893
        %v1428 = vunpack.c.l.b16 %v894
        %v1429 = vunpack.c.h.b16 %v894
        %v1430 = vunpack.c.l.b16 %v895
        %v1431 = vunpack.c.h.b16 %v895
        %v1432 = vunpack.c.l.b16 %v896
        %v1433 = vunpack.c.h.b16 %v896
        %v1434 = vunpack.c.l.b16 %v897
        %v1435 = vunpack.c.h.b16 %v897
        %v1436 = vunpack.c.l.b16 %v898
        %v1437 = vunpack.c.h.b16 %v898
        %v1438 = vunpack.c.l.b16 %v899
        %v1439 = vunpack.c.h.b16 %v899
        %v1440 = vunpack.c.l.b16 %v900
        %v1441 = vunpack.c.h.b16 %v900
        %v1442 = vunpack.c.l.b16 %v901
        %v1443 = vunpack.c.h.b16 %v901
        %v1444 = vunpack.c.l.b16 %v902
        %v1445 = vunpack.c.h.b16 %v902
        %v1446 = vunpack.c.l.b16 %v903
        %v1447 = vunpack.c.h.b16 %v903
        %v1448 = vunpack.c.l.b16 %v904
        %v1449 = vunpack.c.h.b16 %v904
        %v1450 = vunpack.c.l.b16 %v905
        %v1451 = vunpack.c.h.b16 %v905
        %v1452 = vunpack.c.l.b16 %v906
        %v1453 = vunpack.c.h.b16 %v906
        %v1454 = vunpack.c.l.b16 %v907
        %v1455 = vunpack.c.h.b16 %v907
        %v1456 = vunpack.c.l.b16 %v908
        %v1457 = vunpack.c.h.b16 %v908
        %v1458 = vunpack.c.l.b16 %v909
        %v1459 = vunpack.c.h.b16 %v909
        %v1460 = vunpack.c.l.b16 %v910
        %v1461 = vunpack.c.h.b16 %v910
        %v1462 = vunpack.c.l.b16 %v911
        %v1463 = vunpack.c.h.b16 %v911
        %v1464 = vunpack.c.l.b16 %v912
        %v1465 = vunpack.c.h.b16 %v912
        %v1466 = vunpack.c.l.b16 %v913
        %v1467 = vunpack.c.h.b16 %v913
        %v1468 = vunpack.c.l.b16 %v914
        %v1469 = vunpack.c.h.b16 %v914
        %v1470 = vunpack.c.l.b16 %v915
        %v1471 = vunpack.c.h.b16 %v915
        %v1472 = vunpack.c.l.b16 %v916
        %v1473 = vunpack.c.h.b16 %v916
        %v1474 = vunpack.c.l.b16 %v917
        %v1475 = vunpack.c.h.b16 %v917
        %v1476 = vunpack.c.l.b16 %v918
        %v1477 = vunpack.c.h.b16 %v918
        %v1478 = vunpack.c.l.b16 %v919
        %v1479 = vunpack.c.h.b16 %v919
        %v1480 = vunpack.c.l.b16 %v920
        %v1481 = vunpack.c.h.b16 %v920
        %v1482 = vunpack.c.l.b16 %v921
        %v1483 = vunpack.c.h.b16 %v921
        %v1484 = vunpack.c.l.b16 %v922
        %v1485 = vunpack.c.h.b16 %v922
        %v1486 = vunpack.c.l.b16 %v923
        %v1487 = vunpack.c.h.b16 %v923
        %v1488 = vunpack.c.l.b16 %v924
        %v1489 = vunpack.c.h.b16 %v924
        %v1490 = vunpack.c.l.b16 %v925
        %v1491 = vunpack.c.h.b16 %v925
        %v1492 = vunpack.c.l.b16 %v926
        %v1493 = vunpack.c.h.b16 %v926
        %v1494 = vunpack.c.l.b16 %v927
        %v1495 = vunpack.c.h.b16 %v927
        %v1496 = vunpack.c.l.b16 %v928
        %v1497 = vunpack.c.h.b16 %v928
        %v1498 = vunpack.c.l.b16 %v929
        %v1499 = vunpack.c.h.b16 %v929
        %v1500 = vunpack.c.l.b16 %v930
        %v1501 = vunpack.c.h.b16 %v930
        %v1502 = vunpack.c.l.b16 %v931
        %v1503 = vunpack.c.h.b16 %v931
        %v1504 = vunpack.c.l.b16 %v932
        %v1505 = vunpack.c.h.b16 %v932
        %v1506 = vunpack.c.l.b16 %v933
        %v1507 = vunpack.c.h.b16 %v933
        %v1508 = vunpack.c.l.b16 %v934
        %v1509 = vunpack.c.h.b16 %v934
        %v1510 = vunpack.c.l.b16 %v935
        %v1511 = vunpack.c.h.b16 %v935
        %v1512 = vunpack.c.l.b16 %v936
        %v1513 = vunpack.c.h.b16 %v936
        %v1514 = vunpack.c.l.b16 %v937
        %v1515 = vunpack.c.h.b16 %v937
        %v1516 = vunpack.c.l.b16 %v938
        %v1517 = vunpack.c.h.b16 %v938
        %v1518 = vunpack.c.l.b16 %v939
        %v1519 = vunpack.c.h.b16 %v939
        %v1520 = vunpack.c.l.b16 %v940
        %v1521 = vunpack.c.h.b16 %v940
        %v1522 = vunpack.c.l.b16 %v941
        %v1523 = vunpack.c.h.b16 %v941
        %v1524 = vunpack.c.l.b16 %v942
        %v1525 = vunpack.c.h.b16 %v942
        %v1526 = vunpack.c.l.b16 %v943
        %v1527 = vunpack.c.h.b16 %v943
        %v1528 = vunpack.c.l.b16 %v944
        %v1529 = vunpack.c.h.b16 %v944
        %v1530 = vunpack.c.l.b16 %v945
        %v1531 = vunpack.c.h.b16 %v945
        %v1532 = vunpack.c.l.b16 %v946
        %v1533 = vunpack.c.h.b16 %v946
        %v1534 = vunpack.c.l.b16 %v947
        %v1535 = vunpack.c.h.b16 %v947
        %v1536 = vunpack.c.l.b16 %v948
        %v1537 = vunpack.c.h.b16 %v948
        %v1538 = vunpack.c.l.b16 %v949
        %v1539 = vunpack.c.h.b16 %v949
        %v1540 = vunpack.c.l.b16 %v950
        %v1541 = vunpack.c.h.b16 %v950
        %v1542 = vunpack.c.l.b16 %v951
        %v1543 = vunpack.c.h.b16 %v951
        %v1544 = vunpack.c.l.b16 %v952
        %v1545 = vunpack.c.h.b16 %v952
        %v1546 = vunpack.c.l.b16 %v953
        %v1547 = vunpack.c.h.b16 %v953
        %v1548 = vunpack.c.l.b16 %v954
        %v1549 = vunpack.c.h.b16 %v954
        %v1550 = vunpack.c.l.b16 %v955
        %v1551 = vunpack.c.h.b16 %v955
        %v1552 = vunpack.c.l.b16 %v956
        %v1553 = vunpack.c.h.b16 %v956
        %v1554 = vunpack.c.l.b16 %v957
        %v1555 = vunpack.c.h.b16 %v957
        %v1556 = vpack.c.b16 %v1176, %v1172
        %v1557 = vpack.c.b16 %v1177, %v1173
        %v1558 = vpack.c.b16 %v1178, %v1174
        %v1559 = vpack.c.b16 %v1179, %v1175
        %v1560 = vpack.c.b16 %v1184, %v1180
        %v1561 = vpack.c.b16 %v1185, %v1181
        %v1562 = vpack.c.b16 %v1186, %v1182
        %v1563 = vpack.c.b16 %v1187, %v1183
        %v1564 = vpack.c.b16 %v1192, %v1188
        %v1565 = vpack.c.b16 %v1193, %v1189
        %v1566 = vpack.c.b16 %v1194, %v1190
        %v1567 = vpack.c.b16 %v1195, %v1191
        %v1568 = vpack.c.b16 %v1200, %v1196
        %v1569 = vpack.c.b16 %v1201, %v1197
        %v1570 = vpack.c.b16 %v1202, %v1198
        %v1571 = vpack.c.b16 %v1203, %v1199
        %v1572 = vpack.c.b16 %v1208, %v1204
        %v1573 = vpack.c.b16 %v1209, %v1205
        %v1574 = vpack.c.b16 %v1210, %v1206
        %v1575 = vpack.c.b16 %v1211, %v1207
        %v1576 = vpack.c.b16 %v1216, %v1212
        %v1577 = vpack.c.b16 %v1217, %v1213
        %v1578 = vpack.c.b16 %v1218, %v1214
        %v1579 = vpack.c.b16 %v1219, %v1215
        %v1580 = vpack.c.b16 %v1224, %v1220
        %v1581 = vpack.c.b16 %v1225, %v1221
        %v1582 = vpack.c.b16 %v1226, %v1222
        %v1583 = vpack.c.b16 %v1227, %v1223
        %v1584 = vpack.c.b16 %v1232, %v1228
        %v1585 = vpack.c.b16 %v1233, %v1229
        %v1586 = vpack.c.b16 %v1234, %v1230
        %v1587 = vpack.c.b16 %v1235, %v1231
        %v1588 = vpack.c.b16 %v1240, %v1236
        %v1589 = vpack.c.b16 %v1241, %v1237
        %v1590 = vpack.c.b16 %v1242, %v1238
        %v1591 = vpack.c.b16 %v1243, %v1239
        %v1592 = vpack.c.b16 %v1248, %v1244
        %v1593 = vpack.c.b16 %v1249, %v1245
        %v1594 = vpack.c.b16 %v1250, %v1246
        %v1595 = vpack.c.b16 %v1251, %v1247
        %v1596 = vpack.c.b16 %v1256, %v1252
        %v1597 = vpack.c.b16 %v1257, %v1253
        %v1598 = vpack.c.b16 %v1258, %v1254
        %v1599 = vpack.c.b16 %v1259, %v1255
        %v1600 = vpack.c.b16 %v1264, %v1260
        %v1601 = vpack.c.b16 %v1265, %v1261
        %v1602 = vpack.c.b16 %v1266, %v1262
        %v1603 = vpack.c.b16 %v1267, %v1263
        %v1604 = vpack.c.b16 %v1272, %v1268
        %v1605 = vpack.c.b16 %v1273, %v1269
        %v1606 = vpack.c.b16 %v1274, %v1270
        %v1607 = vpack.c.b16 %v1275, %v1271
        %v1608 = vpack.c.b16 %v1280, %v1276
        %v1609 = vpack.c.b16 %v1281, %v1277
        %v1610 = vpack.c.b16 %v1282, %v1278
        %v1611 = vpack.c.b16 %v1283, %v1279
        %v1612 = vpack.c.b16 %v1288, %v1284
        %v1613 = vpack.c.b16 %v1289, %v1285
        %v1614 = vpack.c.b16 %v1290, %v1286
        %v1615 = vpack.c.b16 %v1291, %v1287
        %v1616 = vpack.c.b16 %v1296, %v1292
        %v1617 = vpack.c.b16 %v1297, %v1293
        %v1618 = vpack.c.b16 %v1298, %v1294
        %v1619 = vpack.c.b16 %v1299, %v1295
        %v1620 = vpack.c.b16 %v1304, %v1300
        %v1621 = vpack.c.b16 %v1305, %v1301
        %v1622 = vpack.c.b16 %v1306, %v1302
        %v1623 = vpack.c.b16 %v1307, %v1303
        %v1624 = vpack.c.b16 %v1312, %v1308
        %v1625 = vpack.c.b16 %v1313, %v1309
        %v1626 = vpack.c.b16 %v1314, %v1310
        %v1627 = vpack.c.b16 %v1315, %v1311
        %v1628 = vpack.c.b16 %v1320, %v1316
        %v1629 = vpack.c.b16 %v1321, %v1317
        %v1630 = vpack.c.b16 %v1322, %v1318
        %v1631 = vpack.c.b16 %v1323, %v1319
        %v1632 = vpack.c.b16 %v1328, %v1324
        %v1633 = vpack.c.b16 %v1329, %v1325
        %v1634 = vpack.c.b16 %v1330, %v1326
        %v1635 = vpack.c.b16 %v1331, %v1327
        %v1636 = vpack.c.b16 %v1336, %v1332
        %v1637 = vpack.c.b16 %v1337, %v1333
        %v1638 = vpack.c.b16 %v1338, %v1334
        %v1639 = vpack.c.b16 %v1339, %v1335
        %v1640 = vpack.c.b16 %v1344, %v1340
        %v1641 = vpack.c.b16 %v1345, %v1341
        %v1642 = vpack.c.b16 %v1346, %v1342
        %v1643 = vpack.c.b16 %v1347, %v1343
        %v1644 = vpack.c.b16 %v1352, %v1348
        %v1645 = vpack.c.b16 %v1353, %v1349
        %v1646 = vpack.c.b16 %v1354, %v1350
        %v1647 = vpack.c.b16 %v1355, %v1351
        %v1648 = vpack.c.b16 %v1360, %v1356
        %v1649 = vpack.c.b16 %v1361, %v1357
        %v1650 = vpack.c.b16 %v1362, %v1358
        %v1651 = vpack.c.b16 %v1363, %v1359
        %v1652 = vpack.c.b16 %v1368, %v1364
        %v1653 = vpack.c.b16 %v1369, %v1365
        %v1654 = vpack.c.b16 %v1370, %v1366
        %v1655 = vpack.c.b16 %v1371, %v1367
        %v1656 = vpack.c.b16 %v1376, %v1372
        %v1657 = vpack.c.b16 %v1377, %v1373
        %v1658 = vpack.c.b16 %v1378, %v1374
        %v1659 = vpack.c.b16 %v1379, %v1375
        %v1660 = vpack.c.b16 %v1384, %v1380
        %v1661 = vpack.c.b16 %v1385, %v1381
        %v1662 = vpack.c.b16 %v1386, %v1382
        %v1663 = vpack.c.b16 %v1387, %v1383
        %v1664 = vpack.c.b16 %v1392, %v1388
        %v1665 = vpack.c.b16 %v1393, %v1389
        %v1666 = vpack.c.b16 %v1394, %v1390
        %v1667 = vpack.c.b16 %v1395, %v1391
        %v1668 = vpack.c.b16 %v1400, %v1396
        %v1669 = vpack.c.b16 %v1401, %v1397
        %v1670 = vpack.c.b16 %v1402, %v1398
        %v1671 = vpack.c.b16 %v1403, %v1399
        %v1672 = vpack.c.b16 %v1408, %v1404
        %v1673 = vpack.c.b16 %v1409, %v1405
        %v1674 = vpack.c.b16 %v1410, %v1406
        %v1675 = vpack.c.b16 %v1411, %v1407
        %v1676 = vpack.c.b16 %v1416, %v1412
        %v1677 = vpack.c.b16 %v1417, %v1413
        %v1678 = vpack.c.b16 %v1418, %v1414
        %v1679 = vpack.c.b16 %v1419, %v1415
        %v1680 = vpack.c.b16 %v1424, %v1420
        %v1681 = vpack.c.b16 %v1425, %v1421
        %v1682 = vpack.c.b16 %v1426, %v1422
        %v1683 = vpack.c.b16 %v1427, %v1423
        %v1684 = vpack.c.b16 %v1432, %v1428
        %v1685 = vpack.c.b16 %v1433, %v1429
        %v1686 = vpack.c.b16 %v1434, %v1430
        %v1687 = vpack.c.b16 %v1435, %v1431
        %v1688 = vpack.c.b16 %v1440, %v1436
        %v1689 = vpack.c.b16 %v1441, %v1437
        %v1690 = vpack.c.b16 %v1442, %v1438
        %v1691 = vpack.c.b16 %v1443, %v1439
        %v1692 = vpack.c.b16 %v1448, %v1444
        %v1693 = vpack.c.b16 %v1449, %v1445
        %v1694 = vpack.c.b16 %v1450, %v1446
        %v1695 = vpack.c.b16 %v1451, %v1447
        %v1696 = vpack.c.b16 %v1456, %v1452
        %v1697 = vpack.c.b16 %v1457, %v1453
        %v1698 = vpack.c.b16 %v1458, %v1454
        %v1699 = vpack.c.b16 %v1459, %v1455
        %v1700 = vpack.c.b16 %v1464, %v1460
        %v1701 = vpack.c.b16 %v1465, %v1461
        %v1702 = vpack.c.b16 %v1466, %v1462
        %v1703 = vpack.c.b16 %v1467, %v1463
        %v1704 = vpack.c.b16 %v1472, %v1468
        %v1705 = vpack.c.b16 %v1473, %v1469
        %v1706 = vpack.c.b16 %v1474, %v1470
        %v1707 = vpack.c.b16 %v1475, %v1471
        %v1708 = vpack.c.b16 %v1480, %v1476
        %v1709 = vpack.c.b16 %v1481, %v1477
        %v1710 = vpack.c.b16 %v1482, %v1478
        %v1711 = vpack.c.b16 %v1483, %v1479
        %v1712 = vpack.c.b16 %v1488, %v1484
        %v1713 = vpack.c.b16 %v1489, %v1485
        %v1714 = vpack.c.b16 %v1490, %v1486
        %v1715 = vpack.c.b16 %v1491, %v1487
        %v1716 = vpack.c.b16 %v1496, %v1492
        %v1717 = vpack.c.b16 %v1497, %v1493
        %v1718 = vpack.c.b16 %v1498, %v1494
        %v1719 = vpack.c.b16 %v1499, %v1495
        %v1720 = vpack.c.b16 %v1504, %v1500
        %v1721 = vpack.c.b16 %v1505, %v1501
        %v1722 = vpack.c.b16 %v1506, %v1502
        %v1723 = vpack.c.b16 %v1507, %v1503
        %v1724 = vpack.c.b16 %v1512, %v1508
        %v1725 = vpack.c.b16 %v1513, %v1509
        %v1726 = vpack.c.b16 %v1514, %v1510
        %v1727 = vpack.c.b16 %v1515, %v1511
        %v1728 = vpack.c.b16 %v1520, %v1516
        %v1729 = vpack.c.b16 %v1521, %v1517
        %v1730 = vpack.c.b16 %v1522, %v1518
        %v1731 = vpack.c.b16 %v1523, %v1519
        %v1732 = vpack.c.b16 %v1528, %v1524
        %v1733 = vpack.c.b16 %v1529, %v1525
        %v1734 = vpack.c.b16 %v1530, %v1526
        %v1735 = vpack.c.b16 %v1531, %v1527
        %v1736 = vpack.c.b16 %v1536, %v1532
        %v1737 = vpack.c.b16 %v1537, %v1533
        %v1738 = vpack.c.b16 %v1538, %v1534
        %v1739 = vpack.c.b16 %v1539, %v1535
        %v1740 = vpack.c.b16 %v1544, %v1540
        %v1741 = vpack.c.b16 %v1545, %v1541
        %v1742 = vpack.c.b16 %v1546, %v1542
        %v1743 = vpack.c.b16 %v1547, %v1543
        %v1744 = vpack.c.b16 %v1552, %v1548
        %v1745 = vpack.c.b16 %v1553, %v1549
        %v1746 = vpack.c.b16 %v1554, %v1550
        %v1747 = vpack.c.b16 %v1555, %v1551
        %1940 = vmatprep.subr.bf16.mxu0 %v1557
        %1941 = vmatpush1.bf16.msra.mxu0 %v1556
        %1942 = vmatprep.subr.bf16.mxu0 %v1561
        %1943 = vmatpush1.bf16.msra.mxu0 %v1560
        %1944 = vmatprep.subr.bf16.mxu0 %v1565
        %1945 = vmatpush1.bf16.msra.mxu0 %v1564
        %1946 = vmatprep.subr.bf16.mxu0 %v1569
        %1947 = vmatpush1.bf16.msra.mxu0 %v1568
        %1948 = vmatprep.subr.bf16.mxu0 %v1573
        %1949 = vmatpush1.bf16.msra.mxu0 %v1572
        %1950 = vmatprep.subr.bf16.mxu0 %v1577
        %1951 = vmatpush1.bf16.msra.mxu0 %v1576
        %1952 = vmatprep.subr.bf16.mxu0 %v1581
        %1953 = vmatpush1.bf16.msra.mxu0 %v1580
        %1954 = vmatprep.subr.bf16.mxu0 %v1585
        %1955 = vmatpush1.bf16.msra.mxu0 %v1584
        %1956 = vmatprep.subr.bf16.mxu0 %v1589
        %1957 = vmatpush1.bf16.msra.mxu0 %v1588
        %1958 = vmatprep.subr.bf16.mxu0 %v1593
        %1959 = vmatpush1.bf16.msra.mxu0 %v1592
        %1960 = vmatprep.subr.bf16.mxu0 %v1597
        %1961 = vmatpush1.bf16.msra.mxu0 %v1596
        %1962 = vmatprep.subr.bf16.mxu0 %v1601
        %1963 = vmatpush1.bf16.msra.mxu0 %v1600
        %1964 = vmatprep.subr.bf16.mxu0 %v1605
        %1965 = vmatpush1.bf16.msra.mxu0 %v1604
        %1966 = vmatprep.subr.bf16.mxu0 %v1609
        %1967 = vmatpush1.bf16.msra.mxu0 %v1608
        %1968 = vmatprep.subr.bf16.mxu0 %v1613
        %1969 = vmatpush1.bf16.msra.mxu0 %v1612
        %1970 = vmatprep.subr.bf16.mxu0 %v1617
        %1971 = vmatpush1.bf16.msra.mxu0 %v1616
        %1972 = vmatprep.mubr.bf16.mxu0 %v748
        %1973 = vmatmul.mubr.bf16.gmra.mrb[0].mxu0 %v744
        %v1974 = vpop.f32.mrb[0].mxu0
        %v1975 = vadd.f32 %v963, %v1974
        %v1976 = vpop.f32.mrb[0].mxu0
        %v1977 = vadd.f32 %v967, %v1976
        %v1978 = vpop.f32.mrb[0].mxu0
        %v1979 = vadd.f32 %v963, %v1978
        %v1980 = vpop.f32.mrb[0].mxu0
        %v1981 = vadd.f32 %v967, %v1980
        %1982 = vdwg.mxu0
        %1983 = vmatprep.subr.bf16.mxu0 %v1621
        %1984 = vmatpush1.bf16.msra.mxu0 %v1620
        %1985 = vmatprep.subr.bf16.mxu0 %v1625
        %1986 = vmatpush1.bf16.msra.mxu0 %v1624
        %1987 = vmatprep.subr.bf16.mxu0 %v1629
        %1988 = vmatpush1.bf16.msra.mxu0 %v1628
        %1989 = vmatprep.subr.bf16.mxu0 %v1633
        %1990 = vmatpush1.bf16.msra.mxu0 %v1632
        %1991 = vmatprep.subr.bf16.mxu0 %v1637
        %1992 = vmatpush1.bf16.msra.mxu0 %v1636
        %1993 = vmatprep.subr.bf16.mxu0 %v1641
        %1994 = vmatpush1.bf16.msra.mxu0 %v1640
        %1995 = vmatprep.subr.bf16.mxu0 %v1645
        %1996 = vmatpush1.bf16.msra.mxu0 %v1644
        %1997 = vmatprep.subr.bf16.mxu0 %v1649
        %1998 = vmatpush1.bf16.msra.mxu0 %v1648
        %1999 = vmatprep.subr.bf16.mxu0 %v1653
        %2000 = vmatpush1.bf16.msra.mxu0 %v1652
        %2001 = vmatprep.subr.bf16.mxu0 %v1657
        %2002 = vmatpush1.bf16.msra.mxu0 %v1656
        %2003 = vmatprep.subr.bf16.mxu0 %v1661
        %2004 = vmatpush1.bf16.msra.mxu0 %v1660
        %2005 = vmatprep.subr.bf16.mxu0 %v1665
        %2006 = vmatpush1.bf16.msra.mxu0 %v1664
        %2007 = vmatprep.subr.bf16.mxu0 %v1669
        %2008 = vmatpush1.bf16.msra.mxu0 %v1668
        %2009 = vmatprep.subr.bf16.mxu0 %v1673
        %2010 = vmatpush1.bf16.msra.mxu0 %v1672
        %2011 = vmatprep.subr.bf16.mxu0 %v1677
        %2012 = vmatpush1.bf16.msra.mxu0 %v1676
        %2013 = vmatprep.subr.bf16.mxu0 %v1681
        %2014 = vmatpush1.bf16.msra.mxu0 %v1680
        %2015 = vmatprep.mubr.bf16.mxu0 %v756
        %2016 = vmatmul.mubr.bf16.gmra.mrb[0].mxu0 %v752
        %v2017 = vpop.f32.mrb[0].mxu0
        %v2018 = vadd.f32 %v1975, %v2017
        %v2019 = vpop.f32.mrb[0].mxu0
        %v2020 = vadd.f32 %v1977, %v2019
        %v2021 = vpop.f32.mrb[0].mxu0
        %v2022 = vadd.f32 %v1979, %v2021
        %v2023 = vpop.f32.mrb[0].mxu0
        %v2024 = vadd.f32 %v1981, %v2023
        %2025 = vdwg.mxu0
        %2026 = vmatprep.subr.bf16.mxu0 %v1685
        %2027 = vmatpush1.bf16.msra.mxu0 %v1684
        %2028 = vmatprep.subr.bf16.mxu0 %v1689
        %2029 = vmatpush1.bf16.msra.mxu0 %v1688
        %2030 = vmatprep.subr.bf16.mxu0 %v1693
        %2031 = vmatpush1.bf16.msra.mxu0 %v1692
        %2032 = vmatprep.subr.bf16.mxu0 %v1697
        %2033 = vmatpush1.bf16.msra.mxu0 %v1696
        %2034 = vmatprep.subr.bf16.mxu0 %v1701
        %2035 = vmatpush1.bf16.msra.mxu0 %v1700
        %2036 = vmatprep.subr.bf16.mxu0 %v1705
        %2037 = vmatpush1.bf16.msra.mxu0 %v1704
        %2038 = vmatprep.subr.bf16.mxu0 %v1709
        %2039 = vmatpush1.bf16.msra.mxu0 %v1708
        %2040 = vmatprep.subr.bf16.mxu0 %v1713
        %2041 = vmatpush1.bf16.msra.mxu0 %v1712
        %2042 = vmatprep.subr.bf16.mxu0 %v1717
        %2043 = vmatpush1.bf16.msra.mxu0 %v1716
        %2044 = vmatprep.subr.bf16.mxu0 %v1721
        %2045 = vmatpush1.bf16.msra.mxu0 %v1720
        %2046 = vmatprep.subr.bf16.mxu0 %v1725
        %2047 = vmatpush1.bf16.msra.mxu0 %v1724
        %2048 = vmatprep.subr.bf16.mxu0 %v1729
        %2049 = vmatpush1.bf16.msra.mxu0 %v1728
        %2050 = vmatprep.subr.bf16.mxu0 %v1733
        %2051 = vmatpush1.bf16.msra.mxu0 %v1732
        %2052 = vmatprep.subr.bf16.mxu0 %v1737
        %2053 = vmatpush1.bf16.msra.mxu0 %v1736
        %2054 = vmatprep.subr.bf16.mxu0 %v1741
        %2055 = vmatpush1.bf16.msra.mxu0 %v1740
        %2056 = vmatprep.subr.bf16.mxu0 %v1745
        %2057 = vmatpush1.bf16.msra.mxu0 %v1744
        %2058 = vmatprep.mubr.bf16.mxu0 %v764
        %2059 = vmatmul.mubr.bf16.gmra.mrb[0].mxu0 %v760
        %v2060 = vpop.f32.mrb[0].mxu0
        %v2061 = vadd.f32 %v2018, %v2060
        %v2062 = vpop.f32.mrb[0].mxu0
        %v2063 = vadd.f32 %v2020, %v2062
        %v2064 = vpop.f32.mrb[0].mxu0
        %v2065 = vadd.f32 %v2022, %v2064
        %v2066 = vpop.f32.mrb[0].mxu0
        %v2067 = vadd.f32 %v2024, %v2066
        %2068 = vdwg.mxu0
        %2069 = vmatprep.subr.bf16.mxu0 %v1559
        %2070 = vmatpush1.bf16.msra.mxu0 %v1558
        %2071 = vmatprep.subr.bf16.mxu0 %v1563
        %2072 = vmatpush1.bf16.msra.mxu0 %v1562
        %2073 = vmatprep.subr.bf16.mxu0 %v1567
        %2074 = vmatpush1.bf16.msra.mxu0 %v1566
        %2075 = vmatprep.subr.bf16.mxu0 %v1571
        %2076 = vmatpush1.bf16.msra.mxu0 %v1570
        %2077 = vmatprep.subr.bf16.mxu0 %v1575
        %2078 = vmatpush1.bf16.msra.mxu0 %v1574
        %2079 = vmatprep.subr.bf16.mxu0 %v1579
        %2080 = vmatpush1.bf16.msra.mxu0 %v1578
        %2081 = vmatprep.subr.bf16.mxu0 %v1583
        %2082 = vmatpush1.bf16.msra.mxu0 %v1582
        %2083 = vmatprep.subr.bf16.mxu0 %v1587
        %2084 = vmatpush1.bf16.msra.mxu0 %v1586
        %2085 = vmatprep.subr.bf16.mxu0 %v1591
        %2086 = vmatpush1.bf16.msra.mxu0 %v1590
        %2087 = vmatprep.subr.bf16.mxu0 %v1595
        %2088 = vmatpush1.bf16.msra.mxu0 %v1594
        %2089 = vmatprep.subr.bf16.mxu0 %v1599
        %2090 = vmatpush1.bf16.msra.mxu0 %v1598
        %2091 = vmatprep.subr.bf16.mxu0 %v1603
        %2092 = vmatpush1.bf16.msra.mxu0 %v1602
        %2093 = vmatprep.subr.bf16.mxu0 %v1607
        %2094 = vmatpush1.bf16.msra.mxu0 %v1606
        %2095 = vmatprep.subr.bf16.mxu0 %v1611
        %2096 = vmatpush1.bf16.msra.mxu0 %v1610
        %2097 = vmatprep.subr.bf16.mxu0 %v1615
        %2098 = vmatpush1.bf16.msra.mxu0 %v1614
        %2099 = vmatprep.subr.bf16.mxu0 %v1619
        %2100 = vmatpush1.bf16.msra.mxu0 %v1618
        %2101 = vmatprep.mubr.bf16.mxu0 %v748
        %2102 = vmatmul.mubr.bf16.gmra.mrb[0].mxu0 %v744
        %v2103 = vpop.f32.mrb[0].mxu0
        %v2104 = vadd.f32 %v971, %v2103
        %v2105 = vpop.f32.mrb[0].mxu0
        %v2106 = vadd.f32 %v975, %v2105
        %v2107 = vpop.f32.mrb[0].mxu0
        %v2108 = vadd.f32 %v971, %v2107
        %v2109 = vpop.f32.mrb[0].mxu0
        %v2110 = vadd.f32 %v975, %v2109
        %2111 = vdwg.mxu0
        %2112 = vmatprep.subr.bf16.mxu0 %v1623
        %2113 = vmatpush1.bf16.msra.mxu0 %v1622
        %2114 = vmatprep.subr.bf16.mxu0 %v1627
        %2115 = vmatpush1.bf16.msra.mxu0 %v1626
        %2116 = vmatprep.subr.bf16.mxu0 %v1631
        %2117 = vmatpush1.bf16.msra.mxu0 %v1630
        %2118 = vmatprep.subr.bf16.mxu0 %v1635
        %2119 = vmatpush1.bf16.msra.mxu0 %v1634
        %2120 = vmatprep.subr.bf16.mxu0 %v1639
        %2121 = vmatpush1.bf16.msra.mxu0 %v1638
        %2122 = vmatprep.subr.bf16.mxu0 %v1643
        %2123 = vmatpush1.bf16.msra.mxu0 %v1642
        %2124 = vmatprep.subr.bf16.mxu0 %v1647
        %2125 = vmatpush1.bf16.msra.mxu0 %v1646
        %2126 = vmatprep.subr.bf16.mxu0 %v1651
        %2127 = vmatpush1.bf16.msra.mxu0 %v1650
        %2128 = vmatprep.subr.bf16.mxu0 %v1655
        %2129 = vmatpush1.bf16.msra.mxu0 %v1654
        %2130 = vmatprep.subr.bf16.mxu0 %v1659
        %2131 = vmatpush1.bf16.msra.mxu0 %v1658
        %2132 = vmatprep.subr.bf16.mxu0 %v1663
        %2133 = vmatpush1.bf16.msra.mxu0 %v1662
        %2134 = vmatprep.subr.bf16.mxu0 %v1667
        %2135 = vmatpush1.bf16.msra.mxu0 %v1666
        %2136 = vmatprep.subr.bf16.mxu0 %v1671
        %2137 = vmatpush1.bf16.msra.mxu0 %v1670
        %2138 = vmatprep.subr.bf16.mxu0 %v1675
        %2139 = vmatpush1.bf16.msra.mxu0 %v1674
        %2140 = vmatprep.subr.bf16.mxu0 %v1679
        %2141 = vmatpush1.bf16.msra.mxu0 %v1678
        %2142 = vmatprep.subr.bf16.mxu0 %v1683
        %2143 = vmatpush1.bf16.msra.mxu0 %v1682
        %2144 = vmatprep.mubr.bf16.mxu0 %v756
        %2145 = vmatmul.mubr.bf16.gmra.mrb[0].mxu0 %v752
        %v2146 = vpop.f32.mrb[0].mxu0
        %v2147 = vadd.f32 %v2104, %v2146
        %v2148 = vpop.f32.mrb[0].mxu0
        %v2149 = vadd.f32 %v2106, %v2148
        %v2150 = vpop.f32.mrb[0].mxu0
        %v2151 = vadd.f32 %v2108, %v2150
        %v2152 = vpop.f32.mrb[0].mxu0
        %v2153 = vadd.f32 %v2110, %v2152
        %2154 = vdwg.mxu0
        %2155 = vmatprep.subr.bf16.mxu0 %v1687
        %2156 = vmatpush1.bf16.msra.mxu0 %v1686
        %2157 = vmatprep.subr.bf16.mxu0 %v1691
        %2158 = vmatpush1.bf16.msra.mxu0 %v1690
        %2159 = vmatprep.subr.bf16.mxu0 %v1695
        %2160 = vmatpush1.bf16.msra.mxu0 %v1694
        %2161 = vmatprep.subr.bf16.mxu0 %v1699
        %2162 = vmatpush1.bf16.msra.mxu0 %v1698
        %2163 = vmatprep.subr.bf16.mxu0 %v1703
        %2164 = vmatpush1.bf16.msra.mxu0 %v1702
        %2165 = vmatprep.subr.bf16.mxu0 %v1707
        %2166 = vmatpush1.bf16.msra.mxu0 %v1706
        %2167 = vmatprep.subr.bf16.mxu0 %v1711
        %2168 = vmatpush1.bf16.msra.mxu0 %v1710
        %2169 = vmatprep.subr.bf16.mxu0 %v1715
        %2170 = vmatpush1.bf16.msra.mxu0 %v1714
        %2171 = vmatprep.subr.bf16.mxu0 %v1719
        %2172 = vmatpush1.bf16.msra.mxu0 %v1718
        %2173 = vmatprep.subr.bf16.mxu0 %v1723
        %2174 = vmatpush1.bf16.msra.mxu0 %v1722
        %2175 = vmatprep.subr.bf16.mxu0 %v1727
        %2176 = vmatpush1.bf16.msra.mxu0 %v1726
        %2177 = vmatprep.subr.bf16.mxu0 %v1731
        %2178 = vmatpush1.bf16.msra.mxu0 %v1730
        %2179 = vmatprep.subr.bf16.mxu0 %v1735
        %2180 = vmatpush1.bf16.msra.mxu0 %v1734
        %2181 = vmatprep.subr.bf16.mxu0 %v1739
        %2182 = vmatpush1.bf16.msra.mxu0 %v1738
        %2183 = vmatprep.subr.bf16.mxu0 %v1743
        %2184 = vmatpush1.bf16.msra.mxu0 %v1742
        %2185 = vmatprep.subr.bf16.mxu0 %v1747
        %2186 = vmatpush1.bf16.msra.mxu0 %v1746
        %2187 = vmatprep.mubr.bf16.mxu0 %v764
        %2188 = vmatmul.mubr.bf16.gmra.mrb[0].mxu0 %v760
        %v2189 = vpop.f32.mrb[0].mxu0
        %v2190 = vadd.f32 %v2147, %v2189
        %v2191 = vpop.f32.mrb[0].mxu0
        %v2192 = vadd.f32 %v2149, %v2191
        %v2193 = vpop.f32.mrb[0].mxu0
        %v2194 = vadd.f32 %v2151, %v2193
        %v2195 = vpop.f32.mrb[0].mxu0
        %v2196 = vadd.f32 %v2153, %v2195
        %2197 = vdwg.mxu0
        %v2198 = vmax.f32 %v2061, 0.0
        %v2199 = vmax.f32 %v2063, 0.0
        %v2200 = vmax.f32 %v2190, 0.0
        %v2201 = vmax.f32 %v2192, 0.0
        %v2202 = vmax.f32 %v2065, 0.0
        %v2203 = vmax.f32 %v2067, 0.0
        %v2204 = vmax.f32 %v2194, 0.0
        %v2205 = vmax.f32 %v2196, 0.0
        %v2206 = vpack.c.bf16 %v2202, %v2198
        %v2207 = vpack.c.bf16 %v2203, %v2199
        %v2208 = vpack.c.bf16 %v2204, %v2200
        %v2209 = vpack.c.bf16 %v2205, %v2201
        %v2210 = vld [vmem:[#allocation10] sm:$0xff]
        %v2211 = vld [vmem:[#allocation10 + $0x8] sm:$0xff]
        %v2212 = vld [vmem:[#allocation10 + $0x10] sm:$0xff]
        %v2213 = vld [vmem:[#allocation10 + $0x18] sm:$0xff]
        %v2214 = vld [vmem:[#allocation10 + $0x20] sm:$0xff]
        %v2215 = vld [vmem:[#allocation10 + $0x28] sm:$0xff]
        %v2216 = vld [vmem:[#allocation10 + $0x30] sm:$0xff]
        %v2217 = vld [vmem:[#allocation10 + $0x38] sm:$0xff]
        %v2218 = vld [vmem:[#allocation10 + $0x40] sm:$0xff]
        %v2219 = vld [vmem:[#allocation10 + $0x48] sm:$0xff]
        %v2220 = vld [vmem:[#allocation10 + $0x50] sm:$0xff]
        %v2221 = vld [vmem:[#allocation10 + $0x58] sm:$0xff]
        %v2222 = vld [vmem:[#allocation10 + $0x60] sm:$0xff]
        %v2223 = vld [vmem:[#allocation10 + $0x68] sm:$0xff]
        %v2224 = vld [vmem:[#allocation10 + $0x70] sm:$0xff]
        %v2225 = vld [vmem:[#allocation10 + $0x78] sm:$0xff]
        %v2226 = vld [vmem:[#allocation10 + $0x80] sm:$0xff]
        %v2227 = vld [vmem:[#allocation10 + $0x88] sm:$0xff]
        %v2228 = vld [vmem:[#allocation10 + $0x90] sm:$0xff]
        %v2229 = vld [vmem:[#allocation10 + $0x98] sm:$0xff]
        %v2230 = vld [vmem:[#allocation10 + $0xa0] sm:$0xff]
        %v2231 = vld [vmem:[#allocation10 + $0xa8] sm:$0xff]
        %v2232 = vld [vmem:[#allocation10 + $0xb0] sm:$0xff]
        %v2233 = vld [vmem:[#allocation10 + $0xb8] sm:$0xff]
        %v2234 = vld [vmem:[#allocation10 + $0xc0] sm:$0xff]
        %v2235 = vld [vmem:[#allocation10 + $0xc8] sm:$0xff]
        %v2236 = vld [vmem:[#allocation10 + $0xd0] sm:$0xff]
        %v2237 = vld [vmem:[#allocation10 + $0xd8] sm:$0xff]
        %v2238 = vld [vmem:[#allocation10 + $0xe0] sm:$0xff]
        %v2239 = vld [vmem:[#allocation10 + $0xe8] sm:$0xff]
        %v2240 = vld [vmem:[#allocation10 + $0xf0] sm:$0xff]
        %v2241 = vld [vmem:[#allocation10 + $0xf8] sm:$0xff]
        %v2242 = vld [vmem:[#allocation10 + $0x100] sm:$0xff]
        %v2243 = vld [vmem:[#allocation10 + $0x108] sm:$0xff]
        %v2244 = vld [vmem:[#allocation10 + $0x110] sm:$0xff]
        %v2245 = vld [vmem:[#allocation10 + $0x118] sm:$0xff]
        %v2246 = vld [vmem:[#allocation10 + $0x120] sm:$0xff]
        %v2247 = vld [vmem:[#allocation10 + $0x128] sm:$0xff]
        %v2248 = vld [vmem:[#allocation10 + $0x130] sm:$0xff]
        %v2249 = vld [vmem:[#allocation10 + $0x138] sm:$0xff]
        %v2250 = vld [vmem:[#allocation10 + $0x140] sm:$0xff]
        %v2251 = vld [vmem:[#allocation10 + $0x148] sm:$0xff]
        %v2252 = vld [vmem:[#allocation10 + $0x150] sm:$0xff]
        %v2253 = vld [vmem:[#allocation10 + $0x158] sm:$0xff]
        %v2254 = vld [vmem:[#allocation10 + $0x160] sm:$0xff]
        %v2255 = vld [vmem:[#allocation10 + $0x168] sm:$0xff]
        %v2256 = vld [vmem:[#allocation10 + $0x170] sm:$0xff]
        %v2257 = vld [vmem:[#allocation10 + $0x178] sm:$0xff]
        %v2258 = vld [vmem:[#allocation10 + $0x180] sm:$0xff]
        %v2259 = vld [vmem:[#allocation10 + $0x188] sm:$0xff]
        %v2260 = vld [vmem:[#allocation10 + $0x190] sm:$0xff]
        %v2261 = vld [vmem:[#allocation10 + $0x198] sm:$0xff]
        %v2262 = vld [vmem:[#allocation10 + $0x1a0] sm:$0xff]
        %v2263 = vld [vmem:[#allocation10 + $0x1a8] sm:$0xff]
        %v2264 = vld [vmem:[#allocation10 + $0x1b0] sm:$0xff]
        %v2265 = vld [vmem:[#allocation10 + $0x1b8] sm:$0xff]
        %v2266 = vld [vmem:[#allocation10 + $0x1c0] sm:$0xff]
        %v2267 = vld [vmem:[#allocation10 + $0x1c8] sm:$0xff]
        %v2268 = vld [vmem:[#allocation10 + $0x1d0] sm:$0xff]
        %v2269 = vld [vmem:[#allocation10 + $0x1d8] sm:$0xff]
        %v2270 = vld [vmem:[#allocation10 + $0x1e0] sm:$0xff]
        %v2271 = vld [vmem:[#allocation10 + $0x1e8] sm:$0xff]
        %v2272 = vld [vmem:[#allocation10 + $0x1f0] sm:$0xff]
        %v2273 = vld [vmem:[#allocation10 + $0x1f8] sm:$0xff]
        %v2274 = vld [vmem:[%s6] sm:$0x3]
        %v2276 = vlaneseq
        %v2277 = vshrl.u32 %v2276, 7
        %v2278 = vsub.s32 0, %v2277
        %v2279 = vrot.slane %v2274, %v2278
        %v2280 = vlaneseq
        %v2281 = vshrl.u32 %v2280, 7
        %v2282 = vsub.s32 1, %v2281
        %v2283 = vrot.slane %v2274, %v2282
        %v2350 = vunpack.c.l.b16 %v2210
        %v2351 = vunpack.c.h.b16 %v2210
        %v2352 = vunpack.c.l.b16 %v2211
        %v2353 = vunpack.c.h.b16 %v2211
        %v2354 = vunpack.c.l.b16 %v2212
        %v2355 = vunpack.c.h.b16 %v2212
        %v2356 = vunpack.c.l.b16 %v2213
        %v2357 = vunpack.c.h.b16 %v2213
        %v2358 = vunpack.c.l.b16 %v2214
        %v2359 = vunpack.c.h.b16 %v2214
        %v2360 = vunpack.c.l.b16 %v2215
        %v2361 = vunpack.c.h.b16 %v2215
        %v2362 = vunpack.c.l.b16 %v2216
        %v2363 = vunpack.c.h.b16 %v2216
        %v2364 = vunpack.c.l.b16 %v2217
        %v2365 = vunpack.c.h.b16 %v2217
        %v2366 = vunpack.c.l.b16 %v2218
        %v2367 = vunpack.c.h.b16 %v2218
        %v2368 = vunpack.c.l.b16 %v2219
        %v2369 = vunpack.c.h.b16 %v2219
        %v2370 = vunpack.c.l.b16 %v2220
        %v2371 = vunpack.c.h.b16 %v2220
        %v2372 = vunpack.c.l.b16 %v2221
        %v2373 = vunpack.c.h.b16 %v2221
        %v2374 = vunpack.c.l.b16 %v2222
        %v2375 = vunpack.c.h.b16 %v2222
        %v2376 = vunpack.c.l.b16 %v2223
        %v2377 = vunpack.c.h.b16 %v2223
        %v2378 = vunpack.c.l.b16 %v2224
        %v2379 = vunpack.c.h.b16 %v2224
        %v2380 = vunpack.c.l.b16 %v2225
        %v2381 = vunpack.c.h.b16 %v2225
        %v2382 = vunpack.c.l.b16 %v2226
        %v2383 = vunpack.c.h.b16 %v2226
        %v2384 = vunpack.c.l.b16 %v2227
        %v2385 = vunpack.c.h.b16 %v2227
        %v2386 = vunpack.c.l.b16 %v2228
        %v2387 = vunpack.c.h.b16 %v2228
        %v2388 = vunpack.c.l.b16 %v2229
        %v2389 = vunpack.c.h.b16 %v2229
        %v2390 = vunpack.c.l.b16 %v2230
        %v2391 = vunpack.c.h.b16 %v2230
        %v2392 = vunpack.c.l.b16 %v2231
        %v2393 = vunpack.c.h.b16 %v2231
        %v2394 = vunpack.c.l.b16 %v2232
        %v2395 = vunpack.c.h.b16 %v2232
        %v2396 = vunpack.c.l.b16 %v2233
        %v2397 = vunpack.c.h.b16 %v2233
        %v2398 = vunpack.c.l.b16 %v2234
        %v2399 = vunpack.c.h.b16 %v2234
        %v2400 = vunpack.c.l.b16 %v2235
        %v2401 = vunpack.c.h.b16 %v2235
        %v2402 = vunpack.c.l.b16 %v2236
        %v2403 = vunpack.c.h.b16 %v2236
        %v2404 = vunpack.c.l.b16 %v2237
        %v2405 = vunpack.c.h.b16 %v2237
        %v2406 = vunpack.c.l.b16 %v2238
        %v2407 = vunpack.c.h.b16 %v2238
        %v2408 = vunpack.c.l.b16 %v2239
        %v2409 = vunpack.c.h.b16 %v2239
        %v2410 = vunpack.c.l.b16 %v2240
        %v2411 = vunpack.c.h.b16 %v2240
        %v2412 = vunpack.c.l.b16 %v2241
        %v2413 = vunpack.c.h.b16 %v2241
        %v2414 = vunpack.c.l.b16 %v2242
        %v2415 = vunpack.c.h.b16 %v2242
        %v2416 = vunpack.c.l.b16 %v2243
        %v2417 = vunpack.c.h.b16 %v2243
        %v2418 = vunpack.c.l.b16 %v2244
        %v2419 = vunpack.c.h.b16 %v2244
        %v2420 = vunpack.c.l.b16 %v2245
        %v2421 = vunpack.c.h.b16 %v2245
        %v2422 = vunpack.c.l.b16 %v2246
        %v2423 = vunpack.c.h.b16 %v2246
        %v2424 = vunpack.c.l.b16 %v2247
        %v2425 = vunpack.c.h.b16 %v2247
        %v2426 = vunpack.c.l.b16 %v2248
        %v2427 = vunpack.c.h.b16 %v2248
        %v2428 = vunpack.c.l.b16 %v2249
        %v2429 = vunpack.c.h.b16 %v2249
        %v2430 = vunpack.c.l.b16 %v2250
        %v2431 = vunpack.c.h.b16 %v2250
        %v2432 = vunpack.c.l.b16 %v2251
        %v2433 = vunpack.c.h.b16 %v2251
        %v2434 = vunpack.c.l.b16 %v2252
        %v2435 = vunpack.c.h.b16 %v2252
        %v2436 = vunpack.c.l.b16 %v2253
        %v2437 = vunpack.c.h.b16 %v2253
        %v2438 = vunpack.c.l.b16 %v2254
        %v2439 = vunpack.c.h.b16 %v2254
        %v2440 = vunpack.c.l.b16 %v2255
        %v2441 = vunpack.c.h.b16 %v2255
        %v2442 = vunpack.c.l.b16 %v2256
        %v2443 = vunpack.c.h.b16 %v2256
        %v2444 = vunpack.c.l.b16 %v2257
        %v2445 = vunpack.c.h.b16 %v2257
        %v2446 = vunpack.c.l.b16 %v2258
        %v2447 = vunpack.c.h.b16 %v2258
        %v2448 = vunpack.c.l.b16 %v2259
        %v2449 = vunpack.c.h.b16 %v2259
        %v2450 = vunpack.c.l.b16 %v2260
        %v2451 = vunpack.c.h.b16 %v2260
        %v2452 = vunpack.c.l.b16 %v2261
        %v2453 = vunpack.c.h.b16 %v2261
        %v2454 = vunpack.c.l.b16 %v2262
        %v2455 = vunpack.c.h.b16 %v2262
        %v2456 = vunpack.c.l.b16 %v2263
        %v2457 = vunpack.c.h.b16 %v2263
        %v2458 = vunpack.c.l.b16 %v2264
        %v2459 = vunpack.c.h.b16 %v2264
        %v2460 = vunpack.c.l.b16 %v2265
        %v2461 = vunpack.c.h.b16 %v2265
        %v2462 = vunpack.c.l.b16 %v2266
        %v2463 = vunpack.c.h.b16 %v2266
        %v2464 = vunpack.c.l.b16 %v2267
        %v2465 = vunpack.c.h.b16 %v2267
        %v2466 = vunpack.c.l.b16 %v2268
        %v2467 = vunpack.c.h.b16 %v2268
        %v2468 = vunpack.c.l.b16 %v2269
        %v2469 = vunpack.c.h.b16 %v2269
        %v2470 = vunpack.c.l.b16 %v2270
        %v2471 = vunpack.c.h.b16 %v2270
        %v2472 = vunpack.c.l.b16 %v2271
        %v2473 = vunpack.c.h.b16 %v2271
        %v2474 = vunpack.c.l.b16 %v2272
        %v2475 = vunpack.c.h.b16 %v2272
        %v2476 = vunpack.c.l.b16 %v2273
        %v2477 = vunpack.c.h.b16 %v2273
        %v2478 = vpack.c.b16 %v2352, %v2350
        %v2479 = vpack.c.b16 %v2353, %v2351
        %v2480 = vpack.c.b16 %v2356, %v2354
        %v2481 = vpack.c.b16 %v2357, %v2355
        %v2482 = vpack.c.b16 %v2360, %v2358
        %v2483 = vpack.c.b16 %v2361, %v2359
        %v2484 = vpack.c.b16 %v2364, %v2362
        %v2485 = vpack.c.b16 %v2365, %v2363
        %v2486 = vpack.c.b16 %v2368, %v2366
        %v2487 = vpack.c.b16 %v2369, %v2367
        %v2488 = vpack.c.b16 %v2372, %v2370
        %v2489 = vpack.c.b16 %v2373, %v2371
        %v2490 = vpack.c.b16 %v2376, %v2374
        %v2491 = vpack.c.b16 %v2377, %v2375
        %v2492 = vpack.c.b16 %v2380, %v2378
        %v2493 = vpack.c.b16 %v2381, %v2379
        %v2494 = vpack.c.b16 %v2384, %v2382
        %v2495 = vpack.c.b16 %v2385, %v2383
        %v2496 = vpack.c.b16 %v2388, %v2386
        %v2497 = vpack.c.b16 %v2389, %v2387
        %v2498 = vpack.c.b16 %v2392, %v2390
        %v2499 = vpack.c.b16 %v2393, %v2391
        %v2500 = vpack.c.b16 %v2396, %v2394
        %v2501 = vpack.c.b16 %v2397, %v2395
        %v2502 = vpack.c.b16 %v2400, %v2398
        %v2503 = vpack.c.b16 %v2401, %v2399
        %v2504 = vpack.c.b16 %v2404, %v2402
        %v2505 = vpack.c.b16 %v2405, %v2403
        %v2506 = vpack.c.b16 %v2408, %v2406
        %v2507 = vpack.c.b16 %v2409, %v2407
        %v2508 = vpack.c.b16 %v2412, %v2410
        %v2509 = vpack.c.b16 %v2413, %v2411
        %v2510 = vpack.c.b16 %v2416, %v2414
        %v2511 = vpack.c.b16 %v2417, %v2415
        %v2512 = vpack.c.b16 %v2420, %v2418
        %v2513 = vpack.c.b16 %v2421, %v2419
        %v2514 = vpack.c.b16 %v2424, %v2422
        %v2515 = vpack.c.b16 %v2425, %v2423
        %v2516 = vpack.c.b16 %v2428, %v2426
        %v2517 = vpack.c.b16 %v2429, %v2427
        %v2518 = vpack.c.b16 %v2432, %v2430
        %v2519 = vpack.c.b16 %v2433, %v2431
        %v2520 = vpack.c.b16 %v2436, %v2434
        %v2521 = vpack.c.b16 %v2437, %v2435
        %v2522 = vpack.c.b16 %v2440, %v2438
        %v2523 = vpack.c.b16 %v2441, %v2439
        %v2524 = vpack.c.b16 %v2444, %v2442
        %v2525 = vpack.c.b16 %v2445, %v2443
        %v2526 = vpack.c.b16 %v2448, %v2446
        %v2527 = vpack.c.b16 %v2449, %v2447
        %v2528 = vpack.c.b16 %v2452, %v2450
        %v2529 = vpack.c.b16 %v2453, %v2451
        %v2530 = vpack.c.b16 %v2456, %v2454
        %v2531 = vpack.c.b16 %v2457, %v2455
        %v2532 = vpack.c.b16 %v2460, %v2458
        %v2533 = vpack.c.b16 %v2461, %v2459
        %v2534 = vpack.c.b16 %v2464, %v2462
        %v2535 = vpack.c.b16 %v2465, %v2463
        %v2536 = vpack.c.b16 %v2468, %v2466
        %v2537 = vpack.c.b16 %v2469, %v2467
        %v2538 = vpack.c.b16 %v2472, %v2470
        %v2539 = vpack.c.b16 %v2473, %v2471
        %v2540 = vpack.c.b16 %v2476, %v2474
        %v2541 = vpack.c.b16 %v2477, %v2475
        %2606 = vmatprep.subr.bf16.mxu0 %v2479
        %2607 = vmatpush1.bf16.msra.mxu0 %v2478
        %2608 = vmatprep.subr.bf16.mxu0 %v2481
        %2609 = vmatpush1.bf16.msra.mxu0 %v2480
        %2610 = vmatprep.subr.bf16.mxu0 %v2483
        %2611 = vmatpush1.bf16.msra.mxu0 %v2482
        %2612 = vmatprep.subr.bf16.mxu0 %v2485
        %2613 = vmatpush1.bf16.msra.mxu0 %v2484
        %2614 = vmatprep.subr.bf16.mxu0 %v2487
        %2615 = vmatpush1.bf16.msra.mxu0 %v2486
        %2616 = vmatprep.subr.bf16.mxu0 %v2489
        %2617 = vmatpush1.bf16.msra.mxu0 %v2488
        %2618 = vmatprep.subr.bf16.mxu0 %v2491
        %2619 = vmatpush1.bf16.msra.mxu0 %v2490
        %2620 = vmatprep.subr.bf16.mxu0 %v2493
        %2621 = vmatpush1.bf16.msra.mxu0 %v2492
        %2622 = vmatprep.subr.bf16.mxu0 %v2495
        %2623 = vmatpush1.bf16.msra.mxu0 %v2494
        %2624 = vmatprep.subr.bf16.mxu0 %v2497
        %2625 = vmatpush1.bf16.msra.mxu0 %v2496
        %2626 = vmatprep.subr.bf16.mxu0 %v2499
        %2627 = vmatpush1.bf16.msra.mxu0 %v2498
        %2628 = vmatprep.subr.bf16.mxu0 %v2501
        %2629 = vmatpush1.bf16.msra.mxu0 %v2500
        %2630 = vmatprep.subr.bf16.mxu0 %v2503
        %2631 = vmatpush1.bf16.msra.mxu0 %v2502
        %2632 = vmatprep.subr.bf16.mxu0 %v2505
        %2633 = vmatpush1.bf16.msra.mxu0 %v2504
        %2634 = vmatprep.subr.bf16.mxu0 %v2507
        %2635 = vmatpush1.bf16.msra.mxu0 %v2506
        %2636 = vmatprep.subr.bf16.mxu0 %v2509
        %2637 = vmatpush1.bf16.msra.mxu0 %v2508
        %2638 = vmatprep.mubr.bf16.mxu0 %v2207
        %2639 = vmatmul.mubr.bf16.gmra.mrb[0].mxu0 %v2206
        %v2640 = vpop.f32.mrb[0].mxu0
        %v2641 = vadd.f32 %v2279, %v2640
        %v2642 = vpop.f32.mrb[0].mxu0
        %v2643 = vadd.f32 %v2283, %v2642
        %v2644 = vpop.f32.mrb[0].mxu0
        %v2645 = vadd.f32 %v2279, %v2644
        %v2646 = vpop.f32.mrb[0].mxu0
        %v2647 = vadd.f32 %v2283, %v2646
        %2648 = vdwg.mxu0
        %2649 = vmatprep.subr.bf16.mxu0 %v2511
        %2650 = vmatpush1.bf16.msra.mxu0 %v2510
        %2651 = vmatprep.subr.bf16.mxu0 %v2513
        %2652 = vmatpush1.bf16.msra.mxu0 %v2512
        %2653 = vmatprep.subr.bf16.mxu0 %v2515
        %2654 = vmatpush1.bf16.msra.mxu0 %v2514
        %2655 = vmatprep.subr.bf16.mxu0 %v2517
        %2656 = vmatpush1.bf16.msra.mxu0 %v2516
        %2657 = vmatprep.subr.bf16.mxu0 %v2519
        %2658 = vmatpush1.bf16.msra.mxu0 %v2518
        %2659 = vmatprep.subr.bf16.mxu0 %v2521
        %2660 = vmatpush1.bf16.msra.mxu0 %v2520
        %2661 = vmatprep.subr.bf16.mxu0 %v2523
        %2662 = vmatpush1.bf16.msra.mxu0 %v2522
        %2663 = vmatprep.subr.bf16.mxu0 %v2525
        %2664 = vmatpush1.bf16.msra.mxu0 %v2524
        %2665 = vmatprep.subr.bf16.mxu0 %v2527
        %2666 = vmatpush1.bf16.msra.mxu0 %v2526
        %2667 = vmatprep.subr.bf16.mxu0 %v2529
        %2668 = vmatpush1.bf16.msra.mxu0 %v2528
        %2669 = vmatprep.subr.bf16.mxu0 %v2531
        %2670 = vmatpush1.bf16.msra.mxu0 %v2530
        %2671 = vmatprep.subr.bf16.mxu0 %v2533
        %2672 = vmatpush1.bf16.msra.mxu0 %v2532
        %2673 = vmatprep.subr.bf16.mxu0 %v2535
        %2674 = vmatpush1.bf16.msra.mxu0 %v2534
        %2675 = vmatprep.subr.bf16.mxu0 %v2537
        %2676 = vmatpush1.bf16.msra.mxu0 %v2536
        %2677 = vmatprep.subr.bf16.mxu0 %v2539
        %2678 = vmatpush1.bf16.msra.mxu0 %v2538
        %2679 = vmatprep.subr.bf16.mxu0 %v2541
        %2680 = vmatpush1.bf16.msra.mxu0 %v2540
        %2681 = vmatprep.mubr.bf16.mxu0 %v2209
        %2682 = vmatmul.mubr.bf16.gmra.mrb[0].mxu0 %v2208
        %v2683 = vpop.f32.mrb[0].mxu0
        %v2684 = vadd.f32 %v2641, %v2683
        %v2685 = vpop.f32.mrb[0].mxu0
        %v2686 = vadd.f32 %v2643, %v2685
        %v2687 = vpop.f32.mrb[0].mxu0
        %v2688 = vadd.f32 %v2645, %v2687
        %v2689 = vpop.f32.mrb[0].mxu0
        %v2690 = vadd.f32 %v2647, %v2689
        %2691 = vdwg.mxu0
        %v2692 = vmax.f32 %v2684, 0.0
        %v2693 = vmax.f32 %v2686, 0.0
        %v2694 = vmax.f32 %v2688, 0.0
        %v2695 = vmax.f32 %v2690, 0.0
        %v2696 = vpack.c.bf16 %v2694, %v2692
        %v2697 = vpack.c.bf16 %v2695, %v2693
        %v2698 = vld [vmem:[#allocation12] sm:$0xff]
        %v2699 = vld [vmem:[#allocation12 + $0x8] sm:$0xff]
        %v2700 = vld [vmem:[#allocation12 + $0x10] sm:$0xff]
        %v2701 = vld [vmem:[#allocation12 + $0x18] sm:$0xff]
        %v2702 = vld [vmem:[#allocation12 + $0x20] sm:$0xff]
        %v2703 = vld [vmem:[#allocation12 + $0x28] sm:$0xff]
        %v2704 = vld [vmem:[#allocation12 + $0x30] sm:$0xff]
        %v2705 = vld [vmem:[#allocation12 + $0x38] sm:$0xff]
        %v2706 = vld [vmem:[#allocation12 + $0x40] sm:$0xff]
        %v2707 = vld [vmem:[#allocation12 + $0x48] sm:$0xff]
        %v2708 = vld [vmem:[#allocation12 + $0x50] sm:$0xff]
        %v2709 = vld [vmem:[#allocation12 + $0x58] sm:$0xff]
        %v2710 = vld [vmem:[#allocation12 + $0x60] sm:$0xff]
        %v2711 = vld [vmem:[#allocation12 + $0x68] sm:$0xff]
        %v2712 = vld [vmem:[#allocation12 + $0x70] sm:$0xff]
        %v2713 = vld [vmem:[#allocation12 + $0x78] sm:$0xff]
        %v2714 = vld [vmem:[#allocation12 + $0x80] sm:$0xff]
        %v2715 = vld [vmem:[#allocation12 + $0x88] sm:$0xff]
        %v2716 = vld [vmem:[#allocation12 + $0x90] sm:$0xff]
        %v2717 = vld [vmem:[#allocation12 + $0x98] sm:$0xff]
        %v2718 = vld [vmem:[#allocation12 + $0xa0] sm:$0xff]
        %v2719 = vld [vmem:[#allocation12 + $0xa8] sm:$0xff]
        %v2720 = vld [vmem:[#allocation12 + $0xb0] sm:$0xff]
        %v2721 = vld [vmem:[#allocation12 + $0xb8] sm:$0xff]
        %v2722 = vld [vmem:[#allocation12 + $0xc0] sm:$0xff]
        %v2723 = vld [vmem:[#allocation12 + $0xc8] sm:$0xff]
        %v2724 = vld [vmem:[#allocation12 + $0xd0] sm:$0xff]
        %v2725 = vld [vmem:[#allocation12 + $0xd8] sm:$0xff]
        %v2726 = vld [vmem:[#allocation12 + $0xe0] sm:$0xff]
        %v2727 = vld [vmem:[#allocation12 + $0xe8] sm:$0xff]
        %v2728 = vld [vmem:[#allocation12 + $0xf0] sm:$0xff]
        %v2729 = vld [vmem:[#allocation12 + $0xf8] sm:$0xff]
        %v2730 = vld [vmem:[#allocation12 + $0x100] sm:$0xff]
        %v2731 = vld [vmem:[#allocation12 + $0x108] sm:$0xff]
        %v2732 = vld [vmem:[#allocation12 + $0x110] sm:$0xff]
        %v2733 = vld [vmem:[#allocation12 + $0x118] sm:$0xff]
        %v2734 = vld [vmem:[#allocation12 + $0x120] sm:$0xff]
        %v2735 = vld [vmem:[#allocation12 + $0x128] sm:$0xff]
        %v2736 = vld [vmem:[#allocation12 + $0x130] sm:$0xff]
        %v2737 = vld [vmem:[#allocation12 + $0x138] sm:$0xff]
        %v2738 = vld [vmem:[#allocation12 + $0x140] sm:$0xff]
        %v2739 = vld [vmem:[#allocation12 + $0x148] sm:$0xff]
        %v2740 = vld [vmem:[#allocation12 + $0x150] sm:$0xff]
        %v2741 = vld [vmem:[#allocation12 + $0x158] sm:$0xff]
        %v2742 = vld [vmem:[#allocation12 + $0x160] sm:$0xff]
        %v2743 = vld [vmem:[#allocation12 + $0x168] sm:$0xff]
        %v2744 = vld [vmem:[#allocation12 + $0x170] sm:$0xff]
        %v2745 = vld [vmem:[#allocation12 + $0x178] sm:$0xff]
        %v2746 = vld [vmem:[#allocation12 + $0x180] sm:$0xff]
        %v2747 = vld [vmem:[#allocation12 + $0x188] sm:$0xff]
        %v2748 = vld [vmem:[#allocation12 + $0x190] sm:$0xff]
        %v2749 = vld [vmem:[#allocation12 + $0x198] sm:$0xff]
        %v2750 = vld [vmem:[#allocation12 + $0x1a0] sm:$0xff]
        %v2751 = vld [vmem:[#allocation12 + $0x1a8] sm:$0xff]
        %v2752 = vld [vmem:[#allocation12 + $0x1b0] sm:$0xff]
        %v2753 = vld [vmem:[#allocation12 + $0x1b8] sm:$0xff]
        %v2754 = vld [vmem:[#allocation12 + $0x1c0] sm:$0xff]
        %v2755 = vld [vmem:[#allocation12 + $0x1c8] sm:$0xff]
        %v2756 = vld [vmem:[#allocation12 + $0x1d0] sm:$0xff]
        %v2757 = vld [vmem:[#allocation12 + $0x1d8] sm:$0xff]
        %v2758 = vld [vmem:[#allocation12 + $0x1e0] sm:$0xff]
        %v2759 = vld [vmem:[#allocation12 + $0x1e8] sm:$0xff]
        %v2760 = vld [vmem:[#allocation12 + $0x1f0] sm:$0xff]
        %v2761 = vld [vmem:[#allocation12 + $0x1f8] sm:$0xff]
        %v2762 = vld [vmem:[#allocation12 + $0x200] sm:$0xff]
        %v2763 = vld [vmem:[#allocation12 + $0x208] sm:$0xff]
        %v2764 = vld [vmem:[#allocation12 + $0x210] sm:$0xff]
        %v2765 = vld [vmem:[#allocation12 + $0x218] sm:$0xff]
        %v2766 = vld [vmem:[#allocation12 + $0x220] sm:$0xff]
        %v2767 = vld [vmem:[#allocation12 + $0x228] sm:$0xff]
        %v2768 = vld [vmem:[#allocation12 + $0x230] sm:$0xff]
        %v2769 = vld [vmem:[#allocation12 + $0x238] sm:$0xff]
        %v2770 = vld [vmem:[#allocation12 + $0x240] sm:$0xff]
        %v2771 = vld [vmem:[#allocation12 + $0x248] sm:$0xff]
        %v2772 = vld [vmem:[#allocation12 + $0x250] sm:$0xff]
        %v2773 = vld [vmem:[#allocation12 + $0x258] sm:$0xff]
        %v2774 = vld [vmem:[#allocation12 + $0x260] sm:$0xff]
        %v2775 = vld [vmem:[#allocation12 + $0x268] sm:$0xff]
        %v2776 = vld [vmem:[#allocation12 + $0x270] sm:$0xff]
        %v2777 = vld [vmem:[#allocation12 + $0x278] sm:$0xff]
        %v2778 = vld [vmem:[#allocation12 + $0x280] sm:$0xff]
        %v2779 = vld [vmem:[#allocation12 + $0x288] sm:$0xff]
        %v2780 = vld [vmem:[#allocation12 + $0x290] sm:$0xff]
        %v2781 = vld [vmem:[#allocation12 + $0x298] sm:$0xff]
        %v2782 = vld [vmem:[#allocation12 + $0x2a0] sm:$0xff]
        %v2783 = vld [vmem:[#allocation12 + $0x2a8] sm:$0xff]
        %v2784 = vld [vmem:[#allocation12 + $0x2b0] sm:$0xff]
        %v2785 = vld [vmem:[#allocation12 + $0x2b8] sm:$0xff]
        %v2786 = vld [vmem:[#allocation12 + $0x2c0] sm:$0xff]
        %v2787 = vld [vmem:[#allocation12 + $0x2c8] sm:$0xff]
        %v2788 = vld [vmem:[#allocation12 + $0x2d0] sm:$0xff]
        %v2789 = vld [vmem:[#allocation12 + $0x2d8] sm:$0xff]
        %v2790 = vld [vmem:[#allocation12 + $0x2e0] sm:$0xff]
        %v2791 = vld [vmem:[#allocation12 + $0x2e8] sm:$0xff]
        %v2792 = vld [vmem:[#allocation12 + $0x2f0] sm:$0xff]
        %v2793 = vld [vmem:[#allocation12 + $0x2f8] sm:$0xff]
        %v2794 = vld [vmem:[%s8] sm:$0x3f]
        %v2796 = vlaneseq
        %v2797 = vshrl.u32 %v2796, 7
        %v2798 = vsub.s32 0, %v2797
        %v2799 = vrot.slane %v2794, %v2798
        %v2800 = vlaneseq
        %v2801 = vshrl.u32 %v2800, 7
        %v2802 = vsub.s32 1, %v2801
        %v2803 = vrot.slane %v2794, %v2802
        %v2804 = vlaneseq
        %v2805 = vshrl.u32 %v2804, 7
        %v2806 = vsub.s32 2, %v2805
        %v2807 = vrot.slane %v2794, %v2806
        %v2808 = vlaneseq
        %v2809 = vshrl.u32 %v2808, 7
        %v2810 = vsub.s32 3, %v2809
        %v2811 = vrot.slane %v2794, %v2810
        %v2812 = vlaneseq
        %v2813 = vshrl.u32 %v2812, 7
        %v2814 = vsub.s32 4, %v2813
        %v2815 = vrot.slane %v2794, %v2814
        %v2816 = vlaneseq
        %v2817 = vshrl.u32 %v2816, 7
        %v2818 = vsub.s32 5, %v2817
        %v2819 = vrot.slane %v2794, %v2818
        %v2922 = vunpack.c.l.b16 %v2698
        %v2923 = vunpack.c.h.b16 %v2698
        %v2924 = vunpack.c.l.b16 %v2699
        %v2925 = vunpack.c.h.b16 %v2699
        %v2926 = vunpack.c.l.b16 %v2700
        %v2927 = vunpack.c.h.b16 %v2700
        %v2928 = vunpack.c.l.b16 %v2701
        %v2929 = vunpack.c.h.b16 %v2701
        %v2930 = vunpack.c.l.b16 %v2702
        %v2931 = vunpack.c.h.b16 %v2702
        %v2932 = vunpack.c.l.b16 %v2703
        %v2933 = vunpack.c.h.b16 %v2703
        %v2934 = vunpack.c.l.b16 %v2704
        %v2935 = vunpack.c.h.b16 %v2704
        %v2936 = vunpack.c.l.b16 %v2705
        %v2937 = vunpack.c.h.b16 %v2705
        %v2938 = vunpack.c.l.b16 %v2706
        %v2939 = vunpack.c.h.b16 %v2706
        %v2940 = vunpack.c.l.b16 %v2707
        %v2941 = vunpack.c.h.b16 %v2707
        %v2942 = vunpack.c.l.b16 %v2708
        %v2943 = vunpack.c.h.b16 %v2708
        %v2944 = vunpack.c.l.b16 %v2709
        %v2945 = vunpack.c.h.b16 %v2709
        %v2946 = vunpack.c.l.b16 %v2710
        %v2947 = vunpack.c.h.b16 %v2710
        %v2948 = vunpack.c.l.b16 %v2711
        %v2949 = vunpack.c.h.b16 %v2711
        %v2950 = vunpack.c.l.b16 %v2712
        %v2951 = vunpack.c.h.b16 %v2712
        %v2952 = vunpack.c.l.b16 %v2713
        %v2953 = vunpack.c.h.b16 %v2713
        %v2954 = vunpack.c.l.b16 %v2714
        %v2955 = vunpack.c.h.b16 %v2714
        %v2956 = vunpack.c.l.b16 %v2715
        %v2957 = vunpack.c.h.b16 %v2715
        %v2958 = vunpack.c.l.b16 %v2716
        %v2959 = vunpack.c.h.b16 %v2716
        %v2960 = vunpack.c.l.b16 %v2717
        %v2961 = vunpack.c.h.b16 %v2717
        %v2962 = vunpack.c.l.b16 %v2718
        %v2963 = vunpack.c.h.b16 %v2718
        %v2964 = vunpack.c.l.b16 %v2719
        %v2965 = vunpack.c.h.b16 %v2719
        %v2966 = vunpack.c.l.b16 %v2720
        %v2967 = vunpack.c.h.b16 %v2720
        %v2968 = vunpack.c.l.b16 %v2721
        %v2969 = vunpack.c.h.b16 %v2721
        %v2970 = vunpack.c.l.b16 %v2722
        %v2971 = vunpack.c.h.b16 %v2722
        %v2972 = vunpack.c.l.b16 %v2723
        %v2973 = vunpack.c.h.b16 %v2723
        %v2974 = vunpack.c.l.b16 %v2724
        %v2975 = vunpack.c.h.b16 %v2724
        %v2976 = vunpack.c.l.b16 %v2725
        %v2977 = vunpack.c.h.b16 %v2725
        %v2978 = vunpack.c.l.b16 %v2726
        %v2979 = vunpack.c.h.b16 %v2726
        %v2980 = vunpack.c.l.b16 %v2727
        %v2981 = vunpack.c.h.b16 %v2727
        %v2982 = vunpack.c.l.b16 %v2728
        %v2983 = vunpack.c.h.b16 %v2728
        %v2984 = vunpack.c.l.b16 %v2729
        %v2985 = vunpack.c.h.b16 %v2729
        %v2986 = vunpack.c.l.b16 %v2730
        %v2987 = vunpack.c.h.b16 %v2730
        %v2988 = vunpack.c.l.b16 %v2731
        %v2989 = vunpack.c.h.b16 %v2731
        %v2990 = vunpack.c.l.b16 %v2732
        %v2991 = vunpack.c.h.b16 %v2732
        %v2992 = vunpack.c.l.b16 %v2733
        %v2993 = vunpack.c.h.b16 %v2733
        %v2994 = vunpack.c.l.b16 %v2734
        %v2995 = vunpack.c.h.b16 %v2734
        %v2996 = vunpack.c.l.b16 %v2735
        %v2997 = vunpack.c.h.b16 %v2735
        %v2998 = vunpack.c.l.b16 %v2736
        %v2999 = vunpack.c.h.b16 %v2736
        %v3000 = vunpack.c.l.b16 %v2737
        %v3001 = vunpack.c.h.b16 %v2737
        %v3002 = vunpack.c.l.b16 %v2738
        %v3003 = vunpack.c.h.b16 %v2738
        %v3004 = vunpack.c.l.b16 %v2739
        %v3005 = vunpack.c.h.b16 %v2739
        %v3006 = vunpack.c.l.b16 %v2740
        %v3007 = vunpack.c.h.b16 %v2740
        %v3008 = vunpack.c.l.b16 %v2741
        %v3009 = vunpack.c.h.b16 %v2741
        %v3010 = vunpack.c.l.b16 %v2742
        %v3011 = vunpack.c.h.b16 %v2742
        %v3012 = vunpack.c.l.b16 %v2743
        %v3013 = vunpack.c.h.b16 %v2743
        %v3014 = vunpack.c.l.b16 %v2744
        %v3015 = vunpack.c.h.b16 %v2744
        %v3016 = vunpack.c.l.b16 %v2745
        %v3017 = vunpack.c.h.b16 %v2745
        %v3018 = vunpack.c.l.b16 %v2746
        %v3019 = vunpack.c.h.b16 %v2746
        %v3020 = vunpack.c.l.b16 %v2747
        %v3021 = vunpack.c.h.b16 %v2747
        %v3022 = vunpack.c.l.b16 %v2748
        %v3023 = vunpack.c.h.b16 %v2748
        %v3024 = vunpack.c.l.b16 %v2749
        %v3025 = vunpack.c.h.b16 %v2749
        %v3026 = vunpack.c.l.b16 %v2750
        %v3027 = vunpack.c.h.b16 %v2750
        %v3028 = vunpack.c.l.b16 %v2751
        %v3029 = vunpack.c.h.b16 %v2751
        %v3030 = vunpack.c.l.b16 %v2752
        %v3031 = vunpack.c.h.b16 %v2752
        %v3032 = vunpack.c.l.b16 %v2753
        %v3033 = vunpack.c.h.b16 %v2753
        %v3034 = vunpack.c.l.b16 %v2754
        %v3035 = vunpack.c.h.b16 %v2754
        %v3036 = vunpack.c.l.b16 %v2755
        %v3037 = vunpack.c.h.b16 %v2755
        %v3038 = vunpack.c.l.b16 %v2756
        %v3039 = vunpack.c.h.b16 %v2756
        %v3040 = vunpack.c.l.b16 %v2757
        %v3041 = vunpack.c.h.b16 %v2757
        %v3042 = vunpack.c.l.b16 %v2758
        %v3043 = vunpack.c.h.b16 %v2758
        %v3044 = vunpack.c.l.b16 %v2759
        %v3045 = vunpack.c.h.b16 %v2759
        %v3046 = vunpack.c.l.b16 %v2760
        %v3047 = vunpack.c.h.b16 %v2760
        %v3048 = vunpack.c.l.b16 %v2761
        %v3049 = vunpack.c.h.b16 %v2761
        %v3050 = vunpack.c.l.b16 %v2762
        %v3051 = vunpack.c.h.b16 %v2762
        %v3052 = vunpack.c.l.b16 %v2763
        %v3053 = vunpack.c.h.b16 %v2763
        %v3054 = vunpack.c.l.b16 %v2764
        %v3055 = vunpack.c.h.b16 %v2764
        %v3056 = vunpack.c.l.b16 %v2765
        %v3057 = vunpack.c.h.b16 %v2765
        %v3058 = vunpack.c.l.b16 %v2766
        %v3059 = vunpack.c.h.b16 %v2766
        %v3060 = vunpack.c.l.b16 %v2767
        %v3061 = vunpack.c.h.b16 %v2767
        %v3062 = vunpack.c.l.b16 %v2768
        %v3063 = vunpack.c.h.b16 %v2768
        %v3064 = vunpack.c.l.b16 %v2769
        %v3065 = vunpack.c.h.b16 %v2769
        %v3066 = vunpack.c.l.b16 %v2770
        %v3067 = vunpack.c.h.b16 %v2770
        %v3068 = vunpack.c.l.b16 %v2771
        %v3069 = vunpack.c.h.b16 %v2771
        %v3070 = vunpack.c.l.b16 %v2772
        %v3071 = vunpack.c.h.b16 %v2772
        %v3072 = vunpack.c.l.b16 %v2773
        %v3073 = vunpack.c.h.b16 %v2773
        %v3074 = vunpack.c.l.b16 %v2774
        %v3075 = vunpack.c.h.b16 %v2774
        %v3076 = vunpack.c.l.b16 %v2775
        %v3077 = vunpack.c.h.b16 %v2775
        %v3078 = vunpack.c.l.b16 %v2776
        %v3079 = vunpack.c.h.b16 %v2776
        %v3080 = vunpack.c.l.b16 %v2777
        %v3081 = vunpack.c.h.b16 %v2777
        %v3082 = vunpack.c.l.b16 %v2778
        %v3083 = vunpack.c.h.b16 %v2778
        %v3084 = vunpack.c.l.b16 %v2779
        %v3085 = vunpack.c.h.b16 %v2779
        %v3086 = vunpack.c.l.b16 %v2780
        %v3087 = vunpack.c.h.b16 %v2780
        %v3088 = vunpack.c.l.b16 %v2781
        %v3089 = vunpack.c.h.b16 %v2781
        %v3090 = vunpack.c.l.b16 %v2782
        %v3091 = vunpack.c.h.b16 %v2782
        %v3092 = vunpack.c.l.b16 %v2783
        %v3093 = vunpack.c.h.b16 %v2783
        %v3094 = vunpack.c.l.b16 %v2784
        %v3095 = vunpack.c.h.b16 %v2784
        %v3096 = vunpack.c.l.b16 %v2785
        %v3097 = vunpack.c.h.b16 %v2785
        %v3098 = vunpack.c.l.b16 %v2786
        %v3099 = vunpack.c.h.b16 %v2786
        %v3100 = vunpack.c.l.b16 %v2787
        %v3101 = vunpack.c.h.b16 %v2787
        %v3102 = vunpack.c.l.b16 %v2788
        %v3103 = vunpack.c.h.b16 %v2788
        %v3104 = vunpack.c.l.b16 %v2789
        %v3105 = vunpack.c.h.b16 %v2789
        %v3106 = vunpack.c.l.b16 %v2790
        %v3107 = vunpack.c.h.b16 %v2790
        %v3108 = vunpack.c.l.b16 %v2791
        %v3109 = vunpack.c.h.b16 %v2791
        %v3110 = vunpack.c.l.b16 %v2792
        %v3111 = vunpack.c.h.b16 %v2792
        %v3112 = vunpack.c.l.b16 %v2793
        %v3113 = vunpack.c.h.b16 %v2793
        %v3114 = vpack.c.b16 %v2928, %v2922
        %v3115 = vpack.c.b16 %v2929, %v2923
        %v3116 = vpack.c.b16 %v2930, %v2924
        %v3117 = vpack.c.b16 %v2931, %v2925
        %v3118 = vpack.c.b16 %v2932, %v2926
        %v3119 = vpack.c.b16 %v2933, %v2927
        %v3120 = vpack.c.b16 %v2940, %v2934
        %v3121 = vpack.c.b16 %v2941, %v2935
        %v3122 = vpack.c.b16 %v2942, %v2936
        %v3123 = vpack.c.b16 %v2943, %v2937
        %v3124 = vpack.c.b16 %v2944, %v2938
        %v3125 = vpack.c.b16 %v2945, %v2939
        %v3126 = vpack.c.b16 %v2952, %v2946
        %v3127 = vpack.c.b16 %v2953, %v2947
        %v3128 = vpack.c.b16 %v2954, %v2948
        %v3129 = vpack.c.b16 %v2955, %v2949
        %v3130 = vpack.c.b16 %v2956, %v2950
        %v3131 = vpack.c.b16 %v2957, %v2951
        %v3132 = vpack.c.b16 %v2964, %v2958
        %v3133 = vpack.c.b16 %v2965, %v2959
        %v3134 = vpack.c.b16 %v2966, %v2960
        %v3135 = vpack.c.b16 %v2967, %v2961
        %v3136 = vpack.c.b16 %v2968, %v2962
        %v3137 = vpack.c.b16 %v2969, %v2963
        %v3138 = vpack.c.b16 %v2976, %v2970
        %v3139 = vpack.c.b16 %v2977, %v2971
        %v3140 = vpack.c.b16 %v2978, %v2972
        %v3141 = vpack.c.b16 %v2979, %v2973
        %v3142 = vpack.c.b16 %v2980, %v2974
        %v3143 = vpack.c.b16 %v2981, %v2975
        %v3144 = vpack.c.b16 %v2988, %v2982
        %v3145 = vpack.c.b16 %v2989, %v2983
        %v3146 = vpack.c.b16 %v2990, %v2984
        %v3147 = vpack.c.b16 %v2991, %v2985
        %v3148 = vpack.c.b16 %v2992, %v2986
        %v3149 = vpack.c.b16 %v2993, %v2987
        %v3150 = vpack.c.b16 %v3000, %v2994
        %v3151 = vpack.c.b16 %v3001, %v2995
        %v3152 = vpack.c.b16 %v3002, %v2996
        %v3153 = vpack.c.b16 %v3003, %v2997
        %v3154 = vpack.c.b16 %v3004, %v2998
        %v3155 = vpack.c.b16 %v3005, %v2999
        %v3156 = vpack.c.b16 %v3012, %v3006
        %v3157 = vpack.c.b16 %v3013, %v3007
        %v3158 = vpack.c.b16 %v3014, %v3008
        %v3159 = vpack.c.b16 %v3015, %v3009
        %v3160 = vpack.c.b16 %v3016, %v3010
        %v3161 = vpack.c.b16 %v3017, %v3011
        %v3162 = vpack.c.b16 %v3024, %v3018
        %v3163 = vpack.c.b16 %v3025, %v3019
        %v3164 = vpack.c.b16 %v3026, %v3020
        %v3165 = vpack.c.b16 %v3027, %v3021
        %v3166 = vpack.c.b16 %v3028, %v3022
        %v3167 = vpack.c.b16 %v3029, %v3023
        %v3168 = vpack.c.b16 %v3036, %v3030
        %v3169 = vpack.c.b16 %v3037, %v3031
        %v3170 = vpack.c.b16 %v3038, %v3032
        %v3171 = vpack.c.b16 %v3039, %v3033
        %v3172 = vpack.c.b16 %v3040, %v3034
        %v3173 = vpack.c.b16 %v3041, %v3035
        %v3174 = vpack.c.b16 %v3048, %v3042
        %v3175 = vpack.c.b16 %v3049, %v3043
        %v3176 = vpack.c.b16 %v3050, %v3044
        %v3177 = vpack.c.b16 %v3051, %v3045
        %v3178 = vpack.c.b16 %v3052, %v3046
        %v3179 = vpack.c.b16 %v3053, %v3047
        %v3180 = vpack.c.b16 %v3060, %v3054
        %v3181 = vpack.c.b16 %v3061, %v3055
        %v3182 = vpack.c.b16 %v3062, %v3056
        %v3183 = vpack.c.b16 %v3063, %v3057
        %v3184 = vpack.c.b16 %v3064, %v3058
        %v3185 = vpack.c.b16 %v3065, %v3059
        %v3186 = vpack.c.b16 %v3072, %v3066
        %v3187 = vpack.c.b16 %v3073, %v3067
        %v3188 = vpack.c.b16 %v3074, %v3068
        %v3189 = vpack.c.b16 %v3075, %v3069
        %v3190 = vpack.c.b16 %v3076, %v3070
        %v3191 = vpack.c.b16 %v3077, %v3071
        %v3192 = vpack.c.b16 %v3084, %v3078
        %v3193 = vpack.c.b16 %v3085, %v3079
        %v3194 = vpack.c.b16 %v3086, %v3080
        %v3195 = vpack.c.b16 %v3087, %v3081
        %v3196 = vpack.c.b16 %v3088, %v3082
        %v3197 = vpack.c.b16 %v3089, %v3083
        %v3198 = vpack.c.b16 %v3096, %v3090
        %v3199 = vpack.c.b16 %v3097, %v3091
        %v3200 = vpack.c.b16 %v3098, %v3092
        %v3201 = vpack.c.b16 %v3099, %v3093
        %v3202 = vpack.c.b16 %v3100, %v3094
        %v3203 = vpack.c.b16 %v3101, %v3095
        %v3204 = vpack.c.b16 %v3108, %v3102
        %v3205 = vpack.c.b16 %v3109, %v3103
        %v3206 = vpack.c.b16 %v3110, %v3104
        %v3207 = vpack.c.b16 %v3111, %v3105
        %v3208 = vpack.c.b16 %v3112, %v3106
        %v3209 = vpack.c.b16 %v3113, %v3107
        %3306 = vmatprep.subr.bf16.mxu0 %v3115
        %3307 = vmatpush1.bf16.msra.mxu0 %v3114
        %3308 = vmatprep.subr.bf16.mxu0 %v3121
        %3309 = vmatpush1.bf16.msra.mxu0 %v3120
        %3310 = vmatprep.subr.bf16.mxu0 %v3127
        %3311 = vmatpush1.bf16.msra.mxu0 %v3126
        %3312 = vmatprep.subr.bf16.mxu0 %v3133
        %3313 = vmatpush1.bf16.msra.mxu0 %v3132
        %3314 = vmatprep.subr.bf16.mxu0 %v3139
        %3315 = vmatpush1.bf16.msra.mxu0 %v3138
        %3316 = vmatprep.subr.bf16.mxu0 %v3145
        %3317 = vmatpush1.bf16.msra.mxu0 %v3144
        %3318 = vmatprep.subr.bf16.mxu0 %v3151
        %3319 = vmatpush1.bf16.msra.mxu0 %v3150
        %3320 = vmatprep.subr.bf16.mxu0 %v3157
        %3321 = vmatpush1.bf16.msra.mxu0 %v3156
        %3322 = vmatprep.subr.bf16.mxu0 %v3163
        %3323 = vmatpush1.bf16.msra.mxu0 %v3162
        %3324 = vmatprep.subr.bf16.mxu0 %v3169
        %3325 = vmatpush1.bf16.msra.mxu0 %v3168
        %3326 = vmatprep.subr.bf16.mxu0 %v3175
        %3327 = vmatpush1.bf16.msra.mxu0 %v3174
        %3328 = vmatprep.subr.bf16.mxu0 %v3181
        %3329 = vmatpush1.bf16.msra.mxu0 %v3180
        %3330 = vmatprep.subr.bf16.mxu0 %v3187
        %3331 = vmatpush1.bf16.msra.mxu0 %v3186
        %3332 = vmatprep.subr.bf16.mxu0 %v3193
        %3333 = vmatpush1.bf16.msra.mxu0 %v3192
        %3334 = vmatprep.subr.bf16.mxu0 %v3199
        %3335 = vmatpush1.bf16.msra.mxu0 %v3198
        %3336 = vmatprep.subr.bf16.mxu0 %v3205
        %3337 = vmatpush1.bf16.msra.mxu0 %v3204
        %3338 = vmatprep.mubr.bf16.mxu0 %v2697
        %3339 = vmatmul.mubr.bf16.gmra.mrb[0].mxu0 %v2696
        %v3340 = vpop.f32.mrb[0].mxu0
        %v3341 = vadd.f32 %v2799, %v3340
        %v3342 = vpop.f32.mrb[0].mxu0
        %v3343 = vadd.f32 %v2803, %v3342
        %v3344 = vpop.f32.mrb[0].mxu0
        %v3345 = vadd.f32 %v2799, %v3344
        %v3346 = vpop.f32.mrb[0].mxu0
        %v3347 = vadd.f32 %v2803, %v3346
        %3348 = vdwg.mxu0
        %3349 = vmatprep.subr.bf16.mxu0 %v3117
        %3350 = vmatpush1.bf16.msra.mxu0 %v3116
        %3351 = vmatprep.subr.bf16.mxu0 %v3123
        %3352 = vmatpush1.bf16.msra.mxu0 %v3122
        %3353 = vmatprep.subr.bf16.mxu0 %v3129
        %3354 = vmatpush1.bf16.msra.mxu0 %v3128
        %3355 = vmatprep.subr.bf16.mxu0 %v3135
        %3356 = vmatpush1.bf16.msra.mxu0 %v3134
        %3357 = vmatprep.subr.bf16.mxu0 %v3141
        %3358 = vmatpush1.bf16.msra.mxu0 %v3140
        %3359 = vmatprep.subr.bf16.mxu0 %v3147
        %3360 = vmatpush1.bf16.msra.mxu0 %v3146
        %3361 = vmatprep.subr.bf16.mxu0 %v3153
        %3362 = vmatpush1.bf16.msra.mxu0 %v3152
        %3363 = vmatprep.subr.bf16.mxu0 %v3159
        %3364 = vmatpush1.bf16.msra.mxu0 %v3158
        %3365 = vmatprep.subr.bf16.mxu0 %v3165
        %3366 = vmatpush1.bf16.msra.mxu0 %v3164
        %3367 = vmatprep.subr.bf16.mxu0 %v3171
        %3368 = vmatpush1.bf16.msra.mxu0 %v3170
        %3369 = vmatprep.subr.bf16.mxu0 %v3177
        %3370 = vmatpush1.bf16.msra.mxu0 %v3176
        %3371 = vmatprep.subr.bf16.mxu0 %v3183
        %3372 = vmatpush1.bf16.msra.mxu0 %v3182
        %3373 = vmatprep.subr.bf16.mxu0 %v3189
        %3374 = vmatpush1.bf16.msra.mxu0 %v3188
        %3375 = vmatprep.subr.bf16.mxu0 %v3195
        %3376 = vmatpush1.bf16.msra.mxu0 %v3194
        %3377 = vmatprep.subr.bf16.mxu0 %v3201
        %3378 = vmatpush1.bf16.msra.mxu0 %v3200
        %3379 = vmatprep.subr.bf16.mxu0 %v3207
        %3380 = vmatpush1.bf16.msra.mxu0 %v3206
        %3381 = vmatprep.mubr.bf16.mxu0 %v2697
        %3382 = vmatmul.mubr.bf16.gmra.mrb[0].mxu0 %v2696
        %v3383 = vpop.f32.mrb[0].mxu0
        %v3384 = vadd.f32 %v2807, %v3383
        %v3385 = vpop.f32.mrb[0].mxu0
        %v3386 = vadd.f32 %v2811, %v3385
        %v3387 = vpop.f32.mrb[0].mxu0
        %v3388 = vadd.f32 %v2807, %v3387
        %v3389 = vpop.f32.mrb[0].mxu0
        %v3390 = vadd.f32 %v2811, %v3389
        %3391 = vdwg.mxu0
        %3392 = vmatprep.subr.bf16.mxu0 %v3119
        %3393 = vmatpush1.bf16.msra.mxu0 %v3118
        %3394 = vmatprep.subr.bf16.mxu0 %v3125
        %3395 = vmatpush1.bf16.msra.mxu0 %v3124
        %3396 = vmatprep.subr.bf16.mxu0 %v3131
        %3397 = vmatpush1.bf16.msra.mxu0 %v3130
        %3398 = vmatprep.subr.bf16.mxu0 %v3137
        %3399 = vmatpush1.bf16.msra.mxu0 %v3136
        %3400 = vmatprep.subr.bf16.mxu0 %v3143
        %3401 = vmatpush1.bf16.msra.mxu0 %v3142
        %3402 = vmatprep.subr.bf16.mxu0 %v3149
        %3403 = vmatpush1.bf16.msra.mxu0 %v3148
        %3404 = vmatprep.subr.bf16.mxu0 %v3155
        %3405 = vmatpush1.bf16.msra.mxu0 %v3154
        %3406 = vmatprep.subr.bf16.mxu0 %v3161
        %3407 = vmatpush1.bf16.msra.mxu0 %v3160
        %3408 = vmatprep.subr.bf16.mxu0 %v3167
        %3409 = vmatpush1.bf16.msra.mxu0 %v3166
        %3410 = vmatprep.subr.bf16.mxu0 %v3173
        %3411 = vmatpush1.bf16.msra.mxu0 %v3172
        %3412 = vmatprep.subr.bf16.mxu0 %v3179
        %3413 = vmatpush1.bf16.msra.mxu0 %v3178
        %3414 = vmatprep.subr.bf16.mxu0 %v3185
        %3415 = vmatpush1.bf16.msra.mxu0 %v3184
        %3416 = vmatprep.subr.bf16.mxu0 %v3191
        %3417 = vmatpush1.bf16.msra.mxu0 %v3190
        %3418 = vmatprep.subr.bf16.mxu0 %v3197
        %3419 = vmatpush1.bf16.msra.mxu0 %v3196
        %3420 = vmatprep.subr.bf16.mxu0 %v3203
        %3421 = vmatpush1.bf16.msra.mxu0 %v3202
        %3422 = vmatprep.subr.bf16.mxu0 %v3209
        %3423 = vmatpush1.bf16.msra.mxu0 %v3208
        %3424 = vmatprep.mubr.bf16.mxu0 %v2697
        %3425 = vmatmul.mubr.bf16.gmra.mrb[0].mxu0 %v2696
        %v3426 = vpop.f32.mrb[0].mxu0
        %v3427 = vadd.f32 %v2815, %v3426
        %v3428 = vpop.f32.mrb[0].mxu0
        %v3429 = vadd.f32 %v2819, %v3428
        %v3430 = vpop.f32.mrb[0].mxu0
        %v3431 = vadd.f32 %v2815, %v3430
        %v3432 = vpop.f32.mrb[0].mxu0
        %v3433 = vadd.f32 %v2819, %v3432
        %3434 = vdwg.mxu0
        %v3435 = vtanh.pop %v3341
        %v3436 = vtanh.pop %v3343
        %v3437 = vtanh.pop %v3384
        %v3438 = vtanh.pop %v3386
        %v3439 = vtanh.pop %v3427
        %v3440 = vtanh.pop %v3429
        %v3441 = vtanh.pop %v3345
        %v3442 = vtanh.pop %v3347
        %v3443 = vtanh.pop %v3388
        %v3444 = vtanh.pop %v3390
        %v3445 = vtanh.pop %v3431
        %v3446 = vtanh.pop %v3433
        %v3447 = vpack.c.bf16 %v3435, %v3435
        %v3448 = vpack.c.bf16 %v3436, %v3436
        %v3449 = vpack.c.bf16 %v3437, %v3437
        %v3450 = vpack.c.bf16 %v3438, %v3438
        %v3451 = vpack.c.bf16 %v3439, %v3439
        %v3452 = vpack.c.bf16 %v3440, %v3440
        %v3453 = vpack.c.bf16 %v3441, %v3441
        %v3454 = vpack.c.bf16 %v3442, %v3442
        %v3455 = vpack.c.bf16 %v3443, %v3443
        %v3456 = vpack.c.bf16 %v3444, %v3444
        %v3457 = vpack.c.bf16 %v3445, %v3445
        %v3458 = vpack.c.bf16 %v3446, %v3446
        %v3459 = vld [vmem:[#allocation13] sm:$0xff]
        %v3460 = vld [vmem:[#allocation13 + $0x8] sm:$0xff]
        %v3461 = vld [vmem:[#allocation13 + $0x10] sm:$0xff]
        %v3462 = vld [vmem:[#allocation13 + $0x18] sm:$0xff]
        %v3463 = vld [vmem:[#allocation13 + $0x20] sm:$0xff]
        %v3464 = vld [vmem:[#allocation13 + $0x28] sm:$0xff]
        %v3465 = vld [vmem:[#allocation13 + $0x30] sm:$0xff]
        %v3466 = vld [vmem:[#allocation13 + $0x38] sm:$0xff]
        %v3467 = vld [vmem:[#allocation13 + $0x40] sm:$0xff]
        %v3468 = vld [vmem:[#allocation13 + $0x48] sm:$0xff]
        %v3469 = vld [vmem:[#allocation13 + $0x50] sm:$0xff]
        %v3470 = vld [vmem:[#allocation13 + $0x58] sm:$0xff]
        %v3471 = vld [vmem:[#allocation13 + $0x60] sm:$0xff]
        %v3472 = vld [vmem:[#allocation13 + $0x68] sm:$0xff]
        %v3473 = vld [vmem:[#allocation13 + $0x70] sm:$0xff]
        %v3474 = vld [vmem:[#allocation13 + $0x78] sm:$0xff]
        %v3475 = vld [vmem:[#allocation13 + $0x80] sm:$0xff]
        %v3476 = vld [vmem:[#allocation13 + $0x88] sm:$0xff]
        %v3477 = vld [vmem:[#allocation13 + $0x90] sm:$0xff]
        %v3478 = vld [vmem:[#allocation13 + $0x98] sm:$0xff]
        %v3479 = vld [vmem:[#allocation13 + $0xa0] sm:$0xff]
        %v3480 = vld [vmem:[#allocation13 + $0xa8] sm:$0xff]
        %v3481 = vld [vmem:[#allocation13 + $0xb0] sm:$0xff]
        %v3482 = vld [vmem:[#allocation13 + $0xb8] sm:$0xff]
        %v3483 = vld [vmem:[#allocation13 + $0xc0] sm:$0xff]
        %v3484 = vld [vmem:[#allocation13 + $0xc8] sm:$0xff]
        %v3485 = vld [vmem:[#allocation13 + $0xd0] sm:$0xff]
        %v3486 = vld [vmem:[#allocation13 + $0xd8] sm:$0xff]
        %v3487 = vld [vmem:[#allocation13 + $0xe0] sm:$0xff]
        %v3488 = vld [vmem:[#allocation13 + $0xe8] sm:$0xff]
        %v3489 = vld [vmem:[#allocation13 + $0xf0] sm:$0xff]
        %v3490 = vld [vmem:[#allocation13 + $0xf8] sm:$0xff]
        %v3491 = vld [vmem:[#allocation13 + $0x100] sm:$0xff]
        %v3492 = vld [vmem:[#allocation13 + $0x108] sm:$0xff]
        %v3493 = vld [vmem:[#allocation13 + $0x110] sm:$0xff]
        %v3494 = vld [vmem:[#allocation13 + $0x118] sm:$0xff]
        %v3495 = vld [vmem:[#allocation13 + $0x120] sm:$0xff]
        %v3496 = vld [vmem:[#allocation13 + $0x128] sm:$0xff]
        %v3497 = vld [vmem:[#allocation13 + $0x130] sm:$0xff]
        %v3498 = vld [vmem:[#allocation13 + $0x138] sm:$0xff]
        %v3499 = vld [vmem:[#allocation13 + $0x140] sm:$0xff]
        %v3500 = vld [vmem:[#allocation13 + $0x148] sm:$0xff]
        %v3501 = vld [vmem:[#allocation13 + $0x150] sm:$0xff]
        %v3502 = vld [vmem:[#allocation13 + $0x158] sm:$0xff]
        %v3503 = vld [vmem:[#allocation13 + $0x160] sm:$0xff]
        %v3504 = vld [vmem:[#allocation13 + $0x168] sm:$0xff]
        %v3505 = vld [vmem:[#allocation13 + $0x170] sm:$0xff]
        %v3506 = vld [vmem:[#allocation13 + $0x178] sm:$0xff]
        %v3507 = vld [vmem:[#allocation13 + $0x180] sm:$0xff]
        %v3508 = vld [vmem:[#allocation13 + $0x188] sm:$0xff]
        %v3509 = vld [vmem:[#allocation13 + $0x190] sm:$0xff]
        %v3510 = vld [vmem:[#allocation13 + $0x198] sm:$0xff]
        %v3511 = vld [vmem:[#allocation13 + $0x1a0] sm:$0xff]
        %v3512 = vld [vmem:[#allocation13 + $0x1a8] sm:$0xff]
        %v3513 = vld [vmem:[#allocation13 + $0x1b0] sm:$0xff]
        %v3514 = vld [vmem:[#allocation13 + $0x1b8] sm:$0xff]
        %v3515 = vld [vmem:[#allocation13 + $0x1c0] sm:$0xff]
        %v3516 = vld [vmem:[#allocation13 + $0x1c8] sm:$0xff]
        %v3517 = vld [vmem:[#allocation13 + $0x1d0] sm:$0xff]
        %v3518 = vld [vmem:[#allocation13 + $0x1d8] sm:$0xff]
        %v3519 = vld [vmem:[#allocation13 + $0x1e0] sm:$0xff]
        %v3520 = vld [vmem:[#allocation13 + $0x1e8] sm:$0xff]
        %v3521 = vld [vmem:[#allocation13 + $0x1f0] sm:$0xff]
        %v3522 = vld [vmem:[#allocation13 + $0x1f8] sm:$0xff]
        %v3523 = vld [vmem:[#allocation13 + $0x200] sm:$0xff]
        %v3524 = vld [vmem:[#allocation13 + $0x208] sm:$0xff]
        %v3525 = vld [vmem:[#allocation13 + $0x210] sm:$0xff]
        %v3526 = vld [vmem:[#allocation13 + $0x218] sm:$0xff]
        %v3527 = vld [vmem:[#allocation13 + $0x220] sm:$0xff]
        %v3528 = vld [vmem:[#allocation13 + $0x228] sm:$0xff]
        %v3529 = vld [vmem:[#allocation13 + $0x230] sm:$0xff]
        %v3530 = vld [vmem:[#allocation13 + $0x238] sm:$0xff]
        %v3531 = vld [vmem:[#allocation13 + $0x240] sm:$0xff]
        %v3532 = vld [vmem:[#allocation13 + $0x248] sm:$0xff]
        %v3533 = vld [vmem:[#allocation13 + $0x250] sm:$0xff]
        %v3534 = vld [vmem:[#allocation13 + $0x258] sm:$0xff]
        %v3535 = vld [vmem:[#allocation13 + $0x260] sm:$0xff]
        %v3536 = vld [vmem:[#allocation13 + $0x268] sm:$0xff]
        %v3537 = vld [vmem:[#allocation13 + $0x270] sm:$0xff]
        %v3538 = vld [vmem:[#allocation13 + $0x278] sm:$0xff]
        %v3539 = vld [vmem:[#allocation13 + $0x280] sm:$0xff]
        %v3540 = vld [vmem:[#allocation13 + $0x288] sm:$0xff]
        %v3541 = vld [vmem:[#allocation13 + $0x290] sm:$0xff]
        %v3542 = vld [vmem:[#allocation13 + $0x298] sm:$0xff]
        %v3543 = vld [vmem:[#allocation13 + $0x2a0] sm:$0xff]
        %v3544 = vld [vmem:[#allocation13 + $0x2a8] sm:$0xff]
        %v3545 = vld [vmem:[#allocation13 + $0x2b0] sm:$0xff]
        %v3546 = vld [vmem:[#allocation13 + $0x2b8] sm:$0xff]
        %v3547 = vld [vmem:[#allocation13 + $0x2c0] sm:$0xff]
        %v3548 = vld [vmem:[#allocation13 + $0x2c8] sm:$0xff]
        %v3549 = vld [vmem:[#allocation13 + $0x2d0] sm:$0xff]
        %v3550 = vld [vmem:[#allocation13 + $0x2d8] sm:$0xff]
        %v3551 = vld [vmem:[#allocation13 + $0x2e0] sm:$0xff]
        %v3552 = vld [vmem:[#allocation13 + $0x2e8] sm:$0xff]
        %v3553 = vld [vmem:[#allocation13 + $0x2f0] sm:$0xff]
        %v3554 = vld [vmem:[#allocation13 + $0x2f8] sm:$0xff]
        %v3555 = vld [vmem:[#allocation15] sm:$0xff]
        %v3556 = vld [vmem:[#allocation15 + $0x8] sm:$0xff]
        %v3557 = vld [vmem:[#allocation15 + $0x10] sm:$0xff]
        %v3558 = vld [vmem:[#allocation15 + $0x18] sm:$0xff]
        %v3559 = vld [vmem:[#allocation15 + $0x20] sm:$0xff]
        %v3560 = vld [vmem:[#allocation15 + $0x28] sm:$0xff]
        %v3561 = vld [vmem:[#allocation15 + $0x30] sm:$0xff]
        %v3562 = vld [vmem:[#allocation15 + $0x38] sm:$0xff]
        %v3563 = vld [vmem:[#allocation15 + $0x40] sm:$0xff]
        %v3564 = vld [vmem:[#allocation15 + $0x48] sm:$0xff]
        %v3565 = vld [vmem:[#allocation15 + $0x50] sm:$0xff]
        %v3566 = vld [vmem:[#allocation15 + $0x58] sm:$0xff]
        %v3567 = vld [vmem:[#allocation15 + $0x60] sm:$0xff]
        %v3568 = vld [vmem:[#allocation15 + $0x68] sm:$0xff]
        %v3569 = vld [vmem:[#allocation15 + $0x70] sm:$0xff]
        %v3570 = vld [vmem:[#allocation15 + $0x78] sm:$0xff]
        %v3571 = vld [vmem:[#allocation15 + $0x80] sm:$0xff]
        %v3572 = vld [vmem:[#allocation15 + $0x88] sm:$0xff]
        %v3573 = vld [vmem:[#allocation15 + $0x90] sm:$0xff]
        %v3574 = vld [vmem:[#allocation15 + $0x98] sm:$0xff]
        %v3575 = vld [vmem:[#allocation15 + $0xa0] sm:$0xff]
        %v3576 = vld [vmem:[#allocation15 + $0xa8] sm:$0xff]
        %v3577 = vld [vmem:[#allocation15 + $0xb0] sm:$0xff]
        %v3578 = vld [vmem:[#allocation15 + $0xb8] sm:$0xff]
        %v3579 = vld [vmem:[#allocation15 + $0xc0] sm:$0xff]
        %v3580 = vld [vmem:[#allocation15 + $0xc8] sm:$0xff]
        %v3581 = vld [vmem:[#allocation15 + $0xd0] sm:$0xff]
        %v3582 = vld [vmem:[#allocation15 + $0xd8] sm:$0xff]
        %v3583 = vld [vmem:[#allocation15 + $0xe0] sm:$0xff]
        %v3584 = vld [vmem:[#allocation15 + $0xe8] sm:$0xff]
        %v3585 = vld [vmem:[#allocation15 + $0xf0] sm:$0xff]
        %v3586 = vld [vmem:[#allocation15 + $0xf8] sm:$0xff]
        %v3587 = vld [vmem:[#allocation15 + $0x100] sm:$0xff]
        %v3588 = vld [vmem:[#allocation15 + $0x108] sm:$0xff]
        %v3589 = vld [vmem:[#allocation15 + $0x110] sm:$0xff]
        %v3590 = vld [vmem:[#allocation15 + $0x118] sm:$0xff]
        %v3591 = vld [vmem:[#allocation15 + $0x120] sm:$0xff]
        %v3592 = vld [vmem:[#allocation15 + $0x128] sm:$0xff]
        %v3593 = vld [vmem:[#allocation15 + $0x130] sm:$0xff]
        %v3594 = vld [vmem:[#allocation15 + $0x138] sm:$0xff]
        %v3595 = vld [vmem:[#allocation15 + $0x140] sm:$0xff]
        %v3596 = vld [vmem:[#allocation15 + $0x148] sm:$0xff]
        %v3597 = vld [vmem:[#allocation15 + $0x150] sm:$0xff]
        %v3598 = vld [vmem:[#allocation15 + $0x158] sm:$0xff]
        %v3599 = vld [vmem:[#allocation15 + $0x160] sm:$0xff]
        %v3600 = vld [vmem:[#allocation15 + $0x168] sm:$0xff]
        %v3601 = vld [vmem:[#allocation15 + $0x170] sm:$0xff]
        %v3602 = vld [vmem:[#allocation15 + $0x178] sm:$0xff]
        %v3603 = vld [vmem:[#allocation15 + $0x180] sm:$0xff]
        %v3604 = vld [vmem:[#allocation15 + $0x188] sm:$0xff]
        %v3605 = vld [vmem:[#allocation15 + $0x190] sm:$0xff]
        %v3606 = vld [vmem:[#allocation15 + $0x198] sm:$0xff]
        %v3607 = vld [vmem:[#allocation15 + $0x1a0] sm:$0xff]
        %v3608 = vld [vmem:[#allocation15 + $0x1a8] sm:$0xff]
        %v3609 = vld [vmem:[#allocation15 + $0x1b0] sm:$0xff]
        %v3610 = vld [vmem:[#allocation15 + $0x1b8] sm:$0xff]
        %v3611 = vld [vmem:[#allocation15 + $0x1c0] sm:$0xff]
        %v3612 = vld [vmem:[#allocation15 + $0x1c8] sm:$0xff]
        %v3613 = vld [vmem:[#allocation15 + $0x1d0] sm:$0xff]
        %v3614 = vld [vmem:[#allocation15 + $0x1d8] sm:$0xff]
        %v3615 = vld [vmem:[#allocation15 + $0x1e0] sm:$0xff]
        %v3616 = vld [vmem:[#allocation15 + $0x1e8] sm:$0xff]
        %v3617 = vld [vmem:[#allocation15 + $0x1f0] sm:$0xff]
        %v3618 = vld [vmem:[#allocation15 + $0x1f8] sm:$0xff]
        %v3619 = vld [vmem:[#allocation15 + $0x200] sm:$0xff]
        %v3620 = vld [vmem:[#allocation15 + $0x208] sm:$0xff]
        %v3621 = vld [vmem:[#allocation15 + $0x210] sm:$0xff]
        %v3622 = vld [vmem:[#allocation15 + $0x218] sm:$0xff]
        %v3623 = vld [vmem:[#allocation15 + $0x220] sm:$0xff]
        %v3624 = vld [vmem:[#allocation15 + $0x228] sm:$0xff]
        %v3625 = vld [vmem:[#allocation15 + $0x230] sm:$0xff]
        %v3626 = vld [vmem:[#allocation15 + $0x238] sm:$0xff]
        %v3627 = vld [vmem:[#allocation15 + $0x240] sm:$0xff]
        %v3628 = vld [vmem:[#allocation15 + $0x248] sm:$0xff]
        %v3629 = vld [vmem:[#allocation15 + $0x250] sm:$0xff]
        %v3630 = vld [vmem:[#allocation15 + $0x258] sm:$0xff]
        %v3631 = vld [vmem:[#allocation15 + $0x260] sm:$0xff]
        %v3632 = vld [vmem:[#allocation15 + $0x268] sm:$0xff]
        %v3633 = vld [vmem:[#allocation15 + $0x270] sm:$0xff]
        %v3634 = vld [vmem:[#allocation15 + $0x278] sm:$0xff]
        %v3635 = vld [vmem:[#allocation15 + $0x280] sm:$0xff]
        %v3636 = vld [vmem:[#allocation15 + $0x288] sm:$0xff]
        %v3637 = vld [vmem:[#allocation15 + $0x290] sm:$0xff]
        %v3638 = vld [vmem:[#allocation15 + $0x298] sm:$0xff]
        %v3639 = vld [vmem:[#allocation15 + $0x2a0] sm:$0xff]
        %v3640 = vld [vmem:[#allocation15 + $0x2a8] sm:$0xff]
        %v3641 = vld [vmem:[#allocation15 + $0x2b0] sm:$0xff]
        %v3642 = vld [vmem:[#allocation15 + $0x2b8] sm:$0xff]
        %v3643 = vld [vmem:[#allocation15 + $0x2c0] sm:$0xff]
        %v3644 = vld [vmem:[#allocation15 + $0x2c8] sm:$0xff]
        %v3645 = vld [vmem:[#allocation15 + $0x2d0] sm:$0xff]
        %v3646 = vld [vmem:[#allocation15 + $0x2d8] sm:$0xff]
        %v3647 = vld [vmem:[#allocation15 + $0x2e0] sm:$0xff]
        %v3648 = vld [vmem:[#allocation15 + $0x2e8] sm:$0xff]
        %v3649 = vld [vmem:[#allocation15 + $0x2f0] sm:$0xff]
        %v3650 = vld [vmem:[#allocation15 + $0x2f8] sm:$0xff]
        %v3747 = vunpack.c.l.b16 %v3555
        %v3748 = vunpack.c.h.b16 %v3555
        %v3749 = vunpack.c.l.b16 %v3556
        %v3750 = vunpack.c.h.b16 %v3556
        %v3751 = vunpack.c.l.b16 %v3557
        %v3752 = vunpack.c.h.b16 %v3557
        %v3753 = vunpack.c.l.b16 %v3558
        %v3754 = vunpack.c.h.b16 %v3558
        %v3755 = vunpack.c.l.b16 %v3559
        %v3756 = vunpack.c.h.b16 %v3559
        %v3757 = vunpack.c.l.b16 %v3560
        %v3758 = vunpack.c.h.b16 %v3560
        %v3759 = vunpack.c.l.b16 %v3561
        %v3760 = vunpack.c.h.b16 %v3561
        %v3761 = vunpack.c.l.b16 %v3562
        %v3762 = vunpack.c.h.b16 %v3562
        %v3763 = vunpack.c.l.b16 %v3563
        %v3764 = vunpack.c.h.b16 %v3563
        %v3765 = vunpack.c.l.b16 %v3564
        %v3766 = vunpack.c.h.b16 %v3564
        %v3767 = vunpack.c.l.b16 %v3565
        %v3768 = vunpack.c.h.b16 %v3565
        %v3769 = vunpack.c.l.b16 %v3566
        %v3770 = vunpack.c.h.b16 %v3566
        %v3771 = vunpack.c.l.b16 %v3567
        %v3772 = vunpack.c.h.b16 %v3567
        %v3773 = vunpack.c.l.b16 %v3568
        %v3774 = vunpack.c.h.b16 %v3568
        %v3775 = vunpack.c.l.b16 %v3569
        %v3776 = vunpack.c.h.b16 %v3569
        %v3777 = vunpack.c.l.b16 %v3570
        %v3778 = vunpack.c.h.b16 %v3570
        %v3779 = vunpack.c.l.b16 %v3571
        %v3780 = vunpack.c.h.b16 %v3571
        %v3781 = vunpack.c.l.b16 %v3572
        %v3782 = vunpack.c.h.b16 %v3572
        %v3783 = vunpack.c.l.b16 %v3573
        %v3784 = vunpack.c.h.b16 %v3573
        %v3785 = vunpack.c.l.b16 %v3574
        %v3786 = vunpack.c.h.b16 %v3574
        %v3787 = vunpack.c.l.b16 %v3575
        %v3788 = vunpack.c.h.b16 %v3575
        %v3789 = vunpack.c.l.b16 %v3576
        %v3790 = vunpack.c.h.b16 %v3576
        %v3791 = vunpack.c.l.b16 %v3577
        %v3792 = vunpack.c.h.b16 %v3577
        %v3793 = vunpack.c.l.b16 %v3578
        %v3794 = vunpack.c.h.b16 %v3578
        %v3795 = vunpack.c.l.b16 %v3579
        %v3796 = vunpack.c.h.b16 %v3579
        %v3797 = vunpack.c.l.b16 %v3580
        %v3798 = vunpack.c.h.b16 %v3580
        %v3799 = vunpack.c.l.b16 %v3581
        %v3800 = vunpack.c.h.b16 %v3581
        %v3801 = vunpack.c.l.b16 %v3582
        %v3802 = vunpack.c.h.b16 %v3582
        %v3803 = vunpack.c.l.b16 %v3583
        %v3804 = vunpack.c.h.b16 %v3583
        %v3805 = vunpack.c.l.b16 %v3584
        %v3806 = vunpack.c.h.b16 %v3584
        %v3807 = vunpack.c.l.b16 %v3585
        %v3808 = vunpack.c.h.b16 %v3585
        %v3809 = vunpack.c.l.b16 %v3586
        %v3810 = vunpack.c.h.b16 %v3586
        %v3811 = vunpack.c.l.b16 %v3587
        %v3812 = vunpack.c.h.b16 %v3587
        %v3813 = vunpack.c.l.b16 %v3588
        %v3814 = vunpack.c.h.b16 %v3588
        %v3815 = vunpack.c.l.b16 %v3589
        %v3816 = vunpack.c.h.b16 %v3589
        %v3817 = vunpack.c.l.b16 %v3590
        %v3818 = vunpack.c.h.b16 %v3590
        %v3819 = vunpack.c.l.b16 %v3591
        %v3820 = vunpack.c.h.b16 %v3591
        %v3821 = vunpack.c.l.b16 %v3592
        %v3822 = vunpack.c.h.b16 %v3592
        %v3823 = vunpack.c.l.b16 %v3593
        %v3824 = vunpack.c.h.b16 %v3593
        %v3825 = vunpack.c.l.b16 %v3594
        %v3826 = vunpack.c.h.b16 %v3594
        %v3827 = vunpack.c.l.b16 %v3595
        %v3828 = vunpack.c.h.b16 %v3595
        %v3829 = vunpack.c.l.b16 %v3596
        %v3830 = vunpack.c.h.b16 %v3596
        %v3831 = vunpack.c.l.b16 %v3597
        %v3832 = vunpack.c.h.b16 %v3597
        %v3833 = vunpack.c.l.b16 %v3598
        %v3834 = vunpack.c.h.b16 %v3598
        %v3835 = vunpack.c.l.b16 %v3599
        %v3836 = vunpack.c.h.b16 %v3599
        %v3837 = vunpack.c.l.b16 %v3600
        %v3838 = vunpack.c.h.b16 %v3600
        %v3839 = vunpack.c.l.b16 %v3601
        %v3840 = vunpack.c.h.b16 %v3601
        %v3841 = vunpack.c.l.b16 %v3602
        %v3842 = vunpack.c.h.b16 %v3602
        %v3843 = vunpack.c.l.b16 %v3603
        %v3844 = vunpack.c.h.b16 %v3603
        %v3845 = vunpack.c.l.b16 %v3604
        %v3846 = vunpack.c.h.b16 %v3604
        %v3847 = vunpack.c.l.b16 %v3605
        %v3848 = vunpack.c.h.b16 %v3605
        %v3849 = vunpack.c.l.b16 %v3606
        %v3850 = vunpack.c.h.b16 %v3606
        %v3851 = vunpack.c.l.b16 %v3607
        %v3852 = vunpack.c.h.b16 %v3607
        %v3853 = vunpack.c.l.b16 %v3608
        %v3854 = vunpack.c.h.b16 %v3608
        %v3855 = vunpack.c.l.b16 %v3609
        %v3856 = vunpack.c.h.b16 %v3609
        %v3857 = vunpack.c.l.b16 %v3610
        %v3858 = vunpack.c.h.b16 %v3610
        %v3859 = vunpack.c.l.b16 %v3611
        %v3860 = vunpack.c.h.b16 %v3611
        %v3861 = vunpack.c.l.b16 %v3612
        %v3862 = vunpack.c.h.b16 %v3612
        %v3863 = vunpack.c.l.b16 %v3613
        %v3864 = vunpack.c.h.b16 %v3613
        %v3865 = vunpack.c.l.b16 %v3614
        %v3866 = vunpack.c.h.b16 %v3614
        %v3867 = vunpack.c.l.b16 %v3615
        %v3868 = vunpack.c.h.b16 %v3615
        %v3869 = vunpack.c.l.b16 %v3616
        %v3870 = vunpack.c.h.b16 %v3616
        %v3871 = vunpack.c.l.b16 %v3617
        %v3872 = vunpack.c.h.b16 %v3617
        %v3873 = vunpack.c.l.b16 %v3618
        %v3874 = vunpack.c.h.b16 %v3618
        %v3875 = vunpack.c.l.b16 %v3619
        %v3876 = vunpack.c.h.b16 %v3619
        %v3877 = vunpack.c.l.b16 %v3620
        %v3878 = vunpack.c.h.b16 %v3620
        %v3879 = vunpack.c.l.b16 %v3621
        %v3880 = vunpack.c.h.b16 %v3621
        %v3881 = vunpack.c.l.b16 %v3622
        %v3882 = vunpack.c.h.b16 %v3622
        %v3883 = vunpack.c.l.b16 %v3623
        %v3884 = vunpack.c.h.b16 %v3623
        %v3885 = vunpack.c.l.b16 %v3624
        %v3886 = vunpack.c.h.b16 %v3624
        %v3887 = vunpack.c.l.b16 %v3625
        %v3888 = vunpack.c.h.b16 %v3625
        %v3889 = vunpack.c.l.b16 %v3626
        %v3890 = vunpack.c.h.b16 %v3626
        %v3891 = vunpack.c.l.b16 %v3627
        %v3892 = vunpack.c.h.b16 %v3627
        %v3893 = vunpack.c.l.b16 %v3628
        %v3894 = vunpack.c.h.b16 %v3628
        %v3895 = vunpack.c.l.b16 %v3629
        %v3896 = vunpack.c.h.b16 %v3629
        %v3897 = vunpack.c.l.b16 %v3630
        %v3898 = vunpack.c.h.b16 %v3630
        %v3899 = vunpack.c.l.b16 %v3631
        %v3900 = vunpack.c.h.b16 %v3631
        %v3901 = vunpack.c.l.b16 %v3632
        %v3902 = vunpack.c.h.b16 %v3632
        %v3903 = vunpack.c.l.b16 %v3633
        %v3904 = vunpack.c.h.b16 %v3633
        %v3905 = vunpack.c.l.b16 %v3634
        %v3906 = vunpack.c.h.b16 %v3634
        %v3907 = vunpack.c.l.b16 %v3635
        %v3908 = vunpack.c.h.b16 %v3635
        %v3909 = vunpack.c.l.b16 %v3636
        %v3910 = vunpack.c.h.b16 %v3636
        %v3911 = vunpack.c.l.b16 %v3637
        %v3912 = vunpack.c.h.b16 %v3637
        %v3913 = vunpack.c.l.b16 %v3638
        %v3914 = vunpack.c.h.b16 %v3638
        %v3915 = vunpack.c.l.b16 %v3639
        %v3916 = vunpack.c.h.b16 %v3639
        %v3917 = vunpack.c.l.b16 %v3640
        %v3918 = vunpack.c.h.b16 %v3640
        %v3919 = vunpack.c.l.b16 %v3641
        %v3920 = vunpack.c.h.b16 %v3641
        %v3921 = vunpack.c.l.b16 %v3642
        %v3922 = vunpack.c.h.b16 %v3642
        %v3923 = vunpack.c.l.b16 %v3643
        %v3924 = vunpack.c.h.b16 %v3643
        %v3925 = vunpack.c.l.b16 %v3644
        %v3926 = vunpack.c.h.b16 %v3644
        %v3927 = vunpack.c.l.b16 %v3645
        %v3928 = vunpack.c.h.b16 %v3645
        %v3929 = vunpack.c.l.b16 %v3646
        %v3930 = vunpack.c.h.b16 %v3646
        %v3931 = vunpack.c.l.b16 %v3647
        %v3932 = vunpack.c.h.b16 %v3647
        %v3933 = vunpack.c.l.b16 %v3648
        %v3934 = vunpack.c.h.b16 %v3648
        %v3935 = vunpack.c.l.b16 %v3649
        %v3936 = vunpack.c.h.b16 %v3649
        %v3937 = vunpack.c.l.b16 %v3650
        %v3938 = vunpack.c.h.b16 %v3650
        %v3939 = vpack.c.b16 %v3749, %v3747
        %v3940 = vpack.c.b16 %v3750, %v3748
        %v3941 = vpack.c.b16 %v3753, %v3751
        %v3942 = vpack.c.b16 %v3754, %v3752
        %v3943 = vpack.c.b16 %v3757, %v3755
        %v3944 = vpack.c.b16 %v3758, %v3756
        %v3945 = vpack.c.b16 %v3761, %v3759
        %v3946 = vpack.c.b16 %v3762, %v3760
        %v3947 = vpack.c.b16 %v3765, %v3763
        %v3948 = vpack.c.b16 %v3766, %v3764
        %v3949 = vpack.c.b16 %v3769, %v3767
        %v3950 = vpack.c.b16 %v3770, %v3768
        %v3951 = vpack.c.b16 %v3773, %v3771
        %v3952 = vpack.c.b16 %v3774, %v3772
        %v3953 = vpack.c.b16 %v3777, %v3775
        %v3954 = vpack.c.b16 %v3778, %v3776
        %v3955 = vpack.c.b16 %v3781, %v3779
        %v3956 = vpack.c.b16 %v3782, %v3780
        %v3957 = vpack.c.b16 %v3785, %v3783
        %v3958 = vpack.c.b16 %v3786, %v3784
        %v3959 = vpack.c.b16 %v3789, %v3787
        %v3960 = vpack.c.b16 %v3790, %v3788
        %v3961 = vpack.c.b16 %v3793, %v3791
        %v3962 = vpack.c.b16 %v3794, %v3792
        %v3963 = vpack.c.b16 %v3797, %v3795
        %v3964 = vpack.c.b16 %v3798, %v3796
        %v3965 = vpack.c.b16 %v3801, %v3799
        %v3966 = vpack.c.b16 %v3802, %v3800
        %v3967 = vpack.c.b16 %v3805, %v3803
        %v3968 = vpack.c.b16 %v3806, %v3804
        %v3969 = vpack.c.b16 %v3809, %v3807
        %v3970 = vpack.c.b16 %v3810, %v3808
        %v3971 = vpack.c.b16 %v3813, %v3811
        %v3972 = vpack.c.b16 %v3814, %v3812
        %v3973 = vpack.c.b16 %v3817, %v3815
        %v3974 = vpack.c.b16 %v3818, %v3816
        %v3975 = vpack.c.b16 %v3821, %v3819
        %v3976 = vpack.c.b16 %v3822, %v3820
        %v3977 = vpack.c.b16 %v3825, %v3823
        %v3978 = vpack.c.b16 %v3826, %v3824
        %v3979 = vpack.c.b16 %v3829, %v3827
        %v3980 = vpack.c.b16 %v3830, %v3828
        %v3981 = vpack.c.b16 %v3833, %v3831
        %v3982 = vpack.c.b16 %v3834, %v3832
        %v3983 = vpack.c.b16 %v3837, %v3835
        %v3984 = vpack.c.b16 %v3838, %v3836
        %v3985 = vpack.c.b16 %v3841, %v3839
        %v3986 = vpack.c.b16 %v3842, %v3840
        %v3987 = vpack.c.b16 %v3845, %v3843
        %v3988 = vpack.c.b16 %v3846, %v3844
        %v3989 = vpack.c.b16 %v3849, %v3847
        %v3990 = vpack.c.b16 %v3850, %v3848
        %v3991 = vpack.c.b16 %v3853, %v3851
        %v3992 = vpack.c.b16 %v3854, %v3852
        %v3993 = vpack.c.b16 %v3857, %v3855
        %v3994 = vpack.c.b16 %v3858, %v3856
        %v3995 = vpack.c.b16 %v3861, %v3859
        %v3996 = vpack.c.b16 %v3862, %v3860
        %v3997 = vpack.c.b16 %v3865, %v3863
        %v3998 = vpack.c.b16 %v3866, %v3864
        %v3999 = vpack.c.b16 %v3869, %v3867
        %v4000 = vpack.c.b16 %v3870, %v3868
        %v4001 = vpack.c.b16 %v3873, %v3871
        %v4002 = vpack.c.b16 %v3874, %v3872
        %v4003 = vpack.c.b16 %v3877, %v3875
        %v4004 = vpack.c.b16 %v3878, %v3876
        %v4005 = vpack.c.b16 %v3881, %v3879
        %v4006 = vpack.c.b16 %v3882, %v3880
        %v4007 = vpack.c.b16 %v3885, %v3883
        %v4008 = vpack.c.b16 %v3886, %v3884
        %v4009 = vpack.c.b16 %v3889, %v3887
        %v4010 = vpack.c.b16 %v3890, %v3888
        %v4011 = vpack.c.b16 %v3893, %v3891
        %v4012 = vpack.c.b16 %v3894, %v3892
        %v4013 = vpack.c.b16 %v3897, %v3895
        %v4014 = vpack.c.b16 %v3898, %v3896
        %v4015 = vpack.c.b16 %v3901, %v3899
        %v4016 = vpack.c.b16 %v3902, %v3900
        %v4017 = vpack.c.b16 %v3905, %v3903
        %v4018 = vpack.c.b16 %v3906, %v3904
        %v4019 = vpack.c.b16 %v3909, %v3907
        %v4020 = vpack.c.b16 %v3910, %v3908
        %v4021 = vpack.c.b16 %v3913, %v3911
        %v4022 = vpack.c.b16 %v3914, %v3912
        %v4023 = vpack.c.b16 %v3917, %v3915
        %v4024 = vpack.c.b16 %v3918, %v3916
        %v4025 = vpack.c.b16 %v3921, %v3919
        %v4026 = vpack.c.b16 %v3922, %v3920
        %v4027 = vpack.c.b16 %v3925, %v3923
        %v4028 = vpack.c.b16 %v3926, %v3924
        %v4029 = vpack.c.b16 %v3929, %v3927
        %v4030 = vpack.c.b16 %v3930, %v3928
        %v4031 = vpack.c.b16 %v3933, %v3931
        %v4032 = vpack.c.b16 %v3934, %v3932
        %v4033 = vpack.c.b16 %v3937, %v3935
        %v4034 = vpack.c.b16 %v3938, %v3936
        %4131 = vmatprep.subr.bf16.mxu0 %v3940
        %4132 = vmatpush1.bf16.msra.mxu0 %v3939
        %4133 = vmatprep.subr.bf16.mxu0 %v3942
        %4134 = vmatpush1.bf16.msra.mxu0 %v3941
        %4135 = vmatprep.subr.bf16.mxu0 %v3944
        %4136 = vmatpush1.bf16.msra.mxu0 %v3943
        %4137 = vmatprep.subr.bf16.mxu0 %v3946
        %4138 = vmatpush1.bf16.msra.mxu0 %v3945
        %4139 = vmatprep.subr.bf16.mxu0 %v3948
        %4140 = vmatpush1.bf16.msra.mxu0 %v3947
        %4141 = vmatprep.subr.bf16.mxu0 %v3950
        %4142 = vmatpush1.bf16.msra.mxu0 %v3949
        %4143 = vmatprep.subr.bf16.mxu0 %v3952
        %4144 = vmatpush1.bf16.msra.mxu0 %v3951
        %4145 = vmatprep.subr.bf16.mxu0 %v3954
        %4146 = vmatpush1.bf16.msra.mxu0 %v3953
        %4147 = vmatprep.subr.bf16.mxu0 %v3956
        %4148 = vmatpush1.bf16.msra.mxu0 %v3955
        %4149 = vmatprep.subr.bf16.mxu0 %v3958
        %4150 = vmatpush1.bf16.msra.mxu0 %v3957
        %4151 = vmatprep.subr.bf16.mxu0 %v3960
        %4152 = vmatpush1.bf16.msra.mxu0 %v3959
        %4153 = vmatprep.subr.bf16.mxu0 %v3962
        %4154 = vmatpush1.bf16.msra.mxu0 %v3961
        %4155 = vmatprep.subr.bf16.mxu0 %v3964
        %4156 = vmatpush1.bf16.msra.mxu0 %v3963
        %4157 = vmatprep.subr.bf16.mxu0 %v3966
        %4158 = vmatpush1.bf16.msra.mxu0 %v3965
        %4159 = vmatprep.subr.bf16.mxu0 %v3968
        %4160 = vmatpush1.bf16.msra.mxu0 %v3967
        %4161 = vmatprep.subr.bf16.mxu0 %v3970
        %4162 = vmatpush1.bf16.msra.mxu0 %v3969
        %4163 = vmatprep.mubr.bf16.mxu0 %v3454
        %4164 = vmatmul.mubr.bf16.gmra.mrb[0].mxu0 %v3453
        %v4165 = vpop.f32.mrb[0].mxu0
        %v4166 = vadd.f32 0.0, %v4165
        %v4167 = vpop.f32.mrb[0].mxu0
        %v4168 = vadd.f32 0.0, %v4167
        %v4169 = vpop.f32.mrb[0].mxu0
        %v4170 = vpop.f32.mrb[0].mxu0
        %4171 = vdwg.mxu0
        %4172 = vmatprep.subr.bf16.mxu0 %v3972
        %4173 = vmatpush1.bf16.msra.mxu0 %v3971
        %4174 = vmatprep.subr.bf16.mxu0 %v3974
        %4175 = vmatpush1.bf16.msra.mxu0 %v3973
        %4176 = vmatprep.subr.bf16.mxu0 %v3976
        %4177 = vmatpush1.bf16.msra.mxu0 %v3975
        %4178 = vmatprep.subr.bf16.mxu0 %v3978
        %4179 = vmatpush1.bf16.msra.mxu0 %v3977
        %4180 = vmatprep.subr.bf16.mxu0 %v3980
        %4181 = vmatpush1.bf16.msra.mxu0 %v3979
        %4182 = vmatprep.subr.bf16.mxu0 %v3982
        %4183 = vmatpush1.bf16.msra.mxu0 %v3981
        %4184 = vmatprep.subr.bf16.mxu0 %v3984
        %4185 = vmatpush1.bf16.msra.mxu0 %v3983
        %4186 = vmatprep.subr.bf16.mxu0 %v3986
        %4187 = vmatpush1.bf16.msra.mxu0 %v3985
        %4188 = vmatprep.subr.bf16.mxu0 %v3988
        %4189 = vmatpush1.bf16.msra.mxu0 %v3987
        %4190 = vmatprep.subr.bf16.mxu0 %v3990
        %4191 = vmatpush1.bf16.msra.mxu0 %v3989
        %4192 = vmatprep.subr.bf16.mxu0 %v3992
        %4193 = vmatpush1.bf16.msra.mxu0 %v3991
        %4194 = vmatprep.subr.bf16.mxu0 %v3994
        %4195 = vmatpush1.bf16.msra.mxu0 %v3993
        %4196 = vmatprep.subr.bf16.mxu0 %v3996
        %4197 = vmatpush1.bf16.msra.mxu0 %v3995
        %4198 = vmatprep.subr.bf16.mxu0 %v3998
        %4199 = vmatpush1.bf16.msra.mxu0 %v3997
        %4200 = vmatprep.subr.bf16.mxu0 %v4000
        %4201 = vmatpush1.bf16.msra.mxu0 %v3999
        %4202 = vmatprep.subr.bf16.mxu0 %v4002
        %4203 = vmatpush1.bf16.msra.mxu0 %v4001
        %4204 = vmatprep.mubr.bf16.mxu0 %v3456
        %4205 = vmatmul.mubr.bf16.gmra.mrb[0].mxu0 %v3455
        %v4206 = vpop.f32.mrb[0].mxu0
        %v4207 = vadd.f32 %v4166, %v4206
        %v4208 = vpop.f32.mrb[0].mxu0
        %v4209 = vadd.f32 %v4168, %v4208
        %v4210 = vpop.f32.mrb[0].mxu0
        %v4211 = vpop.f32.mrb[0].mxu0
        %4212 = vdwg.mxu0
        %4213 = vmatprep.subr.bf16.mxu0 %v4004
        %4214 = vmatpush1.bf16.msra.mxu0 %v4003
        %4215 = vmatprep.subr.bf16.mxu0 %v4006
        %4216 = vmatpush1.bf16.msra.mxu0 %v4005
        %4217 = vmatprep.subr.bf16.mxu0 %v4008
        %4218 = vmatpush1.bf16.msra.mxu0 %v4007
        %4219 = vmatprep.subr.bf16.mxu0 %v4010
        %4220 = vmatpush1.bf16.msra.mxu0 %v4009
        %4221 = vmatprep.subr.bf16.mxu0 %v4012
        %4222 = vmatpush1.bf16.msra.mxu0 %v4011
        %4223 = vmatprep.subr.bf16.mxu0 %v4014
        %4224 = vmatpush1.bf16.msra.mxu0 %v4013
        %4225 = vmatprep.subr.bf16.mxu0 %v4016
        %4226 = vmatpush1.bf16.msra.mxu0 %v4015
        %4227 = vmatprep.subr.bf16.mxu0 %v4018
        %4228 = vmatpush1.bf16.msra.mxu0 %v4017
        %4229 = vmatprep.subr.bf16.mxu0 %v4020
        %4230 = vmatpush1.bf16.msra.mxu0 %v4019
        %4231 = vmatprep.subr.bf16.mxu0 %v4022
        %4232 = vmatpush1.bf16.msra.mxu0 %v4021
        %4233 = vmatprep.subr.bf16.mxu0 %v4024
        %4234 = vmatpush1.bf16.msra.mxu0 %v4023
        %4235 = vmatprep.subr.bf16.mxu0 %v4026
        %4236 = vmatpush1.bf16.msra.mxu0 %v4025
        %4237 = vmatprep.subr.bf16.mxu0 %v4028
        %4238 = vmatpush1.bf16.msra.mxu0 %v4027
        %4239 = vmatprep.subr.bf16.mxu0 %v4030
        %4240 = vmatpush1.bf16.msra.mxu0 %v4029
        %4241 = vmatprep.subr.bf16.mxu0 %v4032
        %4242 = vmatpush1.bf16.msra.mxu0 %v4031
        %4243 = vmatprep.subr.bf16.mxu0 %v4034
        %4244 = vmatpush1.bf16.msra.mxu0 %v4033
        %4245 = vmatprep.mubr.bf16.mxu0 %v3458
        %4246 = vmatmul.mubr.bf16.gmra.mrb[0].mxu0 %v3457
        %v4247 = vpop.f32.mrb[0].mxu0
        %v4248 = vadd.f32 %v4207, %v4247
        %v4249 = vpop.f32.mrb[0].mxu0
        %v4250 = vadd.f32 %v4209, %v4249
        %v4251 = vpop.f32.mrb[0].mxu0
        %v4252 = vpop.f32.mrb[0].mxu0
        %4253 = vdwg.mxu0
        %v4350 = vunpack.c.l.b16 %v3459
        %v4351 = vunpack.c.h.b16 %v3459
        %v4352 = vunpack.c.l.b16 %v3460
        %v4353 = vunpack.c.h.b16 %v3460
        %v4354 = vunpack.c.l.b16 %v3461
        %v4355 = vunpack.c.h.b16 %v3461
        %v4356 = vunpack.c.l.b16 %v3462
        %v4357 = vunpack.c.h.b16 %v3462
        %v4358 = vunpack.c.l.b16 %v3463
        %v4359 = vunpack.c.h.b16 %v3463
        %v4360 = vunpack.c.l.b16 %v3464
        %v4361 = vunpack.c.h.b16 %v3464
        %v4362 = vunpack.c.l.b16 %v3465
        %v4363 = vunpack.c.h.b16 %v3465
        %v4364 = vunpack.c.l.b16 %v3466
        %v4365 = vunpack.c.h.b16 %v3466
        %v4366 = vunpack.c.l.b16 %v3467
        %v4367 = vunpack.c.h.b16 %v3467
        %v4368 = vunpack.c.l.b16 %v3468
        %v4369 = vunpack.c.h.b16 %v3468
        %v4370 = vunpack.c.l.b16 %v3469
        %v4371 = vunpack.c.h.b16 %v3469
        %v4372 = vunpack.c.l.b16 %v3470
        %v4373 = vunpack.c.h.b16 %v3470
        %v4374 = vunpack.c.l.b16 %v3471
        %v4375 = vunpack.c.h.b16 %v3471
        %v4376 = vunpack.c.l.b16 %v3472
        %v4377 = vunpack.c.h.b16 %v3472
        %v4378 = vunpack.c.l.b16 %v3473
        %v4379 = vunpack.c.h.b16 %v3473
        %v4380 = vunpack.c.l.b16 %v3474
        %v4381 = vunpack.c.h.b16 %v3474
        %v4382 = vunpack.c.l.b16 %v3475
        %v4383 = vunpack.c.h.b16 %v3475
        %v4384 = vunpack.c.l.b16 %v3476
        %v4385 = vunpack.c.h.b16 %v3476
        %v4386 = vunpack.c.l.b16 %v3477
        %v4387 = vunpack.c.h.b16 %v3477
        %v4388 = vunpack.c.l.b16 %v3478
        %v4389 = vunpack.c.h.b16 %v3478
        %v4390 = vunpack.c.l.b16 %v3479
        %v4391 = vunpack.c.h.b16 %v3479
        %v4392 = vunpack.c.l.b16 %v3480
        %v4393 = vunpack.c.h.b16 %v3480
        %v4394 = vunpack.c.l.b16 %v3481
        %v4395 = vunpack.c.h.b16 %v3481
        %v4396 = vunpack.c.l.b16 %v3482
        %v4397 = vunpack.c.h.b16 %v3482
        %v4398 = vunpack.c.l.b16 %v3483
        %v4399 = vunpack.c.h.b16 %v3483
        %v4400 = vunpack.c.l.b16 %v3484
        %v4401 = vunpack.c.h.b16 %v3484
        %v4402 = vunpack.c.l.b16 %v3485
        %v4403 = vunpack.c.h.b16 %v3485
        %v4404 = vunpack.c.l.b16 %v3486
        %v4405 = vunpack.c.h.b16 %v3486
        %v4406 = vunpack.c.l.b16 %v3487
        %v4407 = vunpack.c.h.b16 %v3487
        %v4408 = vunpack.c.l.b16 %v3488
        %v4409 = vunpack.c.h.b16 %v3488
        %v4410 = vunpack.c.l.b16 %v3489
        %v4411 = vunpack.c.h.b16 %v3489
        %v4412 = vunpack.c.l.b16 %v3490
        %v4413 = vunpack.c.h.b16 %v3490
        %v4414 = vunpack.c.l.b16 %v3491
        %v4415 = vunpack.c.h.b16 %v3491
        %v4416 = vunpack.c.l.b16 %v3492
        %v4417 = vunpack.c.h.b16 %v3492
        %v4418 = vunpack.c.l.b16 %v3493
        %v4419 = vunpack.c.h.b16 %v3493
        %v4420 = vunpack.c.l.b16 %v3494
        %v4421 = vunpack.c.h.b16 %v3494
        %v4422 = vunpack.c.l.b16 %v3495
        %v4423 = vunpack.c.h.b16 %v3495
        %v4424 = vunpack.c.l.b16 %v3496
        %v4425 = vunpack.c.h.b16 %v3496
        %v4426 = vunpack.c.l.b16 %v3497
        %v4427 = vunpack.c.h.b16 %v3497
        %v4428 = vunpack.c.l.b16 %v3498
        %v4429 = vunpack.c.h.b16 %v3498
        %v4430 = vunpack.c.l.b16 %v3499
        %v4431 = vunpack.c.h.b16 %v3499
        %v4432 = vunpack.c.l.b16 %v3500
        %v4433 = vunpack.c.h.b16 %v3500
        %v4434 = vunpack.c.l.b16 %v3501
        %v4435 = vunpack.c.h.b16 %v3501
        %v4436 = vunpack.c.l.b16 %v3502
        %v4437 = vunpack.c.h.b16 %v3502
        %v4438 = vunpack.c.l.b16 %v3503
        %v4439 = vunpack.c.h.b16 %v3503
        %v4440 = vunpack.c.l.b16 %v3504
        %v4441 = vunpack.c.h.b16 %v3504
        %v4442 = vunpack.c.l.b16 %v3505
        %v4443 = vunpack.c.h.b16 %v3505
        %v4444 = vunpack.c.l.b16 %v3506
        %v4445 = vunpack.c.h.b16 %v3506
        %v4446 = vunpack.c.l.b16 %v3507
        %v4447 = vunpack.c.h.b16 %v3507
        %v4448 = vunpack.c.l.b16 %v3508
        %v4449 = vunpack.c.h.b16 %v3508
        %v4450 = vunpack.c.l.b16 %v3509
        %v4451 = vunpack.c.h.b16 %v3509
        %v4452 = vunpack.c.l.b16 %v3510
        %v4453 = vunpack.c.h.b16 %v3510
        %v4454 = vunpack.c.l.b16 %v3511
        %v4455 = vunpack.c.h.b16 %v3511
        %v4456 = vunpack.c.l.b16 %v3512
        %v4457 = vunpack.c.h.b16 %v3512
        %v4458 = vunpack.c.l.b16 %v3513
        %v4459 = vunpack.c.h.b16 %v3513
        %v4460 = vunpack.c.l.b16 %v3514
        %v4461 = vunpack.c.h.b16 %v3514
        %v4462 = vunpack.c.l.b16 %v3515
        %v4463 = vunpack.c.h.b16 %v3515
        %v4464 = vunpack.c.l.b16 %v3516
        %v4465 = vunpack.c.h.b16 %v3516
        %v4466 = vunpack.c.l.b16 %v3517
        %v4467 = vunpack.c.h.b16 %v3517
        %v4468 = vunpack.c.l.b16 %v3518
        %v4469 = vunpack.c.h.b16 %v3518
        %v4470 = vunpack.c.l.b16 %v3519
        %v4471 = vunpack.c.h.b16 %v3519
        %v4472 = vunpack.c.l.b16 %v3520
        %v4473 = vunpack.c.h.b16 %v3520
        %v4474 = vunpack.c.l.b16 %v3521
        %v4475 = vunpack.c.h.b16 %v3521
        %v4476 = vunpack.c.l.b16 %v3522
        %v4477 = vunpack.c.h.b16 %v3522
        %v4478 = vunpack.c.l.b16 %v3523
        %v4479 = vunpack.c.h.b16 %v3523
        %v4480 = vunpack.c.l.b16 %v3524
        %v4481 = vunpack.c.h.b16 %v3524
        %v4482 = vunpack.c.l.b16 %v3525
        %v4483 = vunpack.c.h.b16 %v3525
        %v4484 = vunpack.c.l.b16 %v3526
        %v4485 = vunpack.c.h.b16 %v3526
        %v4486 = vunpack.c.l.b16 %v3527
        %v4487 = vunpack.c.h.b16 %v3527
        %v4488 = vunpack.c.l.b16 %v3528
        %v4489 = vunpack.c.h.b16 %v3528
        %v4490 = vunpack.c.l.b16 %v3529
        %v4491 = vunpack.c.h.b16 %v3529
        %v4492 = vunpack.c.l.b16 %v3530
        %v4493 = vunpack.c.h.b16 %v3530
        %v4494 = vunpack.c.l.b16 %v3531
        %v4495 = vunpack.c.h.b16 %v3531
        %v4496 = vunpack.c.l.b16 %v3532
        %v4497 = vunpack.c.h.b16 %v3532
        %v4498 = vunpack.c.l.b16 %v3533
        %v4499 = vunpack.c.h.b16 %v3533
        %v4500 = vunpack.c.l.b16 %v3534
        %v4501 = vunpack.c.h.b16 %v3534
        %v4502 = vunpack.c.l.b16 %v3535
        %v4503 = vunpack.c.h.b16 %v3535
        %v4504 = vunpack.c.l.b16 %v3536
        %v4505 = vunpack.c.h.b16 %v3536
        %v4506 = vunpack.c.l.b16 %v3537
        %v4507 = vunpack.c.h.b16 %v3537
        %v4508 = vunpack.c.l.b16 %v3538
        %v4509 = vunpack.c.h.b16 %v3538
        %v4510 = vunpack.c.l.b16 %v3539
        %v4511 = vunpack.c.h.b16 %v3539
        %v4512 = vunpack.c.l.b16 %v3540
        %v4513 = vunpack.c.h.b16 %v3540
        %v4514 = vunpack.c.l.b16 %v3541
        %v4515 = vunpack.c.h.b16 %v3541
        %v4516 = vunpack.c.l.b16 %v3542
        %v4517 = vunpack.c.h.b16 %v3542
        %v4518 = vunpack.c.l.b16 %v3543
        %v4519 = vunpack.c.h.b16 %v3543
        %v4520 = vunpack.c.l.b16 %v3544
        %v4521 = vunpack.c.h.b16 %v3544
        %v4522 = vunpack.c.l.b16 %v3545
        %v4523 = vunpack.c.h.b16 %v3545
        %v4524 = vunpack.c.l.b16 %v3546
        %v4525 = vunpack.c.h.b16 %v3546
        %v4526 = vunpack.c.l.b16 %v3547
        %v4527 = vunpack.c.h.b16 %v3547
        %v4528 = vunpack.c.l.b16 %v3548
        %v4529 = vunpack.c.h.b16 %v3548
        %v4530 = vunpack.c.l.b16 %v3549
        %v4531 = vunpack.c.h.b16 %v3549
        %v4532 = vunpack.c.l.b16 %v3550
        %v4533 = vunpack.c.h.b16 %v3550
        %v4534 = vunpack.c.l.b16 %v3551
        %v4535 = vunpack.c.h.b16 %v3551
        %v4536 = vunpack.c.l.b16 %v3552
        %v4537 = vunpack.c.h.b16 %v3552
        %v4538 = vunpack.c.l.b16 %v3553
        %v4539 = vunpack.c.h.b16 %v3553
        %v4540 = vunpack.c.l.b16 %v3554
        %v4541 = vunpack.c.h.b16 %v3554
        %v4542 = vpack.c.b16 %v4352, %v4350
        %v4543 = vpack.c.b16 %v4353, %v4351
        %v4544 = vpack.c.b16 %v4356, %v4354
        %v4545 = vpack.c.b16 %v4357, %v4355
        %v4546 = vpack.c.b16 %v4360, %v4358
        %v4547 = vpack.c.b16 %v4361, %v4359
        %v4548 = vpack.c.b16 %v4364, %v4362
        %v4549 = vpack.c.b16 %v4365, %v4363
        %v4550 = vpack.c.b16 %v4368, %v4366
        %v4551 = vpack.c.b16 %v4369, %v4367
        %v4552 = vpack.c.b16 %v4372, %v4370
        %v4553 = vpack.c.b16 %v4373, %v4371
        %v4554 = vpack.c.b16 %v4376, %v4374
        %v4555 = vpack.c.b16 %v4377, %v4375
        %v4556 = vpack.c.b16 %v4380, %v4378
        %v4557 = vpack.c.b16 %v4381, %v4379
        %v4558 = vpack.c.b16 %v4384, %v4382
        %v4559 = vpack.c.b16 %v4385, %v4383
        %v4560 = vpack.c.b16 %v4388, %v4386
        %v4561 = vpack.c.b16 %v4389, %v4387
        %v4562 = vpack.c.b16 %v4392, %v4390
        %v4563 = vpack.c.b16 %v4393, %v4391
        %v4564 = vpack.c.b16 %v4396, %v4394
        %v4565 = vpack.c.b16 %v4397, %v4395
        %v4566 = vpack.c.b16 %v4400, %v4398
        %v4567 = vpack.c.b16 %v4401, %v4399
        %v4568 = vpack.c.b16 %v4404, %v4402
        %v4569 = vpack.c.b16 %v4405, %v4403
        %v4570 = vpack.c.b16 %v4408, %v4406
        %v4571 = vpack.c.b16 %v4409, %v4407
        %v4572 = vpack.c.b16 %v4412, %v4410
        %v4573 = vpack.c.b16 %v4413, %v4411
        %v4574 = vpack.c.b16 %v4416, %v4414
        %v4575 = vpack.c.b16 %v4417, %v4415
        %v4576 = vpack.c.b16 %v4420, %v4418
        %v4577 = vpack.c.b16 %v4421, %v4419
        %v4578 = vpack.c.b16 %v4424, %v4422
        %v4579 = vpack.c.b16 %v4425, %v4423
        %v4580 = vpack.c.b16 %v4428, %v4426
        %v4581 = vpack.c.b16 %v4429, %v4427
        %v4582 = vpack.c.b16 %v4432, %v4430
        %v4583 = vpack.c.b16 %v4433, %v4431
        %v4584 = vpack.c.b16 %v4436, %v4434
        %v4585 = vpack.c.b16 %v4437, %v4435
        %v4586 = vpack.c.b16 %v4440, %v4438
        %v4587 = vpack.c.b16 %v4441, %v4439
        %v4588 = vpack.c.b16 %v4444, %v4442
        %v4589 = vpack.c.b16 %v4445, %v4443
        %v4590 = vpack.c.b16 %v4448, %v4446
        %v4591 = vpack.c.b16 %v4449, %v4447
        %v4592 = vpack.c.b16 %v4452, %v4450
        %v4593 = vpack.c.b16 %v4453, %v4451
        %v4594 = vpack.c.b16 %v4456, %v4454
        %v4595 = vpack.c.b16 %v4457, %v4455
        %v4596 = vpack.c.b16 %v4460, %v4458
        %v4597 = vpack.c.b16 %v4461, %v4459
        %v4598 = vpack.c.b16 %v4464, %v4462
        %v4599 = vpack.c.b16 %v4465, %v4463
        %v4600 = vpack.c.b16 %v4468, %v4466
        %v4601 = vpack.c.b16 %v4469, %v4467
        %v4602 = vpack.c.b16 %v4472, %v4470
        %v4603 = vpack.c.b16 %v4473, %v4471
        %v4604 = vpack.c.b16 %v4476, %v4474
        %v4605 = vpack.c.b16 %v4477, %v4475
        %v4606 = vpack.c.b16 %v4480, %v4478
        %v4607 = vpack.c.b16 %v4481, %v4479
        %v4608 = vpack.c.b16 %v4484, %v4482
        %v4609 = vpack.c.b16 %v4485, %v4483
        %v4610 = vpack.c.b16 %v4488, %v4486
        %v4611 = vpack.c.b16 %v4489, %v4487
        %v4612 = vpack.c.b16 %v4492, %v4490
        %v4613 = vpack.c.b16 %v4493, %v4491
        %v4614 = vpack.c.b16 %v4496, %v4494
        %v4615 = vpack.c.b16 %v4497, %v4495
        %v4616 = vpack.c.b16 %v4500, %v4498
        %v4617 = vpack.c.b16 %v4501, %v4499
        %v4618 = vpack.c.b16 %v4504, %v4502
        %v4619 = vpack.c.b16 %v4505, %v4503
        %v4620 = vpack.c.b16 %v4508, %v4506
        %v4621 = vpack.c.b16 %v4509, %v4507
        %v4622 = vpack.c.b16 %v4512, %v4510
        %v4623 = vpack.c.b16 %v4513, %v4511
        %v4624 = vpack.c.b16 %v4516, %v4514
        %v4625 = vpack.c.b16 %v4517, %v4515
        %v4626 = vpack.c.b16 %v4520, %v4518
        %v4627 = vpack.c.b16 %v4521, %v4519
        %v4628 = vpack.c.b16 %v4524, %v4522
        %v4629 = vpack.c.b16 %v4525, %v4523
        %v4630 = vpack.c.b16 %v4528, %v4526
        %v4631 = vpack.c.b16 %v4529, %v4527
        %v4632 = vpack.c.b16 %v4532, %v4530
        %v4633 = vpack.c.b16 %v4533, %v4531
        %v4634 = vpack.c.b16 %v4536, %v4534
        %v4635 = vpack.c.b16 %v4537, %v4535
        %v4636 = vpack.c.b16 %v4540, %v4538
        %v4637 = vpack.c.b16 %v4541, %v4539
        %4734 = vmatprep.subr.bf16.mxu0 %v4543
        %4735 = vmatpush1.bf16.msra.mxu0 %v4542
        %4736 = vmatprep.subr.bf16.mxu0 %v4545
        %4737 = vmatpush1.bf16.msra.mxu0 %v4544
        %4738 = vmatprep.subr.bf16.mxu0 %v4547
        %4739 = vmatpush1.bf16.msra.mxu0 %v4546
        %4740 = vmatprep.subr.bf16.mxu0 %v4549
        %4741 = vmatpush1.bf16.msra.mxu0 %v4548
        %4742 = vmatprep.subr.bf16.mxu0 %v4551
        %4743 = vmatpush1.bf16.msra.mxu0 %v4550
        %4744 = vmatprep.subr.bf16.mxu0 %v4553
        %4745 = vmatpush1.bf16.msra.mxu0 %v4552
        %4746 = vmatprep.subr.bf16.mxu0 %v4555
        %4747 = vmatpush1.bf16.msra.mxu0 %v4554
        %4748 = vmatprep.subr.bf16.mxu0 %v4557
        %4749 = vmatpush1.bf16.msra.mxu0 %v4556
        %4750 = vmatprep.subr.bf16.mxu0 %v4559
        %4751 = vmatpush1.bf16.msra.mxu0 %v4558
        %4752 = vmatprep.subr.bf16.mxu0 %v4561
        %4753 = vmatpush1.bf16.msra.mxu0 %v4560
        %4754 = vmatprep.subr.bf16.mxu0 %v4563
        %4755 = vmatpush1.bf16.msra.mxu0 %v4562
        %4756 = vmatprep.subr.bf16.mxu0 %v4565
        %4757 = vmatpush1.bf16.msra.mxu0 %v4564
        %4758 = vmatprep.subr.bf16.mxu0 %v4567
        %4759 = vmatpush1.bf16.msra.mxu0 %v4566
        %4760 = vmatprep.subr.bf16.mxu0 %v4569
        %4761 = vmatpush1.bf16.msra.mxu0 %v4568
        %4762 = vmatprep.subr.bf16.mxu0 %v4571
        %4763 = vmatpush1.bf16.msra.mxu0 %v4570
        %4764 = vmatprep.subr.bf16.mxu0 %v4573
        %4765 = vmatpush1.bf16.msra.mxu0 %v4572
        %4766 = vmatprep.mubr.bf16.mxu0 %v3448
        %4767 = vmatmul.mubr.bf16.gmra.mrb[0].mxu0 %v3447
        %v4768 = vpop.f32.mrb[0].mxu0
        %v4769 = vadd.f32 %v4248, %v4768
        %v4770 = vpop.f32.mrb[0].mxu0
        %v4771 = vadd.f32 %v4250, %v4770
        %v4772 = vpop.f32.mrb[0].mxu0
        %v4773 = vpop.f32.mrb[0].mxu0
        %4774 = vdwg.mxu0
        %4775 = vmatprep.subr.bf16.mxu0 %v4575
        %4776 = vmatpush1.bf16.msra.mxu0 %v4574
        %4777 = vmatprep.subr.bf16.mxu0 %v4577
        %4778 = vmatpush1.bf16.msra.mxu0 %v4576
        %4779 = vmatprep.subr.bf16.mxu0 %v4579
        %4780 = vmatpush1.bf16.msra.mxu0 %v4578
        %4781 = vmatprep.subr.bf16.mxu0 %v4581
        %4782 = vmatpush1.bf16.msra.mxu0 %v4580
        %4783 = vmatprep.subr.bf16.mxu0 %v4583
        %4784 = vmatpush1.bf16.msra.mxu0 %v4582
        %4785 = vmatprep.subr.bf16.mxu0 %v4585
        %4786 = vmatpush1.bf16.msra.mxu0 %v4584
        %4787 = vmatprep.subr.bf16.mxu0 %v4587
        %4788 = vmatpush1.bf16.msra.mxu0 %v4586
        %4789 = vmatprep.subr.bf16.mxu0 %v4589
        %4790 = vmatpush1.bf16.msra.mxu0 %v4588
        %4791 = vmatprep.subr.bf16.mxu0 %v4591
        %4792 = vmatpush1.bf16.msra.mxu0 %v4590
        %4793 = vmatprep.subr.bf16.mxu0 %v4593
        %4794 = vmatpush1.bf16.msra.mxu0 %v4592
        %4795 = vmatprep.subr.bf16.mxu0 %v4595
        %4796 = vmatpush1.bf16.msra.mxu0 %v4594
        %4797 = vmatprep.subr.bf16.mxu0 %v4597
        %4798 = vmatpush1.bf16.msra.mxu0 %v4596
        %4799 = vmatprep.subr.bf16.mxu0 %v4599
        %4800 = vmatpush1.bf16.msra.mxu0 %v4598
        %4801 = vmatprep.subr.bf16.mxu0 %v4601
        %4802 = vmatpush1.bf16.msra.mxu0 %v4600
        %4803 = vmatprep.subr.bf16.mxu0 %v4603
        %4804 = vmatpush1.bf16.msra.mxu0 %v4602
        %4805 = vmatprep.subr.bf16.mxu0 %v4605
        %4806 = vmatpush1.bf16.msra.mxu0 %v4604
        %4807 = vmatprep.mubr.bf16.mxu0 %v3450
        %4808 = vmatmul.mubr.bf16.gmra.mrb[0].mxu0 %v3449
        %v4809 = vpop.f32.mrb[0].mxu0
        %v4810 = vadd.f32 %v4769, %v4809
        %v4811 = vpop.f32.mrb[0].mxu0
        %v4812 = vadd.f32 %v4771, %v4811
        %v4813 = vpop.f32.mrb[0].mxu0
        %v4814 = vpop.f32.mrb[0].mxu0
        %4815 = vdwg.mxu0
        %4816 = vmatprep.subr.bf16.mxu0 %v4607
        %4817 = vmatpush1.bf16.msra.mxu0 %v4606
        %4818 = vmatprep.subr.bf16.mxu0 %v4609
        %4819 = vmatpush1.bf16.msra.mxu0 %v4608
        %4820 = vmatprep.subr.bf16.mxu0 %v4611
        %4821 = vmatpush1.bf16.msra.mxu0 %v4610
        %4822 = vmatprep.subr.bf16.mxu0 %v4613
        %4823 = vmatpush1.bf16.msra.mxu0 %v4612
        %4824 = vmatprep.subr.bf16.mxu0 %v4615
        %4825 = vmatpush1.bf16.msra.mxu0 %v4614
        %4826 = vmatprep.subr.bf16.mxu0 %v4617
        %4827 = vmatpush1.bf16.msra.mxu0 %v4616
        %4828 = vmatprep.subr.bf16.mxu0 %v4619
        %4829 = vmatpush1.bf16.msra.mxu0 %v4618
        %4830 = vmatprep.subr.bf16.mxu0 %v4621
        %4831 = vmatpush1.bf16.msra.mxu0 %v4620
        %4832 = vmatprep.subr.bf16.mxu0 %v4623
        %4833 = vmatpush1.bf16.msra.mxu0 %v4622
        %4834 = vmatprep.subr.bf16.mxu0 %v4625
        %4835 = vmatpush1.bf16.msra.mxu0 %v4624
        %4836 = vmatprep.subr.bf16.mxu0 %v4627
        %4837 = vmatpush1.bf16.msra.mxu0 %v4626
        %4838 = vmatprep.subr.bf16.mxu0 %v4629
        %4839 = vmatpush1.bf16.msra.mxu0 %v4628
        %4840 = vmatprep.subr.bf16.mxu0 %v4631
        %4841 = vmatpush1.bf16.msra.mxu0 %v4630
        %4842 = vmatprep.subr.bf16.mxu0 %v4633
        %4843 = vmatpush1.bf16.msra.mxu0 %v4632
        %4844 = vmatprep.subr.bf16.mxu0 %v4635
        %4845 = vmatpush1.bf16.msra.mxu0 %v4634
        %4846 = vmatprep.subr.bf16.mxu0 %v4637
        %4847 = vmatpush1.bf16.msra.mxu0 %v4636
        %4848 = vmatprep.mubr.bf16.mxu0 %v3452
        %4849 = vmatmul.mubr.bf16.gmra.mrb[0].mxu0 %v3451
        %v4850 = vpop.f32.mrb[0].mxu0
        %v4851 = vadd.f32 %v4810, %v4850
        %v4852 = vpop.f32.mrb[0].mxu0
        %v4853 = vadd.f32 %v4812, %v4852
        %v4854 = vpop.f32.mrb[0].mxu0
        %v4855 = vpop.f32.mrb[0].mxu0
        %4856 = vdwg.mxu0
        %v4857 = vld [vmem:[%s11] sm:$0x3]
        %v4859 = vlaneseq
        %v4860 = vshrl.u32 %v4859, 7
        %v4861 = vsub.s32 0, %v4860
        %v4862 = vrot.slane %v4857, %v4861
        %v4863 = vlaneseq
        %v4864 = vshrl.u32 %v4863, 7
        %v4865 = vsub.s32 1, %v4864
        %v4866 = vrot.slane %v4857, %v4865
        %v4869 = vadd.f32 %v4851, %v4862
        %v4870 = vadd.f32 %v4853, %v4866
        %v4871 = vmax.f32 %v4869, 0.0
        %v4872 = vmax.f32 %v4870, 0.0
        %v4873 = vpack.c.bf16 %v4871, %v4871
        %v4874 = vpack.c.bf16 %v4872, %v4872
        %v4875 = vld [vmem:[#allocation16] sm:$0xf]
        %v4876 = vld [vmem:[#allocation16 + $0x4] sm:$0xf]
        %v4877 = vld [vmem:[#allocation16 + $0x8] sm:$0xf]
        %v4878 = vld [vmem:[#allocation16 + $0xc] sm:$0xf]
        %v4879 = vld [vmem:[#allocation16 + $0x10] sm:$0xf]
        %v4880 = vld [vmem:[#allocation16 + $0x14] sm:$0xf]
        %v4881 = vld [vmem:[#allocation16 + $0x18] sm:$0xf]
        %v4882 = vld [vmem:[#allocation16 + $0x1c] sm:$0xf]
        %v4883 = vld [vmem:[#allocation16 + $0x20] sm:$0xf]
        %v4884 = vld [vmem:[#allocation16 + $0x24] sm:$0xf]
        %v4885 = vld [vmem:[#allocation16 + $0x28] sm:$0xf]
        %v4886 = vld [vmem:[#allocation16 + $0x2c] sm:$0xf]
        %v4887 = vld [vmem:[#allocation16 + $0x30] sm:$0xf]
        %v4888 = vld [vmem:[#allocation16 + $0x34] sm:$0xf]
        %v4889 = vld [vmem:[#allocation16 + $0x38] sm:$0xf]
        %v4890 = vld [vmem:[#allocation16 + $0x3c] sm:$0xf]
        %v4891 = vld [vmem:[#allocation16 + $0x40] sm:$0xf]
        %v4892 = vld [vmem:[#allocation16 + $0x44] sm:$0xf]
        %v4893 = vld [vmem:[#allocation16 + $0x48] sm:$0xf]
        %v4894 = vld [vmem:[#allocation16 + $0x4c] sm:$0xf]
        %v4895 = vld [vmem:[#allocation16 + $0x50] sm:$0xf]
        %v4896 = vld [vmem:[#allocation16 + $0x54] sm:$0xf]
        %v4897 = vld [vmem:[#allocation16 + $0x58] sm:$0xf]
        %v4898 = vld [vmem:[#allocation16 + $0x5c] sm:$0xf]
        %v4899 = vld [vmem:[#allocation16 + $0x60] sm:$0xf]
        %v4900 = vld [vmem:[#allocation16 + $0x64] sm:$0xf]
        %v4901 = vld [vmem:[#allocation16 + $0x68] sm:$0xf]
        %v4902 = vld [vmem:[#allocation16 + $0x6c] sm:$0xf]
        %v4903 = vld [vmem:[#allocation16 + $0x70] sm:$0xf]
        %v4904 = vld [vmem:[#allocation16 + $0x74] sm:$0xf]
        %v4905 = vld [vmem:[#allocation16 + $0x78] sm:$0xf]
        %v4906 = vld [vmem:[#allocation16 + $0x7c] sm:$0xf]
        %v4907 = vld [vmem:[%s13] sm:$0x1]
        %v4909 = vlaneseq
        %v4910 = vshrl.u32 %v4909, 7
        %v4911 = vsub.s32 0, %v4910
        %v4912 = vrot.slane %v4907, %v4911
        %v4946 = vunpack.c.l.b16 %v4875
        %v4947 = vunpack.c.l.b16 %v4876
        %v4948 = vunpack.c.l.b16 %v4877
        %v4949 = vunpack.c.l.b16 %v4878
        %v4950 = vunpack.c.l.b16 %v4879
        %v4951 = vunpack.c.l.b16 %v4880
        %v4952 = vunpack.c.l.b16 %v4881
        %v4953 = vunpack.c.l.b16 %v4882
        %v4954 = vunpack.c.l.b16 %v4883
        %v4955 = vunpack.c.l.b16 %v4884
        %v4956 = vunpack.c.l.b16 %v4885
        %v4957 = vunpack.c.l.b16 %v4886
        %v4958 = vunpack.c.l.b16 %v4887
        %v4959 = vunpack.c.l.b16 %v4888
        %v4960 = vunpack.c.l.b16 %v4889
        %v4961 = vunpack.c.l.b16 %v4890
        %v4962 = vunpack.c.l.b16 %v4891
        %v4963 = vunpack.c.l.b16 %v4892
        %v4964 = vunpack.c.l.b16 %v4893
        %v4965 = vunpack.c.l.b16 %v4894
        %v4966 = vunpack.c.l.b16 %v4895
        %v4967 = vunpack.c.l.b16 %v4896
        %v4968 = vunpack.c.l.b16 %v4897
        %v4969 = vunpack.c.l.b16 %v4898
        %v4970 = vunpack.c.l.b16 %v4899
        %v4971 = vunpack.c.l.b16 %v4900
        %v4972 = vunpack.c.l.b16 %v4901
        %v4973 = vunpack.c.l.b16 %v4902
        %v4974 = vunpack.c.l.b16 %v4903
        %v4975 = vunpack.c.l.b16 %v4904
        %v4976 = vunpack.c.l.b16 %v4905
        %v4977 = vunpack.c.l.b16 %v4906
        %v4978 = vpack.c.b16 %v4947, %v4946
        %v4979 = vpack.c.b16 %v4949, %v4948
        %v4980 = vpack.c.b16 %v4951, %v4950
        %v4981 = vpack.c.b16 %v4953, %v4952
        %v4982 = vpack.c.b16 %v4955, %v4954
        %v4983 = vpack.c.b16 %v4957, %v4956
        %v4984 = vpack.c.b16 %v4959, %v4958
        %v4985 = vpack.c.b16 %v4961, %v4960
        %v4986 = vpack.c.b16 %v4963, %v4962
        %v4987 = vpack.c.b16 %v4965, %v4964
        %v4988 = vpack.c.b16 %v4967, %v4966
        %v4989 = vpack.c.b16 %v4969, %v4968
        %v4990 = vpack.c.b16 %v4971, %v4970
        %v4991 = vpack.c.b16 %v4973, %v4972
        %v4992 = vpack.c.b16 %v4975, %v4974
        %v4993 = vpack.c.b16 %v4977, %v4976
        %5010 = vmatprep.subr.bf16.mxu0 0
        %5011 = vmatpush1.bf16.msra.mxu0 %v4978
        %5012 = vmatprep.subr.bf16.mxu0 0
        %5013 = vmatpush1.bf16.msra.mxu0 %v4979
        %5014 = vmatprep.subr.bf16.mxu0 0
        %5015 = vmatpush1.bf16.msra.mxu0 %v4980
        %5016 = vmatprep.subr.bf16.mxu0 0
        %5017 = vmatpush1.bf16.msra.mxu0 %v4981
        %5018 = vmatprep.subr.bf16.mxu0 0
        %5019 = vmatpush1.bf16.msra.mxu0 %v4982
        %5020 = vmatprep.subr.bf16.mxu0 0
        %5021 = vmatpush1.bf16.msra.mxu0 %v4983
        %5022 = vmatprep.subr.bf16.mxu0 0
        %5023 = vmatpush1.bf16.msra.mxu0 %v4984
        %5024 = vmatprep.subr.bf16.mxu0 0
        %5025 = vmatpush1.bf16.msra.mxu0 %v4985
        %5026 = vmatprep.subr.bf16.mxu0 0
        %5027 = vmatpush1.bf16.msra.mxu0 %v4986
        %5028 = vmatprep.subr.bf16.mxu0 0
        %5029 = vmatpush1.bf16.msra.mxu0 %v4987
        %5030 = vmatprep.subr.bf16.mxu0 0
        %5031 = vmatpush1.bf16.msra.mxu0 %v4988
        %5032 = vmatprep.subr.bf16.mxu0 0
        %5033 = vmatpush1.bf16.msra.mxu0 %v4989
        %5034 = vmatprep.subr.bf16.mxu0 0
        %5035 = vmatpush1.bf16.msra.mxu0 %v4990
        %5036 = vmatprep.subr.bf16.mxu0 0
        %5037 = vmatpush1.bf16.msra.mxu0 %v4991
        %5038 = vmatprep.subr.bf16.mxu0 0
        %5039 = vmatpush1.bf16.msra.mxu0 %v4992
        %5040 = vmatprep.subr.bf16.mxu0 0
        %5041 = vmatpush1.bf16.msra.mxu0 %v4993
        %5042 = vmatprep.mubr.bf16.mxu0 %v4874
        %5043 = vmatmul.mubr.bf16.gmra.mrb[0].mxu0 %v4873
        %v5044 = vpop.f32.mrb[0].mxu0
        %v5045 = vadd.f32 %v4912, %v5044
        %v5046 = vpop.f32.mrb[0].mxu0
        %v5047 = vpop.f32.mrb[0].mxu0
        %v5048 = vpop.f32.mrb[0].mxu0
        %5049 = vdwg.mxu0
        %v5050 = vmax.f32 %v5045, 0.0
        %v5051 = vld [vmem:[%s14] sm:$0x1]
        %v5053 = vlaneseq
        %v5054 = vshrl.u32 %v5053, 7
        %v5055 = vsub.s32 0, %v5054
        %v5056 = vrot.slane %v5051, %v5055
        %v5058 = vmul.f32 %v5050, %v5056
        %5059 = vadd.xlane.f32.xlu0 %v5058
        %v5060 = vpop.xlane.xlu0 %5059
        %v5061 = vld [vmem:[#allocation3] sm:$0x1]
        %v5063 = vlaneseq
        %v5064 = vshrl.u32 %v5063, 7
        %v5065 = vsub.s32 0, %v5064
        %v5066 = vrot.slane %v5061, %v5065
        %v5068 = vadd.f32 %v5060, %v5066
        %v5069 = vxor.u32 %v5068, 2147483648
        %v5070 = vmul.f32 %v5069, 1.442695
        %v5071 = vpow.pop %v5070
        %v5072 = vadd.f32 %v5071, 1.0
        %v5073 = vrcp.pop %v5072
        %v5074 = vmul.f32 1.0, %v5073
        %vm5075 = vcmask 7168
        %5076 = vst.msk [vmem:[%s703] sm:$0xff] %vm5075, %v5074
        %s5077 = sld [smem:[#allocation2]]
        %v5078 = vstv %s5077
        %v5079 = vmul.f32 %v5078, %v3435
        %v5080 = vmul.f32 %v5078, %v3436
        %v5081 = vmul.f32 %v5078, %v3437
        %v5082 = vmul.f32 %v5078, %v3438
        %v5083 = vmul.f32 %v5078, %v3439
        %v5084 = vmul.f32 %v5078, %v3440
        %s5085 = ssub.f32 1.0, %s5077
        %v5086 = vstv %s5085
        %v5087 = vmul.f32 %v5086, %v3441
        %v5088 = vmul.f32 %v5086, %v3442
        %v5089 = vmul.f32 %v5086, %v3443
        %v5090 = vmul.f32 %v5086, %v3444
        %v5091 = vmul.f32 %v5086, %v3445
        %v5092 = vmul.f32 %v5086, %v3446
        %v5093 = vadd.f32 %v5079, %v5087
        %v5094 = vadd.f32 %v5080, %v5088
        %v5095 = vadd.f32 %v5081, %v5089
        %v5096 = vadd.f32 %v5082, %v5090
        %v5097 = vadd.f32 %v5083, %v5091
        %v5098 = vadd.f32 %v5084, %v5092
        %5099 = vst [vmem:[%s693] sm:$0xff] %v5093
        %5100 = vst [vmem:[%s693 + $0x8] sm:$0xff] %v5094
        %5101 = vst [vmem:[%s693 + $0x10] sm:$0xff] %v5095
        %5102 = vst [vmem:[%s693 + $0x18] sm:$0xff] %v5096
        %5103 = vst [vmem:[%s693 + $0x20] sm:$0xff] %v5097
        %5104 = vst [vmem:[%s693 + $0x28] sm:$0xff] %v5098
        %s5105 = sand.u32 %s398, 1
        %s5106 = scalar_lea.sflag [#allocation6], %s5105
        %s5107 = sand.u32 %s398, 1
        %s5108 = smul.addr %s5107, 48
        %s5109 = scalar_lea.vmem [#allocation18], %s5108
        %p5110 = scmp.lt.s32.totalorder %s44, 1
        %s5111 = scalar_select %p5110, %s44, 1
        %s5112 = smul.addr %s5111, 8
        %s5113 = scalar_lea.vmem %s17, %s5112
        // Predicated region
        $region117: #{tpu_custom_call.1} parent=83 // pred_check
          %p5114 = pneg %p408
        $region118: #{tpu_custom_call.1} parent=83 // pred_check_branch
          %5116 = sbr.rel (%p5114) target = $region120
        $region119: #{tpu_custom_call.1} parent=83 // pred_region
          %s5118 = ssub.s32 768, 768
          %5119 = vsyncadd %s5106, %s5118
          %s5120 = smul.addr %s44, 6
          %s5121 = smul.addr %s5120, 128
          %s5122 = scalar_lea.hbm %s16, %s5121
          %s5124 = sshll.u32 %s5109, 4
          %s5125 = int_to_ptr.vmem [resolvable:$true] %s5124
          %5127 = dma.vmem_to_hbm [thread:$0]  %s5125, 768, %s5122, %s5106
        $region120: #{tpu_custom_call.1} parent=83 // pred_fallthru
          _
        // Predicated region
        $region121: #{tpu_custom_call.1} parent=83 // pred_check
          %p5128 = pneg %p434
        $region122: #{tpu_custom_call.1} parent=83 // pred_check_branch
          %5130 = sbr.rel (%p5128) target = $region124
        $region123: #{tpu_custom_call.1} parent=83 // pred_region
          _
        $region124: #{tpu_custom_call.1} parent=83 // pred_fallthru
          _
      $region84: #{tpu_custom_call.1} parent=5 // pred_fallthru
        _
      %p5131 = scmp.le.s32.totalorder 2, %s39
      // Predicated region
      $region125: #{tpu_custom_call.1} parent=5 // pred_check
        %p5132 = pneg %p5131
      $region126: #{tpu_custom_call.1} parent=5 // pred_check_branch
        %5134 = sbr.rel (%p5132) target = $region128
      $region127: #{tpu_custom_call.1} parent=5 // pred_region
        %s5135 = ssub.s32 %s39, 2
        // Predicated region
        $region129: #{tpu_custom_call.1} parent=127 // pred_check
          %p5136 = pneg %p414
        $region130: #{tpu_custom_call.1} parent=127 // pred_check_branch
          %5138 = sbr.rel (%p5136) target = $region132
        $region131: #{tpu_custom_call.1} parent=127 // pred_region
          %s5139 = sand.u32 %s399, 1
          %s5140 = scalar_lea.sflag [#allocation6], %s5139
          %s5141 = sand.u32 %s399, 1
          %s5142 = smul.addr %s5141, 48
          %s5143 = scalar_lea.vmem [#allocation18], %s5142
          %5144 = dma.done %s5140, 768
        $region132: #{tpu_custom_call.1} parent=127 // pred_fallthru
          _
        // Predicated region
        $region133: #{tpu_custom_call.1} parent=127 // pred_check
          %p5145 = pneg %p440
        $region134: #{tpu_custom_call.1} parent=127 // pred_check_branch
          %5147 = sbr.rel (%p5145) target = $region136
        $region135: #{tpu_custom_call.1} parent=127 // pred_region
          %p5148 = scmp.lt.s32.totalorder %s45, 1
          %s5149 = scalar_select %p5148, %s45, 1
          %s5150 = smul.addr %s5149, 8
          %s5151 = scalar_lea.vmem %s17, %s5150
        $region136: #{tpu_custom_call.1} parent=127 // pred_fallthru
          _
      $region128: #{tpu_custom_call.1} parent=5 // pred_fallthru
        _
    $region6: #{tpu_custom_call.1} parent=1 // loop_footer
      %s43 = sadd.s32 1, %s39
    $region7: #{tpu_custom_call.1} parent=1 // loop_footer_branch
      %38 = sbr.rel target = $region3
    $region8: #{tpu_custom_call.1} parent=1 // loop_exit
      _
    %5152 = vsyncpa [#allocation5], 1
    %s5153 = scalar_lea.sflag [#allocation5], 1
    %5154 = vsyncpa %s5153, 1
    %5155 = vsyncpa [#allocation8], 1
    %s5156 = scalar_lea.sflag [#allocation8], 1
    %5157 = vsyncpa %s5156, 1
    %5158 = vsyncpa [#allocation11], 1
    %5159 = vsyncpa [#allocation14], 1
    %5160 = vsyncpa [#allocation17], 1
    %5161 = vsyncpa [#allocation6], 1
    %s5162 = scalar_lea.sflag [#allocation6], 1
    %5163 = vsyncpa %s5162, 1

// kernel: tpu_custom_call.1
$region0: #{tpu_custom_call.1}
  #allocation0 [shape = 'u32[]', space=smem, size = 0x4, offset = 0x4, fixed_abs, tag = 'smem constant byte address 0x4 - core index']
  #allocation1 [shape = 'u32[144,128]{1,0:T(1,128)}', space=vmem, size = 0x12000, scoped, tag = 'internal scratch']
  #allocation2 [shape = 'f32[1,1]{1,0:T(1,128)S(6)}', space=smem, size = 0x200, scoped, tag = 'scoped memory for tpu_custom_call.1']
  #allocation3 [shape = 'f32[1,1]{1,0:T(1,128)S(1)}', space=vmem, size = 0x200, scoped, tag = 'scoped memory for tpu_custom_call.1']
  %s0 = inlined_call_operand.<no memory space> [shape: f32[1,1], index: 0, kind: input, shape index: {}]
  %s1 = inlined_call_operand.hbm [shape: f32[16,768], index: 1, kind: input, shape index: {}]
  %s2 = inlined_call_operand.hbm [shape: f32[16,768], index: 2, kind: input, shape index: {}]
  %s3 = inlined_call_operand.hbm [shape: bf16[768,512], index: 3, kind: input, shape index: {}]
  %s4 = inlined_call_operand.vmem [shape: f32[1,512], index: 4, kind: input, shape index: {}]
  %s5 = inlined_call_operand.hbm [shape: bf16[512,256], index: 5, kind: input, shape index: {}]
  %s6 = inlined_call_operand.vmem [shape: f32[1,256], index: 6, kind: input, shape index: {}]
  %s7 = inlined_call_operand.hbm [shape: bf16[256,768], index: 7, kind: input, shape index: {}]
  %s8 = inlined_call_operand.vmem [shape: f32[1,768], index: 8, kind: input, shape index: {}]
  %s9 = inlined_call_operand.hbm [shape: bf16[768,256], index: 9, kind: input, shape index: {}]
  %s10 = inlined_call_operand.hbm [shape: bf16[768,256], index: 10, kind: input, shape index: {}]
  %s11 = inlined_call_operand.vmem [shape: f32[1,256], index: 11, kind: input, shape index: {}]
  %s12 = inlined_call_operand.hbm [shape: bf16[256,128], index: 12, kind: input, shape index: {}]
  %s13 = inlined_call_operand.vmem [shape: f32[1,128], index: 13, kind: input, shape index: {}]
  %s14 = inlined_call_operand.vmem [shape: f32[1,128], index: 14, kind: input, shape index: {}]
  %s15 = inlined_call_operand.<no memory space> [shape: f32[1,1], index: 15, kind: input, shape index: {}]
  %s16 = inlined_call_operand.hbm [shape: f32[16,768], index: 16, kind: output, shape index: {0}]
  %s17 = inlined_call_operand.vmem [shape: f32[16,1], index: 17, kind: output, shape index: {1}]
  %18 = xla_tuple %s16, %s17
  %s19 = sld [smem:[#allocation0]]
  $region137: #{tpu_custom_call.1} parent=0
    _
  %s21 = ssub.s32 1, %s19
  %s22 = scalar_select 0, %s21, %s19
  %23 = sst [smem:[#allocation2]] %s0
  %v24 = vstv %s15
  %25 = vst [vmem:[#allocation3] sm:$0x1] %v24
  $region1: #{tpu_custom_call.1} parent=0
    #allocation4 [shape = 'u8[49152]{0}', space=vmem, size = 0xc000, scoped, tag = 'input window, operand 1']
    #allocation5 [shape = 's32[2]{0}', space=sflag, size = 0x8, scoped, tag = 'scoped memory for tpu_custom_call.1']
    #allocation6 [shape = 's32[2]{0}', space=sflag, size = 0x8, scoped, tag = 'scoped memory for tpu_custom_call.1']
    #allocation7 [shape = 'u8[49152]{0}', space=vmem, size = 0xc000, scoped, tag = 'input window, operand 2']
    #allocation8 [shape = 's32[2]{0}', space=sflag, size = 0x8, scoped, tag = 'scoped memory for tpu_custom_call.1']
    #allocation9 [shape = 'u8[786432]{0}', space=vmem, size = 0xc0000, scoped, tag = 'input window, operand 3, single buffered']
    #allocation10 [shape = 'u8[262144]{0}', space=vmem, size = 0x40000, scoped, tag = 'input window, operand 5, single buffered']
    #allocation11 [shape = 's32[1]{0}', space=sflag, size = 0x4, scoped, tag = 'scoped memory for tpu_custom_call.1']
    #allocation12 [shape = 'u8[393216]{0}', space=vmem, size = 0x60000, scoped, tag = 'input window, operand 7, single buffered']
    #allocation13 [shape = 'u8[393216]{0}', space=vmem, size = 0x60000, scoped, tag = 'input window, operand 9, single buffered']
    #allocation14 [shape = 's32[1]{0}', space=sflag, size = 0x4, scoped, tag = 'scoped memory for tpu_custom_call.1']
    #allocation15 [shape = 'u8[393216]{0}', space=vmem, size = 0x60000, scoped, tag = 'input window, operand 10, single buffered']
    #allocation16 [shape = 'u8[65536]{0}', space=vmem, size = 0x10000, scoped, tag = 'input window, operand 12, single buffered']
    #allocation17 [shape = 's32[1]{0}', space=sflag, size = 0x4, scoped, tag = 'scoped memory for tpu_custom_call.1']
    #allocation18 [shape = 'u8[49152]{0}', space=vmem, size = 0xc000, scoped, tag = 'output window, operand 0']
    %26 = vsyncpa [#allocation5], 0
    %s27 = scalar_lea.sflag [#allocation5], 1
    %28 = vsyncpa %s27, 0
    %29 = vsyncpa [#allocation8], 0
    %s30 = scalar_lea.sflag [#allocation8], 1
    %31 = vsyncpa %s30, 0
    %32 = vsyncpa [#allocation11], 0
    %33 = vsyncpa [#allocation14], 0
    %34 = vsyncpa [#allocation17], 0
    %35 = vsyncpa [#allocation6], 0
    %s36 = scalar_lea.sflag [#allocation6], 1
    %37 = vsyncpa %s36, 0
    loop: start=0, step=1, limit=4
    $region2: #{tpu_custom_call.1} parent=1 // loop_pre_header
      _
    $region3: #{tpu_custom_call.1} parent=1 // loop_header
      %s39 = sphi 0, %s43
      %p40 = scmp.ge.s32.totalorder %s39, 4
      %s47 = sphi 0, %s47
      %s49 = sphi 0, %s47
      %s50 = sphi 0, %s49
      %s64 = sphi 0, %s50
      %s70 = sphi 0, %s72
      %s73 = sphi 0, %s70
      %s74 = sphi 0, %s73
      %s90 = sphi 0, %s74
      %s96 = sphi 0, %s98
      %s99 = sphi 0, %s96
      %s100 = sphi 0, %s99
      %s116 = sphi 0, %s100
      %s120 = sphi 0, %s120
      %s122 = sphi 0, %s120
      %s123 = sphi 0, %s122
      %s137 = sphi 0, %s123
      %s141 = sphi 0, %s141
      %s143 = sphi 0, %s141
      %s144 = sphi 0, %s143
      %s158 = sphi 0, %s144
      %s162 = sphi 0, %s162
      %s164 = sphi 0, %s162
      %s165 = sphi 0, %s164
      %s179 = sphi 0, %s165
      %s183 = sphi 0, %s183
      %s185 = sphi 0, %s183
      %s186 = sphi 0, %s185
      %s200 = sphi 0, %s186
      %s204 = sphi 0, %s204
      %s206 = sphi 0, %s204
      %s207 = sphi 0, %s206
      %s221 = sphi 0, %s207
      %s225 = sphi 0, %s225
      %s227 = sphi 0, %s225
      %s228 = sphi 0, %s227
      %s242 = sphi 0, %s228
      %s246 = sphi 0, %s246
      %s248 = sphi 0, %s246
      %s249 = sphi 0, %s248
      %s263 = sphi 0, %s249
      %s267 = sphi 0, %s267
      %s269 = sphi 0, %s267
      %s270 = sphi 0, %s269
      %s284 = sphi 0, %s270
      %s288 = sphi 0, %s288
      %s290 = sphi 0, %s288
      %s291 = sphi 0, %s290
      %s305 = sphi 0, %s291
      %s309 = sphi 0, %s309
      %s311 = sphi 0, %s309
      %s312 = sphi 0, %s311
      %s326 = sphi 0, %s312
      %s330 = sphi 0, %s330
      %s332 = sphi 0, %s330
      %s333 = sphi 0, %s332
      %s347 = sphi 0, %s333
      %s351 = sphi 0, %s351
      %s353 = sphi 0, %s351
      %s354 = sphi 0, %s353
      %s368 = sphi 0, %s354
      %s372 = sphi 0, %s372
      %s374 = sphi 0, %s372
      %s375 = sphi 0, %s374
      %s389 = sphi 0, %s375
      %s395 = sphi 0, %s397
      %s398 = sphi 0, %s395
      %s399 = sphi 0, %s398
      %s415 = sphi 0, %s399
      %s421 = sphi 0, %s423
      %s424 = sphi 0, %s421
      %s425 = sphi 0, %s424
      %s441 = sphi 0, %s425
    $region4: #{tpu_custom_call.1} parent=1 // loop_header_branch
      %42 = sbr.rel (%p40) target = $region8
    $region5: #{tpu_custom_call.1} parent=1 // loop_body
      %s44 = ssub.s32 %s39, 1
      %s45 = ssub.s32 %s39, 2
      %s46 = sadd.s32 %s39, 1
      %s48 = sadd.s32 %s47, 1
      %p51 = scmp.eq.s32.totalorder %s39, 1
      %p52 = scmp.ne.s32.totalorder %s47, %s49
      %p53 = scmp.eq.s32.totalorder %s39, 0
      %p54 = por %p52, %p53
      %p55 = scmp.ne.s32.totalorder %s47, %s49
      %p56 = scmp.eq.s32.totalorder %s44, 1
      %p57 = por %p55, %p56
      %p58 = scmp.ne.s32.totalorder %s49, %s50
      %p59 = scmp.eq.s32.totalorder %s44, 0
      %p60 = por %p58, %p59
      %p61 = scmp.ne.s32.totalorder %s49, %s50
      %p62 = scmp.eq.s32.totalorder %s45, 1
      %p63 = por %p61, %p62
      %p65 = scmp.ne.s32.totalorder %s50, %s64
      %p66 = scmp.eq.s32.totalorder %s45, 0
      %p67 = por %p65, %p66
      %s68 = ssub.s32 %s39, %s46
      %p69 = scmp.eq.s32.totalorder %s68, 0
      %s71 = sadd.s32 %s70, 1
      %s72 = scalar_select %p69, %s70, %s71
      %p75 = pneg %p69
      %p76 = scmp.eq.s32.totalorder %s39, 1
      %p77 = por %p75, %p76
      %p78 = scmp.ne.s32.totalorder %s70, %s73
      %p79 = scmp.eq.s32.totalorder %s39, 0
      %p80 = por %p78, %p79
      %p81 = scmp.ne.s32.totalorder %s70, %s73
      %p82 = scmp.eq.s32.totalorder %s44, 1
      %p83 = por %p81, %p82
      %p84 = scmp.ne.s32.totalorder %s73, %s74
      %p85 = scmp.eq.s32.totalorder %s44, 0
      %p86 = por %p84, %p85
      %p87 = scmp.ne.s32.totalorder %s73, %s74
      %p88 = scmp.eq.s32.totalorder %s45, 1
      %p89 = por %p87, %p88
      %p91 = scmp.ne.s32.totalorder %s74, %s90
      %p92 = scmp.eq.s32.totalorder %s45, 0
      %p93 = por %p91, %p92
      %s94 = ssub.s32 %s39, %s46
      %p95 = scmp.eq.s32.totalorder %s94, 0
      %s97 = sadd.s32 %s96, 1
      %s98 = scalar_select %p95, %s96, %s97
      %p101 = pneg %p95
      %p102 = scmp.eq.s32.totalorder %s39, 1
      %p103 = por %p101, %p102
      %p104 = scmp.ne.s32.totalorder %s96, %s99
      %p105 = scmp.eq.s32.totalorder %s39, 0
      %p106 = por %p104, %p105
      %p107 = scmp.ne.s32.totalorder %s96, %s99
      %p108 = scmp.eq.s32.totalorder %s44, 1
      %p109 = por %p107, %p108
      %p110 = scmp.ne.s32.totalorder %s99, %s100
      %p111 = scmp.eq.s32.totalorder %s44, 0
      %p112 = por %p110, %p111
      %p113 = scmp.ne.s32.totalorder %s99, %s100
      %p114 = scmp.eq.s32.totalorder %s45, 1
      %p115 = por %p113, %p114
      %p117 = scmp.ne.s32.totalorder %s100, %s116
      %p118 = scmp.eq.s32.totalorder %s45, 0
      %p119 = por %p117, %p118
      %s121 = sadd.s32 %s120, 1
      %p124 = scmp.eq.s32.totalorder %s39, 1
      %p125 = scmp.ne.s32.totalorder %s120, %s122
      %p126 = scmp.eq.s32.totalorder %s39, 0
      %p127 = por %p125, %p126
      %p128 = scmp.ne.s32.totalorder %s120, %s122
      %p129 = scmp.eq.s32.totalorder %s44, 1
      %p130 = por %p128, %p129
      %p131 = scmp.ne.s32.totalorder %s122, %s123
      %p132 = scmp.eq.s32.totalorder %s44, 0
      %p133 = por %p131, %p132
      %p134 = scmp.ne.s32.totalorder %s122, %s123
      %p135 = scmp.eq.s32.totalorder %s45, 1
      %p136 = por %p134, %p135
      %p138 = scmp.ne.s32.totalorder %s123, %s137
      %p139 = scmp.eq.s32.totalorder %s45, 0
      %p140 = por %p138, %p139
      %s142 = sadd.s32 %s141, 1
      %p145 = scmp.eq.s32.totalorder %s39, 1
      %p146 = scmp.ne.s32.totalorder %s141, %s143
      %p147 = scmp.eq.s32.totalorder %s39, 0
      %p148 = por %p146, %p147
      %p149 = scmp.ne.s32.totalorder %s141, %s143
      %p150 = scmp.eq.s32.totalorder %s44, 1
      %p151 = por %p149, %p150
      %p152 = scmp.ne.s32.totalorder %s143, %s144
      %p153 = scmp.eq.s32.totalorder %s44, 0
      %p154 = por %p152, %p153
      %p155 = scmp.ne.s32.totalorder %s143, %s144
      %p156 = scmp.eq.s32.totalorder %s45, 1
      %p157 = por %p155, %p156
      %p159 = scmp.ne.s32.totalorder %s144, %s158
      %p160 = scmp.eq.s32.totalorder %s45, 0
      %p161 = por %p159, %p160
      %s163 = sadd.s32 %s162, 1
      %p166 = scmp.eq.s32.totalorder %s39, 1
      %p167 = scmp.ne.s32.totalorder %s162, %s164
      %p168 = scmp.eq.s32.totalorder %s39, 0
      %p169 = por %p167, %p168
      %p170 = scmp.ne.s32.totalorder %s162, %s164
      %p171 = scmp.eq.s32.totalorder %s44, 1
      %p172 = por %p170, %p171
      %p173 = scmp.ne.s32.totalorder %s164, %s165
      %p174 = scmp.eq.s32.totalorder %s44, 0
      %p175 = por %p173, %p174
      %p176 = scmp.ne.s32.totalorder %s164, %s165
      %p177 = scmp.eq.s32.totalorder %s45, 1
      %p178 = por %p176, %p177
      %p180 = scmp.ne.s32.totalorder %s165, %s179
      %p181 = scmp.eq.s32.totalorder %s45, 0
      %p182 = por %p180, %p181
      %s184 = sadd.s32 %s183, 1
      %p187 = scmp.eq.s32.totalorder %s39, 1
      %p188 = scmp.ne.s32.totalorder %s183, %s185
      %p189 = scmp.eq.s32.totalorder %s39, 0
      %p190 = por %p188, %p189
      %p191 = scmp.ne.s32.totalorder %s183, %s185
      %p192 = scmp.eq.s32.totalorder %s44, 1
      %p193 = por %p191, %p192
      %p194 = scmp.ne.s32.totalorder %s185, %s186
      %p195 = scmp.eq.s32.totalorder %s44, 0
      %p196 = por %p194, %p195
      %p197 = scmp.ne.s32.totalorder %s185, %s186
      %p198 = scmp.eq.s32.totalorder %s45, 1
      %p199 = por %p197, %p198
      %p201 = scmp.ne.s32.totalorder %s186, %s200
      %p202 = scmp.eq.s32.totalorder %s45, 0
      %p203 = por %p201, %p202
      %s205 = sadd.s32 %s204, 1
      %p208 = scmp.eq.s32.totalorder %s39, 1
      %p209 = scmp.ne.s32.totalorder %s204, %s206
      %p210 = scmp.eq.s32.totalorder %s39, 0
      %p211 = por %p209, %p210
      %p212 = scmp.ne.s32.totalorder %s204, %s206
      %p213 = scmp.eq.s32.totalorder %s44, 1
      %p214 = por %p212, %p213
      %p215 = scmp.ne.s32.totalorder %s206, %s207
      %p216 = scmp.eq.s32.totalorder %s44, 0
      %p217 = por %p215, %p216
      %p218 = scmp.ne.s32.totalorder %s206, %s207
      %p219 = scmp.eq.s32.totalorder %s45, 1
      %p220 = por %p218, %p219
      %p222 = scmp.ne.s32.totalorder %s207, %s221
      %p223 = scmp.eq.s32.totalorder %s45, 0
      %p224 = por %p222, %p223
      %s226 = sadd.s32 %s225, 1
      %p229 = scmp.eq.s32.totalorder %s39, 1
      %p230 = scmp.ne.s32.totalorder %s225, %s227
      %p231 = scmp.eq.s32.totalorder %s39, 0
      %p232 = por %p230, %p231
      %p233 = scmp.ne.s32.totalorder %s225, %s227
      %p234 = scmp.eq.s32.totalorder %s44, 1
      %p235 = por %p233, %p234
      %p236 = scmp.ne.s32.totalorder %s227, %s228
      %p237 = scmp.eq.s32.totalorder %s44, 0
      %p238 = por %p236, %p237
      %p239 = scmp.ne.s32.totalorder %s227, %s228
      %p240 = scmp.eq.s32.totalorder %s45, 1
      %p241 = por %p239, %p240
      %p243 = scmp.ne.s32.totalorder %s228, %s242
      %p244 = scmp.eq.s32.totalorder %s45, 0
      %p245 = por %p243, %p244
      %s247 = sadd.s32 %s246, 1
      %p250 = scmp.eq.s32.totalorder %s39, 1
      %p251 = scmp.ne.s32.totalorder %s246, %s248
      %p252 = scmp.eq.s32.totalorder %s39, 0
      %p253 = por %p251, %p252
      %p254 = scmp.ne.s32.totalorder %s246, %s248
      %p255 = scmp.eq.s32.totalorder %s44, 1
      %p256 = por %p254, %p255
      %p257 = scmp.ne.s32.totalorder %s248, %s249
      %p258 = scmp.eq.s32.totalorder %s44, 0
      %p259 = por %p257, %p258
      %p260 = scmp.ne.s32.totalorder %s248, %s249
      %p261 = scmp.eq.s32.totalorder %s45, 1
      %p262 = por %p260, %p261
      %p264 = scmp.ne.s32.totalorder %s249, %s263
      %p265 = scmp.eq.s32.totalorder %s45, 0
      %p266 = por %p264, %p265
      %s268 = sadd.s32 %s267, 1
      %p271 = scmp.eq.s32.totalorder %s39, 1
      %p272 = scmp.ne.s32.totalorder %s267, %s269
      %p273 = scmp.eq.s32.totalorder %s39, 0
      %p274 = por %p272, %p273
      %p275 = scmp.ne.s32.totalorder %s267, %s269
      %p276 = scmp.eq.s32.totalorder %s44, 1
      %p277 = por %p275, %p276
      %p278 = scmp.ne.s32.totalorder %s269, %s270
      %p279 = scmp.eq.s32.totalorder %s44, 0
      %p280 = por %p278, %p279
      %p281 = scmp.ne.s32.totalorder %s269, %s270
      %p282 = scmp.eq.s32.totalorder %s45, 1
      %p283 = por %p281, %p282
      %p285 = scmp.ne.s32.totalorder %s270, %s284
      %p286 = scmp.eq.s32.totalorder %s45, 0
      %p287 = por %p285, %p286
      %s289 = sadd.s32 %s288, 1
      %p292 = scmp.eq.s32.totalorder %s39, 1
      %p293 = scmp.ne.s32.totalorder %s288, %s290
      %p294 = scmp.eq.s32.totalorder %s39, 0
      %p295 = por %p293, %p294
      %p296 = scmp.ne.s32.totalorder %s288, %s290
      %p297 = scmp.eq.s32.totalorder %s44, 1
      %p298 = por %p296, %p297
      %p299 = scmp.ne.s32.totalorder %s290, %s291
      %p300 = scmp.eq.s32.totalorder %s44, 0
      %p301 = por %p299, %p300
      %p302 = scmp.ne.s32.totalorder %s290, %s291
      %p303 = scmp.eq.s32.totalorder %s45, 1
      %p304 = por %p302, %p303
      %p306 = scmp.ne.s32.totalorder %s291, %s305
      %p307 = scmp.eq.s32.totalorder %s45, 0
      %p308 = por %p306, %p307
      %s310 = sadd.s32 %s309, 1
      %p313 = scmp.eq.s32.totalorder %s39, 1
      %p314 = scmp.ne.s32.totalorder %s309, %s311
      %p315 = scmp.eq.s32.totalorder %s39, 0
      %p316 = por %p314, %p315
      %p317 = scmp.ne.s32.totalorder %s309, %s311
      %p318 = scmp.eq.s32.totalorder %s44, 1
      %p319 = por %p317, %p318
      %p320 = scmp.ne.s32.totalorder %s311, %s312
      %p321 = scmp.eq.s32.totalorder %s44, 0
      %p322 = por %p320, %p321
      %p323 = scmp.ne.s32.totalorder %s311, %s312
      %p324 = scmp.eq.s32.totalorder %s45, 1
      %p325 = por %p323, %p324
      %p327 = scmp.ne.s32.totalorder %s312, %s326
      %p328 = scmp.eq.s32.totalorder %s45, 0
      %p329 = por %p327, %p328
      %s331 = sadd.s32 %s330, 1
      %p334 = scmp.eq.s32.totalorder %s39, 1
      %p335 = scmp.ne.s32.totalorder %s330, %s332
      %p336 = scmp.eq.s32.totalorder %s39, 0
      %p337 = por %p335, %p336
      %p338 = scmp.ne.s32.totalorder %s330, %s332
      %p339 = scmp.eq.s32.totalorder %s44, 1
      %p340 = por %p338, %p339
      %p341 = scmp.ne.s32.totalorder %s332, %s333
      %p342 = scmp.eq.s32.totalorder %s44, 0
      %p343 = por %p341, %p342
      %p344 = scmp.ne.s32.totalorder %s332, %s333
      %p345 = scmp.eq.s32.totalorder %s45, 1
      %p346 = por %p344, %p345
      %p348 = scmp.ne.s32.totalorder %s333, %s347
      %p349 = scmp.eq.s32.totalorder %s45, 0
      %p350 = por %p348, %p349
      %s352 = sadd.s32 %s351, 1
      %p355 = scmp.eq.s32.totalorder %s39, 1
      %p356 = scmp.ne.s32.totalorder %s351, %s353
      %p357 = scmp.eq.s32.totalorder %s39, 0
      %p358 = por %p356, %p357
      %p359 = scmp.ne.s32.totalorder %s351, %s353
      %p360 = scmp.eq.s32.totalorder %s44, 1
      %p361 = por %p359, %p360
      %p362 = scmp.ne.s32.totalorder %s353, %s354
      %p363 = scmp.eq.s32.totalorder %s44, 0
      %p364 = por %p362, %p363
      %p365 = scmp.ne.s32.totalorder %s353, %s354
      %p366 = scmp.eq.s32.totalorder %s45, 1
      %p367 = por %p365, %p366
      %p369 = scmp.ne.s32.totalorder %s354, %s368
      %p370 = scmp.eq.s32.totalorder %s45, 0
      %p371 = por %p369, %p370
      %s373 = sadd.s32 %s372, 1
      %p376 = scmp.eq.s32.totalorder %s39, 1
      %p377 = scmp.ne.s32.totalorder %s372, %s374
      %p378 = scmp.eq.s32.totalorder %s39, 0
      %p379 = por %p377, %p378
      %p380 = scmp.ne.s32.totalorder %s372, %s374
      %p381 = scmp.eq.s32.totalorder %s44, 1
      %p382 = por %p380, %p381
      %p383 = scmp.ne.s32.totalorder %s374, %s375
      %p384 = scmp.eq.s32.totalorder %s44, 0
      %p385 = por %p383, %p384
      %p386 = scmp.ne.s32.totalorder %s374, %s375
      %p387 = scmp.eq.s32.totalorder %s45, 1
      %p388 = por %p386, %p387
      %p390 = scmp.ne.s32.totalorder %s375, %s389
      %p391 = scmp.eq.s32.totalorder %s45, 0
      %p392 = por %p390, %p391
      %s393 = ssub.s32 %s39, %s46
      %p394 = scmp.eq.s32.totalorder %s393, 0
      %s396 = sadd.s32 %s395, 1
      %s397 = scalar_select %p394, %s395, %s396
      %p400 = pneg %p394
      %p401 = scmp.eq.s32.totalorder %s39, 1
      %p402 = por %p400, %p401
      %p403 = scmp.ne.s32.totalorder %s395, %s398
      %p404 = scmp.eq.s32.totalorder %s39, 0
      %p405 = por %p403, %p404
      %p406 = scmp.ne.s32.totalorder %s395, %s398
      %p407 = scmp.eq.s32.totalorder %s44, 1
      %p408 = por %p406, %p407
      %p409 = scmp.ne.s32.totalorder %s398, %s399
      %p410 = scmp.eq.s32.totalorder %s44, 0
      %p411 = por %p409, %p410
      %p412 = scmp.ne.s32.totalorder %s398, %s399
      %p413 = scmp.eq.s32.totalorder %s45, 1
      %p414 = por %p412, %p413
      %p416 = scmp.ne.s32.totalorder %s399, %s415
      %p417 = scmp.eq.s32.totalorder %s45, 0
      %p418 = por %p416, %p417
      %s419 = ssub.s32 %s39, %s46
      %p420 = scmp.eq.s32.totalorder %s419, 0
      %s422 = sadd.s32 %s421, 1
      %s423 = scalar_select %p420, %s421, %s422
      %p426 = pneg %p420
      %p427 = scmp.eq.s32.totalorder %s39, 1
      %p428 = por %p426, %p427
      %p429 = scmp.ne.s32.totalorder %s421, %s424
      %p430 = scmp.eq.s32.totalorder %s39, 0
      %p431 = por %p429, %p430
      %p432 = scmp.ne.s32.totalorder %s421, %s424
      %p433 = scmp.eq.s32.totalorder %s44, 1
      %p434 = por %p432, %p433
      %p435 = scmp.ne.s32.totalorder %s424, %s425
      %p436 = scmp.eq.s32.totalorder %s44, 0
      %p437 = por %p435, %p436
      %p438 = scmp.ne.s32.totalorder %s424, %s425
      %p439 = scmp.eq.s32.totalorder %s45, 1
      %p440 = por %p438, %p439
      %p442 = scmp.ne.s32.totalorder %s425, %s441
      %p443 = scmp.eq.s32.totalorder %s45, 0
      %p444 = por %p442, %p443
      %p445 = scmp.le.s32.totalorder 1, %s39
      %p446 = scmp.lt.s32.totalorder %s39, 3
      %p447 = pnand %p445, %p446
      %p448 = pneg %p447
      // Predicated region
      $region9: #{tpu_custom_call.1} parent=5 // pred_check
        _
      $region10: #{tpu_custom_call.1} parent=5 // pred_check_branch
        %450 = sbr.rel (%p447) target = $region12
      $region11: #{tpu_custom_call.1} parent=5 // pred_region
        %s451 = ssub.s32 %s39, 1
        // Predicated region
        $region13: #{tpu_custom_call.1} parent=11 // pred_check
          %p452 = pneg %p60
        $region14: #{tpu_custom_call.1} parent=11 // pred_check_branch
          %454 = sbr.rel (%p452) target = $region16
        $region15: #{tpu_custom_call.1} parent=11 // pred_region
          _
        $region16: #{tpu_custom_call.1} parent=11 // pred_fallthru
          _
        // Predicated region
        $region17: #{tpu_custom_call.1} parent=11 // pred_check
          %p455 = pneg %p133
        $region18: #{tpu_custom_call.1} parent=11 // pred_check_branch
          %457 = sbr.rel (%p455) target = $region20
        $region19: #{tpu_custom_call.1} parent=11 // pred_region
          %s459 = ssub.s32 24576, 24576
          %460 = vsyncadd [#allocation8], %s459
          %s461 = sshll.u32 [#allocation9], 4
          %s462 = int_to_ptr.vmem [resolvable:$true] %s461
          %467 = dma.hbm_to_vmem [thread:$0]  %s3, 24576, %s462, [#allocation8], 256, 256, 16
        $region20: #{tpu_custom_call.1} parent=11 // pred_fallthru
          _
        // Predicated region
        $region21: #{tpu_custom_call.1} parent=11 // pred_check
          %p468 = pneg %p154
        $region22: #{tpu_custom_call.1} parent=11 // pred_check_branch
          %470 = sbr.rel (%p468) target = $region24
        $region23: #{tpu_custom_call.1} parent=11 // pred_region
          _
        $region24: #{tpu_custom_call.1} parent=11 // pred_fallthru
          _
        // Predicated region
        $region25: #{tpu_custom_call.1} parent=11 // pred_check
          %p471 = pneg %p175
        $region26: #{tpu_custom_call.1} parent=11 // pred_check_branch
          %473 = sbr.rel (%p471) target = $region28
        $region27: #{tpu_custom_call.1} parent=11 // pred_region
          %s475 = ssub.s32 8192, 8192
          %476 = vsyncadd [#allocation11], %s475
          %s477 = sshll.u32 [#allocation10], 4
          %s478 = int_to_ptr.vmem [resolvable:$true] %s477
          %483 = dma.hbm_to_vmem [thread:$0]  %s5, 8192, %s478, [#allocation11], 128, 128, 8
        $region28: #{tpu_custom_call.1} parent=11 // pred_fallthru
          _
        // Predicated region
        $region29: #{tpu_custom_call.1} parent=11 // pred_check
          %p484 = pneg %p196
        $region30: #{tpu_custom_call.1} parent=11 // pred_check_branch
          %486 = sbr.rel (%p484) target = $region32
        $region31: #{tpu_custom_call.1} parent=11 // pred_region
          _
        $region32: #{tpu_custom_call.1} parent=11 // pred_fallthru
          _
        // Predicated region
        $region33: #{tpu_custom_call.1} parent=11 // pred_check
          %p487 = pneg %p217
        $region34: #{tpu_custom_call.1} parent=11 // pred_check_branch
          %489 = sbr.rel (%p487) target = $region36
        $region35: #{tpu_custom_call.1} parent=11 // pred_region
          %s491 = ssub.s32 12288, 12288
          %492 = vsyncadd [#allocation11], %s491
          %s493 = sshll.u32 [#allocation12], 4
          %s494 = int_to_ptr.vmem [resolvable:$true] %s493
          %499 = dma.hbm_to_vmem [thread:$0]  %s7, 12288, %s494, [#allocation11], 384, 384, 24
        $region36: #{tpu_custom_call.1} parent=11 // pred_fallthru
          _
        // Predicated region
        $region37: #{tpu_custom_call.1} parent=11 // pred_check
          %p500 = pneg %p238
        $region38: #{tpu_custom_call.1} parent=11 // pred_check_branch
          %502 = sbr.rel (%p500) target = $region40
        $region39: #{tpu_custom_call.1} parent=11 // pred_region
          _
        $region40: #{tpu_custom_call.1} parent=11 // pred_fallthru
          _
        // Predicated region
        $region41: #{tpu_custom_call.1} parent=11 // pred_check
          %p503 = pneg %p259
        $region42: #{tpu_custom_call.1} parent=11 // pred_check_branch
          %505 = sbr.rel (%p503) target = $region44
        $region43: #{tpu_custom_call.1} parent=11 // pred_region
          %s507 = ssub.s32 12288, 12288
          %508 = vsyncadd [#allocation14], %s507
          %s509 = sshll.u32 [#allocation13], 4
          %s510 = int_to_ptr.vmem [resolvable:$true] %s509
          %515 = dma.hbm_to_vmem [thread:$0]  %s9, 12288, %s510, [#allocation14], 128, 128, 8
        $region44: #{tpu_custom_call.1} parent=11 // pred_fallthru
          _
        // Predicated region
        $region45: #{tpu_custom_call.1} parent=11 // pred_check
          %p516 = pneg %p280
        $region46: #{tpu_custom_call.1} parent=11 // pred_check_branch
          %518 = sbr.rel (%p516) target = $region48
        $region47: #{tpu_custom_call.1} parent=11 // pred_region
          %s520 = ssub.s32 12288, 12288
          %521 = vsyncadd [#allocation14], %s520
          %s522 = sshll.u32 [#allocation15], 4
          %s523 = int_to_ptr.vmem [resolvable:$true] %s522
          %528 = dma.hbm_to_vmem [thread:$0]  %s10, 12288, %s523, [#allocation14], 128, 128, 8
        $region48: #{tpu_custom_call.1} parent=11 // pred_fallthru
          _
        // Predicated region
        $region49: #{tpu_custom_call.1} parent=11 // pred_check
          %p529 = pneg %p301
        $region50: #{tpu_custom_call.1} parent=11 // pred_check_branch
          %531 = sbr.rel (%p529) target = $region52
        $region51: #{tpu_custom_call.1} parent=11 // pred_region
          _
        $region52: #{tpu_custom_call.1} parent=11 // pred_fallthru
          _
        // Predicated region
        $region53: #{tpu_custom_call.1} parent=11 // pred_check
          %p532 = pneg %p322
        $region54: #{tpu_custom_call.1} parent=11 // pred_check_branch
          %534 = sbr.rel (%p532) target = $region56
        $region55: #{tpu_custom_call.1} parent=11 // pred_region
          %s536 = ssub.s32 2048, 2048
          %537 = vsyncadd [#allocation17], %s536
          %s538 = sshll.u32 [#allocation16], 4
          %s539 = int_to_ptr.vmem [resolvable:$true] %s538
          %544 = dma.hbm_to_vmem [thread:$0]  %s12, 2048, %s539, [#allocation17], 64, 64, 4
        $region56: #{tpu_custom_call.1} parent=11 // pred_fallthru
          _
        // Predicated region
        $region57: #{tpu_custom_call.1} parent=11 // pred_check
          %p545 = pneg %p343
        $region58: #{tpu_custom_call.1} parent=11 // pred_check_branch
          %547 = sbr.rel (%p545) target = $region60
        $region59: #{tpu_custom_call.1} parent=11 // pred_region
          _
        $region60: #{tpu_custom_call.1} parent=11 // pred_fallthru
          _
        // Predicated region
        $region61: #{tpu_custom_call.1} parent=11 // pred_check
          %p548 = pneg %p364
        $region62: #{tpu_custom_call.1} parent=11 // pred_check_branch
          %550 = sbr.rel (%p548) target = $region64
        $region63: #{tpu_custom_call.1} parent=11 // pred_region
          _
        $region64: #{tpu_custom_call.1} parent=11 // pred_fallthru
          _
        // Predicated region
        $region65: #{tpu_custom_call.1} parent=11 // pred_check
          %p551 = pneg %p385
        $region66: #{tpu_custom_call.1} parent=11 // pred_check_branch
          %553 = sbr.rel (%p551) target = $region68
        $region67: #{tpu_custom_call.1} parent=11 // pred_region
          _
        $region68: #{tpu_custom_call.1} parent=11 // pred_fallthru
          _
      $region12: #{tpu_custom_call.1} parent=5 // pred_fallthru
        _
      %p554 = scmp.lt.s32.totalorder %s39, 2
      // Predicated region
      $region69: #{tpu_custom_call.1} parent=5 // pred_check
        %p555 = pneg %p554
      $region70: #{tpu_custom_call.1} parent=5 // pred_check_branch
        %557 = sbr.rel (%p555) target = $region72
      $region71: #{tpu_custom_call.1} parent=5 // pred_region
        // Predicated region
        $region73: #{tpu_custom_call.1} parent=71 // pred_check
          %p558 = pneg %p80
        $region74: #{tpu_custom_call.1} parent=71 // pred_check_branch
          %560 = sbr.rel (%p558) target = $region76
        $region75: #{tpu_custom_call.1} parent=71 // pred_region
          %s561 = sand.u32 %s70, 1
          %s562 = scalar_lea.sflag [#allocation5], %s561
          %s563 = sand.u32 %s70, 1
          %s564 = smul.addr %s563, 48
          %s565 = scalar_lea.vmem [#allocation4], %s564
          %s567 = ssub.s32 768, 768
          %568 = vsyncadd %s562, %s567
          %s569 = smul.addr %s39, 6
          %s570 = smul.addr %s569, 128
          %s571 = scalar_lea.hbm %s1, %s570
          %s573 = sshll.u32 %s565, 4
          %s574 = int_to_ptr.vmem [resolvable:$true] %s573
          %576 = dma.hbm_to_vmem [thread:$0]  %s571, 768, %s574, %s562
        $region76: #{tpu_custom_call.1} parent=71 // pred_fallthru
          _
        // Predicated region
        $region77: #{tpu_custom_call.1} parent=71 // pred_check
          %p577 = pneg %p106
        $region78: #{tpu_custom_call.1} parent=71 // pred_check_branch
          %579 = sbr.rel (%p577) target = $region80
        $region79: #{tpu_custom_call.1} parent=71 // pred_region
          %s580 = sand.u32 %s39, 1
          %s581 = scalar_lea.sflag [#allocation8], %s580
          %s582 = sand.u32 %s96, 1
          %s583 = smul.addr %s582, 48
          %s584 = scalar_lea.vmem [#allocation7], %s583
          %s586 = ssub.s32 768, 768
          %587 = vsyncadd %s581, %s586
          %s588 = smul.addr %s39, 6
          %s589 = smul.addr %s588, 128
          %s590 = scalar_lea.hbm %s2, %s589
          %s592 = sshll.u32 %s584, 4
          %s593 = int_to_ptr.vmem [resolvable:$true] %s592
          %595 = dma.hbm_to_vmem [thread:$0]  %s590, 768, %s593, %s581
        $region80: #{tpu_custom_call.1} parent=71 // pred_fallthru
          _
      $region72: #{tpu_custom_call.1} parent=5 // pred_fallthru
        _
      %p596 = scmp.le.s32.totalorder 1, %s39
      %p597 = scmp.lt.s32.totalorder %s39, 3
      %p598 = pnand %p596, %p597
      %p599 = pneg %p598
      // Predicated region
      $region81: #{tpu_custom_call.1} parent=5 // pred_check
        _
      $region82: #{tpu_custom_call.1} parent=5 // pred_check_branch
        %601 = sbr.rel (%p598) target = $region84
      $region83: #{tpu_custom_call.1} parent=5 // pred_region
        %s602 = ssub.s32 %s39, 1
        %s603 = sand.u32 %s73, 1
        %s604 = scalar_lea.sflag [#allocation5], %s603
        %s605 = sand.u32 %s73, 1
        %s606 = smul.addr %s605, 48
        %s607 = scalar_lea.vmem [#allocation4], %s606
        // Predicated region
        $region85: #{tpu_custom_call.1} parent=83 // pred_check
          %p608 = pneg %p86
        $region86: #{tpu_custom_call.1} parent=83 // pred_check_branch
          %610 = sbr.rel (%p608) target = $region88
        $region87: #{tpu_custom_call.1} parent=83 // pred_region
          %611 = dma.done %s604, 768
        $region88: #{tpu_custom_call.1} parent=83 // pred_fallthru
          _
        %s612 = sand.u32 %s44, 1
        %s613 = scalar_lea.sflag [#allocation8], %s612
        %s614 = sand.u32 %s99, 1
        %s615 = smul.addr %s614, 48
        %s616 = scalar_lea.vmem [#allocation7], %s615
        // Predicated region
        $region89: #{tpu_custom_call.1} parent=83 // pred_check
          %p617 = pneg %p112
        $region90: #{tpu_custom_call.1} parent=83 // pred_check_branch
          %619 = sbr.rel (%p617) target = $region92
        $region91: #{tpu_custom_call.1} parent=83 // pred_region
          %620 = dma.done %s613, 768
        $region92: #{tpu_custom_call.1} parent=83 // pred_fallthru
          _
        // Predicated region
        $region93: #{tpu_custom_call.1} parent=83 // pred_check
          %p621 = pneg %p133
        $region94: #{tpu_custom_call.1} parent=83 // pred_check_branch
          %623 = sbr.rel (%p621) target = $region96
        $region95: #{tpu_custom_call.1} parent=83 // pred_region
          %624 = dma.done [#allocation8], 24576
        $region96: #{tpu_custom_call.1} parent=83 // pred_fallthru
          _
        // Predicated region
        $region97: #{tpu_custom_call.1} parent=83 // pred_check
          %p625 = pneg %p175
        $region98: #{tpu_custom_call.1} parent=83 // pred_check_branch
          %627 = sbr.rel (%p625) target = $region100
        $region99: #{tpu_custom_call.1} parent=83 // pred_region
          %628 = dma.done [#allocation11], 8192
        $region100: #{tpu_custom_call.1} parent=83 // pred_fallthru
          _
        // Predicated region
        $region101: #{tpu_custom_call.1} parent=83 // pred_check
          %p629 = pneg %p217
        $region102: #{tpu_custom_call.1} parent=83 // pred_check_branch
          %631 = sbr.rel (%p629) target = $region104
        $region103: #{tpu_custom_call.1} parent=83 // pred_region
          %632 = dma.done [#allocation11], 12288
        $region104: #{tpu_custom_call.1} parent=83 // pred_fallthru
          _
        // Predicated region
        $region105: #{tpu_custom_call.1} parent=83 // pred_check
          %p633 = pneg %p259
        $region106: #{tpu_custom_call.1} parent=83 // pred_check_branch
          %635 = sbr.rel (%p633) target = $region108
        $region107: #{tpu_custom_call.1} parent=83 // pred_region
          %636 = dma.done [#allocation14], 12288
        $region108: #{tpu_custom_call.1} parent=83 // pred_fallthru
          _
        // Predicated region
        $region109: #{tpu_custom_call.1} parent=83 // pred_check
          %p637 = pneg %p280
        $region110: #{tpu_custom_call.1} parent=83 // pred_check_branch
          %639 = sbr.rel (%p637) target = $region112
        $region111: #{tpu_custom_call.1} parent=83 // pred_region
          %640 = dma.done [#allocation14], 12288
        $region112: #{tpu_custom_call.1} parent=83 // pred_fallthru
          _
        // Predicated region
        $region113: #{tpu_custom_call.1} parent=83 // pred_check
          %p641 = pneg %p322
        $region114: #{tpu_custom_call.1} parent=83 // pred_check_branch
          %643 = sbr.rel (%p641) target = $region116
        $region115: #{tpu_custom_call.1} parent=83 // pred_region
          %644 = dma.done [#allocation17], 2048
        $region116: #{tpu_custom_call.1} parent=83 // pred_fallthru
          _
        %p645 = pneg %p60
        %p646 = pneg %p57
        %s647 = sand.u32 %s73, 1
        %s648 = scalar_lea.sflag [#allocation5], %s647
        %s649 = sand.u32 %s73, 1
        %s650 = smul.addr %s649, 48
        %s651 = scalar_lea.vmem [#allocation4], %s650
        %p652 = pneg %p86
        %p653 = pneg %p83
        %s654 = sand.u32 %s44, 1
        %s655 = scalar_lea.sflag [#allocation8], %s654
        %s656 = sand.u32 %s99, 1
        %s657 = smul.addr %s656, 48
        %s658 = scalar_lea.vmem [#allocation7], %s657
        %p659 = pneg %p112
        %p660 = pneg %p109
        %p661 = pneg %p133
        %p662 = pneg %p130
        %p663 = pneg %p154
        %p664 = pneg %p151
        %p665 = pneg %p175
        %p666 = pneg %p172
        %p667 = pneg %p196
        %p668 = pneg %p193
        %p669 = pneg %p217
        %p670 = pneg %p214
        %p671 = pneg %p238
        %p672 = pneg %p235
        %p673 = pneg %p259
        %p674 = pneg %p256
        %p675 = pneg %p280
        %p676 = pneg %p277
        %p677 = pneg %p301
        %p678 = pneg %p298
        %p679 = pneg %p322
        %p680 = pneg %p319
        %p681 = pneg %p343
        %p682 = pneg %p340
        %p683 = pneg %p364
        %p684 = pneg %p361
        %p685 = pneg %p385
        %p686 = pneg %p382
        %p687 = pneg %p411
        %p688 = pneg %p408
        %s689 = sand.u32 %s398, 1
        %s690 = scalar_lea.sflag [#allocation6], %s689
        %s691 = sand.u32 %s398, 1
        %s692 = smul.addr %s691, 48
        %s693 = scalar_lea.vmem [#allocation18], %s692
        %p694 = pneg %p437
        %p695 = pneg %p434
        %p696 = scmp.lt.s32.totalorder %s44, 1
        %s697 = scalar_select %p696, %s44, 1
        %s698 = smul.addr %s697, 8
        %s699 = scalar_lea.vmem %s17, %s698
        %p700 = scmp.lt.s32.totalorder %s44, 1
        %s701 = scalar_select %p700, %s44, 1
        %s702 = smul.addr %s701, 8
        %s703 = scalar_lea.vmem %s17, %s702
        %v705 = vld [vmem:[%s607] sm:$0xff]
        %v706 = vld [vmem:[%s607 + $0x8] sm:$0xff]
        %v707 = vld [vmem:[%s607 + $0x10] sm:$0xff]
        %v708 = vld [vmem:[%s607 + $0x18] sm:$0xff]
        %v709 = vld [vmem:[%s607 + $0x20] sm:$0xff]
        %v710 = vld [vmem:[%s607 + $0x28] sm:$0xff]
        %v711 = vpack.c.bf16 %v705, %v705
        %v712 = vpack.c.bf16 %v706, %v706
        %v713 = vpack.c.bf16 %v707, %v707
        %v714 = vpack.c.bf16 %v708, %v708
        %v715 = vpack.c.bf16 %v709, %v709
        %v716 = vpack.c.bf16 %v710, %v710
        %v717 = vld [vmem:[%s616] sm:$0xff]
        %v718 = vld [vmem:[%s616 + $0x8] sm:$0xff]
        %v719 = vld [vmem:[%s616 + $0x10] sm:$0xff]
        %v720 = vld [vmem:[%s616 + $0x18] sm:$0xff]
        %v721 = vld [vmem:[%s616 + $0x20] sm:$0xff]
        %v722 = vld [vmem:[%s616 + $0x28] sm:$0xff]
        %v723 = vpack.c.bf16 %v717, %v717
        %v724 = vpack.c.bf16 %v718, %v718
        %v725 = vpack.c.bf16 %v719, %v719
        %v726 = vpack.c.bf16 %v720, %v720
        %v727 = vpack.c.bf16 %v721, %v721
        %v728 = vpack.c.bf16 %v722, %v722
        %v735 = vrot.slane %v723, 4
        %v736 = vrot.slane %v724, 4
        %v737 = vrot.slane %v725, 4
        %v738 = vrot.slane %v726, 4
        %v739 = vrot.slane %v727, 4
        %v740 = vrot.slane %v728, 4
        %vm741 = vcmask 1043456
        %v744 = vsel %vm741, %v711, %v735
        %v748 = vsel %vm741, %v712, %v736
        %v752 = vsel %vm741, %v713, %v737
        %v756 = vsel %vm741, %v714, %v738
        %v760 = vsel %vm741, %v715, %v739
        %v764 = vsel %vm741, %v716, %v740
        %v766 = vld [vmem:[#allocation9] sm:$0xff]
        %v767 = vld [vmem:[#allocation9 + $0x8] sm:$0xff]
        %v768 = vld [vmem:[#allocation9 + $0x10] sm:$0xff]
        %v769 = vld [vmem:[#allocation9 + $0x18] sm:$0xff]
        %v770 = vld [vmem:[#allocation9 + $0x20] sm:$0xff]
        %v771 = vld [vmem:[#allocation9 + $0x28] sm:$0xff]
        %v772 = vld [vmem:[#allocation9 + $0x30] sm:$0xff]
        %v773 = vld [vmem:[#allocation9 + $0x38] sm:$0xff]
        %v774 = vld [vmem:[#allocation9 + $0x40] sm:$0xff]
        %v775 = vld [vmem:[#allocation9 + $0x48] sm:$0xff]
        %v776 = vld [vmem:[#allocation9 + $0x50] sm:$0xff]
        %v777 = vld [vmem:[#allocation9 + $0x58] sm:$0xff]
        %v778 = vld [vmem:[#allocation9 + $0x60] sm:$0xff]
        %v779 = vld [vmem:[#allocation9 + $0x68] sm:$0xff]
        %v780 = vld [vmem:[#allocation9 + $0x70] sm:$0xff]
        %v781 = vld [vmem:[#allocation9 + $0x78] sm:$0xff]
        %v782 = vld [vmem:[#allocation9 + $0x80] sm:$0xff]
        %v783 = vld [vmem:[#allocation9 + $0x88] sm:$0xff]
        %v784 = vld [vmem:[#allocation9 + $0x90] sm:$0xff]
        %v785 = vld [vmem:[#allocation9 + $0x98] sm:$0xff]
        %v786 = vld [vmem:[#allocation9 + $0xa0] sm:$0xff]
        %v787 = vld [vmem:[#allocation9 + $0xa8] sm:$0xff]
        %v788 = vld [vmem:[#allocation9 + $0xb0] sm:$0xff]
        %v789 = vld [vmem:[#allocation9 + $0xb8] sm:$0xff]
        %v790 = vld [vmem:[#allocation9 + $0xc0] sm:$0xff]
        %v791 = vld [vmem:[#allocation9 + $0xc8] sm:$0xff]
        %v792 = vld [vmem:[#allocation9 + $0xd0] sm:$0xff]
        %v793 = vld [vmem:[#allocation9 + $0xd8] sm:$0xff]
        %v794 = vld [vmem:[#allocation9 + $0xe0] sm:$0xff]
        %v795 = vld [vmem:[#allocation9 + $0xe8] sm:$0xff]
        %v796 = vld [vmem:[#allocation9 + $0xf0] sm:$0xff]
        %v797 = vld [vmem:[#allocation9 + $0xf8] sm:$0xff]
        %v798 = vld [vmem:[#allocation9 + $0x100] sm:$0xff]
        %v799 = vld [vmem:[#allocation9 + $0x108] sm:$0xff]
        %v800 = vld [vmem:[#allocation9 + $0x110] sm:$0xff]
        %v801 = vld [vmem:[#allocation9 + $0x118] sm:$0xff]
        %v802 = vld [vmem:[#allocation9 + $0x120] sm:$0xff]
        %v803 = vld [vmem:[#allocation9 + $0x128] sm:$0xff]
        %v804 = vld [vmem:[#allocation9 + $0x130] sm:$0xff]
        %v805 = vld [vmem:[#allocation9 + $0x138] sm:$0xff]
        %v806 = vld [vmem:[#allocation9 + $0x140] sm:$0xff]
        %v807 = vld [vmem:[#allocation9 + $0x148] sm:$0xff]
        %v808 = vld [vmem:[#allocation9 + $0x150] sm:$0xff]
        %v809 = vld [vmem:[#allocation9 + $0x158] sm:$0xff]
        %v810 = vld [vmem:[#allocation9 + $0x160] sm:$0xff]
        %v811 = vld [vmem:[#allocation9 + $0x168] sm:$0xff]
        %v812 = vld [vmem:[#allocation9 + $0x170] sm:$0xff]
        %v813 = vld [vmem:[#allocation9 + $0x178] sm:$0xff]
        %v814 = vld [vmem:[#allocation9 + $0x180] sm:$0xff]
        %v815 = vld [vmem:[#allocation9 + $0x188] sm:$0xff]
        %v816 = vld [vmem:[#allocation9 + $0x190] sm:$0xff]
        %v817 = vld [vmem:[#allocation9 + $0x198] sm:$0xff]
        %v818 = vld [vmem:[#allocation9 + $0x1a0] sm:$0xff]
        %v819 = vld [vmem:[#allocation9 + $0x1a8] sm:$0xff]
        %v820 = vld [vmem:[#allocation9 + $0x1b0] sm:$0xff]
        %v821 = vld [vmem:[#allocation9 + $0x1b8] sm:$0xff]
        %v822 = vld [vmem:[#allocation9 + $0x1c0] sm:$0xff]
        %v823 = vld [vmem:[#allocation9 + $0x1c8] sm:$0xff]
        %v824 = vld [vmem:[#allocation9 + $0x1d0] sm:$0xff]
        %v825 = vld [vmem:[#allocation9 + $0x1d8] sm:$0xff]
        %v826 = vld [vmem:[#allocation9 + $0x1e0] sm:$0xff]
        %v827 = vld [vmem:[#allocation9 + $0x1e8] sm:$0xff]
        %v828 = vld [vmem:[#allocation9 + $0x1f0] sm:$0xff]
        %v829 = vld [vmem:[#allocation9 + $0x1f8] sm:$0xff]
        %v830 = vld [vmem:[#allocation9 + $0x200] sm:$0xff]
        %v831 = vld [vmem:[#allocation9 + $0x208] sm:$0xff]
        %v832 = vld [vmem:[#allocation9 + $0x210] sm:$0xff]
        %v833 = vld [vmem:[#allocation9 + $0x218] sm:$0xff]
        %v834 = vld [vmem:[#allocation9 + $0x220] sm:$0xff]
        %v835 = vld [vmem:[#allocation9 + $0x228] sm:$0xff]
        %v836 = vld [vmem:[#allocation9 + $0x230] sm:$0xff]
        %v837 = vld [vmem:[#allocation9 + $0x238] sm:$0xff]
        %v838 = vld [vmem:[#allocation9 + $0x240] sm:$0xff]
        %v839 = vld [vmem:[#allocation9 + $0x248] sm:$0xff]
        %v840 = vld [vmem:[#allocation9 + $0x250] sm:$0xff]
        %v841 = vld [vmem:[#allocation9 + $0x258] sm:$0xff]
        %v842 = vld [vmem:[#allocation9 + $0x260] sm:$0xff]
        %v843 = vld [vmem:[#allocation9 + $0x268] sm:$0xff]
        %v844 = vld [vmem:[#allocation9 + $0x270] sm:$0xff]
        %v845 = vld [vmem:[#allocation9 + $0x278] sm:$0xff]
        %v846 = vld [vmem:[#allocation9 + $0x280] sm:$0xff]
        %v847 = vld [vmem:[#allocation9 + $0x288] sm:$0xff]
        %v848 = vld [vmem:[#allocation9 + $0x290] sm:$0xff]
        %v849 = vld [vmem:[#allocation9 + $0x298] sm:$0xff]
        %v850 = vld [vmem:[#allocation9 + $0x2a0] sm:$0xff]
        %v851 = vld [vmem:[#allocation9 + $0x2a8] sm:$0xff]
        %v852 = vld [vmem:[#allocation9 + $0x2b0] sm:$0xff]
        %v853 = vld [vmem:[#allocation9 + $0x2b8] sm:$0xff]
        %v854 = vld [vmem:[#allocation9 + $0x2c0] sm:$0xff]
        %v855 = vld [vmem:[#allocation9 + $0x2c8] sm:$0xff]
        %v856 = vld [vmem:[#allocation9 + $0x2d0] sm:$0xff]
        %v857 = vld [vmem:[#allocation9 + $0x2d8] sm:$0xff]
        %v858 = vld [vmem:[#allocation9 + $0x2e0] sm:$0xff]
        %v859 = vld [vmem:[#allocation9 + $0x2e8] sm:$0xff]
        %v860 = vld [vmem:[#allocation9 + $0x2f0] sm:$0xff]
        %v861 = vld [vmem:[#allocation9 + $0x2f8] sm:$0xff]
        %v862 = vld [vmem:[#allocation9 + $0x300] sm:$0xff]
        %v863 = vld [vmem:[#allocation9 + $0x308] sm:$0xff]
        %v864 = vld [vmem:[#allocation9 + $0x310] sm:$0xff]
        %v865 = vld [vmem:[#allocation9 + $0x318] sm:$0xff]
        %v866 = vld [vmem:[#allocation9 + $0x320] sm:$0xff]
        %v867 = vld [vmem:[#allocation9 + $0x328] sm:$0xff]
        %v868 = vld [vmem:[#allocation9 + $0x330] sm:$0xff]
        %v869 = vld [vmem:[#allocation9 + $0x338] sm:$0xff]
        %v870 = vld [vmem:[#allocation9 + $0x340] sm:$0xff]
        %v871 = vld [vmem:[#allocation9 + $0x348] sm:$0xff]
        %v872 = vld [vmem:[#allocation9 + $0x350] sm:$0xff]
        %v873 = vld [vmem:[#allocation9 + $0x358] sm:$0xff]
        %v874 = vld [vmem:[#allocation9 + $0x360] sm:$0xff]
        %v875 = vld [vmem:[#allocation9 + $0x368] sm:$0xff]
        %v876 = vld [vmem:[#allocation9 + $0x370] sm:$0xff]
        %v877 = vld [vmem:[#allocation9 + $0x378] sm:$0xff]
        %v878 = vld [vmem:[#allocation9 + $0x380] sm:$0xff]
        %v879 = vld [vmem:[#allocation9 + $0x388] sm:$0xff]
        %v880 = vld [vmem:[#allocation9 + $0x390] sm:$0xff]
        %v881 = vld [vmem:[#allocation9 + $0x398] sm:$0xff]
        %v882 = vld [vmem:[#allocation9 + $0x3a0] sm:$0xff]
        %v883 = vld [vmem:[#allocation9 + $0x3a8] sm:$0xff]
        %v884 = vld [vmem:[#allocation9 + $0x3b0] sm:$0xff]
        %v885 = vld [vmem:[#allocation9 + $0x3b8] sm:$0xff]
        %v886 = vld [vmem:[#allocation9 + $0x3c0] sm:$0xff]
        %v887 = vld [vmem:[#allocation9 + $0x3c8] sm:$0xff]
        %v888 = vld [vmem:[#allocation9 + $0x3d0] sm:$0xff]
        %v889 = vld [vmem:[#allocation9 + $0x3d8] sm:$0xff]
        %v890 = vld [vmem:[#allocation9 + $0x3e0] sm:$0xff]
        %v891 = vld [vmem:[#allocation9 + $0x3e8] sm:$0xff]
        %v892 = vld [vmem:[#allocation9 + $0x3f0] sm:$0xff]
        %v893 = vld [vmem:[#allocation9 + $0x3f8] sm:$0xff]
        %v894 = vld [vmem:[#allocation9 + $0x400] sm:$0xff]
        %v895 = vld [vmem:[#allocation9 + $0x408] sm:$0xff]
        %v896 = vld [vmem:[#allocation9 + $0x410] sm:$0xff]
        %v897 = vld [vmem:[#allocation9 + $0x418] sm:$0xff]
        %v898 = vld [vmem:[#allocation9 + $0x420] sm:$0xff]
        %v899 = vld [vmem:[#allocation9 + $0x428] sm:$0xff]
        %v900 = vld [vmem:[#allocation9 + $0x430] sm:$0xff]
        %v901 = vld [vmem:[#allocation9 + $0x438] sm:$0xff]
        %v902 = vld [vmem:[#allocation9 + $0x440] sm:$0xff]
        %v903 = vld [vmem:[#allocation9 + $0x448] sm:$0xff]
        %v904 = vld [vmem:[#allocation9 + $0x450] sm:$0xff]
        %v905 = vld [vmem:[#allocation9 + $0x458] sm:$0xff]
        %v906 = vld [vmem:[#allocation9 + $0x460] sm:$0xff]
        %v907 = vld [vmem:[#allocation9 + $0x468] sm:$0xff]
        %v908 = vld [vmem:[#allocation9 + $0x470] sm:$0xff]
        %v909 = vld [vmem:[#allocation9 + $0x478] sm:$0xff]
        %v910 = vld [vmem:[#allocation9 + $0x480] sm:$0xff]
        %v911 = vld [vmem:[#allocation9 + $0x488] sm:$0xff]
        %v912 = vld [vmem:[#allocation9 + $0x490] sm:$0xff]
        %v913 = vld [vmem:[#allocation9 + $0x498] sm:$0xff]
        %v914 = vld [vmem:[#allocation9 + $0x4a0] sm:$0xff]
        %v915 = vld [vmem:[#allocation9 + $0x4a8] sm:$0xff]
        %v916 = vld [vmem:[#allocation9 + $0x4b0] sm:$0xff]
        %v917 = vld [vmem:[#allocation9 + $0x4b8] sm:$0xff]
        %v918 = vld [vmem:[#allocation9 + $0x4c0] sm:$0xff]
        %v919 = vld [vmem:[#allocation9 + $0x4c8] sm:$0xff]
        %v920 = vld [vmem:[#allocation9 + $0x4d0] sm:$0xff]
        %v921 = vld [vmem:[#allocation9 + $0x4d8] sm:$0xff]
        %v922 = vld [vmem:[#allocation9 + $0x4e0] sm:$0xff]
        %v923 = vld [vmem:[#allocation9 + $0x4e8] sm:$0xff]
        %v924 = vld [vmem:[#allocation9 + $0x4f0] sm:$0xff]
        %v925 = vld [vmem:[#allocation9 + $0x4f8] sm:$0xff]
        %v926 = vld [vmem:[#allocation9 + $0x500] sm:$0xff]
        %v927 = vld [vmem:[#allocation9 + $0x508] sm:$0xff]
        %v928 = vld [vmem:[#allocation9 + $0x510] sm:$0xff]
        %v929 = vld [vmem:[#allocation9 + $0x518] sm:$0xff]
        %v930 = vld [vmem:[#allocation9 + $0x520] sm:$0xff]
        %v931 = vld [vmem:[#allocation9 + $0x528] sm:$0xff]
        %v932 = vld [vmem:[#allocation9 + $0x530] sm:$0xff]
        %v933 = vld [vmem:[#allocation9 + $0x538] sm:$0xff]
        %v934 = vld [vmem:[#allocation9 + $0x540] sm:$0xff]
        %v935 = vld [vmem:[#allocation9 + $0x548] sm:$0xff]
        %v936 = vld [vmem:[#allocation9 + $0x550] sm:$0xff]
        %v937 = vld [vmem:[#allocation9 + $0x558] sm:$0xff]
        %v938 = vld [vmem:[#allocation9 + $0x560] sm:$0xff]
        %v939 = vld [vmem:[#allocation9 + $0x568] sm:$0xff]
        %v940 = vld [vmem:[#allocation9 + $0x570] sm:$0xff]
        %v941 = vld [vmem:[#allocation9 + $0x578] sm:$0xff]
        %v942 = vld [vmem:[#allocation9 + $0x580] sm:$0xff]
        %v943 = vld [vmem:[#allocation9 + $0x588] sm:$0xff]
        %v944 = vld [vmem:[#allocation9 + $0x590] sm:$0xff]
        %v945 = vld [vmem:[#allocation9 + $0x598] sm:$0xff]
        %v946 = vld [vmem:[#allocation9 + $0x5a0] sm:$0xff]
        %v947 = vld [vmem:[#allocation9 + $0x5a8] sm:$0xff]
        %v948 = vld [vmem:[#allocation9 + $0x5b0] sm:$0xff]
        %v949 = vld [vmem:[#allocation9 + $0x5b8] sm:$0xff]
        %v950 = vld [vmem:[#allocation9 + $0x5c0] sm:$0xff]
        %v951 = vld [vmem:[#allocation9 + $0x5c8] sm:$0xff]
        %v952 = vld [vmem:[#allocation9 + $0x5d0] sm:$0xff]
        %v953 = vld [vmem:[#allocation9 + $0x5d8] sm:$0xff]
        %v954 = vld [vmem:[#allocation9 + $0x5e0] sm:$0xff]
        %v955 = vld [vmem:[#allocation9 + $0x5e8] sm:$0xff]
        %v956 = vld [vmem:[#allocation9 + $0x5f0] sm:$0xff]
        %v957 = vld [vmem:[#allocation9 + $0x5f8] sm:$0xff]
        %v958 = vld [vmem:[%s4] sm:$0xf]
        %v960 = vlaneseq
        %v961 = vshrl.u32 %v960, 7
        %v962 = vsub.s32 0, %v961
        %v963 = vrot.slane %v958, %v962
        %v964 = vlaneseq
        %v965 = vshrl.u32 %v964, 7
        %v966 = vsub.s32 1, %v965
        %v967 = vrot.slane %v958, %v966
        %v968 = vlaneseq
        %v969 = vshrl.u32 %v968, 7
        %v970 = vsub.s32 2, %v969
        %v971 = vrot.slane %v958, %v970
        %v972 = vlaneseq
        %v973 = vshrl.u32 %v972, 7
        %v974 = vsub.s32 3, %v973
        %v975 = vrot.slane %v958, %v974
        %v1172 = vunpack.c.l.b16 %v766
        %v1173 = vunpack.c.h.b16 %v766
        %v1174 = vunpack.c.l.b16 %v767
        %v1175 = vunpack.c.h.b16 %v767
        %v1176 = vunpack.c.l.b16 %v768
        %v1177 = vunpack.c.h.b16 %v768
        %v1178 = vunpack.c.l.b16 %v769
        %v1179 = vunpack.c.h.b16 %v769
        %v1180 = vunpack.c.l.b16 %v770
        %v1181 = vunpack.c.h.b16 %v770
        %v1182 = vunpack.c.l.b16 %v771
        %v1183 = vunpack.c.h.b16 %v771
        %v1184 = vunpack.c.l.b16 %v772
        %v1185 = vunpack.c.h.b16 %v772
        %v1186 = vunpack.c.l.b16 %v773
        %v1187 = vunpack.c.h.b16 %v773
        %v1188 = vunpack.c.l.b16 %v774
        %v1189 = vunpack.c.h.b16 %v774
        %v1190 = vunpack.c.l.b16 %v775
        %v1191 = vunpack.c.h.b16 %v775
        %v1192 = vunpack.c.l.b16 %v776
        %v1193 = vunpack.c.h.b16 %v776
        %v1194 = vunpack.c.l.b16 %v777
        %v1195 = vunpack.c.h.b16 %v777
        %v1196 = vunpack.c.l.b16 %v778
        %v1197 = vunpack.c.h.b16 %v778
        %v1198 = vunpack.c.l.b16 %v779
        %v1199 = vunpack.c.h.b16 %v779
        %v1200 = vunpack.c.l.b16 %v780
        %v1201 = vunpack.c.h.b16 %v780
        %v1202 = vunpack.c.l.b16 %v781
        %v1203 = vunpack.c.h.b16 %v781
        %v1204 = vunpack.c.l.b16 %v782
        %v1205 = vunpack.c.h.b16 %v782
        %v1206 = vunpack.c.l.b16 %v783
        %v1207 = vunpack.c.h.b16 %v783
        %v1208 = vunpack.c.l.b16 %v784
        %v1209 = vunpack.c.h.b16 %v784
        %v1210 = vunpack.c.l.b16 %v785
        %v1211 = vunpack.c.h.b16 %v785
        %v1212 = vunpack.c.l.b16 %v786
        %v1213 = vunpack.c.h.b16 %v786
        %v1214 = vunpack.c.l.b16 %v787
        %v1215 = vunpack.c.h.b16 %v787
        %v1216 = vunpack.c.l.b16 %v788
        %v1217 = vunpack.c.h.b16 %v788
        %v1218 = vunpack.c.l.b16 %v789
        %v1219 = vunpack.c.h.b16 %v789
        %v1220 = vunpack.c.l.b16 %v790
        %v1221 = vunpack.c.h.b16 %v790
        %v1222 = vunpack.c.l.b16 %v791
        %v1223 = vunpack.c.h.b16 %v791
        %v1224 = vunpack.c.l.b16 %v792
        %v1225 = vunpack.c.h.b16 %v792
        %v1226 = vunpack.c.l.b16 %v793
        %v1227 = vunpack.c.h.b16 %v793
        %v1228 = vunpack.c.l.b16 %v794
        %v1229 = vunpack.c.h.b16 %v794
        %v1230 = vunpack.c.l.b16 %v795
        %v1231 = vunpack.c.h.b16 %v795
        %v1232 = vunpack.c.l.b16 %v796
        %v1233 = vunpack.c.h.b16 %v796
        %v1234 = vunpack.c.l.b16 %v797
        %v1235 = vunpack.c.h.b16 %v797
        %v1236 = vunpack.c.l.b16 %v798
        %v1237 = vunpack.c.h.b16 %v798
        %v1238 = vunpack.c.l.b16 %v799
        %v1239 = vunpack.c.h.b16 %v799
        %v1240 = vunpack.c.l.b16 %v800
        %v1241 = vunpack.c.h.b16 %v800
        %v1242 = vunpack.c.l.b16 %v801
        %v1243 = vunpack.c.h.b16 %v801
        %v1244 = vunpack.c.l.b16 %v802
        %v1245 = vunpack.c.h.b16 %v802
        %v1246 = vunpack.c.l.b16 %v803
        %v1247 = vunpack.c.h.b16 %v803
        %v1248 = vunpack.c.l.b16 %v804
        %v1249 = vunpack.c.h.b16 %v804
        %v1250 = vunpack.c.l.b16 %v805
        %v1251 = vunpack.c.h.b16 %v805
        %v1252 = vunpack.c.l.b16 %v806
        %v1253 = vunpack.c.h.b16 %v806
        %v1254 = vunpack.c.l.b16 %v807
        %v1255 = vunpack.c.h.b16 %v807
        %v1256 = vunpack.c.l.b16 %v808
        %v1257 = vunpack.c.h.b16 %v808
        %v1258 = vunpack.c.l.b16 %v809
        %v1259 = vunpack.c.h.b16 %v809
        %v1260 = vunpack.c.l.b16 %v810
        %v1261 = vunpack.c.h.b16 %v810
        %v1262 = vunpack.c.l.b16 %v811
        %v1263 = vunpack.c.h.b16 %v811
        %v1264 = vunpack.c.l.b16 %v812
        %v1265 = vunpack.c.h.b16 %v812
        %v1266 = vunpack.c.l.b16 %v813
        %v1267 = vunpack.c.h.b16 %v813
        %v1268 = vunpack.c.l.b16 %v814
        %v1269 = vunpack.c.h.b16 %v814
        %v1270 = vunpack.c.l.b16 %v815
        %v1271 = vunpack.c.h.b16 %v815
        %v1272 = vunpack.c.l.b16 %v816
        %v1273 = vunpack.c.h.b16 %v816
        %v1274 = vunpack.c.l.b16 %v817
        %v1275 = vunpack.c.h.b16 %v817
        %v1276 = vunpack.c.l.b16 %v818
        %v1277 = vunpack.c.h.b16 %v818
        %v1278 = vunpack.c.l.b16 %v819
        %v1279 = vunpack.c.h.b16 %v819
        %v1280 = vunpack.c.l.b16 %v820
        %v1281 = vunpack.c.h.b16 %v820
        %v1282 = vunpack.c.l.b16 %v821
        %v1283 = vunpack.c.h.b16 %v821
        %v1284 = vunpack.c.l.b16 %v822
        %v1285 = vunpack.c.h.b16 %v822
        %v1286 = vunpack.c.l.b16 %v823
        %v1287 = vunpack.c.h.b16 %v823
        %v1288 = vunpack.c.l.b16 %v824
        %v1289 = vunpack.c.h.b16 %v824
        %v1290 = vunpack.c.l.b16 %v825
        %v1291 = vunpack.c.h.b16 %v825
        %v1292 = vunpack.c.l.b16 %v826
        %v1293 = vunpack.c.h.b16 %v826
        %v1294 = vunpack.c.l.b16 %v827
        %v1295 = vunpack.c.h.b16 %v827
        %v1296 = vunpack.c.l.b16 %v828
        %v1297 = vunpack.c.h.b16 %v828
        %v1298 = vunpack.c.l.b16 %v829
        %v1299 = vunpack.c.h.b16 %v829
        %v1300 = vunpack.c.l.b16 %v830
        %v1301 = vunpack.c.h.b16 %v830
        %v1302 = vunpack.c.l.b16 %v831
        %v1303 = vunpack.c.h.b16 %v831
        %v1304 = vunpack.c.l.b16 %v832
        %v1305 = vunpack.c.h.b16 %v832
        %v1306 = vunpack.c.l.b16 %v833
        %v1307 = vunpack.c.h.b16 %v833
        %v1308 = vunpack.c.l.b16 %v834
        %v1309 = vunpack.c.h.b16 %v834
        %v1310 = vunpack.c.l.b16 %v835
        %v1311 = vunpack.c.h.b16 %v835
        %v1312 = vunpack.c.l.b16 %v836
        %v1313 = vunpack.c.h.b16 %v836
        %v1314 = vunpack.c.l.b16 %v837
        %v1315 = vunpack.c.h.b16 %v837
        %v1316 = vunpack.c.l.b16 %v838
        %v1317 = vunpack.c.h.b16 %v838
        %v1318 = vunpack.c.l.b16 %v839
        %v1319 = vunpack.c.h.b16 %v839
        %v1320 = vunpack.c.l.b16 %v840
        %v1321 = vunpack.c.h.b16 %v840
        %v1322 = vunpack.c.l.b16 %v841
        %v1323 = vunpack.c.h.b16 %v841
        %v1324 = vunpack.c.l.b16 %v842
        %v1325 = vunpack.c.h.b16 %v842
        %v1326 = vunpack.c.l.b16 %v843
        %v1327 = vunpack.c.h.b16 %v843
        %v1328 = vunpack.c.l.b16 %v844
        %v1329 = vunpack.c.h.b16 %v844
        %v1330 = vunpack.c.l.b16 %v845
        %v1331 = vunpack.c.h.b16 %v845
        %v1332 = vunpack.c.l.b16 %v846
        %v1333 = vunpack.c.h.b16 %v846
        %v1334 = vunpack.c.l.b16 %v847
        %v1335 = vunpack.c.h.b16 %v847
        %v1336 = vunpack.c.l.b16 %v848
        %v1337 = vunpack.c.h.b16 %v848
        %v1338 = vunpack.c.l.b16 %v849
        %v1339 = vunpack.c.h.b16 %v849
        %v1340 = vunpack.c.l.b16 %v850
        %v1341 = vunpack.c.h.b16 %v850
        %v1342 = vunpack.c.l.b16 %v851
        %v1343 = vunpack.c.h.b16 %v851
        %v1344 = vunpack.c.l.b16 %v852
        %v1345 = vunpack.c.h.b16 %v852
        %v1346 = vunpack.c.l.b16 %v853
        %v1347 = vunpack.c.h.b16 %v853
        %v1348 = vunpack.c.l.b16 %v854
        %v1349 = vunpack.c.h.b16 %v854
        %v1350 = vunpack.c.l.b16 %v855
        %v1351 = vunpack.c.h.b16 %v855
        %v1352 = vunpack.c.l.b16 %v856
        %v1353 = vunpack.c.h.b16 %v856
        %v1354 = vunpack.c.l.b16 %v857
        %v1355 = vunpack.c.h.b16 %v857
        %v1356 = vunpack.c.l.b16 %v858
        %v1357 = vunpack.c.h.b16 %v858
        %v1358 = vunpack.c.l.b16 %v859
        %v1359 = vunpack.c.h.b16 %v859
        %v1360 = vunpack.c.l.b16 %v860
        %v1361 = vunpack.c.h.b16 %v860
        %v1362 = vunpack.c.l.b16 %v861
        %v1363 = vunpack.c.h.b16 %v861
        %v1364 = vunpack.c.l.b16 %v862
        %v1365 = vunpack.c.h.b16 %v862
        %v1366 = vunpack.c.l.b16 %v863
        %v1367 = vunpack.c.h.b16 %v863
        %v1368 = vunpack.c.l.b16 %v864
        %v1369 = vunpack.c.h.b16 %v864
        %v1370 = vunpack.c.l.b16 %v865
        %v1371 = vunpack.c.h.b16 %v865
        %v1372 = vunpack.c.l.b16 %v866
        %v1373 = vunpack.c.h.b16 %v866
        %v1374 = vunpack.c.l.b16 %v867
        %v1375 = vunpack.c.h.b16 %v867
        %v1376 = vunpack.c.l.b16 %v868
        %v1377 = vunpack.c.h.b16 %v868
        %v1378 = vunpack.c.l.b16 %v869
        %v1379 = vunpack.c.h.b16 %v869
        %v1380 = vunpack.c.l.b16 %v870
        %v1381 = vunpack.c.h.b16 %v870
        %v1382 = vunpack.c.l.b16 %v871
        %v1383 = vunpack.c.h.b16 %v871
        %v1384 = vunpack.c.l.b16 %v872
        %v1385 = vunpack.c.h.b16 %v872
        %v1386 = vunpack.c.l.b16 %v873
        %v1387 = vunpack.c.h.b16 %v873
        %v1388 = vunpack.c.l.b16 %v874
        %v1389 = vunpack.c.h.b16 %v874
        %v1390 = vunpack.c.l.b16 %v875
        %v1391 = vunpack.c.h.b16 %v875
        %v1392 = vunpack.c.l.b16 %v876
        %v1393 = vunpack.c.h.b16 %v876
        %v1394 = vunpack.c.l.b16 %v877
        %v1395 = vunpack.c.h.b16 %v877
        %v1396 = vunpack.c.l.b16 %v878
        %v1397 = vunpack.c.h.b16 %v878
        %v1398 = vunpack.c.l.b16 %v879
        %v1399 = vunpack.c.h.b16 %v879
        %v1400 = vunpack.c.l.b16 %v880
        %v1401 = vunpack.c.h.b16 %v880
        %v1402 = vunpack.c.l.b16 %v881
        %v1403 = vunpack.c.h.b16 %v881
        %v1404 = vunpack.c.l.b16 %v882
        %v1405 = vunpack.c.h.b16 %v882
        %v1406 = vunpack.c.l.b16 %v883
        %v1407 = vunpack.c.h.b16 %v883
        %v1408 = vunpack.c.l.b16 %v884
        %v1409 = vunpack.c.h.b16 %v884
        %v1410 = vunpack.c.l.b16 %v885
        %v1411 = vunpack.c.h.b16 %v885
        %v1412 = vunpack.c.l.b16 %v886
        %v1413 = vunpack.c.h.b16 %v886
        %v1414 = vunpack.c.l.b16 %v887
        %v1415 = vunpack.c.h.b16 %v887
        %v1416 = vunpack.c.l.b16 %v888
        %v1417 = vunpack.c.h.b16 %v888
        %v1418 = vunpack.c.l.b16 %v889
        %v1419 = vunpack.c.h.b16 %v889
        %v1420 = vunpack.c.l.b16 %v890
        %v1421 = vunpack.c.h.b16 %v890
        %v1422 = vunpack.c.l.b16 %v891
        %v1423 = vunpack.c.h.b16 %v891
        %v1424 = vunpack.c.l.b16 %v892
        %v1425 = vunpack.c.h.b16 %v892
        %v1426 = vunpack.c.l.b16 %v893
        %v1427 = vunpack.c.h.b16 %v893
        %v1428 = vunpack.c.l.b16 %v894
        %v1429 = vunpack.c.h.b16 %v894
        %v1430 = vunpack.c.l.b16 %v895
        %v1431 = vunpack.c.h.b16 %v895
        %v1432 = vunpack.c.l.b16 %v896
        %v1433 = vunpack.c.h.b16 %v896
        %v1434 = vunpack.c.l.b16 %v897
        %v1435 = vunpack.c.h.b16 %v897
        %v1436 = vunpack.c.l.b16 %v898
        %v1437 = vunpack.c.h.b16 %v898
        %v1438 = vunpack.c.l.b16 %v899
        %v1439 = vunpack.c.h.b16 %v899
        %v1440 = vunpack.c.l.b16 %v900
        %v1441 = vunpack.c.h.b16 %v900
        %v1442 = vunpack.c.l.b16 %v901
        %v1443 = vunpack.c.h.b16 %v901
        %v1444 = vunpack.c.l.b16 %v902
        %v1445 = vunpack.c.h.b16 %v902
        %v1446 = vunpack.c.l.b16 %v903
        %v1447 = vunpack.c.h.b16 %v903
        %v1448 = vunpack.c.l.b16 %v904
        %v1449 = vunpack.c.h.b16 %v904
        %v1450 = vunpack.c.l.b16 %v905
        %v1451 = vunpack.c.h.b16 %v905
        %v1452 = vunpack.c.l.b16 %v906
        %v1453 = vunpack.c.h.b16 %v906
        %v1454 = vunpack.c.l.b16 %v907
        %v1455 = vunpack.c.h.b16 %v907
        %v1456 = vunpack.c.l.b16 %v908
        %v1457 = vunpack.c.h.b16 %v908
        %v1458 = vunpack.c.l.b16 %v909
        %v1459 = vunpack.c.h.b16 %v909
        %v1460 = vunpack.c.l.b16 %v910
        %v1461 = vunpack.c.h.b16 %v910
        %v1462 = vunpack.c.l.b16 %v911
        %v1463 = vunpack.c.h.b16 %v911
        %v1464 = vunpack.c.l.b16 %v912
        %v1465 = vunpack.c.h.b16 %v912
        %v1466 = vunpack.c.l.b16 %v913
        %v1467 = vunpack.c.h.b16 %v913
        %v1468 = vunpack.c.l.b16 %v914
        %v1469 = vunpack.c.h.b16 %v914
        %v1470 = vunpack.c.l.b16 %v915
        %v1471 = vunpack.c.h.b16 %v915
        %v1472 = vunpack.c.l.b16 %v916
        %v1473 = vunpack.c.h.b16 %v916
        %v1474 = vunpack.c.l.b16 %v917
        %v1475 = vunpack.c.h.b16 %v917
        %v1476 = vunpack.c.l.b16 %v918
        %v1477 = vunpack.c.h.b16 %v918
        %v1478 = vunpack.c.l.b16 %v919
        %v1479 = vunpack.c.h.b16 %v919
        %v1480 = vunpack.c.l.b16 %v920
        %v1481 = vunpack.c.h.b16 %v920
        %v1482 = vunpack.c.l.b16 %v921
        %v1483 = vunpack.c.h.b16 %v921
        %v1484 = vunpack.c.l.b16 %v922
        %v1485 = vunpack.c.h.b16 %v922
        %v1486 = vunpack.c.l.b16 %v923
        %v1487 = vunpack.c.h.b16 %v923
        %v1488 = vunpack.c.l.b16 %v924
        %v1489 = vunpack.c.h.b16 %v924
        %v1490 = vunpack.c.l.b16 %v925
        %v1491 = vunpack.c.h.b16 %v925
        %v1492 = vunpack.c.l.b16 %v926
        %v1493 = vunpack.c.h.b16 %v926
        %v1494 = vunpack.c.l.b16 %v927
        %v1495 = vunpack.c.h.b16 %v927
        %v1496 = vunpack.c.l.b16 %v928
        %v1497 = vunpack.c.h.b16 %v928
        %v1498 = vunpack.c.l.b16 %v929
        %v1499 = vunpack.c.h.b16 %v929
        %v1500 = vunpack.c.l.b16 %v930
        %v1501 = vunpack.c.h.b16 %v930
        %v1502 = vunpack.c.l.b16 %v931
        %v1503 = vunpack.c.h.b16 %v931
        %v1504 = vunpack.c.l.b16 %v932
        %v1505 = vunpack.c.h.b16 %v932
        %v1506 = vunpack.c.l.b16 %v933
        %v1507 = vunpack.c.h.b16 %v933
        %v1508 = vunpack.c.l.b16 %v934
        %v1509 = vunpack.c.h.b16 %v934
        %v1510 = vunpack.c.l.b16 %v935
        %v1511 = vunpack.c.h.b16 %v935
        %v1512 = vunpack.c.l.b16 %v936
        %v1513 = vunpack.c.h.b16 %v936
        %v1514 = vunpack.c.l.b16 %v937
        %v1515 = vunpack.c.h.b16 %v937
        %v1516 = vunpack.c.l.b16 %v938
        %v1517 = vunpack.c.h.b16 %v938
        %v1518 = vunpack.c.l.b16 %v939
        %v1519 = vunpack.c.h.b16 %v939
        %v1520 = vunpack.c.l.b16 %v940
        %v1521 = vunpack.c.h.b16 %v940
        %v1522 = vunpack.c.l.b16 %v941
        %v1523 = vunpack.c.h.b16 %v941
        %v1524 = vunpack.c.l.b16 %v942
        %v1525 = vunpack.c.h.b16 %v942
        %v1526 = vunpack.c.l.b16 %v943
        %v1527 = vunpack.c.h.b16 %v943
        %v1528 = vunpack.c.l.b16 %v944
        %v1529 = vunpack.c.h.b16 %v944
        %v1530 = vunpack.c.l.b16 %v945
        %v1531 = vunpack.c.h.b16 %v945
        %v1532 = vunpack.c.l.b16 %v946
        %v1533 = vunpack.c.h.b16 %v946
        %v1534 = vunpack.c.l.b16 %v947
        %v1535 = vunpack.c.h.b16 %v947
        %v1536 = vunpack.c.l.b16 %v948
        %v1537 = vunpack.c.h.b16 %v948
        %v1538 = vunpack.c.l.b16 %v949
        %v1539 = vunpack.c.h.b16 %v949
        %v1540 = vunpack.c.l.b16 %v950
        %v1541 = vunpack.c.h.b16 %v950
        %v1542 = vunpack.c.l.b16 %v951
        %v1543 = vunpack.c.h.b16 %v951
        %v1544 = vunpack.c.l.b16 %v952
        %v1545 = vunpack.c.h.b16 %v952
        %v1546 = vunpack.c.l.b16 %v953
        %v1547 = vunpack.c.h.b16 %v953
        %v1548 = vunpack.c.l.b16 %v954
        %v1549 = vunpack.c.h.b16 %v954
        %v1550 = vunpack.c.l.b16 %v955
        %v1551 = vunpack.c.h.b16 %v955
        %v1552 = vunpack.c.l.b16 %v956
        %v1553 = vunpack.c.h.b16 %v956
        %v1554 = vunpack.c.l.b16 %v957
        %v1555 = vunpack.c.h.b16 %v957
        %v1556 = vpack.c.b16 %v1176, %v1172
        %v1557 = vpack.c.b16 %v1177, %v1173
        %v1558 = vpack.c.b16 %v1178, %v1174
        %v1559 = vpack.c.b16 %v1179, %v1175
        %v1560 = vpack.c.b16 %v1184, %v1180
        %v1561 = vpack.c.b16 %v1185, %v1181
        %v1562 = vpack.c.b16 %v1186, %v1182
        %v1563 = vpack.c.b16 %v1187, %v1183
        %v1564 = vpack.c.b16 %v1192, %v1188
        %v1565 = vpack.c.b16 %v1193, %v1189
        %v1566 = vpack.c.b16 %v1194, %v1190
        %v1567 = vpack.c.b16 %v1195, %v1191
        %v1568 = vpack.c.b16 %v1200, %v1196
        %v1569 = vpack.c.b16 %v1201, %v1197
        %v1570 = vpack.c.b16 %v1202, %v1198
        %v1571 = vpack.c.b16 %v1203, %v1199
        %v1572 = vpack.c.b16 %v1208, %v1204
        %v1573 = vpack.c.b16 %v1209, %v1205
        %v1574 = vpack.c.b16 %v1210, %v1206
        %v1575 = vpack.c.b16 %v1211, %v1207
        %v1576 = vpack.c.b16 %v1216, %v1212
        %v1577 = vpack.c.b16 %v1217, %v1213
        %v1578 = vpack.c.b16 %v1218, %v1214
        %v1579 = vpack.c.b16 %v1219, %v1215
        %v1580 = vpack.c.b16 %v1224, %v1220
        %v1581 = vpack.c.b16 %v1225, %v1221
        %v1582 = vpack.c.b16 %v1226, %v1222
        %v1583 = vpack.c.b16 %v1227, %v1223
        %v1584 = vpack.c.b16 %v1232, %v1228
        %v1585 = vpack.c.b16 %v1233, %v1229
        %v1586 = vpack.c.b16 %v1234, %v1230
        %v1587 = vpack.c.b16 %v1235, %v1231
        %v1588 = vpack.c.b16 %v1240, %v1236
        %v1589 = vpack.c.b16 %v1241, %v1237
        %v1590 = vpack.c.b16 %v1242, %v1238
        %v1591 = vpack.c.b16 %v1243, %v1239
        %v1592 = vpack.c.b16 %v1248, %v1244
        %v1593 = vpack.c.b16 %v1249, %v1245
        %v1594 = vpack.c.b16 %v1250, %v1246
        %v1595 = vpack.c.b16 %v1251, %v1247
        %v1596 = vpack.c.b16 %v1256, %v1252
        %v1597 = vpack.c.b16 %v1257, %v1253
        %v1598 = vpack.c.b16 %v1258, %v1254
        %v1599 = vpack.c.b16 %v1259, %v1255
        %v1600 = vpack.c.b16 %v1264, %v1260
        %v1601 = vpack.c.b16 %v1265, %v1261
        %v1602 = vpack.c.b16 %v1266, %v1262
        %v1603 = vpack.c.b16 %v1267, %v1263
        %v1604 = vpack.c.b16 %v1272, %v1268
        %v1605 = vpack.c.b16 %v1273, %v1269
        %v1606 = vpack.c.b16 %v1274, %v1270
        %v1607 = vpack.c.b16 %v1275, %v1271
        %v1608 = vpack.c.b16 %v1280, %v1276
        %v1609 = vpack.c.b16 %v1281, %v1277
        %v1610 = vpack.c.b16 %v1282, %v1278
        %v1611 = vpack.c.b16 %v1283, %v1279
        %v1612 = vpack.c.b16 %v1288, %v1284
        %v1613 = vpack.c.b16 %v1289, %v1285
        %v1614 = vpack.c.b16 %v1290, %v1286
        %v1615 = vpack.c.b16 %v1291, %v1287
        %v1616 = vpack.c.b16 %v1296, %v1292
        %v1617 = vpack.c.b16 %v1297, %v1293
        %v1618 = vpack.c.b16 %v1298, %v1294
        %v1619 = vpack.c.b16 %v1299, %v1295
        %v1620 = vpack.c.b16 %v1304, %v1300
        %v1621 = vpack.c.b16 %v1305, %v1301
        %v1622 = vpack.c.b16 %v1306, %v1302
        %v1623 = vpack.c.b16 %v1307, %v1303
        %v1624 = vpack.c.b16 %v1312, %v1308
        %v1625 = vpack.c.b16 %v1313, %v1309
        %v1626 = vpack.c.b16 %v1314, %v1310
        %v1627 = vpack.c.b16 %v1315, %v1311
        %v1628 = vpack.c.b16 %v1320, %v1316
        %v1629 = vpack.c.b16 %v1321, %v1317
        %v1630 = vpack.c.b16 %v1322, %v1318
        %v1631 = vpack.c.b16 %v1323, %v1319
        %v1632 = vpack.c.b16 %v1328, %v1324
        %v1633 = vpack.c.b16 %v1329, %v1325
        %v1634 = vpack.c.b16 %v1330, %v1326
        %v1635 = vpack.c.b16 %v1331, %v1327
        %v1636 = vpack.c.b16 %v1336, %v1332
        %v1637 = vpack.c.b16 %v1337, %v1333
        %v1638 = vpack.c.b16 %v1338, %v1334
        %v1639 = vpack.c.b16 %v1339, %v1335
        %v1640 = vpack.c.b16 %v1344, %v1340
        %v1641 = vpack.c.b16 %v1345, %v1341
        %v1642 = vpack.c.b16 %v1346, %v1342
        %v1643 = vpack.c.b16 %v1347, %v1343
        %v1644 = vpack.c.b16 %v1352, %v1348
        %v1645 = vpack.c.b16 %v1353, %v1349
        %v1646 = vpack.c.b16 %v1354, %v1350
        %v1647 = vpack.c.b16 %v1355, %v1351
        %v1648 = vpack.c.b16 %v1360, %v1356
        %v1649 = vpack.c.b16 %v1361, %v1357
        %v1650 = vpack.c.b16 %v1362, %v1358
        %v1651 = vpack.c.b16 %v1363, %v1359
        %v1652 = vpack.c.b16 %v1368, %v1364
        %v1653 = vpack.c.b16 %v1369, %v1365
        %v1654 = vpack.c.b16 %v1370, %v1366
        %v1655 = vpack.c.b16 %v1371, %v1367
        %v1656 = vpack.c.b16 %v1376, %v1372
        %v1657 = vpack.c.b16 %v1377, %v1373
        %v1658 = vpack.c.b16 %v1378, %v1374
        %v1659 = vpack.c.b16 %v1379, %v1375
        %v1660 = vpack.c.b16 %v1384, %v1380
        %v1661 = vpack.c.b16 %v1385, %v1381
        %v1662 = vpack.c.b16 %v1386, %v1382
        %v1663 = vpack.c.b16 %v1387, %v1383
        %v1664 = vpack.c.b16 %v1392, %v1388
        %v1665 = vpack.c.b16 %v1393, %v1389
        %v1666 = vpack.c.b16 %v1394, %v1390
        %v1667 = vpack.c.b16 %v1395, %v1391
        %v1668 = vpack.c.b16 %v1400, %v1396
        %v1669 = vpack.c.b16 %v1401, %v1397
        %v1670 = vpack.c.b16 %v1402, %v1398
        %v1671 = vpack.c.b16 %v1403, %v1399
        %v1672 = vpack.c.b16 %v1408, %v1404
        %v1673 = vpack.c.b16 %v1409, %v1405
        %v1674 = vpack.c.b16 %v1410, %v1406
        %v1675 = vpack.c.b16 %v1411, %v1407
        %v1676 = vpack.c.b16 %v1416, %v1412
        %v1677 = vpack.c.b16 %v1417, %v1413
        %v1678 = vpack.c.b16 %v1418, %v1414
        %v1679 = vpack.c.b16 %v1419, %v1415
        %v1680 = vpack.c.b16 %v1424, %v1420
        %v1681 = vpack.c.b16 %v1425, %v1421
        %v1682 = vpack.c.b16 %v1426, %v1422
        %v1683 = vpack.c.b16 %v1427, %v1423
        %v1684 = vpack.c.b16 %v1432, %v1428
        %v1685 = vpack.c.b16 %v1433, %v1429
        %v1686 = vpack.c.b16 %v1434, %v1430
        %v1687 = vpack.c.b16 %v1435, %v1431
        %v1688 = vpack.c.b16 %v1440, %v1436
        %v1689 = vpack.c.b16 %v1441, %v1437
        %v1690 = vpack.c.b16 %v1442, %v1438
        %v1691 = vpack.c.b16 %v1443, %v1439
        %v1692 = vpack.c.b16 %v1448, %v1444
        %v1693 = vpack.c.b16 %v1449, %v1445
        %v1694 = vpack.c.b16 %v1450, %v1446
        %v1695 = vpack.c.b16 %v1451, %v1447
        %v1696 = vpack.c.b16 %v1456, %v1452
        %v1697 = vpack.c.b16 %v1457, %v1453
        %v1698 = vpack.c.b16 %v1458, %v1454
        %v1699 = vpack.c.b16 %v1459, %v1455
        %v1700 = vpack.c.b16 %v1464, %v1460
        %v1701 = vpack.c.b16 %v1465, %v1461
        %v1702 = vpack.c.b16 %v1466, %v1462
        %v1703 = vpack.c.b16 %v1467, %v1463
        %v1704 = vpack.c.b16 %v1472, %v1468
        %v1705 = vpack.c.b16 %v1473, %v1469
        %v1706 = vpack.c.b16 %v1474, %v1470
        %v1707 = vpack.c.b16 %v1475, %v1471
        %v1708 = vpack.c.b16 %v1480, %v1476
        %v1709 = vpack.c.b16 %v1481, %v1477
        %v1710 = vpack.c.b16 %v1482, %v1478
        %v1711 = vpack.c.b16 %v1483, %v1479
        %v1712 = vpack.c.b16 %v1488, %v1484
        %v1713 = vpack.c.b16 %v1489, %v1485
        %v1714 = vpack.c.b16 %v1490, %v1486
        %v1715 = vpack.c.b16 %v1491, %v1487
        %v1716 = vpack.c.b16 %v1496, %v1492
        %v1717 = vpack.c.b16 %v1497, %v1493
        %v1718 = vpack.c.b16 %v1498, %v1494
        %v1719 = vpack.c.b16 %v1499, %v1495
        %v1720 = vpack.c.b16 %v1504, %v1500
        %v1721 = vpack.c.b16 %v1505, %v1501
        %v1722 = vpack.c.b16 %v1506, %v1502
        %v1723 = vpack.c.b16 %v1507, %v1503
        %v1724 = vpack.c.b16 %v1512, %v1508
        %v1725 = vpack.c.b16 %v1513, %v1509
        %v1726 = vpack.c.b16 %v1514, %v1510
        %v1727 = vpack.c.b16 %v1515, %v1511
        %v1728 = vpack.c.b16 %v1520, %v1516
        %v1729 = vpack.c.b16 %v1521, %v1517
        %v1730 = vpack.c.b16 %v1522, %v1518
        %v1731 = vpack.c.b16 %v1523, %v1519
        %v1732 = vpack.c.b16 %v1528, %v1524
        %v1733 = vpack.c.b16 %v1529, %v1525
        %v1734 = vpack.c.b16 %v1530, %v1526
        %v1735 = vpack.c.b16 %v1531, %v1527
        %v1736 = vpack.c.b16 %v1536, %v1532
        %v1737 = vpack.c.b16 %v1537, %v1533
        %v1738 = vpack.c.b16 %v1538, %v1534
        %v1739 = vpack.c.b16 %v1539, %v1535
        %v1740 = vpack.c.b16 %v1544, %v1540
        %v1741 = vpack.c.b16 %v1545, %v1541
        %v1742 = vpack.c.b16 %v1546, %v1542
        %v1743 = vpack.c.b16 %v1547, %v1543
        %v1744 = vpack.c.b16 %v1552, %v1548
        %v1745 = vpack.c.b16 %v1553, %v1549
        %v1746 = vpack.c.b16 %v1554, %v1550
        %v1747 = vpack.c.b16 %v1555, %v1551
        %1940 = vmatprep.subr.bf16.mxu0 %v1557
        %1941 = vmatpush1.bf16.msra.mxu0 %v1556
        %1942 = vmatprep.subr.bf16.mxu0 %v1561
        %1943 = vmatpush1.bf16.msra.mxu0 %v1560
        %1944 = vmatprep.subr.bf16.mxu0 %v1565
        %1945 = vmatpush1.bf16.msra.mxu0 %v1564
        %1946 = vmatprep.subr.bf16.mxu0 %v1569
        %1947 = vmatpush1.bf16.msra.mxu0 %v1568
        %1948 = vmatprep.subr.bf16.mxu0 %v1573
        %1949 = vmatpush1.bf16.msra.mxu0 %v1572
        %1950 = vmatprep.subr.bf16.mxu0 %v1577
        %1951 = vmatpush1.bf16.msra.mxu0 %v1576
        %1952 = vmatprep.subr.bf16.mxu0 %v1581
        %1953 = vmatpush1.bf16.msra.mxu0 %v1580
        %1954 = vmatprep.subr.bf16.mxu0 %v1585
        %1955 = vmatpush1.bf16.msra.mxu0 %v1584
        %1956 = vmatprep.subr.bf16.mxu0 %v1589
        %1957 = vmatpush1.bf16.msra.mxu0 %v1588
        %1958 = vmatprep.subr.bf16.mxu0 %v1593
        %1959 = vmatpush1.bf16.msra.mxu0 %v1592
        %1960 = vmatprep.subr.bf16.mxu0 %v1597
        %1961 = vmatpush1.bf16.msra.mxu0 %v1596
        %1962 = vmatprep.subr.bf16.mxu0 %v1601
        %1963 = vmatpush1.bf16.msra.mxu0 %v1600
        %1964 = vmatprep.subr.bf16.mxu0 %v1605
        %1965 = vmatpush1.bf16.msra.mxu0 %v1604
        %1966 = vmatprep.subr.bf16.mxu0 %v1609
        %1967 = vmatpush1.bf16.msra.mxu0 %v1608
        %1968 = vmatprep.subr.bf16.mxu0 %v1613
        %1969 = vmatpush1.bf16.msra.mxu0 %v1612
        %1970 = vmatprep.subr.bf16.mxu0 %v1617
        %1971 = vmatpush1.bf16.msra.mxu0 %v1616
        %1972 = vmatprep.mubr.bf16.mxu0 %v748
        %1973 = vmatmul.mubr.bf16.gmra.mrb[0].mxu0 %v744
        %v1974 = vpop.f32.mrb[0].mxu0
        %v1975 = vadd.f32 %v963, %v1974
        %v1976 = vpop.f32.mrb[0].mxu0
        %v1977 = vadd.f32 %v967, %v1976
        %v1978 = vpop.f32.mrb[0].mxu0
        %v1979 = vadd.f32 %v963, %v1978
        %v1980 = vpop.f32.mrb[0].mxu0
        %v1981 = vadd.f32 %v967, %v1980
        %1982 = vdwg.mxu0
        %1983 = vmatprep.subr.bf16.mxu0 %v1621
        %1984 = vmatpush1.bf16.msra.mxu0 %v1620
        %1985 = vmatprep.subr.bf16.mxu0 %v1625
        %1986 = vmatpush1.bf16.msra.mxu0 %v1624
        %1987 = vmatprep.subr.bf16.mxu0 %v1629
        %1988 = vmatpush1.bf16.msra.mxu0 %v1628
        %1989 = vmatprep.subr.bf16.mxu0 %v1633
        %1990 = vmatpush1.bf16.msra.mxu0 %v1632
        %1991 = vmatprep.subr.bf16.mxu0 %v1637
        %1992 = vmatpush1.bf16.msra.mxu0 %v1636
        %1993 = vmatprep.subr.bf16.mxu0 %v1641
        %1994 = vmatpush1.bf16.msra.mxu0 %v1640
        %1995 = vmatprep.subr.bf16.mxu0 %v1645
        %1996 = vmatpush1.bf16.msra.mxu0 %v1644
        %1997 = vmatprep.subr.bf16.mxu0 %v1649
        %1998 = vmatpush1.bf16.msra.mxu0 %v1648
        %1999 = vmatprep.subr.bf16.mxu0 %v1653
        %2000 = vmatpush1.bf16.msra.mxu0 %v1652
        %2001 = vmatprep.subr.bf16.mxu0 %v1657
        %2002 = vmatpush1.bf16.msra.mxu0 %v1656
        %2003 = vmatprep.subr.bf16.mxu0 %v1661
        %2004 = vmatpush1.bf16.msra.mxu0 %v1660
        %2005 = vmatprep.subr.bf16.mxu0 %v1665
        %2006 = vmatpush1.bf16.msra.mxu0 %v1664
        %2007 = vmatprep.subr.bf16.mxu0 %v1669
        %2008 = vmatpush1.bf16.msra.mxu0 %v1668
        %2009 = vmatprep.subr.bf16.mxu0 %v1673
        %2010 = vmatpush1.bf16.msra.mxu0 %v1672
        %2011 = vmatprep.subr.bf16.mxu0 %v1677
        %2012 = vmatpush1.bf16.msra.mxu0 %v1676
        %2013 = vmatprep.subr.bf16.mxu0 %v1681
        %2014 = vmatpush1.bf16.msra.mxu0 %v1680
        %2015 = vmatprep.mubr.bf16.mxu0 %v756
        %2016 = vmatmul.mubr.bf16.gmra.mrb[0].mxu0 %v752
        %v2017 = vpop.f32.mrb[0].mxu0
        %v2018 = vadd.f32 %v1975, %v2017
        %v2019 = vpop.f32.mrb[0].mxu0
        %v2020 = vadd.f32 %v1977, %v2019
        %v2021 = vpop.f32.mrb[0].mxu0
        %v2022 = vadd.f32 %v1979, %v2021
        %v2023 = vpop.f32.mrb[0].mxu0
        %v2024 = vadd.f32 %v1981, %v2023
        %2025 = vdwg.mxu0
        %2026 = vmatprep.subr.bf16.mxu0 %v1685
        %2027 = vmatpush1.bf16.msra.mxu0 %v1684
        %2028 = vmatprep.subr.bf16.mxu0 %v1689
        %2029 = vmatpush1.bf16.msra.mxu0 %v1688
        %2030 = vmatprep.subr.bf16.mxu0 %v1693
        %2031 = vmatpush1.bf16.msra.mxu0 %v1692
        %2032 = vmatprep.subr.bf16.mxu0 %v1697
        %2033 = vmatpush1.bf16.msra.mxu0 %v1696
        %2034 = vmatprep.subr.bf16.mxu0 %v1701
        %2035 = vmatpush1.bf16.msra.mxu0 %v1700
        %2036 = vmatprep.subr.bf16.mxu0 %v1705
        %2037 = vmatpush1.bf16.msra.mxu0 %v1704
        %2038 = vmatprep.subr.bf16.mxu0 %v1709
        %2039 = vmatpush1.bf16.msra.mxu0 %v1708
        %2040 = vmatprep.subr.bf16.mxu0 %v1713
        %2041 = vmatpush1.bf16.msra.mxu0 %v1712
        %2042 = vmatprep.subr.bf16.mxu0 %v1717
        %2043 = vmatpush1.bf16.msra.mxu0 %v1716
        %2044 = vmatprep.subr.bf16.mxu0 %v1721
        %2045 = vmatpush1.bf16.msra.mxu0 %v1720
        %2046 = vmatprep.subr.bf16.mxu0 %v1725
        %2047 = vmatpush1.bf16.msra.mxu0 %v1724
        %2048 = vmatprep.subr.bf16.mxu0 %v1729
        %2049 = vmatpush1.bf16.msra.mxu0 %v1728
        %2050 = vmatprep.subr.bf16.mxu0 %v1733
        %2051 = vmatpush1.bf16.msra.mxu0 %v1732
        %2052 = vmatprep.subr.bf16.mxu0 %v1737
        %2053 = vmatpush1.bf16.msra.mxu0 %v1736
        %2054 = vmatprep.subr.bf16.mxu0 %v1741
        %2055 = vmatpush1.bf16.msra.mxu0 %v1740
        %2056 = vmatprep.subr.bf16.mxu0 %v1745
        %2057 = vmatpush1.bf16.msra.mxu0 %v1744
        %2058 = vmatprep.mubr.bf16.mxu0 %v764
        %2059 = vmatmul.mubr.bf16.gmra.mrb[0].mxu0 %v760
        %v2060 = vpop.f32.mrb[0].mxu0
        %v2061 = vadd.f32 %v2018, %v2060
        %v2062 = vpop.f32.mrb[0].mxu0
        %v2063 = vadd.f32 %v2020, %v2062
        %v2064 = vpop.f32.mrb[0].mxu0
        %v2065 = vadd.f32 %v2022, %v2064
        %v2066 = vpop.f32.mrb[0].mxu0
        %v2067 = vadd.f32 %v2024, %v2066
        %2068 = vdwg.mxu0
        %2069 = vmatprep.subr.bf16.mxu0 %v1559
        %2070 = vmatpush1.bf16.msra.mxu0 %v1558
        %2071 = vmatprep.subr.bf16.mxu0 %v1563
        %2072 = vmatpush1.bf16.msra.mxu0 %v1562
        %2073 = vmatprep.subr.bf16.mxu0 %v1567
        %2074 = vmatpush1.bf16.msra.mxu0 %v1566
        %2075 = vmatprep.subr.bf16.mxu0 %v1571
        %2076 = vmatpush1.bf16.msra.mxu0 %v1570
        %2077 = vmatprep.subr.bf16.mxu0 %v1575
        %2078 = vmatpush1.bf16.msra.mxu0 %v1574
        %2079 = vmatprep.subr.bf16.mxu0 %v1579
        %2080 = vmatpush1.bf16.msra.mxu0 %v1578
        %2081 = vmatprep.subr.bf16.mxu0 %v1583
        %2082 = vmatpush1.bf16.msra.mxu0 %v1582
        %2083 = vmatprep.subr.bf16.mxu0 %v1587
        %2084 = vmatpush1.bf16.msra.mxu0 %v1586
        %2085 = vmatprep.subr.bf16.mxu0 %v1591
        %2086 = vmatpush1.bf16.msra.mxu0 %v1590
        %2087 = vmatprep.subr.bf16.mxu0 %v1595
        %2088 = vmatpush1.bf16.msra.mxu0 %v1594
        %2089 = vmatprep.subr.bf16.mxu0 %v1599
        %2090 = vmatpush1.bf16.msra.mxu0 %v1598
        %2091 = vmatprep.subr.bf16.mxu0 %v1603
        %2092 = vmatpush1.bf16.msra.mxu0 %v1602
        %2093 = vmatprep.subr.bf16.mxu0 %v1607
        %2094 = vmatpush1.bf16.msra.mxu0 %v1606
        %2095 = vmatprep.subr.bf16.mxu0 %v1611
        %2096 = vmatpush1.bf16.msra.mxu0 %v1610
        %2097 = vmatprep.subr.bf16.mxu0 %v1615
        %2098 = vmatpush1.bf16.msra.mxu0 %v1614
        %2099 = vmatprep.subr.bf16.mxu0 %v1619
        %2100 = vmatpush1.bf16.msra.mxu0 %v1618
        %2101 = vmatprep.mubr.bf16.mxu0 %v748
        %2102 = vmatmul.mubr.bf16.gmra.mrb[0].mxu0 %v744
        %v2103 = vpop.f32.mrb[0].mxu0
        %v2104 = vadd.f32 %v971, %v2103
        %v2105 = vpop.f32.mrb[0].mxu0
        %v2106 = vadd.f32 %v975, %v2105
        %v2107 = vpop.f32.mrb[0].mxu0
        %v2108 = vadd.f32 %v971, %v2107
        %v2109 = vpop.f32.mrb[0].mxu0
        %v2110 = vadd.f32 %v975, %v2109
        %2111 = vdwg.mxu0
        %2112 = vmatprep.subr.bf16.mxu0 %v1623
        %2113 = vmatpush1.bf16.msra.mxu0 %v1622
        %2114 = vmatprep.subr.bf16.mxu0 %v1627
        %2115 = vmatpush1.bf16.msra.mxu0 %v1626
        %2116 = vmatprep.subr.bf16.mxu0 %v1631
        %2117 = vmatpush1.bf16.msra.mxu0 %v1630
        %2118 = vmatprep.subr.bf16.mxu0 %v1635
        %2119 = vmatpush1.bf16.msra.mxu0 %v1634
        %2120 = vmatprep.subr.bf16.mxu0 %v1639
        %2121 = vmatpush1.bf16.msra.mxu0 %v1638
        %2122 = vmatprep.subr.bf16.mxu0 %v1643
        %2123 = vmatpush1.bf16.msra.mxu0 %v1642
        %2124 = vmatprep.subr.bf16.mxu0 %v1647
        %2125 = vmatpush1.bf16.msra.mxu0 %v1646
        %2126 = vmatprep.subr.bf16.mxu0 %v1651
        %2127 = vmatpush1.bf16.msra.mxu0 %v1650
        %2128 = vmatprep.subr.bf16.mxu0 %v1655
        %2129 = vmatpush1.bf16.msra.mxu0 %v1654
        %2130 = vmatprep.subr.bf16.mxu0 %v1659
        %2131 = vmatpush1.bf16.msra.mxu0 %v1658
        %2132 = vmatprep.subr.bf16.mxu0 %v1663
        %2133 = vmatpush1.bf16.msra.mxu0 %v1662
        %2134 = vmatprep.subr.bf16.mxu0 %v1667
        %2135 = vmatpush1.bf16.msra.mxu0 %v1666
        %2136 = vmatprep.subr.bf16.mxu0 %v1671
        %2137 = vmatpush1.bf16.msra.mxu0 %v1670
        %2138 = vmatprep.subr.bf16.mxu0 %v1675
        %2139 = vmatpush1.bf16.msra.mxu0 %v1674
        %2140 = vmatprep.subr.bf16.mxu0 %v1679
        %2141 = vmatpush1.bf16.msra.mxu0 %v1678
        %2142 = vmatprep.subr.bf16.mxu0 %v1683
        %2143 = vmatpush1.bf16.msra.mxu0 %v1682
        %2144 = vmatprep.mubr.bf16.mxu0 %v756
        %2145 = vmatmul.mubr.bf16.gmra.mrb[0].mxu0 %v752
        %v2146 = vpop.f32.mrb[0].mxu0
        %v2147 = vadd.f32 %v2104, %v2146
        %v2148 = vpop.f32.mrb[0].mxu0
        %v2149 = vadd.f32 %v2106, %v2148
        %v2150 = vpop.f32.mrb[0].mxu0
        %v2151 = vadd.f32 %v2108, %v2150
        %v2152 = vpop.f32.mrb[0].mxu0
        %v2153 = vadd.f32 %v2110, %v2152
        %2154 = vdwg.mxu0
        %2155 = vmatprep.subr.bf16.mxu0 %v1687
        %2156 = vmatpush1.bf16.msra.mxu0 %v1686
        %2157 = vmatprep.subr.bf16.mxu0 %v1691
        %2158 = vmatpush1.bf16.msra.mxu0 %v1690
        %2159 = vmatprep.subr.bf16.mxu0 %v1695
        %2160 = vmatpush1.bf16.msra.mxu0 %v1694
        %2161 = vmatprep.subr.bf16.mxu0 %v1699
        %2162 = vmatpush1.bf16.msra.mxu0 %v1698
        %2163 = vmatprep.subr.bf16.mxu0 %v1703
        %2164 = vmatpush1.bf16.msra.mxu0 %v1702
        %2165 = vmatprep.subr.bf16.mxu0 %v1707
        %2166 = vmatpush1.bf16.msra.mxu0 %v1706
        %2167 = vmatprep.subr.bf16.mxu0 %v1711
        %2168 = vmatpush1.bf16.msra.mxu0 %v1710
        %2169 = vmatprep.subr.bf16.mxu0 %v1715
        %2170 = vmatpush1.bf16.msra.mxu0 %v1714
        %2171 = vmatprep.subr.bf16.mxu0 %v1719
        %2172 = vmatpush1.bf16.msra.mxu0 %v1718
        %2173 = vmatprep.subr.bf16.mxu0 %v1723
        %2174 = vmatpush1.bf16.msra.mxu0 %v1722
        %2175 = vmatprep.subr.bf16.mxu0 %v1727
        %2176 = vmatpush1.bf16.msra.mxu0 %v1726
        %2177 = vmatprep.subr.bf16.mxu0 %v1731
        %2178 = vmatpush1.bf16.msra.mxu0 %v1730
        %2179 = vmatprep.subr.bf16.mxu0 %v1735
        %2180 = vmatpush1.bf16.msra.mxu0 %v1734
        %2181 = vmatprep.subr.bf16.mxu0 %v1739
        %2182 = vmatpush1.bf16.msra.mxu0 %v1738
        %2183 = vmatprep.subr.bf16.mxu0 %v1743
        %2184 = vmatpush1.bf16.msra.mxu0 %v1742
        %2185 = vmatprep.subr.bf16.mxu0 %v1747
        %2186 = vmatpush1.bf16.msra.mxu0 %v1746
        %2187 = vmatprep.mubr.bf16.mxu0 %v764
        %2188 = vmatmul.mubr.bf16.gmra.mrb[0].mxu0 %v760
        %v2189 = vpop.f32.mrb[0].mxu0
        %v2190 = vadd.f32 %v2147, %v2189
        %v2191 = vpop.f32.mrb[0].mxu0
        %v2192 = vadd.f32 %v2149, %v2191
        %v2193 = vpop.f32.mrb[0].mxu0
        %v2194 = vadd.f32 %v2151, %v2193
        %v2195 = vpop.f32.mrb[0].mxu0
        %v2196 = vadd.f32 %v2153, %v2195
        %2197 = vdwg.mxu0
        %v2198 = vmax.f32 %v2061, 0.0
        %v2199 = vmax.f32 %v2063, 0.0
        %v2200 = vmax.f32 %v2190, 0.0
        %v2201 = vmax.f32 %v2192, 0.0
        %v2202 = vmax.f32 %v2065, 0.0
        %v2203 = vmax.f32 %v2067, 0.0
        %v2204 = vmax.f32 %v2194, 0.0
        %v2205 = vmax.f32 %v2196, 0.0
        %v2206 = vpack.c.bf16 %v2202, %v2198
        %v2207 = vpack.c.bf16 %v2203, %v2199
        %v2208 = vpack.c.bf16 %v2204, %v2200
        %v2209 = vpack.c.bf16 %v2205, %v2201
        %v2210 = vld [vmem:[#allocation10] sm:$0xff]
        %v2211 = vld [vmem:[#allocation10 + $0x8] sm:$0xff]
        %v2212 = vld [vmem:[#allocation10 + $0x10] sm:$0xff]
        %v2213 = vld [vmem:[#allocation10 + $0x18] sm:$0xff]
        %v2214 = vld [vmem:[#allocation10 + $0x20] sm:$0xff]
        %v2215 = vld [vmem:[#allocation10 + $0x28] sm:$0xff]
        %v2216 = vld [vmem:[#allocation10 + $0x30] sm:$0xff]
        %v2217 = vld [vmem:[#allocation10 + $0x38] sm:$0xff]
        %v2218 = vld [vmem:[#allocation10 + $0x40] sm:$0xff]
        %v2219 = vld [vmem:[#allocation10 + $0x48] sm:$0xff]
        %v2220 = vld [vmem:[#allocation10 + $0x50] sm:$0xff]
        %v2221 = vld [vmem:[#allocation10 + $0x58] sm:$0xff]
        %v2222 = vld [vmem:[#allocation10 + $0x60] sm:$0xff]
        %v2223 = vld [vmem:[#allocation10 + $0x68] sm:$0xff]
        %v2224 = vld [vmem:[#allocation10 + $0x70] sm:$0xff]
        %v2225 = vld [vmem:[#allocation10 + $0x78] sm:$0xff]
        %v2226 = vld [vmem:[#allocation10 + $0x80] sm:$0xff]
        %v2227 = vld [vmem:[#allocation10 + $0x88] sm:$0xff]
        %v2228 = vld [vmem:[#allocation10 + $0x90] sm:$0xff]
        %v2229 = vld [vmem:[#allocation10 + $0x98] sm:$0xff]
        %v2230 = vld [vmem:[#allocation10 + $0xa0] sm:$0xff]
        %v2231 = vld [vmem:[#allocation10 + $0xa8] sm:$0xff]
        %v2232 = vld [vmem:[#allocation10 + $0xb0] sm:$0xff]
        %v2233 = vld [vmem:[#allocation10 + $0xb8] sm:$0xff]
        %v2234 = vld [vmem:[#allocation10 + $0xc0] sm:$0xff]
        %v2235 = vld [vmem:[#allocation10 + $0xc8] sm:$0xff]
        %v2236 = vld [vmem:[#allocation10 + $0xd0] sm:$0xff]
        %v2237 = vld [vmem:[#allocation10 + $0xd8] sm:$0xff]
        %v2238 = vld [vmem:[#allocation10 + $0xe0] sm:$0xff]
        %v2239 = vld [vmem:[#allocation10 + $0xe8] sm:$0xff]
        %v2240 = vld [vmem:[#allocation10 + $0xf0] sm:$0xff]
        %v2241 = vld [vmem:[#allocation10 + $0xf8] sm:$0xff]
        %v2242 = vld [vmem:[#allocation10 + $0x100] sm:$0xff]
        %v2243 = vld [vmem:[#allocation10 + $0x108] sm:$0xff]
        %v2244 = vld [vmem:[#allocation10 + $0x110] sm:$0xff]
        %v2245 = vld [vmem:[#allocation10 + $0x118] sm:$0xff]
        %v2246 = vld [vmem:[#allocation10 + $0x120] sm:$0xff]
        %v2247 = vld [vmem:[#allocation10 + $0x128] sm:$0xff]
        %v2248 = vld [vmem:[#allocation10 + $0x130] sm:$0xff]
        %v2249 = vld [vmem:[#allocation10 + $0x138] sm:$0xff]
        %v2250 = vld [vmem:[#allocation10 + $0x140] sm:$0xff]
        %v2251 = vld [vmem:[#allocation10 + $0x148] sm:$0xff]
        %v2252 = vld [vmem:[#allocation10 + $0x150] sm:$0xff]
        %v2253 = vld [vmem:[#allocation10 + $0x158] sm:$0xff]
        %v2254 = vld [vmem:[#allocation10 + $0x160] sm:$0xff]
        %v2255 = vld [vmem:[#allocation10 + $0x168] sm:$0xff]
        %v2256 = vld [vmem:[#allocation10 + $0x170] sm:$0xff]
        %v2257 = vld [vmem:[#allocation10 + $0x178] sm:$0xff]
        %v2258 = vld [vmem:[#allocation10 + $0x180] sm:$0xff]
        %v2259 = vld [vmem:[#allocation10 + $0x188] sm:$0xff]
        %v2260 = vld [vmem:[#allocation10 + $0x190] sm:$0xff]
        %v2261 = vld [vmem:[#allocation10 + $0x198] sm:$0xff]
        %v2262 = vld [vmem:[#allocation10 + $0x1a0] sm:$0xff]
        %v2263 = vld [vmem:[#allocation10 + $0x1a8] sm:$0xff]
        %v2264 = vld [vmem:[#allocation10 + $0x1b0] sm:$0xff]
        %v2265 = vld [vmem:[#allocation10 + $0x1b8] sm:$0xff]
        %v2266 = vld [vmem:[#allocation10 + $0x1c0] sm:$0xff]
        %v2267 = vld [vmem:[#allocation10 + $0x1c8] sm:$0xff]
        %v2268 = vld [vmem:[#allocation10 + $0x1d0] sm:$0xff]
        %v2269 = vld [vmem:[#allocation10 + $0x1d8] sm:$0xff]
        %v2270 = vld [vmem:[#allocation10 + $0x1e0] sm:$0xff]
        %v2271 = vld [vmem:[#allocation10 + $0x1e8] sm:$0xff]
        %v2272 = vld [vmem:[#allocation10 + $0x1f0] sm:$0xff]
        %v2273 = vld [vmem:[#allocation10 + $0x1f8] sm:$0xff]
        %v2274 = vld [vmem:[%s6] sm:$0x3]
        %v2276 = vlaneseq
        %v2277 = vshrl.u32 %v2276, 7
        %v2278 = vsub.s32 0, %v2277
        %v2279 = vrot.slane %v2274, %v2278
        %v2280 = vlaneseq
        %v2281 = vshrl.u32 %v2280, 7
        %v2282 = vsub.s32 1, %v2281
        %v2283 = vrot.slane %v2274, %v2282
        %v2350 = vunpack.c.l.b16 %v2210
        %v2351 = vunpack.c.h.b16 %v2210
        %v2352 = vunpack.c.l.b16 %v2211
        %v2353 = vunpack.c.h.b16 %v2211
        %v2354 = vunpack.c.l.b16 %v2212
        %v2355 = vunpack.c.h.b16 %v2212
        %v2356 = vunpack.c.l.b16 %v2213
        %v2357 = vunpack.c.h.b16 %v2213
        %v2358 = vunpack.c.l.b16 %v2214
        %v2359 = vunpack.c.h.b16 %v2214
        %v2360 = vunpack.c.l.b16 %v2215
        %v2361 = vunpack.c.h.b16 %v2215
        %v2362 = vunpack.c.l.b16 %v2216
        %v2363 = vunpack.c.h.b16 %v2216
        %v2364 = vunpack.c.l.b16 %v2217
        %v2365 = vunpack.c.h.b16 %v2217
        %v2366 = vunpack.c.l.b16 %v2218
        %v2367 = vunpack.c.h.b16 %v2218
        %v2368 = vunpack.c.l.b16 %v2219
        %v2369 = vunpack.c.h.b16 %v2219
        %v2370 = vunpack.c.l.b16 %v2220
        %v2371 = vunpack.c.h.b16 %v2220
        %v2372 = vunpack.c.l.b16 %v2221
        %v2373 = vunpack.c.h.b16 %v2221
        %v2374 = vunpack.c.l.b16 %v2222
        %v2375 = vunpack.c.h.b16 %v2222
        %v2376 = vunpack.c.l.b16 %v2223
        %v2377 = vunpack.c.h.b16 %v2223
        %v2378 = vunpack.c.l.b16 %v2224
        %v2379 = vunpack.c.h.b16 %v2224
        %v2380 = vunpack.c.l.b16 %v2225
        %v2381 = vunpack.c.h.b16 %v2225
        %v2382 = vunpack.c.l.b16 %v2226
        %v2383 = vunpack.c.h.b16 %v2226
        %v2384 = vunpack.c.l.b16 %v2227
        %v2385 = vunpack.c.h.b16 %v2227
        %v2386 = vunpack.c.l.b16 %v2228
        %v2387 = vunpack.c.h.b16 %v2228
        %v2388 = vunpack.c.l.b16 %v2229
        %v2389 = vunpack.c.h.b16 %v2229
        %v2390 = vunpack.c.l.b16 %v2230
        %v2391 = vunpack.c.h.b16 %v2230
        %v2392 = vunpack.c.l.b16 %v2231
        %v2393 = vunpack.c.h.b16 %v2231
        %v2394 = vunpack.c.l.b16 %v2232
        %v2395 = vunpack.c.h.b16 %v2232
        %v2396 = vunpack.c.l.b16 %v2233
        %v2397 = vunpack.c.h.b16 %v2233
        %v2398 = vunpack.c.l.b16 %v2234
        %v2399 = vunpack.c.h.b16 %v2234
        %v2400 = vunpack.c.l.b16 %v2235
        %v2401 = vunpack.c.h.b16 %v2235
        %v2402 = vunpack.c.l.b16 %v2236
        %v2403 = vunpack.c.h.b16 %v2236
        %v2404 = vunpack.c.l.b16 %v2237
        %v2405 = vunpack.c.h.b16 %v2237
        %v2406 = vunpack.c.l.b16 %v2238
        %v2407 = vunpack.c.h.b16 %v2238
        %v2408 = vunpack.c.l.b16 %v2239
        %v2409 = vunpack.c.h.b16 %v2239
        %v2410 = vunpack.c.l.b16 %v2240
        %v2411 = vunpack.c.h.b16 %v2240
        %v2412 = vunpack.c.l.b16 %v2241
        %v2413 = vunpack.c.h.b16 %v2241
        %v2414 = vunpack.c.l.b16 %v2242
        %v2415 = vunpack.c.h.b16 %v2242
        %v2416 = vunpack.c.l.b16 %v2243
        %v2417 = vunpack.c.h.b16 %v2243
        %v2418 = vunpack.c.l.b16 %v2244
        %v2419 = vunpack.c.h.b16 %v2244
        %v2420 = vunpack.c.l.b16 %v2245
        %v2421 = vunpack.c.h.b16 %v2245
        %v2422 = vunpack.c.l.b16 %v2246
        %v2423 = vunpack.c.h.b16 %v2246
        %v2424 = vunpack.c.l.b16 %v2247
        %v2425 = vunpack.c.h.b16 %v2247
        %v2426 = vunpack.c.l.b16 %v2248
        %v2427 = vunpack.c.h.b16 %v2248
        %v2428 = vunpack.c.l.b16 %v2249
        %v2429 = vunpack.c.h.b16 %v2249
        %v2430 = vunpack.c.l.b16 %v2250
        %v2431 = vunpack.c.h.b16 %v2250
        %v2432 = vunpack.c.l.b16 %v2251
        %v2433 = vunpack.c.h.b16 %v2251
        %v2434 = vunpack.c.l.b16 %v2252
        %v2435 = vunpack.c.h.b16 %v2252
        %v2436 = vunpack.c.l.b16 %v2253
        %v2437 = vunpack.c.h.b16 %v2253
        %v2438 = vunpack.c.l.b16 %v2254
        %v2439 = vunpack.c.h.b16 %v2254
        %v2440 = vunpack.c.l.b16 %v2255
        %v2441 = vunpack.c.h.b16 %v2255
        %v2442 = vunpack.c.l.b16 %v2256
        %v2443 = vunpack.c.h.b16 %v2256
        %v2444 = vunpack.c.l.b16 %v2257
        %v2445 = vunpack.c.h.b16 %v2257
        %v2446 = vunpack.c.l.b16 %v2258
        %v2447 = vunpack.c.h.b16 %v2258
        %v2448 = vunpack.c.l.b16 %v2259
        %v2449 = vunpack.c.h.b16 %v2259
        %v2450 = vunpack.c.l.b16 %v2260
        %v2451 = vunpack.c.h.b16 %v2260
        %v2452 = vunpack.c.l.b16 %v2261
        %v2453 = vunpack.c.h.b16 %v2261
        %v2454 = vunpack.c.l.b16 %v2262
        %v2455 = vunpack.c.h.b16 %v2262
        %v2456 = vunpack.c.l.b16 %v2263
        %v2457 = vunpack.c.h.b16 %v2263
        %v2458 = vunpack.c.l.b16 %v2264
        %v2459 = vunpack.c.h.b16 %v2264
        %v2460 = vunpack.c.l.b16 %v2265
        %v2461 = vunpack.c.h.b16 %v2265
        %v2462 = vunpack.c.l.b16 %v2266
        %v2463 = vunpack.c.h.b16 %v2266
        %v2464 = vunpack.c.l.b16 %v2267
        %v2465 = vunpack.c.h.b16 %v2267
        %v2466 = vunpack.c.l.b16 %v2268
        %v2467 = vunpack.c.h.b16 %v2268
        %v2468 = vunpack.c.l.b16 %v2269
        %v2469 = vunpack.c.h.b16 %v2269
        %v2470 = vunpack.c.l.b16 %v2270
        %v2471 = vunpack.c.h.b16 %v2270
        %v2472 = vunpack.c.l.b16 %v2271
        %v2473 = vunpack.c.h.b16 %v2271
        %v2474 = vunpack.c.l.b16 %v2272
        %v2475 = vunpack.c.h.b16 %v2272
        %v2476 = vunpack.c.l.b16 %v2273
        %v2477 = vunpack.c.h.b16 %v2273
        %v2478 = vpack.c.b16 %v2352, %v2350
        %v2479 = vpack.c.b16 %v2353, %v2351
        %v2480 = vpack.c.b16 %v2356, %v2354
        %v2481 = vpack.c.b16 %v2357, %v2355
        %v2482 = vpack.c.b16 %v2360, %v2358
        %v2483 = vpack.c.b16 %v2361, %v2359
        %v2484 = vpack.c.b16 %v2364, %v2362
        %v2485 = vpack.c.b16 %v2365, %v2363
        %v2486 = vpack.c.b16 %v2368, %v2366
        %v2487 = vpack.c.b16 %v2369, %v2367
        %v2488 = vpack.c.b16 %v2372, %v2370
        %v2489 = vpack.c.b16 %v2373, %v2371
        %v2490 = vpack.c.b16 %v2376, %v2374
        %v2491 = vpack.c.b16 %v2377, %v2375
        %v2492 = vpack.c.b16 %v2380, %v2378
        %v2493 = vpack.c.b16 %v2381, %v2379
        %v2494 = vpack.c.b16 %v2384, %v2382
        %v2495 = vpack.c.b16 %v2385, %v2383
        %v2496 = vpack.c.b16 %v2388, %v2386
        %v2497 = vpack.c.b16 %v2389, %v2387
        %v2498 = vpack.c.b16 %v2392, %v2390
        %v2499 = vpack.c.b16 %v2393, %v2391
        %v2500 = vpack.c.b16 %v2396, %v2394
        %v2501 = vpack.c.b16 %v2397, %v2395
        %v2502 = vpack.c.b16 %v2400, %v2398
        %v2503 = vpack.c.b16 %v2401, %v2399
        %v2504 = vpack.c.b16 %v2404, %v2402
        %v2505 = vpack.c.b16 %v2405, %v2403
        %v2506 = vpack.c.b16 %v2408, %v2406
        %v2507 = vpack.c.b16 %v2409, %v2407
        %v2508 = vpack.c.b16 %v2412, %v2410
        %v2509 = vpack.c.b16 %v2413, %v2411
        %v2510 = vpack.c.b16 %v2416, %v2414
        %v2511 = vpack.c.b16 %v2417, %v2415
        %v2512 = vpack.c.b16 %v2420, %v2418
        %v2513 = vpack.c.b16 %v2421, %v2419
        %v2514 = vpack.c.b16 %v2424, %v2422
        %v2515 = vpack.c.b16 %v2425, %v2423
        %v2516 = vpack.c.b16 %v2428, %v2426
        %v2517 = vpack.c.b16 %v2429, %v2427
        %v2518 = vpack.c.b16 %v2432, %v2430
        %v2519 = vpack.c.b16 %v2433, %v2431
        %v2520 = vpack.c.b16 %v2436, %v2434
        %v2521 = vpack.c.b16 %v2437, %v2435
        %v2522 = vpack.c.b16 %v2440, %v2438
        %v2523 = vpack.c.b16 %v2441, %v2439
        %v2524 = vpack.c.b16 %v2444, %v2442
        %v2525 = vpack.c.b16 %v2445, %v2443
        %v2526 = vpack.c.b16 %v2448, %v2446
        %v2527 = vpack.c.b16 %v2449, %v2447
        %v2528 = vpack.c.b16 %v2452, %v2450
        %v2529 = vpack.c.b16 %v2453, %v2451
        %v2530 = vpack.c.b16 %v2456, %v2454
        %v2531 = vpack.c.b16 %v2457, %v2455
        %v2532 = vpack.c.b16 %v2460, %v2458
        %v2533 = vpack.c.b16 %v2461, %v2459
        %v2534 = vpack.c.b16 %v2464, %v2462
        %v2535 = vpack.c.b16 %v2465, %v2463
        %v2536 = vpack.c.b16 %v2468, %v2466
        %v2537 = vpack.c.b16 %v2469, %v2467
        %v2538 = vpack.c.b16 %v2472, %v2470
        %v2539 = vpack.c.b16 %v2473, %v2471
        %v2540 = vpack.c.b16 %v2476, %v2474
        %v2541 = vpack.c.b16 %v2477, %v2475
        %2606 = vmatprep.subr.bf16.mxu0 %v2479
        %2607 = vmatpush1.bf16.msra.mxu0 %v2478
        %2608 = vmatprep.subr.bf16.mxu0 %v2481
        %2609 = vmatpush1.bf16.msra.mxu0 %v2480
        %2610 = vmatprep.subr.bf16.mxu0 %v2483
        %2611 = vmatpush1.bf16.msra.mxu0 %v2482
        %2612 = vmatprep.subr.bf16.mxu0 %v2485
        %2613 = vmatpush1.bf16.msra.mxu0 %v2484
        %2614 = vmatprep.subr.bf16.mxu0 %v2487
        %2615 = vmatpush1.bf16.msra.mxu0 %v2486
        %2616 = vmatprep.subr.bf16.mxu0 %v2489
        %2617 = vmatpush1.bf16.msra.mxu0 %v2488
        %2618 = vmatprep.subr.bf16.mxu0 %v2491
        %2619 = vmatpush1.bf16.msra.mxu0 %v2490
        %2620 = vmatprep.subr.bf16.mxu0 %v2493
        %2621 = vmatpush1.bf16.msra.mxu0 %v2492
        %2622 = vmatprep.subr.bf16.mxu0 %v2495
        %2623 = vmatpush1.bf16.msra.mxu0 %v2494
        %2624 = vmatprep.subr.bf16.mxu0 %v2497
        %2625 = vmatpush1.bf16.msra.mxu0 %v2496
        %2626 = vmatprep.subr.bf16.mxu0 %v2499
        %2627 = vmatpush1.bf16.msra.mxu0 %v2498
        %2628 = vmatprep.subr.bf16.mxu0 %v2501
        %2629 = vmatpush1.bf16.msra.mxu0 %v2500
        %2630 = vmatprep.subr.bf16.mxu0 %v2503
        %2631 = vmatpush1.bf16.msra.mxu0 %v2502
        %2632 = vmatprep.subr.bf16.mxu0 %v2505
        %2633 = vmatpush1.bf16.msra.mxu0 %v2504
        %2634 = vmatprep.subr.bf16.mxu0 %v2507
        %2635 = vmatpush1.bf16.msra.mxu0 %v2506
        %2636 = vmatprep.subr.bf16.mxu0 %v2509
        %2637 = vmatpush1.bf16.msra.mxu0 %v2508
        %2638 = vmatprep.mubr.bf16.mxu0 %v2207
        %2639 = vmatmul.mubr.bf16.gmra.mrb[0].mxu0 %v2206
        %v2640 = vpop.f32.mrb[0].mxu0
        %v2641 = vadd.f32 %v2279, %v2640
        %v2642 = vpop.f32.mrb[0].mxu0
        %v2643 = vadd.f32 %v2283, %v2642
        %v2644 = vpop.f32.mrb[0].mxu0
        %v2645 = vadd.f32 %v2279, %v2644
        %v2646 = vpop.f32.mrb[0].mxu0
        %v2647 = vadd.f32 %v2283, %v2646
        %2648 = vdwg.mxu0
        %2649 = vmatprep.subr.bf16.mxu0 %v2511
        %2650 = vmatpush1.bf16.msra.mxu0 %v2510
        %2651 = vmatprep.subr.bf16.mxu0 %v2513
        %2652 = vmatpush1.bf16.msra.mxu0 %v2512
        %2653 = vmatprep.subr.bf16.mxu0 %v2515
        %2654 = vmatpush1.bf16.msra.mxu0 %v2514
        %2655 = vmatprep.subr.bf16.mxu0 %v2517
        %2656 = vmatpush1.bf16.msra.mxu0 %v2516
        %2657 = vmatprep.subr.bf16.mxu0 %v2519
        %2658 = vmatpush1.bf16.msra.mxu0 %v2518
        %2659 = vmatprep.subr.bf16.mxu0 %v2521
        %2660 = vmatpush1.bf16.msra.mxu0 %v2520
        %2661 = vmatprep.subr.bf16.mxu0 %v2523
        %2662 = vmatpush1.bf16.msra.mxu0 %v2522
        %2663 = vmatprep.subr.bf16.mxu0 %v2525
        %2664 = vmatpush1.bf16.msra.mxu0 %v2524
        %2665 = vmatprep.subr.bf16.mxu0 %v2527
        %2666 = vmatpush1.bf16.msra.mxu0 %v2526
        %2667 = vmatprep.subr.bf16.mxu0 %v2529
        %2668 = vmatpush1.bf16.msra.mxu0 %v2528
        %2669 = vmatprep.subr.bf16.mxu0 %v2531
        %2670 = vmatpush1.bf16.msra.mxu0 %v2530
        %2671 = vmatprep.subr.bf16.mxu0 %v2533
        %2672 = vmatpush1.bf16.msra.mxu0 %v2532
        %2673 = vmatprep.subr.bf16.mxu0 %v2535
        %2674 = vmatpush1.bf16.msra.mxu0 %v2534
        %2675 = vmatprep.subr.bf16.mxu0 %v2537
        %2676 = vmatpush1.bf16.msra.mxu0 %v2536
        %2677 = vmatprep.subr.bf16.mxu0 %v2539
        %2678 = vmatpush1.bf16.msra.mxu0 %v2538
        %2679 = vmatprep.subr.bf16.mxu0 %v2541
        %2680 = vmatpush1.bf16.msra.mxu0 %v2540
        %2681 = vmatprep.mubr.bf16.mxu0 %v2209
        %2682 = vmatmul.mubr.bf16.gmra.mrb[0].mxu0 %v2208
        %v2683 = vpop.f32.mrb[0].mxu0
        %v2684 = vadd.f32 %v2641, %v2683
        %v2685 = vpop.f32.mrb[0].mxu0
        %v2686 = vadd.f32 %v2643, %v2685
        %v2687 = vpop.f32.mrb[0].mxu0
        %v2688 = vadd.f32 %v2645, %v2687
        %v2689 = vpop.f32.mrb[0].mxu0
        %v2690 = vadd.f32 %v2647, %v2689
        %2691 = vdwg.mxu0
        %v2692 = vmax.f32 %v2684, 0.0
        %v2693 = vmax.f32 %v2686, 0.0
        %v2694 = vmax.f32 %v2688, 0.0
        %v2695 = vmax.f32 %v2690, 0.0
        %v2696 = vpack.c.bf16 %v2694, %v2692
        %v2697 = vpack.c.bf16 %v2695, %v2693
        %v2698 = vld [vmem:[#allocation12] sm:$0xff]
        %v2699 = vld [vmem:[#allocation12 + $0x8] sm:$0xff]
        %v2700 = vld [vmem:[#allocation12 + $0x10] sm:$0xff]
        %v2701 = vld [vmem:[#allocation12 + $0x18] sm:$0xff]
        %v2702 = vld [vmem:[#allocation12 + $0x20] sm:$0xff]
        %v2703 = vld [vmem:[#allocation12 + $0x28] sm:$0xff]
        %v2704 = vld [vmem:[#allocation12 + $0x30] sm:$0xff]
        %v2705 = vld [vmem:[#allocation12 + $0x38] sm:$0xff]
        %v2706 = vld [vmem:[#allocation12 + $0x40] sm:$0xff]
        %v2707 = vld [vmem:[#allocation12 + $0x48] sm:$0xff]
        %v2708 = vld [vmem:[#allocation12 + $0x50] sm:$0xff]
        %v2709 = vld [vmem:[#allocation12 + $0x58] sm:$0xff]
        %v2710 = vld [vmem:[#allocation12 + $0x60] sm:$0xff]
        %v2711 = vld [vmem:[#allocation12 + $0x68] sm:$0xff]
        %v2712 = vld [vmem:[#allocation12 + $0x70] sm:$0xff]
        %v2713 = vld [vmem:[#allocation12 + $0x78] sm:$0xff]
        %v2714 = vld [vmem:[#allocation12 + $0x80] sm:$0xff]
        %v2715 = vld [vmem:[#allocation12 + $0x88] sm:$0xff]
        %v2716 = vld [vmem:[#allocation12 + $0x90] sm:$0xff]
        %v2717 = vld [vmem:[#allocation12 + $0x98] sm:$0xff]
        %v2718 = vld [vmem:[#allocation12 + $0xa0] sm:$0xff]
        %v2719 = vld [vmem:[#allocation12 + $0xa8] sm:$0xff]
        %v2720 = vld [vmem:[#allocation12 + $0xb0] sm:$0xff]
        %v2721 = vld [vmem:[#allocation12 + $0xb8] sm:$0xff]
        %v2722 = vld [vmem:[#allocation12 + $0xc0] sm:$0xff]
        %v2723 = vld [vmem:[#allocation12 + $0xc8] sm:$0xff]
        %v2724 = vld [vmem:[#allocation12 + $0xd0] sm:$0xff]
        %v2725 = vld [vmem:[#allocation12 + $0xd8] sm:$0xff]
        %v2726 = vld [vmem:[#allocation12 + $0xe0] sm:$0xff]
        %v2727 = vld [vmem:[#allocation12 + $0xe8] sm:$0xff]
        %v2728 = vld [vmem:[#allocation12 + $0xf0] sm:$0xff]
        %v2729 = vld [vmem:[#allocation12 + $0xf8] sm:$0xff]
        %v2730 = vld [vmem:[#allocation12 + $0x100] sm:$0xff]
        %v2731 = vld [vmem:[#allocation12 + $0x108] sm:$0xff]
        %v2732 = vld [vmem:[#allocation12 + $0x110] sm:$0xff]
        %v2733 = vld [vmem:[#allocation12 + $0x118] sm:$0xff]
        %v2734 = vld [vmem:[#allocation12 + $0x120] sm:$0xff]
        %v2735 = vld [vmem:[#allocation12 + $0x128] sm:$0xff]
        %v2736 = vld [vmem:[#allocation12 + $0x130] sm:$0xff]
        %v2737 = vld [vmem:[#allocation12 + $0x138] sm:$0xff]
        %v2738 = vld [vmem:[#allocation12 + $0x140] sm:$0xff]
        %v2739 = vld [vmem:[#allocation12 + $0x148] sm:$0xff]
        %v2740 = vld [vmem:[#allocation12 + $0x150] sm:$0xff]
        %v2741 = vld [vmem:[#allocation12 + $0x158] sm:$0xff]
        %v2742 = vld [vmem:[#allocation12 + $0x160] sm:$0xff]
        %v2743 = vld [vmem:[#allocation12 + $0x168] sm:$0xff]
        %v2744 = vld [vmem:[#allocation12 + $0x170] sm:$0xff]
        %v2745 = vld [vmem:[#allocation12 + $0x178] sm:$0xff]
        %v2746 = vld [vmem:[#allocation12 + $0x180] sm:$0xff]
        %v2747 = vld [vmem:[#allocation12 + $0x188] sm:$0xff]
        %v2748 = vld [vmem:[#allocation12 + $0x190] sm:$0xff]
        %v2749 = vld [vmem:[#allocation12 + $0x198] sm:$0xff]
        %v2750 = vld [vmem:[#allocation12 + $0x1a0] sm:$0xff]
        %v2751 = vld [vmem:[#allocation12 + $0x1a8] sm:$0xff]
        %v2752 = vld [vmem:[#allocation12 + $0x1b0] sm:$0xff]
        %v2753 = vld [vmem:[#allocation12 + $0x1b8] sm:$0xff]
        %v2754 = vld [vmem:[#allocation12 + $0x1c0] sm:$0xff]
        %v2755 = vld [vmem:[#allocation12 + $0x1c8] sm:$0xff]
        %v2756 = vld [vmem:[#allocation12 + $0x1d0] sm:$0xff]
        %v2757 = vld [vmem:[#allocation12 + $0x1d8] sm:$0xff]
        %v2758 = vld [vmem:[#allocation12 + $0x1e0] sm:$0xff]
        %v2759 = vld [vmem:[#allocation12 + $0x1e8] sm:$0xff]
        %v2760 = vld [vmem:[#allocation12 + $0x1f0] sm:$0xff]
        %v2761 = vld [vmem:[#allocation12 + $0x1f8] sm:$0xff]
        %v2762 = vld [vmem:[#allocation12 + $0x200] sm:$0xff]
        %v2763 = vld [vmem:[#allocation12 + $0x208] sm:$0xff]
        %v2764 = vld [vmem:[#allocation12 + $0x210] sm:$0xff]
        %v2765 = vld [vmem:[#allocation12 + $0x218] sm:$0xff]
        %v2766 = vld [vmem:[#allocation12 + $0x220] sm:$0xff]
        %v2767 = vld [vmem:[#allocation12 + $0x228] sm:$0xff]
        %v2768 = vld [vmem:[#allocation12 + $0x230] sm:$0xff]
        %v2769 = vld [vmem:[#allocation12 + $0x238] sm:$0xff]
        %v2770 = vld [vmem:[#allocation12 + $0x240] sm:$0xff]
        %v2771 = vld [vmem:[#allocation12 + $0x248] sm:$0xff]
        %v2772 = vld [vmem:[#allocation12 + $0x250] sm:$0xff]
        %v2773 = vld [vmem:[#allocation12 + $0x258] sm:$0xff]
        %v2774 = vld [vmem:[#allocation12 + $0x260] sm:$0xff]
        %v2775 = vld [vmem:[#allocation12 + $0x268] sm:$0xff]
        %v2776 = vld [vmem:[#allocation12 + $0x270] sm:$0xff]
        %v2777 = vld [vmem:[#allocation12 + $0x278] sm:$0xff]
        %v2778 = vld [vmem:[#allocation12 + $0x280] sm:$0xff]
        %v2779 = vld [vmem:[#allocation12 + $0x288] sm:$0xff]
        %v2780 = vld [vmem:[#allocation12 + $0x290] sm:$0xff]
        %v2781 = vld [vmem:[#allocation12 + $0x298] sm:$0xff]
        %v2782 = vld [vmem:[#allocation12 + $0x2a0] sm:$0xff]
        %v2783 = vld [vmem:[#allocation12 + $0x2a8] sm:$0xff]
        %v2784 = vld [vmem:[#allocation12 + $0x2b0] sm:$0xff]
        %v2785 = vld [vmem:[#allocation12 + $0x2b8] sm:$0xff]
        %v2786 = vld [vmem:[#allocation12 + $0x2c0] sm:$0xff]
        %v2787 = vld [vmem:[#allocation12 + $0x2c8] sm:$0xff]
        %v2788 = vld [vmem:[#allocation12 + $0x2d0] sm:$0xff]
        %v2789 = vld [vmem:[#allocation12 + $0x2d8] sm:$0xff]
        %v2790 = vld [vmem:[#allocation12 + $0x2e0] sm:$0xff]
        %v2791 = vld [vmem:[#allocation12 + $0x2e8] sm:$0xff]
        %v2792 = vld [vmem:[#allocation12 + $0x2f0] sm:$0xff]
        %v2793 = vld [vmem:[#allocation12 + $0x2f8] sm:$0xff]
        %v2794 = vld [vmem:[%s8] sm:$0x3f]
        %v2796 = vlaneseq
        %v2797 = vshrl.u32 %v2796, 7
        %v2798 = vsub.s32 0, %v2797
        %v2799 = vrot.slane %v2794, %v2798
        %v2800 = vlaneseq
        %v2801 = vshrl.u32 %v2800, 7
        %v2802 = vsub.s32 1, %v2801
        %v2803 = vrot.slane %v2794, %v2802
        %v2804 = vlaneseq
        %v2805 = vshrl.u32 %v2804, 7
        %v2806 = vsub.s32 2, %v2805
        %v2807 = vrot.slane %v2794, %v2806
        %v2808 = vlaneseq
        %v2809 = vshrl.u32 %v2808, 7
        %v2810 = vsub.s32 3, %v2809
        %v2811 = vrot.slane %v2794, %v2810
        %v2812 = vlaneseq
        %v2813 = vshrl.u32 %v2812, 7
        %v2814 = vsub.s32 4, %v2813
        %v2815 = vrot.slane %v2794, %v2814
        %v2816 = vlaneseq
        %v2817 = vshrl.u32 %v2816, 7
        %v2818 = vsub.s32 5, %v2817
        %v2819 = vrot.slane %v2794, %v2818
        %v2922 = vunpack.c.l.b16 %v2698
        %v2923 = vunpack.c.h.b16 %v2698
        %v2924 = vunpack.c.l.b16 %v2699
        %v2925 = vunpack.c.h.b16 %v2699
        %v2926 = vunpack.c.l.b16 %v2700
        %v2927 = vunpack.c.h.b16 %v2700
        %v2928 = vunpack.c.l.b16 %v2701
        %v2929 = vunpack.c.h.b16 %v2701
        %v2930 = vunpack.c.l.b16 %v2702
        %v2931 = vunpack.c.h.b16 %v2702
        %v2932 = vunpack.c.l.b16 %v2703
        %v2933 = vunpack.c.h.b16 %v2703
        %v2934 = vunpack.c.l.b16 %v2704
        %v2935 = vunpack.c.h.b16 %v2704
        %v2936 = vunpack.c.l.b16 %v2705
        %v2937 = vunpack.c.h.b16 %v2705
        %v2938 = vunpack.c.l.b16 %v2706
        %v2939 = vunpack.c.h.b16 %v2706
        %v2940 = vunpack.c.l.b16 %v2707
        %v2941 = vunpack.c.h.b16 %v2707
        %v2942 = vunpack.c.l.b16 %v2708
        %v2943 = vunpack.c.h.b16 %v2708
        %v2944 = vunpack.c.l.b16 %v2709
        %v2945 = vunpack.c.h.b16 %v2709
        %v2946 = vunpack.c.l.b16 %v2710
        %v2947 = vunpack.c.h.b16 %v2710
        %v2948 = vunpack.c.l.b16 %v2711
        %v2949 = vunpack.c.h.b16 %v2711
        %v2950 = vunpack.c.l.b16 %v2712
        %v2951 = vunpack.c.h.b16 %v2712
        %v2952 = vunpack.c.l.b16 %v2713
        %v2953 = vunpack.c.h.b16 %v2713
        %v2954 = vunpack.c.l.b16 %v2714
        %v2955 = vunpack.c.h.b16 %v2714
        %v2956 = vunpack.c.l.b16 %v2715
        %v2957 = vunpack.c.h.b16 %v2715
        %v2958 = vunpack.c.l.b16 %v2716
        %v2959 = vunpack.c.h.b16 %v2716
        %v2960 = vunpack.c.l.b16 %v2717
        %v2961 = vunpack.c.h.b16 %v2717
        %v2962 = vunpack.c.l.b16 %v2718
        %v2963 = vunpack.c.h.b16 %v2718
        %v2964 = vunpack.c.l.b16 %v2719
        %v2965 = vunpack.c.h.b16 %v2719
        %v2966 = vunpack.c.l.b16 %v2720
        %v2967 = vunpack.c.h.b16 %v2720
        %v2968 = vunpack.c.l.b16 %v2721
        %v2969 = vunpack.c.h.b16 %v2721
        %v2970 = vunpack.c.l.b16 %v2722
        %v2971 = vunpack.c.h.b16 %v2722
        %v2972 = vunpack.c.l.b16 %v2723
        %v2973 = vunpack.c.h.b16 %v2723
        %v2974 = vunpack.c.l.b16 %v2724
        %v2975 = vunpack.c.h.b16 %v2724
        %v2976 = vunpack.c.l.b16 %v2725
        %v2977 = vunpack.c.h.b16 %v2725
        %v2978 = vunpack.c.l.b16 %v2726
        %v2979 = vunpack.c.h.b16 %v2726
        %v2980 = vunpack.c.l.b16 %v2727
        %v2981 = vunpack.c.h.b16 %v2727
        %v2982 = vunpack.c.l.b16 %v2728
        %v2983 = vunpack.c.h.b16 %v2728
        %v2984 = vunpack.c.l.b16 %v2729
        %v2985 = vunpack.c.h.b16 %v2729
        %v2986 = vunpack.c.l.b16 %v2730
        %v2987 = vunpack.c.h.b16 %v2730
        %v2988 = vunpack.c.l.b16 %v2731
        %v2989 = vunpack.c.h.b16 %v2731
        %v2990 = vunpack.c.l.b16 %v2732
        %v2991 = vunpack.c.h.b16 %v2732
        %v2992 = vunpack.c.l.b16 %v2733
        %v2993 = vunpack.c.h.b16 %v2733
        %v2994 = vunpack.c.l.b16 %v2734
        %v2995 = vunpack.c.h.b16 %v2734
        %v2996 = vunpack.c.l.b16 %v2735
        %v2997 = vunpack.c.h.b16 %v2735
        %v2998 = vunpack.c.l.b16 %v2736
        %v2999 = vunpack.c.h.b16 %v2736
        %v3000 = vunpack.c.l.b16 %v2737
        %v3001 = vunpack.c.h.b16 %v2737
        %v3002 = vunpack.c.l.b16 %v2738
        %v3003 = vunpack.c.h.b16 %v2738
        %v3004 = vunpack.c.l.b16 %v2739
        %v3005 = vunpack.c.h.b16 %v2739
        %v3006 = vunpack.c.l.b16 %v2740
        %v3007 = vunpack.c.h.b16 %v2740
        %v3008 = vunpack.c.l.b16 %v2741
        %v3009 = vunpack.c.h.b16 %v2741
        %v3010 = vunpack.c.l.b16 %v2742
        %v3011 = vunpack.c.h.b16 %v2742
        %v3012 = vunpack.c.l.b16 %v2743
        %v3013 = vunpack.c.h.b16 %v2743
        %v3014 = vunpack.c.l.b16 %v2744
        %v3015 = vunpack.c.h.b16 %v2744
        %v3016 = vunpack.c.l.b16 %v2745
        %v3017 = vunpack.c.h.b16 %v2745
        %v3018 = vunpack.c.l.b16 %v2746
        %v3019 = vunpack.c.h.b16 %v2746
        %v3020 = vunpack.c.l.b16 %v2747
        %v3021 = vunpack.c.h.b16 %v2747
        %v3022 = vunpack.c.l.b16 %v2748
        %v3023 = vunpack.c.h.b16 %v2748
        %v3024 = vunpack.c.l.b16 %v2749
        %v3025 = vunpack.c.h.b16 %v2749
        %v3026 = vunpack.c.l.b16 %v2750
        %v3027 = vunpack.c.h.b16 %v2750
        %v3028 = vunpack.c.l.b16 %v2751
        %v3029 = vunpack.c.h.b16 %v2751
        %v3030 = vunpack.c.l.b16 %v2752
        %v3031 = vunpack.c.h.b16 %v2752
        %v3032 = vunpack.c.l.b16 %v2753
        %v3033 = vunpack.c.h.b16 %v2753
        %v3034 = vunpack.c.l.b16 %v2754
        %v3035 = vunpack.c.h.b16 %v2754
        %v3036 = vunpack.c.l.b16 %v2755
        %v3037 = vunpack.c.h.b16 %v2755
        %v3038 = vunpack.c.l.b16 %v2756
        %v3039 = vunpack.c.h.b16 %v2756
        %v3040 = vunpack.c.l.b16 %v2757
        %v3041 = vunpack.c.h.b16 %v2757
        %v3042 = vunpack.c.l.b16 %v2758
        %v3043 = vunpack.c.h.b16 %v2758
        %v3044 = vunpack.c.l.b16 %v2759
        %v3045 = vunpack.c.h.b16 %v2759
        %v3046 = vunpack.c.l.b16 %v2760
        %v3047 = vunpack.c.h.b16 %v2760
        %v3048 = vunpack.c.l.b16 %v2761
        %v3049 = vunpack.c.h.b16 %v2761
        %v3050 = vunpack.c.l.b16 %v2762
        %v3051 = vunpack.c.h.b16 %v2762
        %v3052 = vunpack.c.l.b16 %v2763
        %v3053 = vunpack.c.h.b16 %v2763
        %v3054 = vunpack.c.l.b16 %v2764
        %v3055 = vunpack.c.h.b16 %v2764
        %v3056 = vunpack.c.l.b16 %v2765
        %v3057 = vunpack.c.h.b16 %v2765
        %v3058 = vunpack.c.l.b16 %v2766
        %v3059 = vunpack.c.h.b16 %v2766
        %v3060 = vunpack.c.l.b16 %v2767
        %v3061 = vunpack.c.h.b16 %v2767
        %v3062 = vunpack.c.l.b16 %v2768
        %v3063 = vunpack.c.h.b16 %v2768
        %v3064 = vunpack.c.l.b16 %v2769
        %v3065 = vunpack.c.h.b16 %v2769
        %v3066 = vunpack.c.l.b16 %v2770
        %v3067 = vunpack.c.h.b16 %v2770
        %v3068 = vunpack.c.l.b16 %v2771
        %v3069 = vunpack.c.h.b16 %v2771
        %v3070 = vunpack.c.l.b16 %v2772
        %v3071 = vunpack.c.h.b16 %v2772
        %v3072 = vunpack.c.l.b16 %v2773
        %v3073 = vunpack.c.h.b16 %v2773
        %v3074 = vunpack.c.l.b16 %v2774
        %v3075 = vunpack.c.h.b16 %v2774
        %v3076 = vunpack.c.l.b16 %v2775
        %v3077 = vunpack.c.h.b16 %v2775
        %v3078 = vunpack.c.l.b16 %v2776
        %v3079 = vunpack.c.h.b16 %v2776
        %v3080 = vunpack.c.l.b16 %v2777
        %v3081 = vunpack.c.h.b16 %v2777
        %v3082 = vunpack.c.l.b16 %v2778
        %v3083 = vunpack.c.h.b16 %v2778
        %v3084 = vunpack.c.l.b16 %v2779
        %v3085 = vunpack.c.h.b16 %v2779
        %v3086 = vunpack.c.l.b16 %v2780
        %v3087 = vunpack.c.h.b16 %v2780
        %v3088 = vunpack.c.l.b16 %v2781
        %v3089 = vunpack.c.h.b16 %v2781
        %v3090 = vunpack.c.l.b16 %v2782
        %v3091 = vunpack.c.h.b16 %v2782
        %v3092 = vunpack.c.l.b16 %v2783
        %v3093 = vunpack.c.h.b16 %v2783
        %v3094 = vunpack.c.l.b16 %v2784
        %v3095 = vunpack.c.h.b16 %v2784
        %v3096 = vunpack.c.l.b16 %v2785
        %v3097 = vunpack.c.h.b16 %v2785
        %v3098 = vunpack.c.l.b16 %v2786
        %v3099 = vunpack.c.h.b16 %v2786
        %v3100 = vunpack.c.l.b16 %v2787
        %v3101 = vunpack.c.h.b16 %v2787
        %v3102 = vunpack.c.l.b16 %v2788
        %v3103 = vunpack.c.h.b16 %v2788
        %v3104 = vunpack.c.l.b16 %v2789
        %v3105 = vunpack.c.h.b16 %v2789
        %v3106 = vunpack.c.l.b16 %v2790
        %v3107 = vunpack.c.h.b16 %v2790
        %v3108 = vunpack.c.l.b16 %v2791
        %v3109 = vunpack.c.h.b16 %v2791
        %v3110 = vunpack.c.l.b16 %v2792
        %v3111 = vunpack.c.h.b16 %v2792
        %v3112 = vunpack.c.l.b16 %v2793
        %v3113 = vunpack.c.h.b16 %v2793
        %v3114 = vpack.c.b16 %v2928, %v2922
        %v3115 = vpack.c.b16 %v2929, %v2923
        %v3116 = vpack.c.b16 %v2930, %v2924
        %v3117 = vpack.c.b16 %v2931, %v2925
        %v3118 = vpack.c.b16 %v2932, %v2926
        %v3119 = vpack.c.b16 %v2933, %v2927
        %v3120 = vpack.c.b16 %v2940, %v2934
        %v3121 = vpack.c.b16 %v2941, %v2935
        %v3122 = vpack.c.b16 %v2942, %v2936
        %v3123 = vpack.c.b16 %v2943, %v2937
        %v3124 = vpack.c.b16 %v2944, %v2938
        %v3125 = vpack.c.b16 %v2945, %v2939
        %v3126 = vpack.c.b16 %v2952, %v2946
        %v3127 = vpack.c.b16 %v2953, %v2947
        %v3128 = vpack.c.b16 %v2954, %v2948
        %v3129 = vpack.c.b16 %v2955, %v2949
        %v3130 = vpack.c.b16 %v2956, %v2950
        %v3131 = vpack.c.b16 %v2957, %v2951
        %v3132 = vpack.c.b16 %v2964, %v2958
        %v3133 = vpack.c.b16 %v2965, %v2959
        %v3134 = vpack.c.b16 %v2966, %v2960
        %v3135 = vpack.c.b16 %v2967, %v2961
        %v3136 = vpack.c.b16 %v2968, %v2962
        %v3137 = vpack.c.b16 %v2969, %v2963
        %v3138 = vpack.c.b16 %v2976, %v2970
        %v3139 = vpack.c.b16 %v2977, %v2971
        %v3140 = vpack.c.b16 %v2978, %v2972
        %v3141 = vpack.c.b16 %v2979, %v2973
        %v3142 = vpack.c.b16 %v2980, %v2974
        %v3143 = vpack.c.b16 %v2981, %v2975
        %v3144 = vpack.c.b16 %v2988, %v2982
        %v3145 = vpack.c.b16 %v2989, %v2983
        %v3146 = vpack.c.b16 %v2990, %v2984
        %v3147 = vpack.c.b16 %v2991, %v2985
        %v3148 = vpack.c.b16 %v2992, %v2986
        %v3149 = vpack.c.b16 %v2993, %v2987
        %v3150 = vpack.c.b16 %v3000, %v2994
        %v3151 = vpack.c.b16 %v3001, %v2995
        %v3152 = vpack.c.b16 %v3002, %v2996
        %v3153 = vpack.c.b16 %v3003, %v2997
        %v3154 = vpack.c.b16 %v3004, %v2998
        %v3155 = vpack.c.b16 %v3005, %v2999
        %v3156 = vpack.c.b16 %v3012, %v3006
        %v3157 = vpack.c.b16 %v3013, %v3007
        %v3158 = vpack.c.b16 %v3014, %v3008
        %v3159 = vpack.c.b16 %v3015, %v3009
        %v3160 = vpack.c.b16 %v3016, %v3010
        %v3161 = vpack.c.b16 %v3017, %v3011
        %v3162 = vpack.c.b16 %v3024, %v3018
        %v3163 = vpack.c.b16 %v3025, %v3019
        %v3164 = vpack.c.b16 %v3026, %v3020
        %v3165 = vpack.c.b16 %v3027, %v3021
        %v3166 = vpack.c.b16 %v3028, %v3022
        %v3167 = vpack.c.b16 %v3029, %v3023
        %v3168 = vpack.c.b16 %v3036, %v3030
        %v3169 = vpack.c.b16 %v3037, %v3031
        %v3170 = vpack.c.b16 %v3038, %v3032
        %v3171 = vpack.c.b16 %v3039, %v3033
        %v3172 = vpack.c.b16 %v3040, %v3034
        %v3173 = vpack.c.b16 %v3041, %v3035
        %v3174 = vpack.c.b16 %v3048, %v3042
        %v3175 = vpack.c.b16 %v3049, %v3043
        %v3176 = vpack.c.b16 %v3050, %v3044
        %v3177 = vpack.c.b16 %v3051, %v3045
        %v3178 = vpack.c.b16 %v3052, %v3046
        %v3179 = vpack.c.b16 %v3053, %v3047
        %v3180 = vpack.c.b16 %v3060, %v3054
        %v3181 = vpack.c.b16 %v3061, %v3055
        %v3182 = vpack.c.b16 %v3062, %v3056
        %v3183 = vpack.c.b16 %v3063, %v3057
        %v3184 = vpack.c.b16 %v3064, %v3058
        %v3185 = vpack.c.b16 %v3065, %v3059
        %v3186 = vpack.c.b16 %v3072, %v3066
        %v3187 = vpack.c.b16 %v3073, %v3067
        %v3188 = vpack.c.b16 %v3074, %v3068
        %v3189 = vpack.c.b16 %v3075, %v3069
        %v3190 = vpack.c.b16 %v3076, %v3070
        %v3191 = vpack.c.b16 %v3077, %v3071
        %v3192 = vpack.c.b16 %v3084, %v3078
        %v3193 = vpack.c.b16 %v3085, %v3079
        %v3194 = vpack.c.b16 %v3086, %v3080
        %v3195 = vpack.c.b16 %v3087, %v3081
        %v3196 = vpack.c.b16 %v3088, %v3082
        %v3197 = vpack.c.b16 %v3089, %v3083
        %v3198 = vpack.c.b16 %v3096, %v3090
        %v3199 = vpack.c.b16 %v3097, %v3091
        %v3200 = vpack.c.b16 %v3098, %v3092
        %v3201 = vpack.c.b16 %v3099, %v3093
        %v3202 = vpack.c.b16 %v3100, %v3094
        %v3203 = vpack.c.b16 %v3101, %v3095
        %v3204 = vpack.c.b16 %v3108, %v3102
        %v3205 = vpack.c.b16 %v3109, %v3103
        %v3206 = vpack.c.b16 %v3110, %v3104
        %v3207 = vpack.c.b16 %v3111, %v3105
        %v3208 = vpack.c.b16 %v3112, %v3106
        %v3209 = vpack.c.b16 %v3113, %v3107
        %3306 = vmatprep.subr.bf16.mxu0 %v3115
        %3307 = vmatpush1.bf16.msra.mxu0 %v3114
        %3308 = vmatprep.subr.bf16.mxu0 %v3121
        %3309 = vmatpush1.bf16.msra.mxu0 %v3120
        %3310 = vmatprep.subr.bf16.mxu0 %v3127
        %3311 = vmatpush1.bf16.msra.mxu0 %v3126
        %3312 = vmatprep.subr.bf16.mxu0 %v3133
        %3313 = vmatpush1.bf16.msra.mxu0 %v3132
        %3314 = vmatprep.subr.bf16.mxu0 %v3139
        %3315 = vmatpush1.bf16.msra.mxu0 %v3138
        %3316 = vmatprep.subr.bf16.mxu0 %v3145
        %3317 = vmatpush1.bf16.msra.mxu0 %v3144
        %3318 = vmatprep.subr.bf16.mxu0 %v3151
        %3319 = vmatpush1.bf16.msra.mxu0 %v3150
        %3320 = vmatprep.subr.bf16.mxu0 %v3157
        %3321 = vmatpush1.bf16.msra.mxu0 %v3156
        %3322 = vmatprep.subr.bf16.mxu0 %v3163
        %3323 = vmatpush1.bf16.msra.mxu0 %v3162
        %3324 = vmatprep.subr.bf16.mxu0 %v3169
        %3325 = vmatpush1.bf16.msra.mxu0 %v3168
        %3326 = vmatprep.subr.bf16.mxu0 %v3175
        %3327 = vmatpush1.bf16.msra.mxu0 %v3174
        %3328 = vmatprep.subr.bf16.mxu0 %v3181
        %3329 = vmatpush1.bf16.msra.mxu0 %v3180
        %3330 = vmatprep.subr.bf16.mxu0 %v3187
        %3331 = vmatpush1.bf16.msra.mxu0 %v3186
        %3332 = vmatprep.subr.bf16.mxu0 %v3193
        %3333 = vmatpush1.bf16.msra.mxu0 %v3192
        %3334 = vmatprep.subr.bf16.mxu0 %v3199
        %3335 = vmatpush1.bf16.msra.mxu0 %v3198
        %3336 = vmatprep.subr.bf16.mxu0 %v3205
        %3337 = vmatpush1.bf16.msra.mxu0 %v3204
        %3338 = vmatprep.mubr.bf16.mxu0 %v2697
        %3339 = vmatmul.mubr.bf16.gmra.mrb[0].mxu0 %v2696
        %v3340 = vpop.f32.mrb[0].mxu0
        %v3341 = vadd.f32 %v2799, %v3340
        %v3342 = vpop.f32.mrb[0].mxu0
        %v3343 = vadd.f32 %v2803, %v3342
        %v3344 = vpop.f32.mrb[0].mxu0
        %v3345 = vadd.f32 %v2799, %v3344
        %v3346 = vpop.f32.mrb[0].mxu0
        %v3347 = vadd.f32 %v2803, %v3346
        %3348 = vdwg.mxu0
        %3349 = vmatprep.subr.bf16.mxu0 %v3117
        %3350 = vmatpush1.bf16.msra.mxu0 %v3116
        %3351 = vmatprep.subr.bf16.mxu0 %v3123
        %3352 = vmatpush1.bf16.msra.mxu0 %v3122
        %3353 = vmatprep.subr.bf16.mxu0 %v3129
        %3354 = vmatpush1.bf16.msra.mxu0 %v3128
        %3355 = vmatprep.subr.bf16.mxu0 %v3135
        %3356 = vmatpush1.bf16.msra.mxu0 %v3134
        %3357 = vmatprep.subr.bf16.mxu0 %v3141
        %3358 = vmatpush1.bf16.msra.mxu0 %v3140
        %3359 = vmatprep.subr.bf16.mxu0 %v3147
        %3360 = vmatpush1.bf16.msra.mxu0 %v3146
        %3361 = vmatprep.subr.bf16.mxu0 %v3153
        %3362 = vmatpush1.bf16.msra.mxu0 %v3152
        %3363 = vmatprep.subr.bf16.mxu0 %v3159
        %3364 = vmatpush1.bf16.msra.mxu0 %v3158
        %3365 = vmatprep.subr.bf16.mxu0 %v3165
        %3366 = vmatpush1.bf16.msra.mxu0 %v3164
        %3367 = vmatprep.subr.bf16.mxu0 %v3171
        %3368 = vmatpush1.bf16.msra.mxu0 %v3170
        %3369 = vmatprep.subr.bf16.mxu0 %v3177
        %3370 = vmatpush1.bf16.msra.mxu0 %v3176
        %3371 = vmatprep.subr.bf16.mxu0 %v3183
        %3372 = vmatpush1.bf16.msra.mxu0 %v3182
        %3373 = vmatprep.subr.bf16.mxu0 %v3189
        %3374 = vmatpush1.bf16.msra.mxu0 %v3188
        %3375 = vmatprep.subr.bf16.mxu0 %v3195
        %3376 = vmatpush1.bf16.msra.mxu0 %v3194
        %3377 = vmatprep.subr.bf16.mxu0 %v3201
        %3378 = vmatpush1.bf16.msra.mxu0 %v3200
        %3379 = vmatprep.subr.bf16.mxu0 %v3207
        %3380 = vmatpush1.bf16.msra.mxu0 %v3206
        %3381 = vmatprep.mubr.bf16.mxu0 %v2697
        %3382 = vmatmul.mubr.bf16.gmra.mrb[0].mxu0 %v2696
        %v3383 = vpop.f32.mrb[0].mxu0
        %v3384 = vadd.f32 %v2807, %v3383
        %v3385 = vpop.f32.mrb[0].mxu0
        %v3386 = vadd.f32 %v2811, %v3385
        %v3387 = vpop.f32.mrb[0].mxu0
        %v3388 = vadd.f32 %v2807, %v3387
        %v3389 = vpop.f32.mrb[0].mxu0
        %v3390 = vadd.f32 %v2811, %v3389
        %3391 = vdwg.mxu0
        %3392 = vmatprep.subr.bf16.mxu0 %v3119
        %3393 = vmatpush1.bf16.msra.mxu0 %v3118
        %3394 = vmatprep.subr.bf16.mxu0 %v3125
        %3395 = vmatpush1.bf16.msra.mxu0 %v3124
        %3396 = vmatprep.subr.bf16.mxu0 %v3131
        %3397 = vmatpush1.bf16.msra.mxu0 %v3130
        %3398 = vmatprep.subr.bf16.mxu0 %v3137
        %3399 = vmatpush1.bf16.msra.mxu0 %v3136
        %3400 = vmatprep.subr.bf16.mxu0 %v3143
        %3401 = vmatpush1.bf16.msra.mxu0 %v3142
        %3402 = vmatprep.subr.bf16.mxu0 %v3149
        %3403 = vmatpush1.bf16.msra.mxu0 %v3148
        %3404 = vmatprep.subr.bf16.mxu0 %v3155
        %3405 = vmatpush1.bf16.msra.mxu0 %v3154
        %3406 = vmatprep.subr.bf16.mxu0 %v3161
        %3407 = vmatpush1.bf16.msra.mxu0 %v3160
        %3408 = vmatprep.subr.bf16.mxu0 %v3167
        %3409 = vmatpush1.bf16.msra.mxu0 %v3166
        %3410 = vmatprep.subr.bf16.mxu0 %v3173
        %3411 = vmatpush1.bf16.msra.mxu0 %v3172
        %3412 = vmatprep.subr.bf16.mxu0 %v3179
        %3413 = vmatpush1.bf16.msra.mxu0 %v3178
        %3414 = vmatprep.subr.bf16.mxu0 %v3185
        %3415 = vmatpush1.bf16.msra.mxu0 %v3184
        %3416 = vmatprep.subr.bf16.mxu0 %v3191
        %3417 = vmatpush1.bf16.msra.mxu0 %v3190
        %3418 = vmatprep.subr.bf16.mxu0 %v3197
        %3419 = vmatpush1.bf16.msra.mxu0 %v3196
        %3420 = vmatprep.subr.bf16.mxu0 %v3203
        %3421 = vmatpush1.bf16.msra.mxu0 %v3202
        %3422 = vmatprep.subr.bf16.mxu0 %v3209
        %3423 = vmatpush1.bf16.msra.mxu0 %v3208
        %3424 = vmatprep.mubr.bf16.mxu0 %v2697
        %3425 = vmatmul.mubr.bf16.gmra.mrb[0].mxu0 %v2696
        %v3426 = vpop.f32.mrb[0].mxu0
        %v3427 = vadd.f32 %v2815, %v3426
        %v3428 = vpop.f32.mrb[0].mxu0
        %v3429 = vadd.f32 %v2819, %v3428
        %v3430 = vpop.f32.mrb[0].mxu0
        %v3431 = vadd.f32 %v2815, %v3430
        %v3432 = vpop.f32.mrb[0].mxu0
        %v3433 = vadd.f32 %v2819, %v3432
        %3434 = vdwg.mxu0
        %v3435 = vtanh.pop %v3341
        %v3436 = vtanh.pop %v3343
        %v3437 = vtanh.pop %v3384
        %v3438 = vtanh.pop %v3386
        %v3439 = vtanh.pop %v3427
        %v3440 = vtanh.pop %v3429
        %v3441 = vtanh.pop %v3345
        %v3442 = vtanh.pop %v3347
        %v3443 = vtanh.pop %v3388
        %v3444 = vtanh.pop %v3390
        %v3445 = vtanh.pop %v3431
        %v3446 = vtanh.pop %v3433
        %v3447 = vpack.c.bf16 %v3435, %v3435
        %v3448 = vpack.c.bf16 %v3436, %v3436
        %v3449 = vpack.c.bf16 %v3437, %v3437
        %v3450 = vpack.c.bf16 %v3438, %v3438
        %v3451 = vpack.c.bf16 %v3439, %v3439
        %v3452 = vpack.c.bf16 %v3440, %v3440
        %v3453 = vpack.c.bf16 %v3441, %v3441
        %v3454 = vpack.c.bf16 %v3442, %v3442
        %v3455 = vpack.c.bf16 %v3443, %v3443
        %v3456 = vpack.c.bf16 %v3444, %v3444
        %v3457 = vpack.c.bf16 %v3445, %v3445
        %v3458 = vpack.c.bf16 %v3446, %v3446
        %v3459 = vld [vmem:[#allocation13] sm:$0xff]
        %v3460 = vld [vmem:[#allocation13 + $0x8] sm:$0xff]
        %v3461 = vld [vmem:[#allocation13 + $0x10] sm:$0xff]
        %v3462 = vld [vmem:[#allocation13 + $0x18] sm:$0xff]
        %v3463 = vld [vmem:[#allocation13 + $0x20] sm:$0xff]
        %v3464 = vld [vmem:[#allocation13 + $0x28] sm:$0xff]
        %v3465 = vld [vmem:[#allocation13 + $0x30] sm:$0xff]
        %v3466 = vld [vmem:[#allocation13 + $0x38] sm:$0xff]
        %v3467 = vld [vmem:[#allocation13 + $0x40] sm:$0xff]
        %v3468 = vld [vmem:[#allocation13 + $0x48] sm:$0xff]
        %v3469 = vld [vmem:[#allocation13 + $0x50] sm:$0xff]
        %v3470 = vld [vmem:[#allocation13 + $0x58] sm:$0xff]
        %v3471 = vld [vmem:[#allocation13 + $0x60] sm:$0xff]
        %v3472 = vld [vmem:[#allocation13 + $0x68] sm:$0xff]
        %v3473 = vld [vmem:[#allocation13 + $0x70] sm:$0xff]
        %v3474 = vld [vmem:[#allocation13 + $0x78] sm:$0xff]
        %v3475 = vld [vmem:[#allocation13 + $0x80] sm:$0xff]
        %v3476 = vld [vmem:[#allocation13 + $0x88] sm:$0xff]
        %v3477 = vld [vmem:[#allocation13 + $0x90] sm:$0xff]
        %v3478 = vld [vmem:[#allocation13 + $0x98] sm:$0xff]
        %v3479 = vld [vmem:[#allocation13 + $0xa0] sm:$0xff]
        %v3480 = vld [vmem:[#allocation13 + $0xa8] sm:$0xff]
        %v3481 = vld [vmem:[#allocation13 + $0xb0] sm:$0xff]
        %v3482 = vld [vmem:[#allocation13 + $0xb8] sm:$0xff]
        %v3483 = vld [vmem:[#allocation13 + $0xc0] sm:$0xff]
        %v3484 = vld [vmem:[#allocation13 + $0xc8] sm:$0xff]
        %v3485 = vld [vmem:[#allocation13 + $0xd0] sm:$0xff]
        %v3486 = vld [vmem:[#allocation13 + $0xd8] sm:$0xff]
        %v3487 = vld [vmem:[#allocation13 + $0xe0] sm:$0xff]
        %v3488 = vld [vmem:[#allocation13 + $0xe8] sm:$0xff]
        %v3489 = vld [vmem:[#allocation13 + $0xf0] sm:$0xff]
        %v3490 = vld [vmem:[#allocation13 + $0xf8] sm:$0xff]
        %v3491 = vld [vmem:[#allocation13 + $0x100] sm:$0xff]
        %v3492 = vld [vmem:[#allocation13 + $0x108] sm:$0xff]
        %v3493 = vld [vmem:[#allocation13 + $0x110] sm:$0xff]
        %v3494 = vld [vmem:[#allocation13 + $0x118] sm:$0xff]
        %v3495 = vld [vmem:[#allocation13 + $0x120] sm:$0xff]
        %v3496 = vld [vmem:[#allocation13 + $0x128] sm:$0xff]
        %v3497 = vld [vmem:[#allocation13 + $0x130] sm:$0xff]
        %v3498 = vld [vmem:[#allocation13 + $0x138] sm:$0xff]
        %v3499 = vld [vmem:[#allocation13 + $0x140] sm:$0xff]
        %v3500 = vld [vmem:[#allocation13 + $0x148] sm:$0xff]
        %v3501 = vld [vmem:[#allocation13 + $0x150] sm:$0xff]
        %v3502 = vld [vmem:[#allocation13 + $0x158] sm:$0xff]
        %v3503 = vld [vmem:[#allocation13 + $0x160] sm:$0xff]
        %v3504 = vld [vmem:[#allocation13 + $0x168] sm:$0xff]
        %v3505 = vld [vmem:[#allocation13 + $0x170] sm:$0xff]
        %v3506 = vld [vmem:[#allocation13 + $0x178] sm:$0xff]
        %v3507 = vld [vmem:[#allocation13 + $0x180] sm:$0xff]
        %v3508 = vld [vmem:[#allocation13 + $0x188] sm:$0xff]
        %v3509 = vld [vmem:[#allocation13 + $0x190] sm:$0xff]
        %v3510 = vld [vmem:[#allocation13 + $0x198] sm:$0xff]
        %v3511 = vld [vmem:[#allocation13 + $0x1a0] sm:$0xff]
        %v3512 = vld [vmem:[#allocation13 + $0x1a8] sm:$0xff]
        %v3513 = vld [vmem:[#allocation13 + $0x1b0] sm:$0xff]
        %v3514 = vld [vmem:[#allocation13 + $0x1b8] sm:$0xff]
        %v3515 = vld [vmem:[#allocation13 + $0x1c0] sm:$0xff]
        %v3516 = vld [vmem:[#allocation13 + $0x1c8] sm:$0xff]
        %v3517 = vld [vmem:[#allocation13 + $0x1d0] sm:$0xff]
        %v3518 = vld [vmem:[#allocation13 + $0x1d8] sm:$0xff]
        %v3519 = vld [vmem:[#allocation13 + $0x1e0] sm:$0xff]
        %v3520 = vld [vmem:[#allocation13 + $0x1e8] sm:$0xff]
        %v3521 = vld [vmem:[#allocation13 + $0x1f0] sm:$0xff]
        %v3522 = vld [vmem:[#allocation13 + $0x1f8] sm:$0xff]
        %v3523 = vld [vmem:[#allocation13 + $0x200] sm:$0xff]
        %v3524 = vld [vmem:[#allocation13 + $0x208] sm:$0xff]
        %v3525 = vld [vmem:[#allocation13 + $0x210] sm:$0xff]
        %v3526 = vld [vmem:[#allocation13 + $0x218] sm:$0xff]
        %v3527 = vld [vmem:[#allocation13 + $0x220] sm:$0xff]
        %v3528 = vld [vmem:[#allocation13 + $0x228] sm:$0xff]
        %v3529 = vld [vmem:[#allocation13 + $0x230] sm:$0xff]
        %v3530 = vld [vmem:[#allocation13 + $0x238] sm:$0xff]
        %v3531 = vld [vmem:[#allocation13 + $0x240] sm:$0xff]
        %v3532 = vld [vmem:[#allocation13 + $0x248] sm:$0xff]
        %v3533 = vld [vmem:[#allocation13 + $0x250] sm:$0xff]
        %v3534 = vld [vmem:[#allocation13 + $0x258] sm:$0xff]
        %v3535 = vld [vmem:[#allocation13 + $0x260] sm:$0xff]
        %v3536 = vld [vmem:[#allocation13 + $0x268] sm:$0xff]
        %v3537 = vld [vmem:[#allocation13 + $0x270] sm:$0xff]
        %v3538 = vld [vmem:[#allocation13 + $0x278] sm:$0xff]
        %v3539 = vld [vmem:[#allocation13 + $0x280] sm:$0xff]
        %v3540 = vld [vmem:[#allocation13 + $0x288] sm:$0xff]
        %v3541 = vld [vmem:[#allocation13 + $0x290] sm:$0xff]
        %v3542 = vld [vmem:[#allocation13 + $0x298] sm:$0xff]
        %v3543 = vld [vmem:[#allocation13 + $0x2a0] sm:$0xff]
        %v3544 = vld [vmem:[#allocation13 + $0x2a8] sm:$0xff]
        %v3545 = vld [vmem:[#allocation13 + $0x2b0] sm:$0xff]
        %v3546 = vld [vmem:[#allocation13 + $0x2b8] sm:$0xff]
        %v3547 = vld [vmem:[#allocation13 + $0x2c0] sm:$0xff]
        %v3548 = vld [vmem:[#allocation13 + $0x2c8] sm:$0xff]
        %v3549 = vld [vmem:[#allocation13 + $0x2d0] sm:$0xff]
        %v3550 = vld [vmem:[#allocation13 + $0x2d8] sm:$0xff]
        %v3551 = vld [vmem:[#allocation13 + $0x2e0] sm:$0xff]
        %v3552 = vld [vmem:[#allocation13 + $0x2e8] sm:$0xff]
        %v3553 = vld [vmem:[#allocation13 + $0x2f0] sm:$0xff]
        %v3554 = vld [vmem:[#allocation13 + $0x2f8] sm:$0xff]
        %v3555 = vld [vmem:[#allocation15] sm:$0xff]
        %v3556 = vld [vmem:[#allocation15 + $0x8] sm:$0xff]
        %v3557 = vld [vmem:[#allocation15 + $0x10] sm:$0xff]
        %v3558 = vld [vmem:[#allocation15 + $0x18] sm:$0xff]
        %v3559 = vld [vmem:[#allocation15 + $0x20] sm:$0xff]
        %v3560 = vld [vmem:[#allocation15 + $0x28] sm:$0xff]
        %v3561 = vld [vmem:[#allocation15 + $0x30] sm:$0xff]
        %v3562 = vld [vmem:[#allocation15 + $0x38] sm:$0xff]
        %v3563 = vld [vmem:[#allocation15 + $0x40] sm:$0xff]
        %v3564 = vld [vmem:[#allocation15 + $0x48] sm:$0xff]
        %v3565 = vld [vmem:[#allocation15 + $0x50] sm:$0xff]
        %v3566 = vld [vmem:[#allocation15 + $0x58] sm:$0xff]
        %v3567 = vld [vmem:[#allocation15 + $0x60] sm:$0xff]
        %v3568 = vld [vmem:[#allocation15 + $0x68] sm:$0xff]
        %v3569 = vld [vmem:[#allocation15 + $0x70] sm:$0xff]
        %v3570 = vld [vmem:[#allocation15 + $0x78] sm:$0xff]
        %v3571 = vld [vmem:[#allocation15 + $0x80] sm:$0xff]
        %v3572 = vld [vmem:[#allocation15 + $0x88] sm:$0xff]
        %v3573 = vld [vmem:[#allocation15 + $0x90] sm:$0xff]
        %v3574 = vld [vmem:[#allocation15 + $0x98] sm:$0xff]
        %v3575 = vld [vmem:[#allocation15 + $0xa0] sm:$0xff]
        %v3576 = vld [vmem:[#allocation15 + $0xa8] sm:$0xff]
        %v3577 = vld [vmem:[#allocation15 + $0xb0] sm:$0xff]
        %v3578 = vld [vmem:[#allocation15 + $0xb8] sm:$0xff]
        %v3579 = vld [vmem:[#allocation15 + $0xc0] sm:$0xff]
        %v3580 = vld [vmem:[#allocation15 + $0xc8] sm:$0xff]
        %v3581 = vld [vmem:[#allocation15 + $0xd0] sm:$0xff]
        %v3582 = vld [vmem:[#allocation15 + $0xd8] sm:$0xff]
        %v3583 = vld [vmem:[#allocation15 + $0xe0] sm:$0xff]
        %v3584 = vld [vmem:[#allocation15 + $0xe8] sm:$0xff]
        %v3585 = vld [vmem:[#allocation15 + $0xf0] sm:$0xff]
        %v3586 = vld [vmem:[#allocation15 + $0xf8] sm:$0xff]
        %v3587 = vld [vmem:[#allocation15 + $0x100] sm:$0xff]
        %v3588 = vld [vmem:[#allocation15 + $0x108] sm:$0xff]
        %v3589 = vld [vmem:[#allocation15 + $0x110] sm:$0xff]
        %v3590 = vld [vmem:[#allocation15 + $0x118] sm:$0xff]
        %v3591 = vld [vmem:[#allocation15 + $0x120] sm:$0xff]
        %v3592 = vld [vmem:[#allocation15 + $0x128] sm:$0xff]
        %v3593 = vld [vmem:[#allocation15 + $0x130] sm:$0xff]
        %v3594 = vld [vmem:[#allocation15 + $0x138] sm:$0xff]
        %v3595 = vld [vmem:[#allocation15 + $0x140] sm:$0xff]
        %v3596 = vld [vmem:[#allocation15 + $0x148] sm:$0xff]
        %v3597 = vld [vmem:[#allocation15 + $0x150] sm:$0xff]
        %v3598 = vld [vmem:[#allocation15 + $0x158] sm:$0xff]
        %v3599 = vld [vmem:[#allocation15 + $0x160] sm:$0xff]
        %v3600 = vld [vmem:[#allocation15 + $0x168] sm:$0xff]
        %v3601 = vld [vmem:[#allocation15 + $0x170] sm:$0xff]
        %v3602 = vld [vmem:[#allocation15 + $0x178] sm:$0xff]
        %v3603 = vld [vmem:[#allocation15 + $0x180] sm:$0xff]
        %v3604 = vld [vmem:[#allocation15 + $0x188] sm:$0xff]
        %v3605 = vld [vmem:[#allocation15 + $0x190] sm:$0xff]
        %v3606 = vld [vmem:[#allocation15 + $0x198] sm:$0xff]
        %v3607 = vld [vmem:[#allocation15 + $0x1a0] sm:$0xff]
        %v3608 = vld [vmem:[#allocation15 + $0x1a8] sm:$0xff]
        %v3609 = vld [vmem:[#allocation15 + $0x1b0] sm:$0xff]
        %v3610 = vld [vmem:[#allocation15 + $0x1b8] sm:$0xff]
        %v3611 = vld [vmem:[#allocation15 + $0x1c0] sm:$0xff]
        %v3612 = vld [vmem:[#allocation15 + $0x1c8] sm:$0xff]
        %v3613 = vld [vmem:[#allocation15 + $0x1d0] sm:$0xff]
        %v3614 = vld [vmem:[#allocation15 + $0x1d8] sm:$0xff]
        %v3615 = vld [vmem:[#allocation15 + $0x1e0] sm:$0xff]
        %v3616 = vld [vmem:[#allocation15 + $0x1e8] sm:$0xff]
        %v3617 = vld [vmem:[#allocation15 + $0x1f0] sm:$0xff]
        %v3618 = vld [vmem:[#allocation15 + $0x1f8] sm:$0xff]
        %v3619 = vld [vmem:[#allocation15 + $0x200] sm:$0xff]
        %v3620 = vld [vmem:[#allocation15 + $0x208] sm:$0xff]
        %v3621 = vld [vmem:[#allocation15 + $0x210] sm:$0xff]
        %v3622 = vld [vmem:[#allocation15 + $0x218] sm:$0xff]
        %v3623 = vld [vmem:[#allocation15 + $0x220] sm:$0xff]
        %v3624 = vld [vmem:[#allocation15 + $0x228] sm:$0xff]
        %v3625 = vld [vmem:[#allocation15 + $0x230] sm:$0xff]
        %v3626 = vld [vmem:[#allocation15 + $0x238] sm:$0xff]
        %v3627 = vld [vmem:[#allocation15 + $0x240] sm:$0xff]
        %v3628 = vld [vmem:[#allocation15 + $0x248] sm:$0xff]
        %v3629 = vld [vmem:[#allocation15 + $0x250] sm:$0xff]
        %v3630 = vld [vmem:[#allocation15 + $0x258] sm:$0xff]
        %v3631 = vld [vmem:[#allocation15 + $0x260] sm:$0xff]
        %v3632 = vld [vmem:[#allocation15 + $0x268] sm:$0xff]
        %v3633 = vld [vmem:[#allocation15 + $0x270] sm:$0xff]
        %v3634 = vld [vmem:[#allocation15 + $0x278] sm:$0xff]
        %v3635 = vld [vmem:[#allocation15 + $0x280] sm:$0xff]
        %v3636 = vld [vmem:[#allocation15 + $0x288] sm:$0xff]
        %v3637 = vld [vmem:[#allocation15 + $0x290] sm:$0xff]
        %v3638 = vld [vmem:[#allocation15 + $0x298] sm:$0xff]
        %v3639 = vld [vmem:[#allocation15 + $0x2a0] sm:$0xff]
        %v3640 = vld [vmem:[#allocation15 + $0x2a8] sm:$0xff]
        %v3641 = vld [vmem:[#allocation15 + $0x2b0] sm:$0xff]
        %v3642 = vld [vmem:[#allocation15 + $0x2b8] sm:$0xff]
        %v3643 = vld [vmem:[#allocation15 + $0x2c0] sm:$0xff]
        %v3644 = vld [vmem:[#allocation15 + $0x2c8] sm:$0xff]
        %v3645 = vld [vmem:[#allocation15 + $0x2d0] sm:$0xff]
        %v3646 = vld [vmem:[#allocation15 + $0x2d8] sm:$0xff]
        %v3647 = vld [vmem:[#allocation15 + $0x2e0] sm:$0xff]
        %v3648 = vld [vmem:[#allocation15 + $0x2e8] sm:$0xff]
        %v3649 = vld [vmem:[#allocation15 + $0x2f0] sm:$0xff]
        %v3650 = vld [vmem:[#allocation15 + $0x2f8] sm:$0xff]
        %v3747 = vunpack.c.l.b16 %v3555
        %v3748 = vunpack.c.h.b16 %v3555
        %v3749 = vunpack.c.l.b16 %v3556
        %v3750 = vunpack.c.h.b16 %v3556
        %v3751 = vunpack.c.l.b16 %v3557
        %v3752 = vunpack.c.h.b16 %v3557
        %v3753 = vunpack.c.l.b16 %v3558
        %v3754 = vunpack.c.h.b16 %v3558
        %v3755 = vunpack.c.l.b16 %v3559
        %v3756 = vunpack.c.h.b16 %v3559
        %v3757 = vunpack.c.l.b16 %v3560
        %v3758 = vunpack.c.h.b16 %v3560
        %v3759 = vunpack.c.l.b16 %v3561
        %v3760 = vunpack.c.h.b16 %v3561
        %v3761 = vunpack.c.l.b16 %v3562
        %v3762 = vunpack.c.h.b16 %v3562
        %v3763 = vunpack.c.l.b16 %v3563
        %v3764 = vunpack.c.h.b16 %v3563
        %v3765 = vunpack.c.l.b16 %v3564
        %v3766 = vunpack.c.h.b16 %v3564
        %v3767 = vunpack.c.l.b16 %v3565
        %v3768 = vunpack.c.h.b16 %v3565
        %v3769 = vunpack.c.l.b16 %v3566
        %v3770 = vunpack.c.h.b16 %v3566
        %v3771 = vunpack.c.l.b16 %v3567
        %v3772 = vunpack.c.h.b16 %v3567
        %v3773 = vunpack.c.l.b16 %v3568
        %v3774 = vunpack.c.h.b16 %v3568
        %v3775 = vunpack.c.l.b16 %v3569
        %v3776 = vunpack.c.h.b16 %v3569
        %v3777 = vunpack.c.l.b16 %v3570
        %v3778 = vunpack.c.h.b16 %v3570
        %v3779 = vunpack.c.l.b16 %v3571
        %v3780 = vunpack.c.h.b16 %v3571
        %v3781 = vunpack.c.l.b16 %v3572
        %v3782 = vunpack.c.h.b16 %v3572
        %v3783 = vunpack.c.l.b16 %v3573
        %v3784 = vunpack.c.h.b16 %v3573
        %v3785 = vunpack.c.l.b16 %v3574
        %v3786 = vunpack.c.h.b16 %v3574
        %v3787 = vunpack.c.l.b16 %v3575
        %v3788 = vunpack.c.h.b16 %v3575
        %v3789 = vunpack.c.l.b16 %v3576
        %v3790 = vunpack.c.h.b16 %v3576
        %v3791 = vunpack.c.l.b16 %v3577
        %v3792 = vunpack.c.h.b16 %v3577
        %v3793 = vunpack.c.l.b16 %v3578
        %v3794 = vunpack.c.h.b16 %v3578
        %v3795 = vunpack.c.l.b16 %v3579
        %v3796 = vunpack.c.h.b16 %v3579
        %v3797 = vunpack.c.l.b16 %v3580
        %v3798 = vunpack.c.h.b16 %v3580
        %v3799 = vunpack.c.l.b16 %v3581
        %v3800 = vunpack.c.h.b16 %v3581
        %v3801 = vunpack.c.l.b16 %v3582
        %v3802 = vunpack.c.h.b16 %v3582
        %v3803 = vunpack.c.l.b16 %v3583
        %v3804 = vunpack.c.h.b16 %v3583
        %v3805 = vunpack.c.l.b16 %v3584
        %v3806 = vunpack.c.h.b16 %v3584
        %v3807 = vunpack.c.l.b16 %v3585
        %v3808 = vunpack.c.h.b16 %v3585
        %v3809 = vunpack.c.l.b16 %v3586
        %v3810 = vunpack.c.h.b16 %v3586
        %v3811 = vunpack.c.l.b16 %v3587
        %v3812 = vunpack.c.h.b16 %v3587
        %v3813 = vunpack.c.l.b16 %v3588
        %v3814 = vunpack.c.h.b16 %v3588
        %v3815 = vunpack.c.l.b16 %v3589
        %v3816 = vunpack.c.h.b16 %v3589
        %v3817 = vunpack.c.l.b16 %v3590
        %v3818 = vunpack.c.h.b16 %v3590
        %v3819 = vunpack.c.l.b16 %v3591
        %v3820 = vunpack.c.h.b16 %v3591
        %v3821 = vunpack.c.l.b16 %v3592
        %v3822 = vunpack.c.h.b16 %v3592
        %v3823 = vunpack.c.l.b16 %v3593
        %v3824 = vunpack.c.h.b16 %v3593
        %v3825 = vunpack.c.l.b16 %v3594
        %v3826 = vunpack.c.h.b16 %v3594
        %v3827 = vunpack.c.l.b16 %v3595
        %v3828 = vunpack.c.h.b16 %v3595
        %v3829 = vunpack.c.l.b16 %v3596
        %v3830 = vunpack.c.h.b16 %v3596
        %v3831 = vunpack.c.l.b16 %v3597
        %v3832 = vunpack.c.h.b16 %v3597
        %v3833 = vunpack.c.l.b16 %v3598
        %v3834 = vunpack.c.h.b16 %v3598
        %v3835 = vunpack.c.l.b16 %v3599
        %v3836 = vunpack.c.h.b16 %v3599
        %v3837 = vunpack.c.l.b16 %v3600
        %v3838 = vunpack.c.h.b16 %v3600
        %v3839 = vunpack.c.l.b16 %v3601
        %v3840 = vunpack.c.h.b16 %v3601
        %v3841 = vunpack.c.l.b16 %v3602
        %v3842 = vunpack.c.h.b16 %v3602
        %v3843 = vunpack.c.l.b16 %v3603
        %v3844 = vunpack.c.h.b16 %v3603
        %v3845 = vunpack.c.l.b16 %v3604
        %v3846 = vunpack.c.h.b16 %v3604
        %v3847 = vunpack.c.l.b16 %v3605
        %v3848 = vunpack.c.h.b16 %v3605
        %v3849 = vunpack.c.l.b16 %v3606
        %v3850 = vunpack.c.h.b16 %v3606
        %v3851 = vunpack.c.l.b16 %v3607
        %v3852 = vunpack.c.h.b16 %v3607
        %v3853 = vunpack.c.l.b16 %v3608
        %v3854 = vunpack.c.h.b16 %v3608
        %v3855 = vunpack.c.l.b16 %v3609
        %v3856 = vunpack.c.h.b16 %v3609
        %v3857 = vunpack.c.l.b16 %v3610
        %v3858 = vunpack.c.h.b16 %v3610
        %v3859 = vunpack.c.l.b16 %v3611
        %v3860 = vunpack.c.h.b16 %v3611
        %v3861 = vunpack.c.l.b16 %v3612
        %v3862 = vunpack.c.h.b16 %v3612
        %v3863 = vunpack.c.l.b16 %v3613
        %v3864 = vunpack.c.h.b16 %v3613
        %v3865 = vunpack.c.l.b16 %v3614
        %v3866 = vunpack.c.h.b16 %v3614
        %v3867 = vunpack.c.l.b16 %v3615
        %v3868 = vunpack.c.h.b16 %v3615
        %v3869 = vunpack.c.l.b16 %v3616
        %v3870 = vunpack.c.h.b16 %v3616
        %v3871 = vunpack.c.l.b16 %v3617
        %v3872 = vunpack.c.h.b16 %v3617
        %v3873 = vunpack.c.l.b16 %v3618
        %v3874 = vunpack.c.h.b16 %v3618
        %v3875 = vunpack.c.l.b16 %v3619
        %v3876 = vunpack.c.h.b16 %v3619
        %v3877 = vunpack.c.l.b16 %v3620
        %v3878 = vunpack.c.h.b16 %v3620
        %v3879 = vunpack.c.l.b16 %v3621
        %v3880 = vunpack.c.h.b16 %v3621
        %v3881 = vunpack.c.l.b16 %v3622
        %v3882 = vunpack.c.h.b16 %v3622
        %v3883 = vunpack.c.l.b16 %v3623
        %v3884 = vunpack.c.h.b16 %v3623
        %v3885 = vunpack.c.l.b16 %v3624
        %v3886 = vunpack.c.h.b16 %v3624
        %v3887 = vunpack.c.l.b16 %v3625
        %v3888 = vunpack.c.h.b16 %v3625
        %v3889 = vunpack.c.l.b16 %v3626
        %v3890 = vunpack.c.h.b16 %v3626
        %v3891 = vunpack.c.l.b16 %v3627
        %v3892 = vunpack.c.h.b16 %v3627
        %v3893 = vunpack.c.l.b16 %v3628
        %v3894 = vunpack.c.h.b16 %v3628
        %v3895 = vunpack.c.l.b16 %v3629
        %v3896 = vunpack.c.h.b16 %v3629
        %v3897 = vunpack.c.l.b16 %v3630
        %v3898 = vunpack.c.h.b16 %v3630
        %v3899 = vunpack.c.l.b16 %v3631
        %v3900 = vunpack.c.h.b16 %v3631
        %v3901 = vunpack.c.l.b16 %v3632
        %v3902 = vunpack.c.h.b16 %v3632
        %v3903 = vunpack.c.l.b16 %v3633
        %v3904 = vunpack.c.h.b16 %v3633
        %v3905 = vunpack.c.l.b16 %v3634
        %v3906 = vunpack.c.h.b16 %v3634
        %v3907 = vunpack.c.l.b16 %v3635
        %v3908 = vunpack.c.h.b16 %v3635
        %v3909 = vunpack.c.l.b16 %v3636
        %v3910 = vunpack.c.h.b16 %v3636
        %v3911 = vunpack.c.l.b16 %v3637
        %v3912 = vunpack.c.h.b16 %v3637
        %v3913 = vunpack.c.l.b16 %v3638
        %v3914 = vunpack.c.h.b16 %v3638
        %v3915 = vunpack.c.l.b16 %v3639
        %v3916 = vunpack.c.h.b16 %v3639
        %v3917 = vunpack.c.l.b16 %v3640
        %v3918 = vunpack.c.h.b16 %v3640
        %v3919 = vunpack.c.l.b16 %v3641
        %v3920 = vunpack.c.h.b16 %v3641
        %v3921 = vunpack.c.l.b16 %v3642
        %v3922 = vunpack.c.h.b16 %v3642
        %v3923 = vunpack.c.l.b16 %v3643
        %v3924 = vunpack.c.h.b16 %v3643
        %v3925 = vunpack.c.l.b16 %v3644
        %v3926 = vunpack.c.h.b16 %v3644
        %v3927 = vunpack.c.l.b16 %v3645
        %v3928 = vunpack.c.h.b16 %v3645
        %v3929 = vunpack.c.l.b16 %v3646
        %v3930 = vunpack.c.h.b16 %v3646
        %v3931 = vunpack.c.l.b16 %v3647
        %v3932 = vunpack.c.h.b16 %v3647
        %v3933 = vunpack.c.l.b16 %v3648
        %v3934 = vunpack.c.h.b16 %v3648
        %v3935 = vunpack.c.l.b16 %v3649
        %v3936 = vunpack.c.h.b16 %v3649
        %v3937 = vunpack.c.l.b16 %v3650
        %v3938 = vunpack.c.h.b16 %v3650
        %v3939 = vpack.c.b16 %v3749, %v3747
        %v3940 = vpack.c.b16 %v3750, %v3748
        %v3941 = vpack.c.b16 %v3753, %v3751
        %v3942 = vpack.c.b16 %v3754, %v3752
        %v3943 = vpack.c.b16 %v3757, %v3755
        %v3944 = vpack.c.b16 %v3758, %v3756
        %v3945 = vpack.c.b16 %v3761, %v3759
        %v3946 = vpack.c.b16 %v3762, %v3760
        %v3947 = vpack.c.b16 %v3765, %v3763
        %v3948 = vpack.c.b16 %v3766, %v3764
        %v3949 = vpack.c.b16 %v3769, %v3767
        %v3950 = vpack.c.b16 %v3770, %v3768
        %v3951 = vpack.c.b16 %v3773, %v3771
        %v3952 = vpack.c.b16 %v3774, %v3772
        %v3953 = vpack.c.b16 %v3777, %v3775
        %v3954 = vpack.c.b16 %v3778, %v3776
        %v3955 = vpack.c.b16 %v3781, %v3779
        %v3956 = vpack.c.b16 %v3782, %v3780
        %v3957 = vpack.c.b16 %v3785, %v3783
        %v3958 = vpack.c.b16 %v3786, %v3784
        %v3959 = vpack.c.b16 %v3789, %v3787
        %v3960 = vpack.c.b16 %v3790, %v3788
        %v3961 = vpack.c.b16 %v3793, %v3791
        %v3962 = vpack.c.b16 %v3794, %v3792
        %v3963 = vpack.c.b16 %v3797, %v3795
        %v3964 = vpack.c.b16 %v3798, %v3796
        %v3965 = vpack.c.b16 %v3801, %v3799
        %v3966 = vpack.c.b16 %v3802, %v3800
        %v3967 = vpack.c.b16 %v3805, %v3803
        %v3968 = vpack.c.b16 %v3806, %v3804
        %v3969 = vpack.c.b16 %v3809, %v3807
        %v3970 = vpack.c.b16 %v3810, %v3808
        %v3971 = vpack.c.b16 %v3813, %v3811
        %v3972 = vpack.c.b16 %v3814, %v3812
        %v3973 = vpack.c.b16 %v3817, %v3815
        %v3974 = vpack.c.b16 %v3818, %v3816
        %v3975 = vpack.c.b16 %v3821, %v3819
        %v3976 = vpack.c.b16 %v3822, %v3820
        %v3977 = vpack.c.b16 %v3825, %v3823
        %v3978 = vpack.c.b16 %v3826, %v3824
        %v3979 = vpack.c.b16 %v3829, %v3827
        %v3980 = vpack.c.b16 %v3830, %v3828
        %v3981 = vpack.c.b16 %v3833, %v3831
        %v3982 = vpack.c.b16 %v3834, %v3832
        %v3983 = vpack.c.b16 %v3837, %v3835
        %v3984 = vpack.c.b16 %v3838, %v3836
        %v3985 = vpack.c.b16 %v3841, %v3839
        %v3986 = vpack.c.b16 %v3842, %v3840
        %v3987 = vpack.c.b16 %v3845, %v3843
        %v3988 = vpack.c.b16 %v3846, %v3844
        %v3989 = vpack.c.b16 %v3849, %v3847
        %v3990 = vpack.c.b16 %v3850, %v3848
        %v3991 = vpack.c.b16 %v3853, %v3851
        %v3992 = vpack.c.b16 %v3854, %v3852
        %v3993 = vpack.c.b16 %v3857, %v3855
        %v3994 = vpack.c.b16 %v3858, %v3856
        %v3995 = vpack.c.b16 %v3861, %v3859
        %v3996 = vpack.c.b16 %v3862, %v3860
        %v3997 = vpack.c.b16 %v3865, %v3863
        %v3998 = vpack.c.b16 %v3866, %v3864
        %v3999 = vpack.c.b16 %v3869, %v3867
        %v4000 = vpack.c.b16 %v3870, %v3868
        %v4001 = vpack.c.b16 %v3873, %v3871
        %v4002 = vpack.c.b16 %v3874, %v3872
        %v4003 = vpack.c.b16 %v3877, %v3875
        %v4004 = vpack.c.b16 %v3878, %v3876
        %v4005 = vpack.c.b16 %v3881, %v3879
        %v4006 = vpack.c.b16 %v3882, %v3880
        %v4007 = vpack.c.b16 %v3885, %v3883
        %v4008 = vpack.c.b16 %v3886, %v3884
        %v4009 = vpack.c.b16 %v3889, %v3887
        %v4010 = vpack.c.b16 %v3890, %v3888
        %v4011 = vpack.c.b16 %v3893, %v3891
        %v4012 = vpack.c.b16 %v3894, %v3892
        %v4013 = vpack.c.b16 %v3897, %v3895
        %v4014 = vpack.c.b16 %v3898, %v3896
        %v4015 = vpack.c.b16 %v3901, %v3899
        %v4016 = vpack.c.b16 %v3902, %v3900
        %v4017 = vpack.c.b16 %v3905, %v3903
        %v4018 = vpack.c.b16 %v3906, %v3904
        %v4019 = vpack.c.b16 %v3909, %v3907
        %v4020 = vpack.c.b16 %v3910, %v3908
        %v4021 = vpack.c.b16 %v3913, %v3911
        %v4022 = vpack.c.b16 %v3914, %v3912
        %v4023 = vpack.c.b16 %v3917, %v3915
        %v4024 = vpack.c.b16 %v3918, %v3916
        %v4025 = vpack.c.b16 %v3921, %v3919
        %v4026 = vpack.c.b16 %v3922, %v3920
        %v4027 = vpack.c.b16 %v3925, %v3923
        %v4028 = vpack.c.b16 %v3926, %v3924
        %v4029 = vpack.c.b16 %v3929, %v3927
        %v4030 = vpack.c.b16 %v3930, %v3928
        %v4031 = vpack.c.b16 %v3933, %v3931
        %v4032 = vpack.c.b16 %v3934, %v3932
        %v4033 = vpack.c.b16 %v3937, %v3935
        %v4034 = vpack.c.b16 %v3938, %v3936
        %4131 = vmatprep.subr.bf16.mxu0 %v3940
        %4132 = vmatpush1.bf16.msra.mxu0 %v3939
        %4133 = vmatprep.subr.bf16.mxu0 %v3942
        %4134 = vmatpush1.bf16.msra.mxu0 %v3941
        %4135 = vmatprep.subr.bf16.mxu0 %v3944
        %4136 = vmatpush1.bf16.msra.mxu0 %v3943
        %4137 = vmatprep.subr.bf16.mxu0 %v3946
        %4138 = vmatpush1.bf16.msra.mxu0 %v3945
        %4139 = vmatprep.subr.bf16.mxu0 %v3948
        %4140 = vmatpush1.bf16.msra.mxu0 %v3947
        %4141 = vmatprep.subr.bf16.mxu0 %v3950
        %4142 = vmatpush1.bf16.msra.mxu0 %v3949
        %4143 = vmatprep.subr.bf16.mxu0 %v3952
        %4144 = vmatpush1.bf16.msra.mxu0 %v3951
        %4145 = vmatprep.subr.bf16.mxu0 %v3954
        %4146 = vmatpush1.bf16.msra.mxu0 %v3953
        %4147 = vmatprep.subr.bf16.mxu0 %v3956
        %4148 = vmatpush1.bf16.msra.mxu0 %v3955
        %4149 = vmatprep.subr.bf16.mxu0 %v3958
        %4150 = vmatpush1.bf16.msra.mxu0 %v3957
        %4151 = vmatprep.subr.bf16.mxu0 %v3960
        %4152 = vmatpush1.bf16.msra.mxu0 %v3959
        %4153 = vmatprep.subr.bf16.mxu0 %v3962
        %4154 = vmatpush1.bf16.msra.mxu0 %v3961
        %4155 = vmatprep.subr.bf16.mxu0 %v3964
        %4156 = vmatpush1.bf16.msra.mxu0 %v3963
        %4157 = vmatprep.subr.bf16.mxu0 %v3966
        %4158 = vmatpush1.bf16.msra.mxu0 %v3965
        %4159 = vmatprep.subr.bf16.mxu0 %v3968
        %4160 = vmatpush1.bf16.msra.mxu0 %v3967
        %4161 = vmatprep.subr.bf16.mxu0 %v3970
        %4162 = vmatpush1.bf16.msra.mxu0 %v3969
        %4163 = vmatprep.mubr.bf16.mxu0 %v3454
        %4164 = vmatmul.mubr.bf16.gmra.mrb[0].mxu0 %v3453
        %v4165 = vpop.f32.mrb[0].mxu0
        %v4166 = vadd.f32 0.0, %v4165
        %v4167 = vpop.f32.mrb[0].mxu0
        %v4168 = vadd.f32 0.0, %v4167
        %v4169 = vpop.f32.mrb[0].mxu0
        %v4170 = vpop.f32.mrb[0].mxu0
        %4171 = vdwg.mxu0
        %4172 = vmatprep.subr.bf16.mxu0 %v3972
        %4173 = vmatpush1.bf16.msra.mxu0 %v3971
        %4174 = vmatprep.subr.bf16.mxu0 %v3974
        %4175 = vmatpush1.bf16.msra.mxu0 %v3973
        %4176 = vmatprep.subr.bf16.mxu0 %v3976
        %4177 = vmatpush1.bf16.msra.mxu0 %v3975
        %4178 = vmatprep.subr.bf16.mxu0 %v3978
        %4179 = vmatpush1.bf16.msra.mxu0 %v3977
        %4180 = vmatprep.subr.bf16.mxu0 %v3980
        %4181 = vmatpush1.bf16.msra.mxu0 %v3979
        %4182 = vmatprep.subr.bf16.mxu0 %v3982
        %4183 = vmatpush1.bf16.msra.mxu0 %v3981
        %4184 = vmatprep.subr.bf16.mxu0 %v3984
        %4185 = vmatpush1.bf16.msra.mxu0 %v3983
        %4186 = vmatprep.subr.bf16.mxu0 %v3986
        %4187 = vmatpush1.bf16.msra.mxu0 %v3985
        %4188 = vmatprep.subr.bf16.mxu0 %v3988
        %4189 = vmatpush1.bf16.msra.mxu0 %v3987
        %4190 = vmatprep.subr.bf16.mxu0 %v3990
        %4191 = vmatpush1.bf16.msra.mxu0 %v3989
        %4192 = vmatprep.subr.bf16.mxu0 %v3992
        %4193 = vmatpush1.bf16.msra.mxu0 %v3991
        %4194 = vmatprep.subr.bf16.mxu0 %v3994
        %4195 = vmatpush1.bf16.msra.mxu0 %v3993
        %4196 = vmatprep.subr.bf16.mxu0 %v3996
        %4197 = vmatpush1.bf16.msra.mxu0 %v3995
        %4198 = vmatprep.subr.bf16.mxu0 %v3998
        %4199 = vmatpush1.bf16.msra.mxu0 %v3997
        %4200 = vmatprep.subr.bf16.mxu0 %v4000
        %4201 = vmatpush1.bf16.msra.mxu0 %v3999
        %4202 = vmatprep.subr.bf16.mxu0 %v4002
        %4203 = vmatpush1.bf16.msra.mxu0 %v4001
        %4204 = vmatprep.mubr.bf16.mxu0 %v3456
        %4205 = vmatmul.mubr.bf16.gmra.mrb[0].mxu0 %v3455
        %v4206 = vpop.f32.mrb[0].mxu0
        %v4207 = vadd.f32 %v4166, %v4206
        %v4208 = vpop.f32.mrb[0].mxu0
        %v4209 = vadd.f32 %v4168, %v4208
        %v4210 = vpop.f32.mrb[0].mxu0
        %v4211 = vpop.f32.mrb[0].mxu0
        %4212 = vdwg.mxu0
        %4213 = vmatprep.subr.bf16.mxu0 %v4004
        %4214 = vmatpush1.bf16.msra.mxu0 %v4003
        %4215 = vmatprep.subr.bf16.mxu0 %v4006
        %4216 = vmatpush1.bf16.msra.mxu0 %v4005
        %4217 = vmatprep.subr.bf16.mxu0 %v4008
        %4218 = vmatpush1.bf16.msra.mxu0 %v4007
        %4219 = vmatprep.subr.bf16.mxu0 %v4010
        %4220 = vmatpush1.bf16.msra.mxu0 %v4009
        %4221 = vmatprep.subr.bf16.mxu0 %v4012
        %4222 = vmatpush1.bf16.msra.mxu0 %v4011
        %4223 = vmatprep.subr.bf16.mxu0 %v4014
        %4224 = vmatpush1.bf16.msra.mxu0 %v4013
        %4225 = vmatprep.subr.bf16.mxu0 %v4016
        %4226 = vmatpush1.bf16.msra.mxu0 %v4015
        %4227 = vmatprep.subr.bf16.mxu0 %v4018
        %4228 = vmatpush1.bf16.msra.mxu0 %v4017
        %4229 = vmatprep.subr.bf16.mxu0 %v4020
        %4230 = vmatpush1.bf16.msra.mxu0 %v4019
        %4231 = vmatprep.subr.bf16.mxu0 %v4022
        %4232 = vmatpush1.bf16.msra.mxu0 %v4021
        %4233 = vmatprep.subr.bf16.mxu0 %v4024
        %4234 = vmatpush1.bf16.msra.mxu0 %v4023
        %4235 = vmatprep.subr.bf16.mxu0 %v4026
        %4236 = vmatpush1.bf16.msra.mxu0 %v4025
        %4237 = vmatprep.subr.bf16.mxu0 %v4028
        %4238 = vmatpush1.bf16.msra.mxu0 %v4027
        %4239 = vmatprep.subr.bf16.mxu0 %v4030
        %4240 = vmatpush1.bf16.msra.mxu0 %v4029
        %4241 = vmatprep.subr.bf16.mxu0 %v4032
        %4242 = vmatpush1.bf16.msra.mxu0 %v4031
        %4243 = vmatprep.subr.bf16.mxu0 %v4034
        %4244 = vmatpush1.bf16.msra.mxu0 %v4033
        %4245 = vmatprep.mubr.bf16.mxu0 %v3458
        %4246 = vmatmul.mubr.bf16.gmra.mrb[0].mxu0 %v3457
        %v4247 = vpop.f32.mrb[0].mxu0
        %v4248 = vadd.f32 %v4207, %v4247
        %v4249 = vpop.f32.mrb[0].mxu0
        %v4250 = vadd.f32 %v4209, %v4249
        %v4251 = vpop.f32.mrb[0].mxu0
        %v4252 = vpop.f32.mrb[0].mxu0
        %4253 = vdwg.mxu0
        %v4350 = vunpack.c.l.b16 %v3459
        %v4351 = vunpack.c.h.b16 %v3459
        %v4352 = vunpack.c.l.b16 %v3460
        %v4353 = vunpack.c.h.b16 %v3460
        %v4354 = vunpack.c.l.b16 %v3461
        %v4355 = vunpack.c.h.b16 %v3461
        %v4356 = vunpack.c.l.b16 %v3462
        %v4357 = vunpack.c.h.b16 %v3462
        %v4358 = vunpack.c.l.b16 %v3463
        %v4359 = vunpack.c.h.b16 %v3463
        %v4360 = vunpack.c.l.b16 %v3464
        %v4361 = vunpack.c.h.b16 %v3464
        %v4362 = vunpack.c.l.b16 %v3465
        %v4363 = vunpack.c.h.b16 %v3465
        %v4364 = vunpack.c.l.b16 %v3466
        %v4365 = vunpack.c.h.b16 %v3466
        %v4366 = vunpack.c.l.b16 %v3467
        %v4367 = vunpack.c.h.b16 %v3467
        %v4368 = vunpack.c.l.b16 %v3468
        %v4369 = vunpack.c.h.b16 %v3468
        %v4370 = vunpack.c.l.b16 %v3469
        %v4371 = vunpack.c.h.b16 %v3469
        %v4372 = vunpack.c.l.b16 %v3470
        %v4373 = vunpack.c.h.b16 %v3470
        %v4374 = vunpack.c.l.b16 %v3471
        %v4375 = vunpack.c.h.b16 %v3471
        %v4376 = vunpack.c.l.b16 %v3472
        %v4377 = vunpack.c.h.b16 %v3472
        %v4378 = vunpack.c.l.b16 %v3473
        %v4379 = vunpack.c.h.b16 %v3473
        %v4380 = vunpack.c.l.b16 %v3474
        %v4381 = vunpack.c.h.b16 %v3474
        %v4382 = vunpack.c.l.b16 %v3475
        %v4383 = vunpack.c.h.b16 %v3475
        %v4384 = vunpack.c.l.b16 %v3476
        %v4385 = vunpack.c.h.b16 %v3476
        %v4386 = vunpack.c.l.b16 %v3477
        %v4387 = vunpack.c.h.b16 %v3477
        %v4388 = vunpack.c.l.b16 %v3478
        %v4389 = vunpack.c.h.b16 %v3478
        %v4390 = vunpack.c.l.b16 %v3479
        %v4391 = vunpack.c.h.b16 %v3479
        %v4392 = vunpack.c.l.b16 %v3480
        %v4393 = vunpack.c.h.b16 %v3480
        %v4394 = vunpack.c.l.b16 %v3481
        %v4395 = vunpack.c.h.b16 %v3481
        %v4396 = vunpack.c.l.b16 %v3482
        %v4397 = vunpack.c.h.b16 %v3482
        %v4398 = vunpack.c.l.b16 %v3483
        %v4399 = vunpack.c.h.b16 %v3483
        %v4400 = vunpack.c.l.b16 %v3484
        %v4401 = vunpack.c.h.b16 %v3484
        %v4402 = vunpack.c.l.b16 %v3485
        %v4403 = vunpack.c.h.b16 %v3485
        %v4404 = vunpack.c.l.b16 %v3486
        %v4405 = vunpack.c.h.b16 %v3486
        %v4406 = vunpack.c.l.b16 %v3487
        %v4407 = vunpack.c.h.b16 %v3487
        %v4408 = vunpack.c.l.b16 %v3488
        %v4409 = vunpack.c.h.b16 %v3488
        %v4410 = vunpack.c.l.b16 %v3489
        %v4411 = vunpack.c.h.b16 %v3489
        %v4412 = vunpack.c.l.b16 %v3490
        %v4413 = vunpack.c.h.b16 %v3490
        %v4414 = vunpack.c.l.b16 %v3491
        %v4415 = vunpack.c.h.b16 %v3491
        %v4416 = vunpack.c.l.b16 %v3492
        %v4417 = vunpack.c.h.b16 %v3492
        %v4418 = vunpack.c.l.b16 %v3493
        %v4419 = vunpack.c.h.b16 %v3493
        %v4420 = vunpack.c.l.b16 %v3494
        %v4421 = vunpack.c.h.b16 %v3494
        %v4422 = vunpack.c.l.b16 %v3495
        %v4423 = vunpack.c.h.b16 %v3495
        %v4424 = vunpack.c.l.b16 %v3496
        %v4425 = vunpack.c.h.b16 %v3496
        %v4426 = vunpack.c.l.b16 %v3497
        %v4427 = vunpack.c.h.b16 %v3497
        %v4428 = vunpack.c.l.b16 %v3498
        %v4429 = vunpack.c.h.b16 %v3498
        %v4430 = vunpack.c.l.b16 %v3499
        %v4431 = vunpack.c.h.b16 %v3499
        %v4432 = vunpack.c.l.b16 %v3500
        %v4433 = vunpack.c.h.b16 %v3500
        %v4434 = vunpack.c.l.b16 %v3501
        %v4435 = vunpack.c.h.b16 %v3501
        %v4436 = vunpack.c.l.b16 %v3502
        %v4437 = vunpack.c.h.b16 %v3502
        %v4438 = vunpack.c.l.b16 %v3503
        %v4439 = vunpack.c.h.b16 %v3503
        %v4440 = vunpack.c.l.b16 %v3504
        %v4441 = vunpack.c.h.b16 %v3504
        %v4442 = vunpack.c.l.b16 %v3505
        %v4443 = vunpack.c.h.b16 %v3505
        %v4444 = vunpack.c.l.b16 %v3506
        %v4445 = vunpack.c.h.b16 %v3506
        %v4446 = vunpack.c.l.b16 %v3507
        %v4447 = vunpack.c.h.b16 %v3507
        %v4448 = vunpack.c.l.b16 %v3508
        %v4449 = vunpack.c.h.b16 %v3508
        %v4450 = vunpack.c.l.b16 %v3509
        %v4451 = vunpack.c.h.b16 %v3509
        %v4452 = vunpack.c.l.b16 %v3510
        %v4453 = vunpack.c.h.b16 %v3510
        %v4454 = vunpack.c.l.b16 %v3511
        %v4455 = vunpack.c.h.b16 %v3511
        %v4456 = vunpack.c.l.b16 %v3512
        %v4457 = vunpack.c.h.b16 %v3512
        %v4458 = vunpack.c.l.b16 %v3513
        %v4459 = vunpack.c.h.b16 %v3513
        %v4460 = vunpack.c.l.b16 %v3514
        %v4461 = vunpack.c.h.b16 %v3514
        %v4462 = vunpack.c.l.b16 %v3515
        %v4463 = vunpack.c.h.b16 %v3515
        %v4464 = vunpack.c.l.b16 %v3516
        %v4465 = vunpack.c.h.b16 %v3516
        %v4466 = vunpack.c.l.b16 %v3517
        %v4467 = vunpack.c.h.b16 %v3517
        %v4468 = vunpack.c.l.b16 %v3518
        %v4469 = vunpack.c.h.b16 %v3518
        %v4470 = vunpack.c.l.b16 %v3519
        %v4471 = vunpack.c.h.b16 %v3519
        %v4472 = vunpack.c.l.b16 %v3520
        %v4473 = vunpack.c.h.b16 %v3520
        %v4474 = vunpack.c.l.b16 %v3521
        %v4475 = vunpack.c.h.b16 %v3521
        %v4476 = vunpack.c.l.b16 %v3522
        %v4477 = vunpack.c.h.b16 %v3522
        %v4478 = vunpack.c.l.b16 %v3523
        %v4479 = vunpack.c.h.b16 %v3523
        %v4480 = vunpack.c.l.b16 %v3524
        %v4481 = vunpack.c.h.b16 %v3524
        %v4482 = vunpack.c.l.b16 %v3525
        %v4483 = vunpack.c.h.b16 %v3525
        %v4484 = vunpack.c.l.b16 %v3526
        %v4485 = vunpack.c.h.b16 %v3526
        %v4486 = vunpack.c.l.b16 %v3527
        %v4487 = vunpack.c.h.b16 %v3527
        %v4488 = vunpack.c.l.b16 %v3528
        %v4489 = vunpack.c.h.b16 %v3528
        %v4490 = vunpack.c.l.b16 %v3529
        %v4491 = vunpack.c.h.b16 %v3529
        %v4492 = vunpack.c.l.b16 %v3530
        %v4493 = vunpack.c.h.b16 %v3530
        %v4494 = vunpack.c.l.b16 %v3531
        %v4495 = vunpack.c.h.b16 %v3531
        %v4496 = vunpack.c.l.b16 %v3532
        %v4497 = vunpack.c.h.b16 %v3532
        %v4498 = vunpack.c.l.b16 %v3533
        %v4499 = vunpack.c.h.b16 %v3533
        %v4500 = vunpack.c.l.b16 %v3534
        %v4501 = vunpack.c.h.b16 %v3534
        %v4502 = vunpack.c.l.b16 %v3535
        %v4503 = vunpack.c.h.b16 %v3535
        %v4504 = vunpack.c.l.b16 %v3536
        %v4505 = vunpack.c.h.b16 %v3536
        %v4506 = vunpack.c.l.b16 %v3537
        %v4507 = vunpack.c.h.b16 %v3537
        %v4508 = vunpack.c.l.b16 %v3538
        %v4509 = vunpack.c.h.b16 %v3538
        %v4510 = vunpack.c.l.b16 %v3539
        %v4511 = vunpack.c.h.b16 %v3539
        %v4512 = vunpack.c.l.b16 %v3540
        %v4513 = vunpack.c.h.b16 %v3540
        %v4514 = vunpack.c.l.b16 %v3541
        %v4515 = vunpack.c.h.b16 %v3541
        %v4516 = vunpack.c.l.b16 %v3542
        %v4517 = vunpack.c.h.b16 %v3542
        %v4518 = vunpack.c.l.b16 %v3543
        %v4519 = vunpack.c.h.b16 %v3543
        %v4520 = vunpack.c.l.b16 %v3544
        %v4521 = vunpack.c.h.b16 %v3544
        %v4522 = vunpack.c.l.b16 %v3545
        %v4523 = vunpack.c.h.b16 %v3545
        %v4524 = vunpack.c.l.b16 %v3546
        %v4525 = vunpack.c.h.b16 %v3546
        %v4526 = vunpack.c.l.b16 %v3547
        %v4527 = vunpack.c.h.b16 %v3547
        %v4528 = vunpack.c.l.b16 %v3548
        %v4529 = vunpack.c.h.b16 %v3548
        %v4530 = vunpack.c.l.b16 %v3549
        %v4531 = vunpack.c.h.b16 %v3549
        %v4532 = vunpack.c.l.b16 %v3550
        %v4533 = vunpack.c.h.b16 %v3550
        %v4534 = vunpack.c.l.b16 %v3551
        %v4535 = vunpack.c.h.b16 %v3551
        %v4536 = vunpack.c.l.b16 %v3552
        %v4537 = vunpack.c.h.b16 %v3552
        %v4538 = vunpack.c.l.b16 %v3553
        %v4539 = vunpack.c.h.b16 %v3553
        %v4540 = vunpack.c.l.b16 %v3554
        %v4541 = vunpack.c.h.b16 %v3554
        %v4542 = vpack.c.b16 %v4352, %v4350
        %v4543 = vpack.c.b16 %v4353, %v4351
        %v4544 = vpack.c.b16 %v4356, %v4354
        %v4545 = vpack.c.b16 %v4357, %v4355
        %v4546 = vpack.c.b16 %v4360, %v4358
        %v4547 = vpack.c.b16 %v4361, %v4359
        %v4548 = vpack.c.b16 %v4364, %v4362
        %v4549 = vpack.c.b16 %v4365, %v4363
        %v4550 = vpack.c.b16 %v4368, %v4366
        %v4551 = vpack.c.b16 %v4369, %v4367
        %v4552 = vpack.c.b16 %v4372, %v4370
        %v4553 = vpack.c.b16 %v4373, %v4371
        %v4554 = vpack.c.b16 %v4376, %v4374
        %v4555 = vpack.c.b16 %v4377, %v4375
        %v4556 = vpack.c.b16 %v4380, %v4378
        %v4557 = vpack.c.b16 %v4381, %v4379
        %v4558 = vpack.c.b16 %v4384, %v4382
        %v4559 = vpack.c.b16 %v4385, %v4383
        %v4560 = vpack.c.b16 %v4388, %v4386
        %v4561 = vpack.c.b16 %v4389, %v4387
        %v4562 = vpack.c.b16 %v4392, %v4390
        %v4563 = vpack.c.b16 %v4393, %v4391
        %v4564 = vpack.c.b16 %v4396, %v4394
        %v4565 = vpack.c.b16 %v4397, %v4395
        %v4566 = vpack.c.b16 %v4400, %v4398
        %v4567 = vpack.c.b16 %v4401, %v4399
        %v4568 = vpack.c.b16 %v4404, %v4402
        %v4569 = vpack.c.b16 %v4405, %v4403
        %v4570 = vpack.c.b16 %v4408, %v4406
        %v4571 = vpack.c.b16 %v4409, %v4407
        %v4572 = vpack.c.b16 %v4412, %v4410
        %v4573 = vpack.c.b16 %v4413, %v4411
        %v4574 = vpack.c.b16 %v4416, %v4414
        %v4575 = vpack.c.b16 %v4417, %v4415
        %v4576 = vpack.c.b16 %v4420, %v4418
        %v4577 = vpack.c.b16 %v4421, %v4419
        %v4578 = vpack.c.b16 %v4424, %v4422
        %v4579 = vpack.c.b16 %v4425, %v4423
        %v4580 = vpack.c.b16 %v4428, %v4426
        %v4581 = vpack.c.b16 %v4429, %v4427
        %v4582 = vpack.c.b16 %v4432, %v4430
        %v4583 = vpack.c.b16 %v4433, %v4431
        %v4584 = vpack.c.b16 %v4436, %v4434
        %v4585 = vpack.c.b16 %v4437, %v4435
        %v4586 = vpack.c.b16 %v4440, %v4438
        %v4587 = vpack.c.b16 %v4441, %v4439
        %v4588 = vpack.c.b16 %v4444, %v4442
        %v4589 = vpack.c.b16 %v4445, %v4443
        %v4590 = vpack.c.b16 %v4448, %v4446
        %v4591 = vpack.c.b16 %v4449, %v4447
        %v4592 = vpack.c.b16 %v4452, %v4450
        %v4593 = vpack.c.b16 %v4453, %v4451
        %v4594 = vpack.c.b16 %v4456, %v4454
        %v4595 = vpack.c.b16 %v4457, %v4455
        %v4596 = vpack.c.b16 %v4460, %v4458
        %v4597 = vpack.c.b16 %v4461, %v4459
        %v4598 = vpack.c.b16 %v4464, %v4462
        %v4599 = vpack.c.b16 %v4465, %v4463
        %v4600 = vpack.c.b16 %v4468, %v4466
        %v4601 = vpack.c.b16 %v4469, %v4467
        %v4602 = vpack.c.b16 %v4472, %v4470
        %v4603 = vpack.c.b16 %v4473, %v4471
        %v4604 = vpack.c.b16 %v4476, %v4474
        %v4605 = vpack.c.b16 %v4477, %v4475
        %v4606 = vpack.c.b16 %v4480, %v4478
        %v4607 = vpack.c.b16 %v4481, %v4479
        %v4608 = vpack.c.b16 %v4484, %v4482
        %v4609 = vpack.c.b16 %v4485, %v4483
        %v4610 = vpack.c.b16 %v4488, %v4486
        %v4611 = vpack.c.b16 %v4489, %v4487
        %v4612 = vpack.c.b16 %v4492, %v4490
        %v4613 = vpack.c.b16 %v4493, %v4491
        %v4614 = vpack.c.b16 %v4496, %v4494
        %v4615 = vpack.c.b16 %v4497, %v4495
        %v4616 = vpack.c.b16 %v4500, %v4498
        %v4617 = vpack.c.b16 %v4501, %v4499
        %v4618 = vpack.c.b16 %v4504, %v4502
        %v4619 = vpack.c.b16 %v4505, %v4503
        %v4620 = vpack.c.b16 %v4508, %v4506
        %v4621 = vpack.c.b16 %v4509, %v4507
        %v4622 = vpack.c.b16 %v4512, %v4510
        %v4623 = vpack.c.b16 %v4513, %v4511
        %v4624 = vpack.c.b16 %v4516, %v4514
        %v4625 = vpack.c.b16 %v4517, %v4515
        %v4626 = vpack.c.b16 %v4520, %v4518
        %v4627 = vpack.c.b16 %v4521, %v4519
        %v4628 = vpack.c.b16 %v4524, %v4522
        %v4629 = vpack.c.b16 %v4525, %v4523
        %v4630 = vpack.c.b16 %v4528, %v4526
        %v4631 = vpack.c.b16 %v4529, %v4527
        %v4632 = vpack.c.b16 %v4532, %v4530
        %v4633 = vpack.c.b16 %v4533, %v4531
        %v4634 = vpack.c.b16 %v4536, %v4534
        %v4635 = vpack.c.b16 %v4537, %v4535
        %v4636 = vpack.c.b16 %v4540, %v4538
        %v4637 = vpack.c.b16 %v4541, %v4539
        %4734 = vmatprep.subr.bf16.mxu0 %v4543
        %4735 = vmatpush1.bf16.msra.mxu0 %v4542
        %4736 = vmatprep.subr.bf16.mxu0 %v4545
        %4737 = vmatpush1.bf16.msra.mxu0 %v4544
        %4738 = vmatprep.subr.bf16.mxu0 %v4547
        %4739 = vmatpush1.bf16.msra.mxu0 %v4546
        %4740 = vmatprep.subr.bf16.mxu0 %v4549
        %4741 = vmatpush1.bf16.msra.mxu0 %v4548
        %4742 = vmatprep.subr.bf16.mxu0 %v4551
        %4743 = vmatpush1.bf16.msra.mxu0 %v4550
        %4744 = vmatprep.subr.bf16.mxu0 %v4553
        %4745 = vmatpush1.bf16.msra.mxu0 %v4552
        %4746 = vmatprep.subr.bf16.mxu0 %v4555
        %4747 = vmatpush1.bf16.msra.mxu0 %v4554
        %4748 = vmatprep.subr.bf16.mxu0 %v4557
        %4749 = vmatpush1.bf16.msra.mxu0 %v4556
        %4750 = vmatprep.subr.bf16.mxu0 %v4559
        %4751 = vmatpush1.bf16.msra.mxu0 %v4558
        %4752 = vmatprep.subr.bf16.mxu0 %v4561
        %4753 = vmatpush1.bf16.msra.mxu0 %v4560
        %4754 = vmatprep.subr.bf16.mxu0 %v4563
        %4755 = vmatpush1.bf16.msra.mxu0 %v4562
        %4756 = vmatprep.subr.bf16.mxu0 %v4565
        %4757 = vmatpush1.bf16.msra.mxu0 %v4564
        %4758 = vmatprep.subr.bf16.mxu0 %v4567
        %4759 = vmatpush1.bf16.msra.mxu0 %v4566
        %4760 = vmatprep.subr.bf16.mxu0 %v4569
        %4761 = vmatpush1.bf16.msra.mxu0 %v4568
        %4762 = vmatprep.subr.bf16.mxu0 %v4571
        %4763 = vmatpush1.bf16.msra.mxu0 %v4570
        %4764 = vmatprep.subr.bf16.mxu0 %v4573
        %4765 = vmatpush1.bf16.msra.mxu0 %v4572
        %4766 = vmatprep.mubr.bf16.mxu0 %v3448
        %4767 = vmatmul.mubr.bf16.gmra.mrb[0].mxu0 %v3447
        %v4768 = vpop.f32.mrb[0].mxu0
        %v4769 = vadd.f32 %v4248, %v4768
        %v4770 = vpop.f32.mrb[0].mxu0
        %v4771 = vadd.f32 %v4250, %v4770
        %v4772 = vpop.f32.mrb[0].mxu0
        %v4773 = vpop.f32.mrb[0].mxu0
        %4774 = vdwg.mxu0
        %4775 = vmatprep.subr.bf16.mxu0 %v4575
        %4776 = vmatpush1.bf16.msra.mxu0 %v4574
        %4777 = vmatprep.subr.bf16.mxu0 %v4577
        %4778 = vmatpush1.bf16.msra.mxu0 %v4576
        %4779 = vmatprep.subr.bf16.mxu0 %v4579
        %4780 = vmatpush1.bf16.msra.mxu0 %v4578
        %4781 = vmatprep.subr.bf16.mxu0 %v4581
        %4782 = vmatpush1.bf16.msra.mxu0 %v4580
        %4783 = vmatprep.subr.bf16.mxu0 %v4583
        %4784 = vmatpush1.bf16.msra.mxu0 %v4582
        %4785 = vmatprep.subr.bf16.mxu0 %v4585
        %4786 = vmatpush1.bf16.msra.mxu0 %v4584
        %4787 = vmatprep.subr.bf16.mxu0 %v4587
        %4788 = vmatpush1.bf16.msra.mxu0 %v4586
        %4789 = vmatprep.subr.bf16.mxu0 %v4589
        %4790 = vmatpush1.bf16.msra.mxu0 %v4588
        %4791 = vmatprep.subr.bf16.mxu0 %v4591
        %4792 = vmatpush1.bf16.msra.mxu0 %v4590
        %4793 = vmatprep.subr.bf16.mxu0 %v4593
        %4794 = vmatpush1.bf16.msra.mxu0 %v4592
        %4795 = vmatprep.subr.bf16.mxu0 %v4595
        %4796 = vmatpush1.bf16.msra.mxu0 %v4594
        %4797 = vmatprep.subr.bf16.mxu0 %v4597
        %4798 = vmatpush1.bf16.msra.mxu0 %v4596
        %4799 = vmatprep.subr.bf16.mxu0 %v4599
        %4800 = vmatpush1.bf16.msra.mxu0 %v4598
        %4801 = vmatprep.subr.bf16.mxu0 %v4601
        %4802 = vmatpush1.bf16.msra.mxu0 %v4600
        %4803 = vmatprep.subr.bf16.mxu0 %v4603
        %4804 = vmatpush1.bf16.msra.mxu0 %v4602
        %4805 = vmatprep.subr.bf16.mxu0 %v4605
        %4806 = vmatpush1.bf16.msra.mxu0 %v4604
        %4807 = vmatprep.mubr.bf16.mxu0 %v3450
        %4808 = vmatmul.mubr.bf16.gmra.mrb[0].mxu0 %v3449
        %v4809 = vpop.f32.mrb[0].mxu0
        %v4810 = vadd.f32 %v4769, %v4809
        %v4811 = vpop.f32.mrb[0].mxu0
        %v4812 = vadd.f32 %v4771, %v4811
        %v4813 = vpop.f32.mrb[0].mxu0
        %v4814 = vpop.f32.mrb[0].mxu0
        %4815 = vdwg.mxu0
        %4816 = vmatprep.subr.bf16.mxu0 %v4607
        %4817 = vmatpush1.bf16.msra.mxu0 %v4606
        %4818 = vmatprep.subr.bf16.mxu0 %v4609
        %4819 = vmatpush1.bf16.msra.mxu0 %v4608
        %4820 = vmatprep.subr.bf16.mxu0 %v4611
        %4821 = vmatpush1.bf16.msra.mxu0 %v4610
        %4822 = vmatprep.subr.bf16.mxu0 %v4613
        %4823 = vmatpush1.bf16.msra.mxu0 %v4612
        %4824 = vmatprep.subr.bf16.mxu0 %v4615
        %4825 = vmatpush1.bf16.msra.mxu0 %v4614
        %4826 = vmatprep.subr.bf16.mxu0 %v4617
        %4827 = vmatpush1.bf16.msra.mxu0 %v4616
        %4828 = vmatprep.subr.bf16.mxu0 %v4619
        %4829 = vmatpush1.bf16.msra.mxu0 %v4618
        %4830 = vmatprep.subr.bf16.mxu0 %v4621
        %4831 = vmatpush1.bf16.msra.mxu0 %v4620
        %4832 = vmatprep.subr.bf16.mxu0 %v4623
        %4833 = vmatpush1.bf16.msra.mxu0 %v4622
        %4834 = vmatprep.subr.bf16.mxu0 %v4625
        %4835 = vmatpush1.bf16.msra.mxu0 %v4624
        %4836 = vmatprep.subr.bf16.mxu0 %v4627
        %4837 = vmatpush1.bf16.msra.mxu0 %v4626
        %4838 = vmatprep.subr.bf16.mxu0 %v4629
        %4839 = vmatpush1.bf16.msra.mxu0 %v4628
        %4840 = vmatprep.subr.bf16.mxu0 %v4631
        %4841 = vmatpush1.bf16.msra.mxu0 %v4630
        %4842 = vmatprep.subr.bf16.mxu0 %v4633
        %4843 = vmatpush1.bf16.msra.mxu0 %v4632
        %4844 = vmatprep.subr.bf16.mxu0 %v4635
        %4845 = vmatpush1.bf16.msra.mxu0 %v4634
        %4846 = vmatprep.subr.bf16.mxu0 %v4637
        %4847 = vmatpush1.bf16.msra.mxu0 %v4636
        %4848 = vmatprep.mubr.bf16.mxu0 %v3452
        %4849 = vmatmul.mubr.bf16.gmra.mrb[0].mxu0 %v3451
        %v4850 = vpop.f32.mrb[0].mxu0
        %v4851 = vadd.f32 %v4810, %v4850
        %v4852 = vpop.f32.mrb[0].mxu0
        %v4853 = vadd.f32 %v4812, %v4852
        %v4854 = vpop.f32.mrb[0].mxu0
        %v4855 = vpop.f32.mrb[0].mxu0
        %4856 = vdwg.mxu0
        %v4857 = vld [vmem:[%s11] sm:$0x3]
        %v4859 = vlaneseq
        %v4860 = vshrl.u32 %v4859, 7
        %v4861 = vsub.s32 0, %v4860
        %v4862 = vrot.slane %v4857, %v4861
        %v4863 = vlaneseq
        %v4864 = vshrl.u32 %v4863, 7
        %v4865 = vsub.s32 1, %v4864
        %v4866 = vrot.slane %v4857, %v4865
        %v4869 = vadd.f32 %v4851, %v4862
        %v4870 = vadd.f32 %v4853, %v4866
        %v4871 = vmax.f32 %v4869, 0.0
        %v4872 = vmax.f32 %v4870, 0.0
        %v4873 = vpack.c.bf16 %v4871, %v4871
        %v4874 = vpack.c.bf16 %v4872, %v4872
        %v4875 = vld [vmem:[#allocation16] sm:$0xf]
        %v4876 = vld [vmem:[#allocation16 + $0x4] sm:$0xf]
        %v4877 = vld [vmem:[#allocation16 + $0x8] sm:$0xf]
        %v4878 = vld [vmem:[#allocation16 + $0xc] sm:$0xf]
        %v4879 = vld [vmem:[#allocation16 + $0x10] sm:$0xf]
        %v4880 = vld [vmem:[#allocation16 + $0x14] sm:$0xf]
        %v4881 = vld [vmem:[#allocation16 + $0x18] sm:$0xf]
        %v4882 = vld [vmem:[#allocation16 + $0x1c] sm:$0xf]
        %v4883 = vld [vmem:[#allocation16 + $0x20] sm:$0xf]
        %v4884 = vld [vmem:[#allocation16 + $0x24] sm:$0xf]
        %v4885 = vld [vmem:[#allocation16 + $0x28] sm:$0xf]
        %v4886 = vld [vmem:[#allocation16 + $0x2c] sm:$0xf]
        %v4887 = vld [vmem:[#allocation16 + $0x30] sm:$0xf]
        %v4888 = vld [vmem:[#allocation16 + $0x34] sm:$0xf]
        %v4889 = vld [vmem:[#allocation16 + $0x38] sm:$0xf]
        %v4890 = vld [vmem:[#allocation16 + $0x3c] sm:$0xf]
        %v4891 = vld [vmem:[#allocation16 + $0x40] sm:$0xf]
        %v4892 = vld [vmem:[#allocation16 + $0x44] sm:$0xf]
        %v4893 = vld [vmem:[#allocation16 + $0x48] sm:$0xf]
        %v4894 = vld [vmem:[#allocation16 + $0x4c] sm:$0xf]
        %v4895 = vld [vmem:[#allocation16 + $0x50] sm:$0xf]
        %v4896 = vld [vmem:[#allocation16 + $0x54] sm:$0xf]
        %v4897 = vld [vmem:[#allocation16 + $0x58] sm:$0xf]
        %v4898 = vld [vmem:[#allocation16 + $0x5c] sm:$0xf]
        %v4899 = vld [vmem:[#allocation16 + $0x60] sm:$0xf]
        %v4900 = vld [vmem:[#allocation16 + $0x64] sm:$0xf]
        %v4901 = vld [vmem:[#allocation16 + $0x68] sm:$0xf]
        %v4902 = vld [vmem:[#allocation16 + $0x6c] sm:$0xf]
        %v4903 = vld [vmem:[#allocation16 + $0x70] sm:$0xf]
        %v4904 = vld [vmem:[#allocation16 + $0x74] sm:$0xf]
        %v4905 = vld [vmem:[#allocation16 + $0x78] sm:$0xf]
        %v4906 = vld [vmem:[#allocation16 + $0x7c] sm:$0xf]
        %v4907 = vld [vmem:[%s13] sm:$0x1]
        %v4909 = vlaneseq
        %v4910 = vshrl.u32 %v4909, 7
        %v4911 = vsub.s32 0, %v4910
        %v4912 = vrot.slane %v4907, %v4911
        %v4946 = vunpack.c.l.b16 %v4875
        %v4947 = vunpack.c.l.b16 %v4876
        %v4948 = vunpack.c.l.b16 %v4877
        %v4949 = vunpack.c.l.b16 %v4878
        %v4950 = vunpack.c.l.b16 %v4879
        %v4951 = vunpack.c.l.b16 %v4880
        %v4952 = vunpack.c.l.b16 %v4881
        %v4953 = vunpack.c.l.b16 %v4882
        %v4954 = vunpack.c.l.b16 %v4883
        %v4955 = vunpack.c.l.b16 %v4884
        %v4956 = vunpack.c.l.b16 %v4885
        %v4957 = vunpack.c.l.b16 %v4886
        %v4958 = vunpack.c.l.b16 %v4887
        %v4959 = vunpack.c.l.b16 %v4888
        %v4960 = vunpack.c.l.b16 %v4889
        %v4961 = vunpack.c.l.b16 %v4890
        %v4962 = vunpack.c.l.b16 %v4891
        %v4963 = vunpack.c.l.b16 %v4892
        %v4964 = vunpack.c.l.b16 %v4893
        %v4965 = vunpack.c.l.b16 %v4894
        %v4966 = vunpack.c.l.b16 %v4895
        %v4967 = vunpack.c.l.b16 %v4896
        %v4968 = vunpack.c.l.b16 %v4897
        %v4969 = vunpack.c.l.b16 %v4898
        %v4970 = vunpack.c.l.b16 %v4899
        %v4971 = vunpack.c.l.b16 %v4900
        %v4972 = vunpack.c.l.b16 %v4901
        %v4973 = vunpack.c.l.b16 %v4902
        %v4974 = vunpack.c.l.b16 %v4903
        %v4975 = vunpack.c.l.b16 %v4904
        %v4976 = vunpack.c.l.b16 %v4905
        %v4977 = vunpack.c.l.b16 %v4906
        %v4978 = vpack.c.b16 %v4947, %v4946
        %v4979 = vpack.c.b16 %v4949, %v4948
        %v4980 = vpack.c.b16 %v4951, %v4950
        %v4981 = vpack.c.b16 %v4953, %v4952
        %v4982 = vpack.c.b16 %v4955, %v4954
        %v4983 = vpack.c.b16 %v4957, %v4956
        %v4984 = vpack.c.b16 %v4959, %v4958
        %v4985 = vpack.c.b16 %v4961, %v4960
        %v4986 = vpack.c.b16 %v4963, %v4962
        %v4987 = vpack.c.b16 %v4965, %v4964
        %v4988 = vpack.c.b16 %v4967, %v4966
        %v4989 = vpack.c.b16 %v4969, %v4968
        %v4990 = vpack.c.b16 %v4971, %v4970
        %v4991 = vpack.c.b16 %v4973, %v4972
        %v4992 = vpack.c.b16 %v4975, %v4974
        %v4993 = vpack.c.b16 %v4977, %v4976
        %5010 = vmatprep.subr.bf16.mxu0 0
        %5011 = vmatpush1.bf16.msra.mxu0 %v4978
        %5012 = vmatprep.subr.bf16.mxu0 0
        %5013 = vmatpush1.bf16.msra.mxu0 %v4979
        %5014 = vmatprep.subr.bf16.mxu0 0
        %5015 = vmatpush1.bf16.msra.mxu0 %v4980
        %5016 = vmatprep.subr.bf16.mxu0 0
        %5017 = vmatpush1.bf16.msra.mxu0 %v4981
        %5018 = vmatprep.subr.bf16.mxu0 0
        %5019 = vmatpush1.bf16.msra.mxu0 %v4982
        %5020 = vmatprep.subr.bf16.mxu0 0
        %5021 = vmatpush1.bf16.msra.mxu0 %v4983
        %5022 = vmatprep.subr.bf16.mxu0 0
        %5023 = vmatpush1.bf16.msra.mxu0 %v4984
        %5024 = vmatprep.subr.bf16.mxu0 0
        %5025 = vmatpush1.bf16.msra.mxu0 %v4985
        %5026 = vmatprep.subr.bf16.mxu0 0
        %5027 = vmatpush1.bf16.msra.mxu0 %v4986
        %5028 = vmatprep.subr.bf16.mxu0 0
        %5029 = vmatpush1.bf16.msra.mxu0 %v4987
        %5030 = vmatprep.subr.bf16.mxu0 0
        %5031 = vmatpush1.bf16.msra.mxu0 %v4988
        %5032 = vmatprep.subr.bf16.mxu0 0
        %5033 = vmatpush1.bf16.msra.mxu0 %v4989
        %5034 = vmatprep.subr.bf16.mxu0 0
        %5035 = vmatpush1.bf16.msra.mxu0 %v4990
        %5036 = vmatprep.subr.bf16.mxu0 0
        %5037 = vmatpush1.bf16.msra.mxu0 %v4991
        %5038 = vmatprep.subr.bf16.mxu0 0
        %5039 = vmatpush1.bf16.msra.mxu0 %v4992
        %5040 = vmatprep.subr.bf16.mxu0 0
        %5041 = vmatpush1.bf16.msra.mxu0 %v4993
        %5042 = vmatprep.mubr.bf16.mxu0 %v4874
        %5043 = vmatmul.mubr.bf16.gmra.mrb[0].mxu0 %v4873
        %v5044 = vpop.f32.mrb[0].mxu0
        %v5045 = vadd.f32 %v4912, %v5044
        %v5046 = vpop.f32.mrb[0].mxu0
        %v5047 = vpop.f32.mrb[0].mxu0
        %v5048 = vpop.f32.mrb[0].mxu0
        %5049 = vdwg.mxu0
        %v5050 = vmax.f32 %v5045, 0.0
        %v5051 = vld [vmem:[%s14] sm:$0x1]
        %v5053 = vlaneseq
        %v5054 = vshrl.u32 %v5053, 7
        %v5055 = vsub.s32 0, %v5054
        %v5056 = vrot.slane %v5051, %v5055
        %v5058 = vmul.f32 %v5050, %v5056
        %5059 = vadd.xlane.f32.xlu0 %v5058
        %v5060 = vpop.xlane.xlu0 %5059
        %v5061 = vld [vmem:[#allocation3] sm:$0x1]
        %v5063 = vlaneseq
        %v5064 = vshrl.u32 %v5063, 7
        %v5065 = vsub.s32 0, %v5064
        %v5066 = vrot.slane %v5061, %v5065
        %v5068 = vadd.f32 %v5060, %v5066
        %v5069 = vxor.u32 %v5068, 2147483648
        %v5070 = vmul.f32 %v5069, 1.442695
        %v5071 = vpow.pop %v5070
        %v5072 = vadd.f32 %v5071, 1.0
        %v5073 = vrcp.pop %v5072
        %v5074 = vmul.f32 1.0, %v5073
        %vm5075 = vcmask 7168
        %5076 = vst.msk [vmem:[%s703] sm:$0xff] %vm5075, %v5074
        %s5077 = sld [smem:[#allocation2]]
        %v5078 = vstv %s5077
        %v5079 = vmul.f32 %v5078, %v3435
        %v5080 = vmul.f32 %v5078, %v3436
        %v5081 = vmul.f32 %v5078, %v3437
        %v5082 = vmul.f32 %v5078, %v3438
        %v5083 = vmul.f32 %v5078, %v3439
        %v5084 = vmul.f32 %v5078, %v3440
        %s5085 = ssub.f32 1.0, %s5077
        %v5086 = vstv %s5085
        %v5087 = vmul.f32 %v5086, %v3441
        %v5088 = vmul.f32 %v5086, %v3442
        %v5089 = vmul.f32 %v5086, %v3443
        %v5090 = vmul.f32 %v5086, %v3444
        %v5091 = vmul.f32 %v5086, %v3445
        %v5092 = vmul.f32 %v5086, %v3446
        %v5093 = vadd.f32 %v5079, %v5087
        %v5094 = vadd.f32 %v5080, %v5088
        %v5095 = vadd.f32 %v5081, %v5089
        %v5096 = vadd.f32 %v5082, %v5090
        %v5097 = vadd.f32 %v5083, %v5091
        %v5098 = vadd.f32 %v5084, %v5092
        %5099 = vst [vmem:[%s693] sm:$0xff] %v5093
        %5100 = vst [vmem:[%s693 + $0x8] sm:$0xff] %v5094
        %5101 = vst [vmem:[%s693 + $0x10] sm:$0xff] %v5095
        %5102 = vst [vmem:[%s693 + $0x18] sm:$0xff] %v5096
        %5103 = vst [vmem:[%s693 + $0x20] sm:$0xff] %v5097
        %5104 = vst [vmem:[%s693 + $0x28] sm:$0xff] %v5098
        %s5105 = sand.u32 %s398, 1
        %s5106 = scalar_lea.sflag [#allocation6], %s5105
        %s5107 = sand.u32 %s398, 1
        %s5108 = smul.addr %s5107, 48
        %s5109 = scalar_lea.vmem [#allocation18], %s5108
        %p5110 = scmp.lt.s32.totalorder %s44, 1
        %s5111 = scalar_select %p5110, %s44, 1
        %s5112 = smul.addr %s5111, 8
        %s5113 = scalar_lea.vmem %s17, %s5112
        // Predicated region
        $region117: #{tpu_custom_call.1} parent=83 // pred_check
          %p5114 = pneg %p408
        $region118: #{tpu_custom_call.1} parent=83 // pred_check_branch
          %5116 = sbr.rel (%p5114) target = $region120
        $region119: #{tpu_custom_call.1} parent=83 // pred_region
          %s5118 = ssub.s32 768, 768
          %5119 = vsyncadd %s5106, %s5118
          %s5120 = smul.addr %s44, 6
          %s5121 = smul.addr %s5120, 128
          %s5122 = scalar_lea.hbm %s16, %s5121
          %s5124 = sshll.u32 %s5109, 4
          %s5125 = int_to_ptr.vmem [resolvable:$true] %s5124
          %5127 = dma.vmem_to_hbm [thread:$0]  %s5125, 768, %s5122, %s5106
        $region120: #{tpu_custom_call.1} parent=83 // pred_fallthru
          _
        // Predicated region
        $region121: #{tpu_custom_call.1} parent=83 // pred_check
          %p5128 = pneg %p434
        $region122: #{tpu_custom_call.1} parent=83 // pred_check_branch
          %5130 = sbr.rel (%p5128) target = $region124
        $region123: #{tpu_custom_call.1} parent=83 // pred_region
          _
        $region124: #{tpu_custom_call.1} parent=83 // pred_fallthru
          _
      $region84: #{tpu_custom_call.1} parent=5 // pred_fallthru
        _
      %p5131 = scmp.le.s32.totalorder 2, %s39
      // Predicated region
      $region125: #{tpu_custom_call.1} parent=5 // pred_check
        %p5132 = pneg %p5131
      $region126: #{tpu_custom_call.1} parent=5 // pred_check_branch
        %5134 = sbr.rel (%p5132) target = $region128
      $region127: #{tpu_custom_call.1} parent=5 // pred_region
        %s5135 = ssub.s32 %s39, 2
        // Predicated region
        $region129: #{tpu_custom_call.1} parent=127 // pred_check
          %p5136 = pneg %p414
        $region130: #{tpu_custom_call.1} parent=127 // pred_check_branch
          %5138 = sbr.rel (%p5136) target = $region132
        $region131: #{tpu_custom_call.1} parent=127 // pred_region
          %s5139 = sand.u32 %s399, 1
          %s5140 = scalar_lea.sflag [#allocation6], %s5139
          %s5141 = sand.u32 %s399, 1
          %s5142 = smul.addr %s5141, 48
          %s5143 = scalar_lea.vmem [#allocation18], %s5142
          %5144 = dma.done %s5140, 768
        $region132: #{tpu_custom_call.1} parent=127 // pred_fallthru
          _
        // Predicated region
        $region133: #{tpu_custom_call.1} parent=127 // pred_check
          %p5145 = pneg %p440
        $region134: #{tpu_custom_call.1} parent=127 // pred_check_branch
          %5147 = sbr.rel (%p5145) target = $region136
        $region135: #{tpu_custom_call.1} parent=127 // pred_region
          %p5148 = scmp.lt.s32.totalorder %s45, 1
          %s5149 = scalar_select %p5148, %s45, 1
          %s5150 = smul.addr %s5149, 8
          %s5151 = scalar_lea.vmem %s17, %s5150
        $region136: #{tpu_custom_call.1} parent=127 // pred_fallthru
          _
      $region128: #{tpu_custom_call.1} parent=5 // pred_fallthru
        _
    $region6: #{tpu_custom_call.1} parent=1 // loop_footer
      %s43 = sadd.s32 1, %s39
    $region7: #{tpu_custom_call.1} parent=1 // loop_footer_branch
      %38 = sbr.rel target = $region3
    $region8: #{tpu_custom_call.1} parent=1 // loop_exit
      _
    %5152 = vsyncpa [#allocation5], 1
    %s5153 = scalar_lea.sflag [#allocation5], 1
    %5154 = vsyncpa %s5153, 1
    %5155 = vsyncpa [#allocation8], 1
    %s5156 = scalar_lea.sflag [#allocation8], 1
    %5157 = vsyncpa %s5156, 1
    %5158 = vsyncpa [#allocation11], 1
    %5159 = vsyncpa [#allocation14], 1
    %5160 = vsyncpa [#allocation17], 1
    %5161 = vsyncpa [#allocation6], 1
    %s5162 = scalar_lea.sflag [#allocation6], 1
    %5163 = vsyncpa %s5162, 1

</llo_original>
